<compile_context>
chip_gen: v7x
topology: tpu7x:2x2x1
jax: 0.10.0
libtpu: 0.0.40
codegen_flags: <defaults>
</compile_context>

<pallas_src>
import functools
import jax
import jax.numpy as jnp
from jax.experimental import pallas as pl
from jax.experimental.pallas import tpu as pltpu

_EPS = 1e-5                       # BatchNorm2d default eps
_LANE = 128                       # TPU lane width -> lane-dense matmul N / stores
_VMEM_LIMIT = 32 * 1024 * 1024    # explicit scoped-VMEM budget (safe on v5e/v6e/v7x)


def _round_up(x, m):
    return ((x + m - 1) // m) * m


def _pick_tile(n_rows, target=512):
    """Row tile for the pixel (M) dim: ~512 rows, multiple of 16 (bf16 sublanes)."""
    return min(_round_up(target, 16), _round_up(max(n_rows, 1), 16))


# ---------- kernel 1: ConvTranspose2d(k=2, s=2) as tiled matmul + bias ----------
def _matmul_bias_kernel(x_ref, w_ref, b_ref, o_ref):
    o_ref[...] = (
        jnp.dot(x_ref[...], w_ref[...], preferred_element_type=jnp.float32)
        + b_ref[...]
    )


def matmul_bias(x, w, b, tm):
    """x (Mp, K) bf16, w (K, Np) bf16, b (1, Np) f32 -> (Mp, Np) f32, tiled over M."""
    Mp, K = x.shape
    Np = w.shape[1]
    flops = 2 * Mp * K * Np
    bytes_accessed = int(x.size * 2 + w.size * 2 + b.size * 4 + Mp * Np * 4)
    return pl.pallas_call(
        _matmul_bias_kernel,
        out_shape=jax.ShapeDtypeStruct((Mp, Np), jnp.float32),
        grid=(Mp // tm,),
        in_specs=[
            pl.BlockSpec((tm, K), lambda i: (i, 0)),
            pl.BlockSpec((K, Np), lambda i: (0, 0)),    # weights: same block every step
            pl.BlockSpec((1, Np), lambda i: (0, 0)),
        ],
        out_specs=pl.BlockSpec((tm, Np), lambda i: (i, 0)),
        compiler_params=pltpu.CompilerParams(
            dimension_semantics=("parallel",),
            vmem_limit_bytes=_VMEM_LIMIT),
        cost_estimate=pl.CostEstimate(flops=flops, transcendentals=0,
                                      bytes_accessed=bytes_accessed),
    )(x, w, b)


# ---------- kernel 2: conv3x3 matmul + per-tile BN partial sums (pass 1) ----------
def _conv_matmul_stats_kernel(p_ref, w_ref, y_ref, s_ref):
    y = jnp.dot(p_ref[...], w_ref[...], preferred_element_type=jnp.float32)
    y_ref[...] = y
    # per-(batch, tile) partial BatchNorm statistics: row 0 = sum, row 1 = sum(x^2)
    s_ref[...] = jnp.concatenate(
        [jnp.sum(y, axis=0, keepdims=True),
         jnp.sum(y * y, axis=0, keepdims=True)], axis=0)


def conv_matmul_stats(patches, w, tm):
    """patches (B, HWp, K) bf16, w (K, Cp) bf16 -> y (B, HWp, Cp) f32,
    partial stats (B, nm, 2, Cp) f32.  Grid (B, nm), fully parallel."""
    B, HWp, K = patches.shape
    Cp = w.shape[1]
    nm = HWp // tm
    flops = 2 * B * HWp * K * Cp
    bytes_accessed = int(patches.size * 2 + w.size * 2
                         + B * HWp * Cp * 4 + B * nm * 2 * Cp * 4)
    return pl.pallas_call(
        _conv_matmul_stats_kernel,
        out_shape=(jax.ShapeDtypeStruct((B, HWp, Cp), jnp.float32),
                   jax.ShapeDtypeStruct((B, nm, 2, Cp), jnp.float32)),
        grid=(B, nm),
        in_specs=[
            pl.BlockSpec((None, tm, K), lambda b, i: (b, i, 0)),
            pl.BlockSpec((K, Cp), lambda b, i: (0, 0)),          # broadcast weights
        ],
        out_specs=(
            pl.BlockSpec((None, tm, Cp), lambda b, i: (b, i, 0)),
            pl.BlockSpec((None, None, 2, Cp), lambda b, i: (b, i, 0, 0)),
        ),
        compiler_params=pltpu.CompilerParams(
            dimension_semantics=("parallel", "parallel"),
            vmem_limit_bytes=_VMEM_LIMIT),
        cost_estimate=pl.CostEstimate(flops=flops, transcendentals=0,
                                      bytes_accessed=bytes_accessed),
    )(patches, w)


# ---------- kernel 3: BN apply + ReLU + fused per-(batch,channel) add (pass 2) ----------
def _bn_relu_add_kernel(y_ref, sc_ref, sh_ref, e_ref, o_ref):
    o_ref[...] = (jnp.maximum(y_ref[...] * sc_ref[...] + sh_ref[...], 0.0)
                  + e_ref[...]).astype(o_ref.dtype)


def bn_relu_add(y, scale, shift, emb, tm, out_dtype):
    """y (B, HWp, Cp) f32, scale/shift (1, Cp) f32, emb (B, 1, Cp) f32."""
    B, HWp, Cp = y.shape
    nm = HWp // tm
    out_bytes = B * HWp * Cp * jnp.dtype(out_dtype).itemsize
    bytes_accessed = int(y.size * 4 + scale.size * 4 + shift.size * 4
                         + emb.size * 4 + out_bytes)
    return pl.pallas_call(
        _bn_relu_add_kernel,
        out_shape=jax.ShapeDtypeStruct((B, HWp, Cp), out_dtype),
        grid=(B, nm),
        in_specs=[
            pl.BlockSpec((None, tm, Cp), lambda b, i: (b, i, 0)),
            pl.BlockSpec((1, Cp), lambda b, i: (0, 0)),
            pl.BlockSpec((1, Cp), lambda b, i: (0, 0)),
            pl.BlockSpec((None, 1, Cp), lambda b, i: (b, 0, 0)),
        ],
        out_specs=pl.BlockSpec((None, tm, Cp), lambda b, i: (b, i, 0)),
        compiler_params=pltpu.CompilerParams(
            dimension_semantics=("parallel", "parallel"),
            vmem_limit_bytes=_VMEM_LIMIT),
        cost_estimate=pl.CostEstimate(flops=3 * B * HWp * Cp, transcendentals=0,
                                      bytes_accessed=bytes_accessed),
    )(y, scale, shift, emb)


# ---------- JAX glue ----------
def _bn_scale_shift(partial_stats, gamma_p, beta_p, count):
    """Reduce tiny per-tile partial sums -> exact training-mode BN scale/shift."""
    stats = jnp.sum(partial_stats, axis=(0, 1))               # (2, Cp)
    mean = stats[0] / count
    var = jnp.maximum(stats[1] / count - mean * mean, 0.0)    # biased variance
    scale = gamma_p * jax.lax.rsqrt(var + _EPS)
    shift = beta_p - mean * scale
    return scale.reshape(1, -1), shift.reshape(1, -1)


def _im2col3x3(x_nhwc):
    B, H, W, C = x_nhwc.shape
    xp = jnp.pad(x_nhwc, ((0, 0), (1, 1), (1, 1), (0, 0)))
    cols = [xp[:, dy:dy + H, dx:dx + W, :] for dy in range(3) for dx in range(3)]
    return jnp.stack(cols, axis=3).reshape(B, H * W, 9 * C)


def init_params(key, in_channels, out_channels, emb_dim):
    ks = jax.random.split(key, 8)
    cup = in_channels // 2
    p = {}
    # ConvTranspose2d weight (Cin, Cin//2, 2, 2) + bias
    p["wt"] = 0.1 * jax.random.normal(ks[0], (in_channels, cup, 2, 2), jnp.float32)
    p["bt"] = 0.1 * jax.random.normal(ks[1], (cup,), jnp.float32)
    # DoubleConv: two 3x3 convs (no bias) + BN affine params (gamma=1, beta=0 init)
    p["w1"] = 0.1 * jax.random.normal(ks[2], (out_channels, in_channels, 3, 3), jnp.float32)
    p["g1"] = jnp.ones((out_channels,), jnp.float32)
    p["b1"] = jnp.zeros((out_channels,), jnp.float32)
    p["w2"] = 0.1 * jax.random.normal(ks[3], (out_channels, out_channels, 3, 3), jnp.float32)
    p["g2"] = jnp.ones((out_channels,), jnp.float32)
    p["b2"] = jnp.zeros((out_channels,), jnp.float32)
    # emb_layer: Linear(emb_dim->Cout), SiLU, Linear(Cout->Cout) (weights as (in, out))
    p["a1"] = 0.1 * jax.random.normal(ks[4], (emb_dim, out_channels), jnp.float32)
    p["c1"] = 0.1 * jax.random.normal(ks[5], (out_channels,), jnp.float32)
    p["a2"] = 0.1 * jax.random.normal(ks[6], (out_channels, out_channels), jnp.float32)
    p["c2"] = 0.1 * jax.random.normal(ks[7], (out_channels,), jnp.float32)
    return p


def upsampling_block_forward(params, x_nchw, xi_nchw, t):
    B, Cin, H, W = x_nchw.shape
    cup = Cin // 2
    Cout = params["w1"].shape[0]
    Cout_p = _round_up(Cout, _LANE)         # lane-dense conv output channels
    Nup = 4 * cup
    Nup_p = _round_up(Nup, _LANE)           # lane-dense deconv output columns

    x = jnp.transpose(x_nchw, (0, 2, 3, 1))     # NCHW -> NHWC
    xi = jnp.transpose(xi_nchw, (0, 2, 3, 1))
    Hs, Ws = xi.shape[1], xi.shape[2]

    # --- ConvTranspose2d(k=2, s=2): out[b,2i+ky,2j+kx,co] = sum_ci x[b,i,j,ci]W[ci,co,ky,kx]+b[co]
    wt = jnp.transpose(params["wt"], (0, 2, 3, 1)).reshape(Cin, Nup)   # cols = (ky, kx, co)
    wt = jnp.pad(wt, ((0, 0), (0, Nup_p - Nup))).astype(jnp.bfloat16)
    bt = jnp.pad(jnp.tile(params["bt"], 4), (0, Nup_p - Nup)).reshape(1, Nup_p)
    Mup = B * H * W
    tm_up = _pick_tile(Mup)
    Mup_p = _round_up(Mup, tm_up)
    x_flat = jnp.pad(x.reshape(Mup, Cin), ((0, Mup_p - Mup), (0, 0)))
    y = matmul_bias(x_flat.astype(jnp.bfloat16), wt, bt, tm_up)        # (Mup_p, Nup_p) f32
    y = y[:Mup, :Nup].reshape(B, H, W, 2, 2, cup)
    y = jnp.transpose(y, (0, 1, 3, 2, 4, 5)).reshape(B, 2 * H, 2 * W, cup)

    # --- F.pad to skip spatial size, channel concat [upsampled, skip] (bf16 for conv path)
    dY, dX = Hs - 2 * H, Ws - 2 * W
    y = jnp.pad(y, ((0, 0), (dY // 2, dY - dY // 2), (dX // 2, dX - dX // 2), (0, 0)))
    xcat = jnp.concatenate([y, xi], axis=-1).astype(jnp.bfloat16)      # (B, Hs, Ws, Cin)

    HW = Hs * Ws
    tm = _pick_tile(HW)
    HWp = _round_up(HW, tm)
    count = float(B * HW)                    # true BN population (zero-padded rows add 0)

    # TODO(synk): replace the HBM im2col below with in-kernel halo-tile DMA +
    # 9 shifted accumulating matmuls to cut conv1/conv2 HBM traffic ~9x.

    # --- DoubleConv, conv1: pass 1 matmul + partial stats, pass 2 BN+ReLU apply
    w1 = jnp.transpose(params["w1"], (2, 3, 1, 0)).reshape(9 * Cin, Cout)
    w1 = jnp.pad(w1, ((0, 0), (0, Cout_p - Cout))).astype(jnp.bfloat16)
    p1 = jnp.pad(_im2col3x3(xcat), ((0, 0), (0, HWp - HW), (0, 0)))    # (B, HWp, 9*Cin) bf16
    y1, s1 = conv_matmul_stats(p1, w1, tm)
    g1 = jnp.pad(params["g1"], (0, Cout_p - Cout))
    b1 = jnp.pad(params["b1"], (0, Cout_p - Cout))
    sc1, sh1 = _bn_scale_shift(s1, g1, b1, count)
    no_emb = jnp.zeros((B, 1, Cout_p), jnp.float32)
    h1 = bn_relu_add(y1, sc1, sh1, no_emb, tm, jnp.bfloat16)           # (B, HWp, Cout_p)

    # --- DoubleConv, conv2 (emb broadcast-add fused into the epilogue kernel)
    w2 = jnp.transpose(params["w2"], (2, 3, 1, 0))                     # (ky, kx, cin, cout)
    w2 = jnp.pad(w2, ((0, 0), (0, 0), (0, Cout_p - Cout), (0, Cout_p - Cout)))
    w2 = w2.reshape(9 * Cout_p, Cout_p).astype(jnp.bfloat16)
    h1 = h1[:, :HW, :].reshape(B, Hs, Ws, Cout_p)
    p2 = jnp.pad(_im2col3x3(h1), ((0, 0), (0, HWp - HW), (0, 0)))      # (B, HWp, 9*Cout_p)
    y2, s2 = conv_matmul_stats(p2, w2, tm)
    g2 = jnp.pad(params["g2"], (0, Cout_p - Cout))
    b2 = jnp.pad(params["b2"], (0, Cout_p - Cout))
    sc2, sh2 = _bn_scale_shift(s2, g2, b2, count)

    # emb MLP: tiny (B, emb_dim) matmul -> keep in XLA (per review); only the
    # broadcast add is fused into conv2's epilogue (saves a full HBM round trip).
    e = t @ params["a1"] + params["c1"]
    e = e * jax.nn.sigmoid(e)                                          # SiLU
    e = e @ params["a2"] + params["c2"]
    e = jnp.pad(e, ((0, 0), (0, Cout_p - Cout))).reshape(B, 1, Cout_p)

    out = bn_relu_add(y2, sc2, sh2, e, tm, jnp.float32)                # (B, HWp, Cout_p)
    out = out[:, :HW, :Cout].reshape(B, Hs, Ws, Cout)
    return jnp.transpose(out, (0, 3, 1, 2))                            # back to NCHW


if __name__ == "__main__":
    B, Cin, H, W = 2, 4, 16, 16
    Cout = 4
    emb_dim = 32

    key = jax.random.PRNGKey(0)
    k1, k2, k3, k4 = jax.random.split(key, 4)
    x = jax.random.normal(k1, (B, Cin, H, W), jnp.float32)
    xi = jax.random.normal(k2, (B, Cin // 2, 2 * H, 2 * W), jnp.float32)
    t = jax.random.normal(k3, (B, emb_dim), jnp.float32)
    params = init_params(k4, Cin, Cout, emb_dim)

    fwd = jax.jit(functools.partial(upsampling_block_forward, params))
    out = jax.block_until_ready(fwd(x, xi, t))
    assert out.shape == (B, Cout, 2 * H, 2 * W), out.shape
    assert out.dtype == jnp.float32
    print("KERNEL_OK")
</pallas_src>

<mosaic_0001>
module attributes {stable_mosaic.version = 11 : i64} {
  func.func @_matmul_bias_kernel(%arg0: i32, %arg1: memref<512x4xbf16, #tpu.memory_space<vmem>>, %arg2: memref<4x128xbf16, #tpu.memory_space<vmem>>, %arg3: memref<1x128xf32, #tpu.memory_space<vmem>>, %arg4: memref<512x128xf32, #tpu.memory_space<vmem>>) attributes {dimension_semantics = [#tpu.dimension_semantics<parallel>], iteration_bounds = array<i64: 1>, scalar_prefetch = 0 : i64, scratch_operands = 0 : i64, tpu.core_type = #tpu.core_type<tc>, window_params = [{transform_indices = @transform_0, window_bounds = array<i64: 512, 4>}, {pipeline_mode = #tpu.pipeline_mode<synchronous>, transform_indices = @transform_1, window_bounds = array<i64: 4, 128>}, {pipeline_mode = #tpu.pipeline_mode<synchronous>, transform_indices = @transform_2, window_bounds = array<i64: 1, 128>}, {transform_indices = @transform_3, window_bounds = array<i64: 512, 128>}]} {
    %c0 = arith.constant 0 : index
    %c0_0 = arith.constant 0 : index
    %0 = vector.load %arg1[%c0, %c0_0] : memref<512x4xbf16, #tpu.memory_space<vmem>>, vector<512x4xbf16>
    %c0_1 = arith.constant 0 : index
    %c0_2 = arith.constant 0 : index
    %1 = vector.load %arg2[%c0_1, %c0_2] : memref<4x128xbf16, #tpu.memory_space<vmem>>, vector<4x128xbf16>
    %cst = arith.constant dense<0.000000e+00> : vector<512x128xf32>
    %2 = tpu.matmul %0, %1, %cst {dimension_numbers = #tpu.dot_dimension_numbers<[1], [0], [0], [1], [0, 0, 1, 1], [], []>} : vector<512x4xbf16>, vector<4x128xbf16>, vector<512x128xf32> -> vector<512x128xf32>
    %c0_3 = arith.constant 0 : index
    %c0_4 = arith.constant 0 : index
    %3 = vector.load %arg3[%c0_3, %c0_4] : memref<1x128xf32, #tpu.memory_space<vmem>>, vector<1x128xf32>
    %4 = vector.broadcast %3 : vector<1x128xf32> to vector<512x128xf32>
    %5 = arith.addf %2, %4 : vector<512x128xf32>
    %c0_5 = arith.constant 0 : index
    %c0_6 = arith.constant 0 : index
    %6 = vector.load %arg4[%c0_5, %c0_6] : memref<512x128xf32, #tpu.memory_space<vmem>>, vector<512x128xf32>
    tpu.vector_store %arg4[%c0_5, %c0_6], %5 {strides = array<i32>} : memref<512x128xf32, #tpu.memory_space<vmem>>, vector<512x128xf32>,
    return
  }
  func.func @transform_0(%arg0: i32) -> (i32, i32) {
    %c0_i32 = arith.constant 0 : i32
    %c0_i32_0 = arith.constant 0 : i32
    return %arg0, %c0_i32 : i32, i32
  }
  func.func @transform_1(%arg0: i32) -> (i32, i32) {
    %c0_i32 = arith.constant 0 : i32
    %c0_i32_0 = arith.constant 0 : i32
    %c0_i32_1 = arith.constant 0 : i32
    return %c0_i32, %c0_i32_0 : i32, i32
  }
  func.func @transform_2(%arg0: i32) -> (i32, i32) {
    %c0_i32 = arith.constant 0 : i32
    %c0_i32_0 = arith.constant 0 : i32
    %c0_i32_1 = arith.constant 0 : i32
    return %c0_i32, %c0_i32_0 : i32, i32
  }
  func.func @transform_3(%arg0: i32) -> (i32, i32) {
    %c0_i32 = arith.constant 0 : i32
    %c0_i32_0 = arith.constant 0 : i32
    return %arg0, %c0_i32 : i32, i32
  }
}

module attributes {stable_mosaic.version = 11 : i64} {
  func.func @_conv_matmul_stats_kernel(%arg0: i32, %arg1: i32, %arg2: memref<1x512x36xbf16, #tpu.memory_space<vmem>>, %arg3: memref<36x128xbf16, #tpu.memory_space<vmem>>, %arg4: memref<1x512x128xf32, #tpu.memory_space<vmem>>, %arg5: memref<1x1x2x128xf32, #tpu.memory_space<vmem>>) attributes {dimension_semantics = [#tpu.dimension_semantics<parallel>, #tpu.dimension_semantics<parallel>], iteration_bounds = array<i64: 2, 2>, scalar_prefetch = 0 : i64, scratch_operands = 0 : i64, tpu.core_type = #tpu.core_type<tc>, window_params = [{transform_indices = @transform_0, window_bounds = array<i64: 1, 512, 36>}, {pipeline_mode = #tpu.pipeline_mode<synchronous>, transform_indices = @transform_1, window_bounds = array<i64: 36, 128>}, {transform_indices = @transform_2, window_bounds = array<i64: 1, 512, 128>}, {transform_indices = @transform_3, window_bounds = array<i64: 1, 1, 2, 128>}]} {
    %c0 = arith.constant 0 : index
    %c0_0 = arith.constant 0 : index
    %c0_1 = arith.constant 0 : index
    %0 = vector.load %arg2[%c0, %c0_0, %c0_1] : memref<1x512x36xbf16, #tpu.memory_space<vmem>>, vector<1x512x36xbf16>
    %1 = vector.shape_cast %0 : vector<1x512x36xbf16> to vector<512x36xbf16>
    %c0_2 = arith.constant 0 : index
    %c0_3 = arith.constant 0 : index
    %2 = vector.load %arg3[%c0_2, %c0_3] : memref<36x128xbf16, #tpu.memory_space<vmem>>, vector<36x128xbf16>
    %cst = arith.constant dense<0.000000e+00> : vector<512x128xf32>
    %3 = tpu.matmul %1, %2, %cst {dimension_numbers = #tpu.dot_dimension_numbers<[1], [0], [0], [1], [0, 0, 1, 1], [], []>} : vector<512x36xbf16>, vector<36x128xbf16>, vector<512x128xf32> -> vector<512x128xf32>
    %c0_4 = arith.constant 0 : index
    %c0_5 = arith.constant 0 : index
    %c0_6 = arith.constant 0 : index
    %4 = vector.load %arg4[%c0_4, %c0_5, %c0_6] : memref<1x512x128xf32, #tpu.memory_space<vmem>>, vector<1x512x128xf32>
    %5 = vector.shape_cast %4 : vector<1x512x128xf32> to vector<512x128xf32>
    %6 = vector.shape_cast %3 : vector<512x128xf32> to vector<1x512x128xf32>
    tpu.vector_store %arg4[%c0_4, %c0_5, %c0_6], %6 {strides = array<i32>} : memref<1x512x128xf32, #tpu.memory_space<vmem>>, vector<1x512x128xf32>,
    %cst_7 = arith.constant dense<0.000000e+00> : vector<128xf32>
    %7 = vector.multi_reduction <add>, %3, %cst_7 [0] : vector<512x128xf32> to vector<128xf32>
    %8 = vector.shape_cast %7 : vector<128xf32> to vector<1x128xf32>
    %9 = arith.mulf %3, %3 : vector<512x128xf32>
    %cst_8 = arith.constant dense<0.000000e+00> : vector<128xf32>
    %10 = vector.multi_reduction <add>, %9, %cst_8 [0] : vector<512x128xf32> to vector<128xf32>
    %11 = vector.shape_cast %10 : vector<128xf32> to vector<1x128xf32>
    %12 = tpu.concatenate %8, %11 in 0 : vector<1x128xf32>, vector<1x128xf32> -> vector<2x128xf32>
    %c0_9 = arith.constant 0 : index
    %c0_10 = arith.constant 0 : index
    %c0_11 = arith.constant 0 : index
    %c0_12 = arith.constant 0 : index
    %13 = vector.load %arg5[%c0_9, %c0_10, %c0_11, %c0_12] : memref<1x1x2x128xf32, #tpu.memory_space<vmem>>, vector<1x1x2x128xf32>
    %14 = vector.shape_cast %13 : vector<1x1x2x128xf32> to vector<2x128xf32>
    %15 = vector.shape_cast %12 : vector<2x128xf32> to vector<1x1x2x128xf32>
    tpu.vector_store %arg5[%c0_9, %c0_10, %c0_11, %c0_12], %15 {strides = array<i32>} : memref<1x1x2x128xf32, #tpu.memory_space<vmem>>, vector<1x1x2x128xf32>,
    return
  }
  func.func @transform_0(%arg0: i32, %arg1: i32) -> (i32, i32, i32) {
    %c0_i32 = arith.constant 0 : i32
    %c0_i32_0 = arith.constant 0 : i32
    return %arg0, %arg1, %c0_i32 : i32, i32, i32
  }
  func.func @transform_1(%arg0: i32, %arg1: i32) -> (i32, i32) {
    %c0_i32 = arith.constant 0 : i32
    %c0_i32_0 = arith.constant 0 : i32
    %c0_i32_1 = arith.constant 0 : i32
    return %c0_i32, %c0_i32_0 : i32, i32
  }
  func.func @transform_2(%arg0: i32, %arg1: i32) -> (i32, i32, i32) {
    %c0_i32 = arith.constant 0 : i32
    %c0_i32_0 = arith.constant 0 : i32
    return %arg0, %arg1, %c0_i32 : i32, i32, i32
  }
  func.func @transform_3(%arg0: i32, %arg1: i32) -> (i32, i32, i32, i32) {
    %c0_i32 = arith.constant 0 : i32
    %c0_i32_0 = arith.constant 0 : i32
    %c0_i32_1 = arith.constant 0 : i32
    return %arg0, %arg1, %c0_i32, %c0_i32_0 : i32, i32, i32, i32
  }
}

module attributes {stable_mosaic.version = 11 : i64} {
  func.func @_bn_relu_add_kernel(%arg0: i32, %arg1: i32, %arg2: memref<1x512x128xf32, #tpu.memory_space<vmem>>, %arg3: memref<1x128xf32, #tpu.memory_space<vmem>>, %arg4: memref<1x128xf32, #tpu.memory_space<vmem>>, %arg5: memref<1x1x128xf32, #tpu.memory_space<vmem>>, %arg6: memref<1x512x128xbf16, #tpu.memory_space<vmem>>) attributes {dimension_semantics = [#tpu.dimension_semantics<parallel>, #tpu.dimension_semantics<parallel>], iteration_bounds = array<i64: 2, 2>, scalar_prefetch = 0 : i64, scratch_operands = 0 : i64, tpu.core_type = #tpu.core_type<tc>, window_params = [{transform_indices = @transform_0, window_bounds = array<i64: 1, 512, 128>}, {pipeline_mode = #tpu.pipeline_mode<synchronous>, transform_indices = @transform_1, window_bounds = array<i64: 1, 128>}, {pipeline_mode = #tpu.pipeline_mode<synchronous>, transform_indices = @transform_2, window_bounds = array<i64: 1, 128>}, {transform_indices = @transform_3, window_bounds = array<i64: 1, 1, 128>}, {transform_indices = @transform_4, window_bounds = array<i64: 1, 512, 128>}]} {
    %c0 = arith.constant 0 : index
    %c0_0 = arith.constant 0 : index
    %c0_1 = arith.constant 0 : index
    %0 = vector.load %arg2[%c0, %c0_0, %c0_1] : memref<1x512x128xf32, #tpu.memory_space<vmem>>, vector<1x512x128xf32>
    %1 = vector.shape_cast %0 : vector<1x512x128xf32> to vector<512x128xf32>
    %c0_2 = arith.constant 0 : index
    %c0_3 = arith.constant 0 : index
    %2 = vector.load %arg3[%c0_2, %c0_3] : memref<1x128xf32, #tpu.memory_space<vmem>>, vector<1x128xf32>
    %3 = vector.broadcast %2 : vector<1x128xf32> to vector<512x128xf32>
    %4 = arith.mulf %1, %3 : vector<512x128xf32>
    %c0_4 = arith.constant 0 : index
    %c0_5 = arith.constant 0 : index
    %5 = vector.load %arg4[%c0_4, %c0_5] : memref<1x128xf32, #tpu.memory_space<vmem>>, vector<1x128xf32>
    %6 = vector.broadcast %5 : vector<1x128xf32> to vector<512x128xf32>
    %7 = arith.addf %4, %6 : vector<512x128xf32>
    %cst = arith.constant 0.000000e+00 : f32
    %8 = vector.broadcast %cst : f32 to vector<512x128xf32>
    %9 = arith.maximumf %7, %8 : vector<512x128xf32>
    %c0_6 = arith.constant 0 : index
    %c0_7 = arith.constant 0 : index
    %c0_8 = arith.constant 0 : index
    %10 = vector.load %arg5[%c0_6, %c0_7, %c0_8] : memref<1x1x128xf32, #tpu.memory_space<vmem>>, vector<1x1x128xf32>
    %11 = vector.shape_cast %10 : vector<1x1x128xf32> to vector<1x128xf32>
    %12 = vector.broadcast %11 : vector<1x128xf32> to vector<512x128xf32>
    %13 = arith.addf %9, %12 : vector<512x128xf32>
    %14 = arith.truncf %13 : vector<512x128xf32> to vector<512x128xbf16>
    %c0_9 = arith.constant 0 : index
    %c0_10 = arith.constant 0 : index
    %c0_11 = arith.constant 0 : index
    %15 = vector.load %arg6[%c0_9, %c0_10, %c0_11] : memref<1x512x128xbf16, #tpu.memory_space<vmem>>, vector<1x512x128xbf16>
    %16 = vector.shape_cast %15 : vector<1x512x128xbf16> to vector<512x128xbf16>
    %17 = vector.shape_cast %14 : vector<512x128xbf16> to vector<1x512x128xbf16>
    tpu.vector_store %arg6[%c0_9, %c0_10, %c0_11], %17 {strides = array<i32>} : memref<1x512x128xbf16, #tpu.memory_space<vmem>>, vector<1x512x128xbf16>,
    return
  }
  func.func @transform_0(%arg0: i32, %arg1: i32) -> (i32, i32, i32) {
    %c0_i32 = arith.constant 0 : i32
    %c0_i32_0 = arith.constant 0 : i32
    return %arg0, %arg1, %c0_i32 : i32, i32, i32
  }
  func.func @transform_1(%arg0: i32, %arg1: i32) -> (i32, i32) {
    %c0_i32 = arith.constant 0 : i32
    %c0_i32_0 = arith.constant 0 : i32
    %c0_i32_1 = arith.constant 0 : i32
    return %c0_i32, %c0_i32_0 : i32, i32
  }
  func.func @transform_2(%arg0: i32, %arg1: i32) -> (i32, i32) {
    %c0_i32 = arith.constant 0 : i32
    %c0_i32_0 = arith.constant 0 : i32
    %c0_i32_1 = arith.constant 0 : i32
    return %c0_i32, %c0_i32_0 : i32, i32
  }
  func.func @transform_3(%arg0: i32, %arg1: i32) -> (i32, i32, i32) {
    %c0_i32 = arith.constant 0 : i32
    %c0_i32_0 = arith.constant 0 : i32
    %c0_i32_1 = arith.constant 0 : i32
    return %arg0, %c0_i32, %c0_i32_0 : i32, i32, i32
  }
  func.func @transform_4(%arg0: i32, %arg1: i32) -> (i32, i32, i32) {
    %c0_i32 = arith.constant 0 : i32
    %c0_i32_0 = arith.constant 0 : i32
    return %arg0, %arg1, %c0_i32 : i32, i32, i32
  }
}

module attributes {stable_mosaic.version = 11 : i64} {
  func.func @_conv_matmul_stats_kernel(%arg0: i32, %arg1: i32, %arg2: memref<1x512x1152xbf16, #tpu.memory_space<vmem>>, %arg3: memref<1152x128xbf16, #tpu.memory_space<vmem>>, %arg4: memref<1x512x128xf32, #tpu.memory_space<vmem>>, %arg5: memref<1x1x2x128xf32, #tpu.memory_space<vmem>>) attributes {dimension_semantics = [#tpu.dimension_semantics<parallel>, #tpu.dimension_semantics<parallel>], iteration_bounds = array<i64: 2, 2>, scalar_prefetch = 0 : i64, scratch_operands = 0 : i64, tpu.core_type = #tpu.core_type<tc>, window_params = [{transform_indices = @transform_0, window_bounds = array<i64: 1, 512, 1152>}, {pipeline_mode = #tpu.pipeline_mode<synchronous>, transform_indices = @transform_1, window_bounds = array<i64: 1152, 128>}, {transform_indices = @transform_2, window_bounds = array<i64: 1, 512, 128>}, {transform_indices = @transform_3, window_bounds = array<i64: 1, 1, 2, 128>}]} {
    %c0 = arith.constant 0 : index
    %c0_0 = arith.constant 0 : index
    %c0_1 = arith.constant 0 : index
    %0 = vector.load %arg2[%c0, %c0_0, %c0_1] : memref<1x512x1152xbf16, #tpu.memory_space<vmem>>, vector<1x512x1152xbf16>
    %1 = vector.shape_cast %0 : vector<1x512x1152xbf16> to vector<512x1152xbf16>
    %c0_2 = arith.constant 0 : index
    %c0_3 = arith.constant 0 : index
    %2 = vector.load %arg3[%c0_2, %c0_3] : memref<1152x128xbf16, #tpu.memory_space<vmem>>, vector<1152x128xbf16>
    %cst = arith.constant dense<0.000000e+00> : vector<512x128xf32>
    %3 = tpu.matmul %1, %2, %cst {dimension_numbers = #tpu.dot_dimension_numbers<[1], [0], [0], [1], [0, 0, 1, 1], [], []>} : vector<512x1152xbf16>, vector<1152x128xbf16>, vector<512x128xf32> -> vector<512x128xf32>
    %c0_4 = arith.constant 0 : index
    %c0_5 = arith.constant 0 : index
    %c0_6 = arith.constant 0 : index
    %4 = vector.load %arg4[%c0_4, %c0_5, %c0_6] : memref<1x512x128xf32, #tpu.memory_space<vmem>>, vector<1x512x128xf32>
    %5 = vector.shape_cast %4 : vector<1x512x128xf32> to vector<512x128xf32>
    %6 = vector.shape_cast %3 : vector<512x128xf32> to vector<1x512x128xf32>
    tpu.vector_store %arg4[%c0_4, %c0_5, %c0_6], %6 {strides = array<i32>} : memref<1x512x128xf32, #tpu.memory_space<vmem>>, vector<1x512x128xf32>,
    %cst_7 = arith.constant dense<0.000000e+00> : vector<128xf32>
    %7 = vector.multi_reduction <add>, %3, %cst_7 [0] : vector<512x128xf32> to vector<128xf32>
    %8 = vector.shape_cast %7 : vector<128xf32> to vector<1x128xf32>
    %9 = arith.mulf %3, %3 : vector<512x128xf32>
    %cst_8 = arith.constant dense<0.000000e+00> : vector<128xf32>
    %10 = vector.multi_reduction <add>, %9, %cst_8 [0] : vector<512x128xf32> to vector<128xf32>
    %11 = vector.shape_cast %10 : vector<128xf32> to vector<1x128xf32>
    %12 = tpu.concatenate %8, %11 in 0 : vector<1x128xf32>, vector<1x128xf32> -> vector<2x128xf32>
    %c0_9 = arith.constant 0 : index
    %c0_10 = arith.constant 0 : index
    %c0_11 = arith.constant 0 : index
    %c0_12 = arith.constant 0 : index
    %13 = vector.load %arg5[%c0_9, %c0_10, %c0_11, %c0_12] : memref<1x1x2x128xf32, #tpu.memory_space<vmem>>, vector<1x1x2x128xf32>
    %14 = vector.shape_cast %13 : vector<1x1x2x128xf32> to vector<2x128xf32>
    %15 = vector.shape_cast %12 : vector<2x128xf32> to vector<1x1x2x128xf32>
    tpu.vector_store %arg5[%c0_9, %c0_10, %c0_11, %c0_12], %15 {strides = array<i32>} : memref<1x1x2x128xf32, #tpu.memory_space<vmem>>, vector<1x1x2x128xf32>,
    return
  }
  func.func @transform_0(%arg0: i32, %arg1: i32) -> (i32, i32, i32) {
    %c0_i32 = arith.constant 0 : i32
    %c0_i32_0 = arith.constant 0 : i32
    return %arg0, %arg1, %c0_i32 : i32, i32, i32
  }
  func.func @transform_1(%arg0: i32, %arg1: i32) -> (i32, i32) {
    %c0_i32 = arith.constant 0 : i32
    %c0_i32_0 = arith.constant 0 : i32
    %c0_i32_1 = arith.constant 0 : i32
    return %c0_i32, %c0_i32_0 : i32, i32
  }
  func.func @transform_2(%arg0: i32, %arg1: i32) -> (i32, i32, i32) {
    %c0_i32 = arith.constant 0 : i32
    %c0_i32_0 = arith.constant 0 : i32
    return %arg0, %arg1, %c0_i32 : i32, i32, i32
  }
  func.func @transform_3(%arg0: i32, %arg1: i32) -> (i32, i32, i32, i32) {
    %c0_i32 = arith.constant 0 : i32
    %c0_i32_0 = arith.constant 0 : i32
    %c0_i32_1 = arith.constant 0 : i32
    return %arg0, %arg1, %c0_i32, %c0_i32_0 : i32, i32, i32, i32
  }
}

module attributes {stable_mosaic.version = 11 : i64} {
  func.func @_bn_relu_add_kernel(%arg0: i32, %arg1: i32, %arg2: memref<1x512x128xf32, #tpu.memory_space<vmem>>, %arg3: memref<1x128xf32, #tpu.memory_space<vmem>>, %arg4: memref<1x128xf32, #tpu.memory_space<vmem>>, %arg5: memref<1x1x128xf32, #tpu.memory_space<vmem>>, %arg6: memref<1x512x128xf32, #tpu.memory_space<vmem>>) attributes {dimension_semantics = [#tpu.dimension_semantics<parallel>, #tpu.dimension_semantics<parallel>], iteration_bounds = array<i64: 2, 2>, scalar_prefetch = 0 : i64, scratch_operands = 0 : i64, tpu.core_type = #tpu.core_type<tc>, window_params = [{transform_indices = @transform_0, window_bounds = array<i64: 1, 512, 128>}, {pipeline_mode = #tpu.pipeline_mode<synchronous>, transform_indices = @transform_1, window_bounds = array<i64: 1, 128>}, {pipeline_mode = #tpu.pipeline_mode<synchronous>, transform_indices = @transform_2, window_bounds = array<i64: 1, 128>}, {transform_indices = @transform_3, window_bounds = array<i64: 1, 1, 128>}, {transform_indices = @transform_4, window_bounds = array<i64: 1, 512, 128>}]} {
    %c0 = arith.constant 0 : index
    %c0_0 = arith.constant 0 : index
    %c0_1 = arith.constant 0 : index
    %0 = vector.load %arg2[%c0, %c0_0, %c0_1] : memref<1x512x128xf32, #tpu.memory_space<vmem>>, vector<1x512x128xf32>
    %1 = vector.shape_cast %0 : vector<1x512x128xf32> to vector<512x128xf32>
    %c0_2 = arith.constant 0 : index
    %c0_3 = arith.constant 0 : index
    %2 = vector.load %arg3[%c0_2, %c0_3] : memref<1x128xf32, #tpu.memory_space<vmem>>, vector<1x128xf32>
    %3 = vector.broadcast %2 : vector<1x128xf32> to vector<512x128xf32>
    %4 = arith.mulf %1, %3 : vector<512x128xf32>
    %c0_4 = arith.constant 0 : index
    %c0_5 = arith.constant 0 : index
    %5 = vector.load %arg4[%c0_4, %c0_5] : memref<1x128xf32, #tpu.memory_space<vmem>>, vector<1x128xf32>
    %6 = vector.broadcast %5 : vector<1x128xf32> to vector<512x128xf32>
    %7 = arith.addf %4, %6 : vector<512x128xf32>
    %cst = arith.constant 0.000000e+00 : f32
    %8 = vector.broadcast %cst : f32 to vector<512x128xf32>
    %9 = arith.maximumf %7, %8 : vector<512x128xf32>
    %c0_6 = arith.constant 0 : index
    %c0_7 = arith.constant 0 : index
    %c0_8 = arith.constant 0 : index
    %10 = vector.load %arg5[%c0_6, %c0_7, %c0_8] : memref<1x1x128xf32, #tpu.memory_space<vmem>>, vector<1x1x128xf32>
    %11 = vector.shape_cast %10 : vector<1x1x128xf32> to vector<1x128xf32>
    %12 = vector.broadcast %11 : vector<1x128xf32> to vector<512x128xf32>
    %13 = arith.addf %9, %12 : vector<512x128xf32>
    %c0_9 = arith.constant 0 : index
    %c0_10 = arith.constant 0 : index
    %c0_11 = arith.constant 0 : index
    %14 = vector.load %arg6[%c0_9, %c0_10, %c0_11] : memref<1x512x128xf32, #tpu.memory_space<vmem>>, vector<1x512x128xf32>
    %15 = vector.shape_cast %14 : vector<1x512x128xf32> to vector<512x128xf32>
    %16 = vector.shape_cast %13 : vector<512x128xf32> to vector<1x512x128xf32>
    tpu.vector_store %arg6[%c0_9, %c0_10, %c0_11], %16 {strides = array<i32>} : memref<1x512x128xf32, #tpu.memory_space<vmem>>, vector<1x512x128xf32>,
    return
  }
  func.func @transform_0(%arg0: i32, %arg1: i32) -> (i32, i32, i32) {
    %c0_i32 = arith.constant 0 : i32
    %c0_i32_0 = arith.constant 0 : i32
    return %arg0, %arg1, %c0_i32 : i32, i32, i32
  }
  func.func @transform_1(%arg0: i32, %arg1: i32) -> (i32, i32) {
    %c0_i32 = arith.constant 0 : i32
    %c0_i32_0 = arith.constant 0 : i32
    %c0_i32_1 = arith.constant 0 : i32
    return %c0_i32, %c0_i32_0 : i32, i32
  }
  func.func @transform_2(%arg0: i32, %arg1: i32) -> (i32, i32) {
    %c0_i32 = arith.constant 0 : i32
    %c0_i32_0 = arith.constant 0 : i32
    %c0_i32_1 = arith.constant 0 : i32
    return %c0_i32, %c0_i32_0 : i32, i32
  }
  func.func @transform_3(%arg0: i32, %arg1: i32) -> (i32, i32, i32) {
    %c0_i32 = arith.constant 0 : i32
    %c0_i32_0 = arith.constant 0 : i32
    %c0_i32_1 = arith.constant 0 : i32
    return %arg0, %c0_i32, %c0_i32_0 : i32, i32, i32
  }
  func.func @transform_4(%arg0: i32, %arg1: i32) -> (i32, i32, i32) {
    %c0_i32 = arith.constant 0 : i32
    %c0_i32_0 = arith.constant 0 : i32
    return %arg0, %arg1, %c0_i32 : i32, i32, i32
  }
}

</mosaic_0001>

<llo_original>
// kernel: tile.6
$region0: #{tile.6}
  #allocation2 [shape = 's32[1]{0}', space=sflag, size = 0x4, scoped, tag = 'scoped memory for tile.6']
  %s0 = inlined_call_operand.hbm [shape: f32[2], index: 0, kind: input, shape index: {}]
  %s1 = inlined_call_operand.vmem [shape: f32[4,2], index: 1, kind: output, shape index: {}]
  $region1: #{tile.6} parent=0
    #allocation0 [shape = 'u8[512]{0}', space=vmem, size = 0x400, scoped, tag = 'operand span for operand 0']
    #allocation1 [shape = 's32[1]{0}', space=sflag, size = 0x4, scoped, tag = 'scoped memory for tile.6']
    %2 = vsyncpa [#allocation1], 0
    // Predicated region
    $region2: #{tile.6} parent=1 // pred_check
      _
    $region3: #{tile.6} parent=1 // pred_check_branch
      %4 = sbr.rel (0) target = $region5
    $region4: #{tile.6} parent=1 // pred_region
      %s6 = ssub.s32 16, 16
      %7 = vsyncadd [#allocation1], %s6
      %s9 = sshll.u32 [#allocation0], 4
      %s10 = int_to_ptr.vmem [resolvable:$true] %s9
      %12 = dma.hbm_to_vmem [thread:$0]  %s0, 16, %s10, [#allocation1]
    $region5: #{tile.6} parent=1 // pred_fallthru
      _
    // Predicated region
    $region6: #{tile.6} parent=1 // pred_check
      _
    $region7: #{tile.6} parent=1 // pred_check_branch
      %14 = sbr.rel (0) target = $region9
    $region8: #{tile.6} parent=1 // pred_region
      %15 = dma.done [#allocation1], 16
    $region9: #{tile.6} parent=1 // pred_fallthru
      _
    %v16 = vld [vmem:[#allocation0] ss:$0 sm:$0xff]
    %17 = vst [vmem:[%s1] sm:$0xf] %v16
    %18 = vsyncpa [#allocation1], 1

// kernel: tile.7
$region0: #{tile.7}
  %s0 = inlined_call_operand.vmem [shape: f32[4,2], index: 0, kind: input, shape index: {}]
  %s1 = inlined_call_operand.vmem [shape: f32[8], index: 1, kind: output, shape index: {}]
  $region1: #{tile.7} parent=0
    #allocation0 [shape = 'u8[4096]{0}', space=vmem, size = 0x1000, scoped, tag = 'scoped mem for output reshape']
    #allocation1 [shape = 'u8[4096]{0}', space=vmem, size = 0x1000, scoped, tag = 'scoped mem for input reshape']
    %s3 = sshllo.u32 0, 4
    %v4 = vld [vmem:[%s0] sm:%s3]
    %5 = vst [vmem:[#allocation1] sm:%s3] %v4
    %v6 = vld [vmem:[#allocation1] sm:$0x1]
    %vm7 = vcmask 15360
    %8 = vst.msk [vmem:[#allocation0] sm:$0x1] %vm7, %v6
    %s9 = scalar_lea.vmem [#allocation1], 3
    %v10 = vld [vmem:[%s9] sm:$0x1]
    %11 = vrot.lane.b32.xlu0 %v10, 6
    %v12 = vpop.permute.xlu0 %11
    %vm13 = vcmask 64560
    %14 = vst.msk [vmem:[#allocation0] sm:$0x1] %vm13, %v12
    %s15 = scalar_lea.vmem [#allocation1], 2
    %v16 = vld [vmem:[%s15] sm:$0x1]
    %17 = vrot.lane.b32.xlu0 %v16, 4
    %v18 = vpop.permute.xlu0 %17
    %vm19 = vcmask 48160
    %20 = vst.msk [vmem:[#allocation0] sm:$0x1] %vm19, %v18
    %s21 = scalar_lea.vmem [#allocation1], 1
    %v22 = vld [vmem:[%s21] sm:$0x1]
    %23 = vrot.lane.b32.xlu0 %v22, 2
    %v24 = vpop.permute.xlu0 %23
    %vm25 = vcmask 31760
    %26 = vst.msk [vmem:[#allocation0] sm:$0x1] %vm25, %v24
    %s28 = sshllo.u32 0, 1
    %v30 = vld [vmem:[#allocation0] sm:%s28]
    %s31 = sshllo.u32 0, 1
    %32 = vst [vmem:[%s1] sm:%s31] %v30

// kernel: upsampling_block_forward.5
$region0: #{upsampling_block_forward.5}
  #allocation0 [shape = 'u32[]', space=smem, size = 0x4, offset = 0x4, fixed_abs, tag = 'smem constant byte address 0x4 - core index']
  #allocation1 [shape = 'u32[144,128]{1,0:T(1,128)}', space=vmem, size = 0x12000, scoped, tag = 'internal scratch']
  %s0 = inlined_call_operand.vmem [shape: bf16[512,4], index: 0, kind: input, shape index: {}]
  %s1 = inlined_call_operand.hbm [shape: bf16[4,128], index: 1, kind: input, shape index: {}]
  %s2 = inlined_call_operand.vmem [shape: f32[1,128], index: 2, kind: input, shape index: {}]
  %s3 = inlined_call_operand.vmem [shape: f32[512,128], index: 3, kind: output, shape index: {}]
  %s4 = sld [smem:[#allocation0]]
  $region26: #{upsampling_block_forward.5} parent=0
    _
  %s6 = ssub.s32 1, %s4
  %s7 = scalar_select 0, %s6, %s4
  $region1: #{upsampling_block_forward.5} parent=0
    #allocation2 [shape = 'u8[1024]{0}', space=vmem, size = 0x400, scoped, tag = 'input window, operand 1, single buffered']
    #allocation3 [shape = 's32[1]{0}', space=sflag, size = 0x4, scoped, tag = 'scoped memory for upsampling_block_forward.5']
    %8 = vsyncpa [#allocation3], 0
    // Predicated region
    $region2: #{upsampling_block_forward.5} parent=1 // pred_check
      _
    $region3: #{upsampling_block_forward.5} parent=1 // pred_check_branch
      %10 = sbr.rel (0) target = $region5
    $region4: #{upsampling_block_forward.5} parent=1 // pred_region
      _
    $region5: #{upsampling_block_forward.5} parent=1 // pred_fallthru
      _
    // Predicated region
    $region6: #{upsampling_block_forward.5} parent=1 // pred_check
      _
    $region7: #{upsampling_block_forward.5} parent=1 // pred_check_branch
      %12 = sbr.rel (0) target = $region9
    $region8: #{upsampling_block_forward.5} parent=1 // pred_region
      %s14 = ssub.s32 32, 32
      %15 = vsyncadd [#allocation3], %s14
      %s17 = sshll.u32 [#allocation2], 4
      %s18 = int_to_ptr.vmem [resolvable:$true] %s17
      %20 = dma.hbm_to_vmem [thread:$0]  %s1, 32, %s18, [#allocation3]
    $region9: #{upsampling_block_forward.5} parent=1 // pred_fallthru
      _
    // Predicated region
    $region10: #{upsampling_block_forward.5} parent=1 // pred_check
      _
    $region11: #{upsampling_block_forward.5} parent=1 // pred_check_branch
      %22 = sbr.rel (0) target = $region13
    $region12: #{upsampling_block_forward.5} parent=1 // pred_region
      _
    $region13: #{upsampling_block_forward.5} parent=1 // pred_fallthru
      _
    // Predicated region
    $region14: #{upsampling_block_forward.5} parent=1 // pred_check
      _
    $region15: #{upsampling_block_forward.5} parent=1 // pred_check_branch
      %24 = sbr.rel (0) target = $region17
    $region16: #{upsampling_block_forward.5} parent=1 // pred_region
      %25 = dma.done [#allocation3], 32
    $region17: #{upsampling_block_forward.5} parent=1 // pred_fallthru
      _
    %v27 = vld [vmem:[%s0] sm:$0xf]
    %v28 = vld [vmem:[%s0 + $0x4] sm:$0xf]
    %v29 = vld [vmem:[%s0 + $0x8] sm:$0xf]
    %v30 = vld [vmem:[%s0 + $0xc] sm:$0xf]
    %v31 = vld [vmem:[%s0 + $0x10] sm:$0xf]
    %v32 = vld [vmem:[%s0 + $0x14] sm:$0xf]
    %v33 = vld [vmem:[%s0 + $0x18] sm:$0xf]
    %v34 = vld [vmem:[%s0 + $0x1c] sm:$0xf]
    %v35 = vld [vmem:[%s0 + $0x20] sm:$0xf]
    %v36 = vld [vmem:[%s0 + $0x24] sm:$0xf]
    %v37 = vld [vmem:[%s0 + $0x28] sm:$0xf]
    %v38 = vld [vmem:[%s0 + $0x2c] sm:$0xf]
    %v39 = vld [vmem:[%s0 + $0x30] sm:$0xf]
    %v40 = vld [vmem:[%s0 + $0x34] sm:$0xf]
    %v41 = vld [vmem:[%s0 + $0x38] sm:$0xf]
    %v42 = vld [vmem:[%s0 + $0x3c] sm:$0xf]
    %v43 = vld [vmem:[%s0 + $0x40] sm:$0xf]
    %v44 = vld [vmem:[%s0 + $0x44] sm:$0xf]
    %v45 = vld [vmem:[%s0 + $0x48] sm:$0xf]
    %v46 = vld [vmem:[%s0 + $0x4c] sm:$0xf]
    %v47 = vld [vmem:[%s0 + $0x50] sm:$0xf]
    %v48 = vld [vmem:[%s0 + $0x54] sm:$0xf]
    %v49 = vld [vmem:[%s0 + $0x58] sm:$0xf]
    %v50 = vld [vmem:[%s0 + $0x5c] sm:$0xf]
    %v51 = vld [vmem:[%s0 + $0x60] sm:$0xf]
    %v52 = vld [vmem:[%s0 + $0x64] sm:$0xf]
    %v53 = vld [vmem:[%s0 + $0x68] sm:$0xf]
    %v54 = vld [vmem:[%s0 + $0x6c] sm:$0xf]
    %v55 = vld [vmem:[%s0 + $0x70] sm:$0xf]
    %v56 = vld [vmem:[%s0 + $0x74] sm:$0xf]
    %v57 = vld [vmem:[%s0 + $0x78] sm:$0xf]
    %v58 = vld [vmem:[%s0 + $0x7c] sm:$0xf]
    %v59 = vld [vmem:[%s0 + $0x80] sm:$0xf]
    %v60 = vld [vmem:[%s0 + $0x84] sm:$0xf]
    %v61 = vld [vmem:[%s0 + $0x88] sm:$0xf]
    %v62 = vld [vmem:[%s0 + $0x8c] sm:$0xf]
    %v63 = vld [vmem:[%s0 + $0x90] sm:$0xf]
    %v64 = vld [vmem:[%s0 + $0x94] sm:$0xf]
    %v65 = vld [vmem:[%s0 + $0x98] sm:$0xf]
    %v66 = vld [vmem:[%s0 + $0x9c] sm:$0xf]
    %v67 = vld [vmem:[%s0 + $0xa0] sm:$0xf]
    %v68 = vld [vmem:[%s0 + $0xa4] sm:$0xf]
    %v69 = vld [vmem:[%s0 + $0xa8] sm:$0xf]
    %v70 = vld [vmem:[%s0 + $0xac] sm:$0xf]
    %v71 = vld [vmem:[%s0 + $0xb0] sm:$0xf]
    %v72 = vld [vmem:[%s0 + $0xb4] sm:$0xf]
    %v73 = vld [vmem:[%s0 + $0xb8] sm:$0xf]
    %v74 = vld [vmem:[%s0 + $0xbc] sm:$0xf]
    %v75 = vld [vmem:[%s0 + $0xc0] sm:$0xf]
    %v76 = vld [vmem:[%s0 + $0xc4] sm:$0xf]
    %v77 = vld [vmem:[%s0 + $0xc8] sm:$0xf]
    %v78 = vld [vmem:[%s0 + $0xcc] sm:$0xf]
    %v79 = vld [vmem:[%s0 + $0xd0] sm:$0xf]
    %v80 = vld [vmem:[%s0 + $0xd4] sm:$0xf]
    %v81 = vld [vmem:[%s0 + $0xd8] sm:$0xf]
    %v82 = vld [vmem:[%s0 + $0xdc] sm:$0xf]
    %v83 = vld [vmem:[%s0 + $0xe0] sm:$0xf]
    %v84 = vld [vmem:[%s0 + $0xe4] sm:$0xf]
    %v85 = vld [vmem:[%s0 + $0xe8] sm:$0xf]
    %v86 = vld [vmem:[%s0 + $0xec] sm:$0xf]
    %v87 = vld [vmem:[%s0 + $0xf0] sm:$0xf]
    %v88 = vld [vmem:[%s0 + $0xf4] sm:$0xf]
    %v89 = vld [vmem:[%s0 + $0xf8] sm:$0xf]
    %v90 = vld [vmem:[%s0 + $0xfc] sm:$0xf]
    %v91 = vld [vmem:[#allocation2] sm:$0x3]
    %v92 = vld [vmem:[%s2] sm:$0x1]
    %v94 = vlaneseq
    %v95 = vshrl.u32 %v94, 7
    %v96 = vsub.s32 0, %v95
    %v97 = vrot.slane %v92, %v96
    %v163 = vunpack.c.l.b16 %v27
    %v164 = vunpack.c.l.b16 %v28
    %v165 = vunpack.c.l.b16 %v29
    %v166 = vunpack.c.l.b16 %v30
    %v167 = vunpack.c.l.b16 %v31
    %v168 = vunpack.c.l.b16 %v32
    %v169 = vunpack.c.l.b16 %v33
    %v170 = vunpack.c.l.b16 %v34
    %v171 = vunpack.c.l.b16 %v35
    %v172 = vunpack.c.l.b16 %v36
    %v173 = vunpack.c.l.b16 %v37
    %v174 = vunpack.c.l.b16 %v38
    %v175 = vunpack.c.l.b16 %v39
    %v176 = vunpack.c.l.b16 %v40
    %v177 = vunpack.c.l.b16 %v41
    %v178 = vunpack.c.l.b16 %v42
    %v179 = vunpack.c.l.b16 %v43
    %v180 = vunpack.c.l.b16 %v44
    %v181 = vunpack.c.l.b16 %v45
    %v182 = vunpack.c.l.b16 %v46
    %v183 = vunpack.c.l.b16 %v47
    %v184 = vunpack.c.l.b16 %v48
    %v185 = vunpack.c.l.b16 %v49
    %v186 = vunpack.c.l.b16 %v50
    %v187 = vunpack.c.l.b16 %v51
    %v188 = vunpack.c.l.b16 %v52
    %v189 = vunpack.c.l.b16 %v53
    %v190 = vunpack.c.l.b16 %v54
    %v191 = vunpack.c.l.b16 %v55
    %v192 = vunpack.c.l.b16 %v56
    %v193 = vunpack.c.l.b16 %v57
    %v194 = vunpack.c.l.b16 %v58
    %v195 = vunpack.c.l.b16 %v59
    %v196 = vunpack.c.l.b16 %v60
    %v197 = vunpack.c.l.b16 %v61
    %v198 = vunpack.c.l.b16 %v62
    %v199 = vunpack.c.l.b16 %v63
    %v200 = vunpack.c.l.b16 %v64
    %v201 = vunpack.c.l.b16 %v65
    %v202 = vunpack.c.l.b16 %v66
    %v203 = vunpack.c.l.b16 %v67
    %v204 = vunpack.c.l.b16 %v68
    %v205 = vunpack.c.l.b16 %v69
    %v206 = vunpack.c.l.b16 %v70
    %v207 = vunpack.c.l.b16 %v71
    %v208 = vunpack.c.l.b16 %v72
    %v209 = vunpack.c.l.b16 %v73
    %v210 = vunpack.c.l.b16 %v74
    %v211 = vunpack.c.l.b16 %v75
    %v212 = vunpack.c.l.b16 %v76
    %v213 = vunpack.c.l.b16 %v77
    %v214 = vunpack.c.l.b16 %v78
    %v215 = vunpack.c.l.b16 %v79
    %v216 = vunpack.c.l.b16 %v80
    %v217 = vunpack.c.l.b16 %v81
    %v218 = vunpack.c.l.b16 %v82
    %v219 = vunpack.c.l.b16 %v83
    %v220 = vunpack.c.l.b16 %v84
    %v221 = vunpack.c.l.b16 %v85
    %v222 = vunpack.c.l.b16 %v86
    %v223 = vunpack.c.l.b16 %v87
    %v224 = vunpack.c.l.b16 %v88
    %v225 = vunpack.c.l.b16 %v89
    %v226 = vunpack.c.l.b16 %v90
    %v227 = vpack.c.b16 %v164, %v163
    %v228 = vpack.c.b16 %v166, %v165
    %v229 = vpack.c.b16 %v168, %v167
    %v230 = vpack.c.b16 %v170, %v169
    %v231 = vpack.c.b16 %v172, %v171
    %v232 = vpack.c.b16 %v174, %v173
    %v233 = vpack.c.b16 %v176, %v175
    %v234 = vpack.c.b16 %v178, %v177
    %v235 = vpack.c.b16 %v180, %v179
    %v236 = vpack.c.b16 %v182, %v181
    %v237 = vpack.c.b16 %v184, %v183
    %v238 = vpack.c.b16 %v186, %v185
    %v239 = vpack.c.b16 %v188, %v187
    %v240 = vpack.c.b16 %v190, %v189
    %v241 = vpack.c.b16 %v192, %v191
    %v242 = vpack.c.b16 %v194, %v193
    %v243 = vpack.c.b16 %v196, %v195
    %v244 = vpack.c.b16 %v198, %v197
    %v245 = vpack.c.b16 %v200, %v199
    %v246 = vpack.c.b16 %v202, %v201
    %v247 = vpack.c.b16 %v204, %v203
    %v248 = vpack.c.b16 %v206, %v205
    %v249 = vpack.c.b16 %v208, %v207
    %v250 = vpack.c.b16 %v210, %v209
    %v251 = vpack.c.b16 %v212, %v211
    %v252 = vpack.c.b16 %v214, %v213
    %v253 = vpack.c.b16 %v216, %v215
    %v254 = vpack.c.b16 %v218, %v217
    %v255 = vpack.c.b16 %v220, %v219
    %v256 = vpack.c.b16 %v222, %v221
    %v257 = vpack.c.b16 %v224, %v223
    %v258 = vpack.c.b16 %v226, %v225
    %vm259 = vcmask 31744
    %v261 = vsel %vm259, %v227, 0
    %v264 = vsel %vm259, %v228, 0
    %v267 = vsel %vm259, %v229, 0
    %v270 = vsel %vm259, %v230, 0
    %v273 = vsel %vm259, %v231, 0
    %v276 = vsel %vm259, %v232, 0
    %v279 = vsel %vm259, %v233, 0
    %v282 = vsel %vm259, %v234, 0
    %v285 = vsel %vm259, %v235, 0
    %v288 = vsel %vm259, %v236, 0
    %v291 = vsel %vm259, %v237, 0
    %v294 = vsel %vm259, %v238, 0
    %v297 = vsel %vm259, %v239, 0
    %v300 = vsel %vm259, %v240, 0
    %v303 = vsel %vm259, %v241, 0
    %v306 = vsel %vm259, %v242, 0
    %v309 = vsel %vm259, %v243, 0
    %v312 = vsel %vm259, %v244, 0
    %v315 = vsel %vm259, %v245, 0
    %v318 = vsel %vm259, %v246, 0
    %v321 = vsel %vm259, %v247, 0
    %v324 = vsel %vm259, %v248, 0
    %v327 = vsel %vm259, %v249, 0
    %v330 = vsel %vm259, %v250, 0
    %v333 = vsel %vm259, %v251, 0
    %v336 = vsel %vm259, %v252, 0
    %v339 = vsel %vm259, %v253, 0
    %v342 = vsel %vm259, %v254, 0
    %v345 = vsel %vm259, %v255, 0
    %v348 = vsel %vm259, %v256, 0
    %v351 = vsel %vm259, %v257, 0
    %v354 = vsel %vm259, %v258, 0
    %vm356 = vcmask 1041408
    %v358 = vsel %vm356, %v91, 0
    %360 = vmatprep.subr.bf16.mxu0 0
    %361 = vmatpush1.bf16.msra.mxu0 %v358
    %362 = vmatprep.subr.bf16.mxu0 0
    %363 = vmatpush1.bf16.msra.mxu0 0
    %364 = vmatprep.subr.bf16.mxu0 0
    %365 = vmatpush1.bf16.msra.mxu0 0
    %366 = vmatprep.subr.bf16.mxu0 0
    %367 = vmatpush1.bf16.msra.mxu0 0
    %368 = vmatprep.subr.bf16.mxu0 0
    %369 = vmatpush1.bf16.msra.mxu0 0
    %370 = vmatprep.subr.bf16.mxu0 0
    %371 = vmatpush1.bf16.msra.mxu0 0
    %372 = vmatprep.subr.bf16.mxu0 0
    %373 = vmatpush1.bf16.msra.mxu0 0
    %374 = vmatprep.subr.bf16.mxu0 0
    %375 = vmatpush1.bf16.msra.mxu0 0
    %376 = vmatprep.subr.bf16.mxu0 0
    %377 = vmatpush1.bf16.msra.mxu0 0
    %378 = vmatprep.subr.bf16.mxu0 0
    %379 = vmatpush1.bf16.msra.mxu0 0
    %380 = vmatprep.subr.bf16.mxu0 0
    %381 = vmatpush1.bf16.msra.mxu0 0
    %382 = vmatprep.subr.bf16.mxu0 0
    %383 = vmatpush1.bf16.msra.mxu0 0
    %384 = vmatprep.subr.bf16.mxu0 0
    %385 = vmatpush1.bf16.msra.mxu0 0
    %386 = vmatprep.subr.bf16.mxu0 0
    %387 = vmatpush1.bf16.msra.mxu0 0
    %388 = vmatprep.subr.bf16.mxu0 0
    %389 = vmatpush1.bf16.msra.mxu0 0
    %390 = vmatprep.subr.bf16.mxu0 0
    %391 = vmatpush1.bf16.msra.mxu0 0
    %392 = vmatprep.mubr.bf16.mxu0 0
    %393 = vmatmul.mubr.bf16.gmra.mrb[0].mxu0 %v261
    %v394 = vpop.f32.mrb[0].mxu0
    %v395 = vadd.f32 %v97, %v394
    %v396 = vpop.f32.mrb[0].mxu0
    %v397 = vpop.f32.mrb[0].mxu0
    %v398 = vadd.f32 %v97, %v397
    %v399 = vpop.f32.mrb[0].mxu0
    %400 = vmatprep.mubr.bf16.mxu0 0
    %401 = vmatmul.mubr.bf16.gmra.mrb[0].mxu0 %v264
    %v402 = vpop.f32.mrb[0].mxu0
    %v403 = vadd.f32 %v97, %v402
    %v404 = vpop.f32.mrb[0].mxu0
    %v405 = vpop.f32.mrb[0].mxu0
    %v406 = vadd.f32 %v97, %v405
    %v407 = vpop.f32.mrb[0].mxu0
    %408 = vmatprep.mubr.bf16.mxu0 0
    %409 = vmatmul.mubr.bf16.gmra.mrb[0].mxu0 %v267
    %v410 = vpop.f32.mrb[0].mxu0
    %v411 = vadd.f32 %v97, %v410
    %v412 = vpop.f32.mrb[0].mxu0
    %v413 = vpop.f32.mrb[0].mxu0
    %v414 = vadd.f32 %v97, %v413
    %v415 = vpop.f32.mrb[0].mxu0
    %416 = vmatprep.mubr.bf16.mxu0 0
    %417 = vmatmul.mubr.bf16.gmra.mrb[0].mxu0 %v270
    %v418 = vpop.f32.mrb[0].mxu0
    %v419 = vadd.f32 %v97, %v418
    %v420 = vpop.f32.mrb[0].mxu0
    %v421 = vpop.f32.mrb[0].mxu0
    %v422 = vadd.f32 %v97, %v421
    %v423 = vpop.f32.mrb[0].mxu0
    %424 = vmatprep.mubr.bf16.mxu0 0
    %425 = vmatmul.mubr.bf16.gmra.mrb[0].mxu0 %v273
    %v426 = vpop.f32.mrb[0].mxu0
    %v427 = vadd.f32 %v97, %v426
    %v428 = vpop.f32.mrb[0].mxu0
    %v429 = vpop.f32.mrb[0].mxu0
    %v430 = vadd.f32 %v97, %v429
    %v431 = vpop.f32.mrb[0].mxu0
    %432 = vmatprep.mubr.bf16.mxu0 0
    %433 = vmatmul.mubr.bf16.gmra.mrb[0].mxu0 %v276
    %v434 = vpop.f32.mrb[0].mxu0
    %v435 = vadd.f32 %v97, %v434
    %v436 = vpop.f32.mrb[0].mxu0
    %v437 = vpop.f32.mrb[0].mxu0
    %v438 = vadd.f32 %v97, %v437
    %v439 = vpop.f32.mrb[0].mxu0
    %440 = vmatprep.mubr.bf16.mxu0 0
    %441 = vmatmul.mubr.bf16.gmra.mrb[0].mxu0 %v279
    %v442 = vpop.f32.mrb[0].mxu0
    %v443 = vadd.f32 %v97, %v442
    %v444 = vpop.f32.mrb[0].mxu0
    %v445 = vpop.f32.mrb[0].mxu0
    %v446 = vadd.f32 %v97, %v445
    %v447 = vpop.f32.mrb[0].mxu0
    %448 = vmatprep.mubr.bf16.mxu0 0
    %449 = vmatmul.mubr.bf16.gmra.mrb[0].mxu0 %v282
    %v450 = vpop.f32.mrb[0].mxu0
    %v451 = vadd.f32 %v97, %v450
    %v452 = vpop.f32.mrb[0].mxu0
    %v453 = vpop.f32.mrb[0].mxu0
    %v454 = vadd.f32 %v97, %v453
    %v455 = vpop.f32.mrb[0].mxu0
    %456 = vmatprep.mubr.bf16.mxu0 0
    %457 = vmatmul.mubr.bf16.gmra.mrb[0].mxu0 %v285
    %v458 = vpop.f32.mrb[0].mxu0
    %v459 = vadd.f32 %v97, %v458
    %v460 = vpop.f32.mrb[0].mxu0
    %v461 = vpop.f32.mrb[0].mxu0
    %v462 = vadd.f32 %v97, %v461
    %v463 = vpop.f32.mrb[0].mxu0
    %464 = vmatprep.mubr.bf16.mxu0 0
    %465 = vmatmul.mubr.bf16.gmra.mrb[0].mxu0 %v288
    %v466 = vpop.f32.mrb[0].mxu0
    %v467 = vadd.f32 %v97, %v466
    %v468 = vpop.f32.mrb[0].mxu0
    %v469 = vpop.f32.mrb[0].mxu0
    %v470 = vadd.f32 %v97, %v469
    %v471 = vpop.f32.mrb[0].mxu0
    %472 = vmatprep.mubr.bf16.mxu0 0
    %473 = vmatmul.mubr.bf16.gmra.mrb[0].mxu0 %v291
    %v474 = vpop.f32.mrb[0].mxu0
    %v475 = vadd.f32 %v97, %v474
    %v476 = vpop.f32.mrb[0].mxu0
    %v477 = vpop.f32.mrb[0].mxu0
    %v478 = vadd.f32 %v97, %v477
    %v479 = vpop.f32.mrb[0].mxu0
    %480 = vmatprep.mubr.bf16.mxu0 0
    %481 = vmatmul.mubr.bf16.gmra.mrb[0].mxu0 %v294
    %v482 = vpop.f32.mrb[0].mxu0
    %v483 = vadd.f32 %v97, %v482
    %v484 = vpop.f32.mrb[0].mxu0
    %v485 = vpop.f32.mrb[0].mxu0
    %v486 = vadd.f32 %v97, %v485
    %v487 = vpop.f32.mrb[0].mxu0
    %488 = vmatprep.mubr.bf16.mxu0 0
    %489 = vmatmul.mubr.bf16.gmra.mrb[0].mxu0 %v297
    %v490 = vpop.f32.mrb[0].mxu0
    %v491 = vadd.f32 %v97, %v490
    %v492 = vpop.f32.mrb[0].mxu0
    %v493 = vpop.f32.mrb[0].mxu0
    %v494 = vadd.f32 %v97, %v493
    %v495 = vpop.f32.mrb[0].mxu0
    %496 = vmatprep.mubr.bf16.mxu0 0
    %497 = vmatmul.mubr.bf16.gmra.mrb[0].mxu0 %v300
    %v498 = vpop.f32.mrb[0].mxu0
    %v499 = vadd.f32 %v97, %v498
    %v500 = vpop.f32.mrb[0].mxu0
    %v501 = vpop.f32.mrb[0].mxu0
    %v502 = vadd.f32 %v97, %v501
    %v503 = vpop.f32.mrb[0].mxu0
    %504 = vmatprep.mubr.bf16.mxu0 0
    %505 = vmatmul.mubr.bf16.gmra.mrb[0].mxu0 %v303
    %v506 = vpop.f32.mrb[0].mxu0
    %v507 = vadd.f32 %v97, %v506
    %v508 = vpop.f32.mrb[0].mxu0
    %v509 = vpop.f32.mrb[0].mxu0
    %v510 = vadd.f32 %v97, %v509
    %v511 = vpop.f32.mrb[0].mxu0
    %512 = vmatprep.mubr.bf16.mxu0 0
    %513 = vmatmul.mubr.bf16.gmra.mrb[0].mxu0 %v306
    %v514 = vpop.f32.mrb[0].mxu0
    %v515 = vadd.f32 %v97, %v514
    %v516 = vpop.f32.mrb[0].mxu0
    %v517 = vpop.f32.mrb[0].mxu0
    %v518 = vadd.f32 %v97, %v517
    %v519 = vpop.f32.mrb[0].mxu0
    %520 = vmatprep.mubr.bf16.mxu0 0
    %521 = vmatmul.mubr.bf16.gmra.mrb[0].mxu0 %v309
    %v522 = vpop.f32.mrb[0].mxu0
    %v523 = vadd.f32 %v97, %v522
    %v524 = vpop.f32.mrb[0].mxu0
    %v525 = vpop.f32.mrb[0].mxu0
    %v526 = vadd.f32 %v97, %v525
    %v527 = vpop.f32.mrb[0].mxu0
    %528 = vmatprep.mubr.bf16.mxu0 0
    %529 = vmatmul.mubr.bf16.gmra.mrb[0].mxu0 %v312
    %v530 = vpop.f32.mrb[0].mxu0
    %v531 = vadd.f32 %v97, %v530
    %v532 = vpop.f32.mrb[0].mxu0
    %v533 = vpop.f32.mrb[0].mxu0
    %v534 = vadd.f32 %v97, %v533
    %v535 = vpop.f32.mrb[0].mxu0
    %536 = vmatprep.mubr.bf16.mxu0 0
    %537 = vmatmul.mubr.bf16.gmra.mrb[0].mxu0 %v315
    %v538 = vpop.f32.mrb[0].mxu0
    %v539 = vadd.f32 %v97, %v538
    %v540 = vpop.f32.mrb[0].mxu0
    %v541 = vpop.f32.mrb[0].mxu0
    %v542 = vadd.f32 %v97, %v541
    %v543 = vpop.f32.mrb[0].mxu0
    %544 = vmatprep.mubr.bf16.mxu0 0
    %545 = vmatmul.mubr.bf16.gmra.mrb[0].mxu0 %v318
    %v546 = vpop.f32.mrb[0].mxu0
    %v547 = vadd.f32 %v97, %v546
    %v548 = vpop.f32.mrb[0].mxu0
    %v549 = vpop.f32.mrb[0].mxu0
    %v550 = vadd.f32 %v97, %v549
    %v551 = vpop.f32.mrb[0].mxu0
    %552 = vmatprep.mubr.bf16.mxu0 0
    %553 = vmatmul.mubr.bf16.gmra.mrb[0].mxu0 %v321
    %v554 = vpop.f32.mrb[0].mxu0
    %v555 = vadd.f32 %v97, %v554
    %v556 = vpop.f32.mrb[0].mxu0
    %v557 = vpop.f32.mrb[0].mxu0
    %v558 = vadd.f32 %v97, %v557
    %v559 = vpop.f32.mrb[0].mxu0
    %560 = vmatprep.mubr.bf16.mxu0 0
    %561 = vmatmul.mubr.bf16.gmra.mrb[0].mxu0 %v324
    %v562 = vpop.f32.mrb[0].mxu0
    %v563 = vadd.f32 %v97, %v562
    %v564 = vpop.f32.mrb[0].mxu0
    %v565 = vpop.f32.mrb[0].mxu0
    %v566 = vadd.f32 %v97, %v565
    %v567 = vpop.f32.mrb[0].mxu0
    %568 = vmatprep.mubr.bf16.mxu0 0
    %569 = vmatmul.mubr.bf16.gmra.mrb[0].mxu0 %v327
    %v570 = vpop.f32.mrb[0].mxu0
    %v571 = vadd.f32 %v97, %v570
    %v572 = vpop.f32.mrb[0].mxu0
    %v573 = vpop.f32.mrb[0].mxu0
    %v574 = vadd.f32 %v97, %v573
    %v575 = vpop.f32.mrb[0].mxu0
    %576 = vmatprep.mubr.bf16.mxu0 0
    %577 = vmatmul.mubr.bf16.gmra.mrb[0].mxu0 %v330
    %v578 = vpop.f32.mrb[0].mxu0
    %v579 = vadd.f32 %v97, %v578
    %v580 = vpop.f32.mrb[0].mxu0
    %v581 = vpop.f32.mrb[0].mxu0
    %v582 = vadd.f32 %v97, %v581
    %v583 = vpop.f32.mrb[0].mxu0
    %584 = vmatprep.mubr.bf16.mxu0 0
    %585 = vmatmul.mubr.bf16.gmra.mrb[0].mxu0 %v333
    %v586 = vpop.f32.mrb[0].mxu0
    %v587 = vadd.f32 %v97, %v586
    %v588 = vpop.f32.mrb[0].mxu0
    %v589 = vpop.f32.mrb[0].mxu0
    %v590 = vadd.f32 %v97, %v589
    %v591 = vpop.f32.mrb[0].mxu0
    %592 = vmatprep.mubr.bf16.mxu0 0
    %593 = vmatmul.mubr.bf16.gmra.mrb[0].mxu0 %v336
    %v594 = vpop.f32.mrb[0].mxu0
    %v595 = vadd.f32 %v97, %v594
    %v596 = vpop.f32.mrb[0].mxu0
    %v597 = vpop.f32.mrb[0].mxu0
    %v598 = vadd.f32 %v97, %v597
    %v599 = vpop.f32.mrb[0].mxu0
    %600 = vmatprep.mubr.bf16.mxu0 0
    %601 = vmatmul.mubr.bf16.gmra.mrb[0].mxu0 %v339
    %v602 = vpop.f32.mrb[0].mxu0
    %v603 = vadd.f32 %v97, %v602
    %v604 = vpop.f32.mrb[0].mxu0
    %v605 = vpop.f32.mrb[0].mxu0
    %v606 = vadd.f32 %v97, %v605
    %v607 = vpop.f32.mrb[0].mxu0
    %608 = vmatprep.mubr.bf16.mxu0 0
    %609 = vmatmul.mubr.bf16.gmra.mrb[0].mxu0 %v342
    %v610 = vpop.f32.mrb[0].mxu0
    %v611 = vadd.f32 %v97, %v610
    %v612 = vpop.f32.mrb[0].mxu0
    %v613 = vpop.f32.mrb[0].mxu0
    %v614 = vadd.f32 %v97, %v613
    %v615 = vpop.f32.mrb[0].mxu0
    %616 = vmatprep.mubr.bf16.mxu0 0
    %617 = vmatmul.mubr.bf16.gmra.mrb[0].mxu0 %v345
    %v618 = vpop.f32.mrb[0].mxu0
    %v619 = vadd.f32 %v97, %v618
    %v620 = vpop.f32.mrb[0].mxu0
    %v621 = vpop.f32.mrb[0].mxu0
    %v622 = vadd.f32 %v97, %v621
    %v623 = vpop.f32.mrb[0].mxu0
    %624 = vmatprep.mubr.bf16.mxu0 0
    %625 = vmatmul.mubr.bf16.gmra.mrb[0].mxu0 %v348
    %v626 = vpop.f32.mrb[0].mxu0
    %v627 = vadd.f32 %v97, %v626
    %v628 = vpop.f32.mrb[0].mxu0
    %v629 = vpop.f32.mrb[0].mxu0
    %v630 = vadd.f32 %v97, %v629
    %v631 = vpop.f32.mrb[0].mxu0
    %632 = vmatprep.mubr.bf16.mxu0 0
    %633 = vmatmul.mubr.bf16.gmra.mrb[0].mxu0 %v351
    %v634 = vpop.f32.mrb[0].mxu0
    %v635 = vadd.f32 %v97, %v634
    %v636 = vpop.f32.mrb[0].mxu0
    %v637 = vpop.f32.mrb[0].mxu0
    %v638 = vadd.f32 %v97, %v637
    %v639 = vpop.f32.mrb[0].mxu0
    %640 = vmatprep.mubr.bf16.mxu0 0
    %641 = vmatmul.mubr.bf16.gmra.mrb[0].mxu0 %v354
    %v642 = vpop.f32.mrb[0].mxu0
    %v643 = vadd.f32 %v97, %v642
    %v644 = vpop.f32.mrb[0].mxu0
    %v645 = vpop.f32.mrb[0].mxu0
    %v646 = vadd.f32 %v97, %v645
    %v647 = vpop.f32.mrb[0].mxu0
    %648 = vdwg.mxu0
    %649 = vst [vmem:[%s3] sm:$0xff] %v395
    %650 = vst [vmem:[%s3 + $0x8] sm:$0xff] %v398
    %651 = vst [vmem:[%s3 + $0x10] sm:$0xff] %v403
    %652 = vst [vmem:[%s3 + $0x18] sm:$0xff] %v406
    %653 = vst [vmem:[%s3 + $0x20] sm:$0xff] %v411
    %654 = vst [vmem:[%s3 + $0x28] sm:$0xff] %v414
    %655 = vst [vmem:[%s3 + $0x30] sm:$0xff] %v419
    %656 = vst [vmem:[%s3 + $0x38] sm:$0xff] %v422
    %657 = vst [vmem:[%s3 + $0x40] sm:$0xff] %v427
    %658 = vst [vmem:[%s3 + $0x48] sm:$0xff] %v430
    %659 = vst [vmem:[%s3 + $0x50] sm:$0xff] %v435
    %660 = vst [vmem:[%s3 + $0x58] sm:$0xff] %v438
    %661 = vst [vmem:[%s3 + $0x60] sm:$0xff] %v443
    %662 = vst [vmem:[%s3 + $0x68] sm:$0xff] %v446
    %663 = vst [vmem:[%s3 + $0x70] sm:$0xff] %v451
    %664 = vst [vmem:[%s3 + $0x78] sm:$0xff] %v454
    %665 = vst [vmem:[%s3 + $0x80] sm:$0xff] %v459
    %666 = vst [vmem:[%s3 + $0x88] sm:$0xff] %v462
    %667 = vst [vmem:[%s3 + $0x90] sm:$0xff] %v467
    %668 = vst [vmem:[%s3 + $0x98] sm:$0xff] %v470
    %669 = vst [vmem:[%s3 + $0xa0] sm:$0xff] %v475
    %670 = vst [vmem:[%s3 + $0xa8] sm:$0xff] %v478
    %671 = vst [vmem:[%s3 + $0xb0] sm:$0xff] %v483
    %672 = vst [vmem:[%s3 + $0xb8] sm:$0xff] %v486
    %673 = vst [vmem:[%s3 + $0xc0] sm:$0xff] %v491
    %674 = vst [vmem:[%s3 + $0xc8] sm:$0xff] %v494
    %675 = vst [vmem:[%s3 + $0xd0] sm:$0xff] %v499
    %676 = vst [vmem:[%s3 + $0xd8] sm:$0xff] %v502
    %677 = vst [vmem:[%s3 + $0xe0] sm:$0xff] %v507
    %678 = vst [vmem:[%s3 + $0xe8] sm:$0xff] %v510
    %679 = vst [vmem:[%s3 + $0xf0] sm:$0xff] %v515
    %680 = vst [vmem:[%s3 + $0xf8] sm:$0xff] %v518
    %681 = vst [vmem:[%s3 + $0x100] sm:$0xff] %v523
    %682 = vst [vmem:[%s3 + $0x108] sm:$0xff] %v526
    %683 = vst [vmem:[%s3 + $0x110] sm:$0xff] %v531
    %684 = vst [vmem:[%s3 + $0x118] sm:$0xff] %v534
    %685 = vst [vmem:[%s3 + $0x120] sm:$0xff] %v539
    %686 = vst [vmem:[%s3 + $0x128] sm:$0xff] %v542
    %687 = vst [vmem:[%s3 + $0x130] sm:$0xff] %v547
    %688 = vst [vmem:[%s3 + $0x138] sm:$0xff] %v550
    %689 = vst [vmem:[%s3 + $0x140] sm:$0xff] %v555
    %690 = vst [vmem:[%s3 + $0x148] sm:$0xff] %v558
    %691 = vst [vmem:[%s3 + $0x150] sm:$0xff] %v563
    %692 = vst [vmem:[%s3 + $0x158] sm:$0xff] %v566
    %693 = vst [vmem:[%s3 + $0x160] sm:$0xff] %v571
    %694 = vst [vmem:[%s3 + $0x168] sm:$0xff] %v574
    %695 = vst [vmem:[%s3 + $0x170] sm:$0xff] %v579
    %696 = vst [vmem:[%s3 + $0x178] sm:$0xff] %v582
    %697 = vst [vmem:[%s3 + $0x180] sm:$0xff] %v587
    %698 = vst [vmem:[%s3 + $0x188] sm:$0xff] %v590
    %699 = vst [vmem:[%s3 + $0x190] sm:$0xff] %v595
    %700 = vst [vmem:[%s3 + $0x198] sm:$0xff] %v598
    %701 = vst [vmem:[%s3 + $0x1a0] sm:$0xff] %v603
    %702 = vst [vmem:[%s3 + $0x1a8] sm:$0xff] %v606
    %703 = vst [vmem:[%s3 + $0x1b0] sm:$0xff] %v611
    %704 = vst [vmem:[%s3 + $0x1b8] sm:$0xff] %v614
    %705 = vst [vmem:[%s3 + $0x1c0] sm:$0xff] %v619
    %706 = vst [vmem:[%s3 + $0x1c8] sm:$0xff] %v622
    %707 = vst [vmem:[%s3 + $0x1d0] sm:$0xff] %v627
    %708 = vst [vmem:[%s3 + $0x1d8] sm:$0xff] %v630
    %709 = vst [vmem:[%s3 + $0x1e0] sm:$0xff] %v635
    %710 = vst [vmem:[%s3 + $0x1e8] sm:$0xff] %v638
    %711 = vst [vmem:[%s3 + $0x1f0] sm:$0xff] %v643
    %712 = vst [vmem:[%s3 + $0x1f8] sm:$0xff] %v646
    // Predicated region
    $region18: #{upsampling_block_forward.5} parent=1 // pred_check
      _
    $region19: #{upsampling_block_forward.5} parent=1 // pred_check_branch
      %714 = sbr.rel (0) target = $region21
    $region20: #{upsampling_block_forward.5} parent=1 // pred_region
      _
    $region21: #{upsampling_block_forward.5} parent=1 // pred_fallthru
      _
    // Predicated region
    $region22: #{upsampling_block_forward.5} parent=1 // pred_check
      _
    $region23: #{upsampling_block_forward.5} parent=1 // pred_check_branch
      %716 = sbr.rel (0) target = $region25
    $region24: #{upsampling_block_forward.5} parent=1 // pred_region
      _
    $region25: #{upsampling_block_forward.5} parent=1 // pred_fallthru
      _
    %717 = vsyncpa [#allocation3], 1

// kernel: upsampling_block_forward.6
$region0: #{upsampling_block_forward.6}
  #allocation0 [shape = 'u32[]', space=smem, size = 0x4, offset = 0x4, fixed_abs, tag = 'smem constant byte address 0x4 - core index']
  #allocation1 [shape = 'u32[144,128]{1,0:T(1,128)}', space=vmem, size = 0x12000, scoped, tag = 'internal scratch']
  %s0 = inlined_call_operand.vmem [shape: bf16[2,1024,36], index: 0, kind: input, shape index: {}]
  %s1 = inlined_call_operand.vmem [shape: bf16[36,128], index: 1, kind: input, shape index: {}]
  %s2 = inlined_call_operand.vmem [shape: f32[2,1024,128], index: 2, kind: output, shape index: {0}]
  %s3 = inlined_call_operand.vmem [shape: f32[2,2,2,128], index: 3, kind: output, shape index: {1}]
  %4 = xla_tuple %s2, %s3
  %s5 = sld [smem:[#allocation0]]
  $region49: #{upsampling_block_forward.6} parent=0
    _
  %s7 = ssub.s32 1, %s5
  %s8 = scalar_select 0, %s7, %s5
  loop: start=0, step=1, limit=6
  $region2: #{upsampling_block_forward.6} parent=0 // loop_pre_header
    _
  $region3: #{upsampling_block_forward.6} parent=0 // loop_header
    %s10 = sphi 0, %s14
    %p11 = scmp.ge.s32.totalorder %s10, 6
    %s17 = sphi 0, %s29
    %s18 = sphi 0, %s25
    %s19 = sphi 0, %s17
    %s20 = sphi 0, %s18
    %s21 = sphi 0, %s19
    %s22 = sphi 0, %s20
    %s34 = sphi 0, %s36
    %s37 = sphi 0, %s34
    %s38 = sphi 0, %s37
    %s54 = sphi 0, %s38
    %s58 = sphi 0, %s58
    %s60 = sphi 0, %s58
    %s61 = sphi 0, %s60
    %s75 = sphi 0, %s61
    %s83 = sphi 0, %s85
    %s86 = sphi 0, %s83
    %s87 = sphi 0, %s86
    %s103 = sphi 0, %s87
    %s111 = sphi 0, %s113
    %s114 = sphi 0, %s111
    %s115 = sphi 0, %s114
    %s131 = sphi 0, %s115
  $region4: #{upsampling_block_forward.6} parent=0 // loop_header_branch
    %13 = sbr.rel (%p11) target = $region8
  $region5: #{upsampling_block_forward.6} parent=0 // loop_body
    %s15 = ssub.s32 %s10, 1
    %s16 = ssub.s32 %s10, 2
    %s23 = sadd.s32 1, %s18
    %p24 = scmp.ge.s32.totalorder %s23, 2
    %s25 = scalar_select %p24, 0, %s23
    %s26 = sadd.s32 1, %s17
    %s27 = scalar_select %p24, %s26, %s17
    %p28 = scmp.ge.s32.totalorder %s27, 2
    %s29 = scalar_select %p28, 0, %s27
    %s30 = ssub.s32 %s17, %s29
    %s31 = ssub.s32 %s18, %s25
    %s32 = sor.u32 %s30, %s31
    %p33 = scmp.eq.s32.totalorder %s32, 0
    %s35 = sadd.s32 %s34, 1
    %s36 = scalar_select %p33, %s34, %s35
    %p39 = pneg %p33
    %p40 = scmp.eq.s32.totalorder %s10, 3
    %p41 = por %p39, %p40
    %p42 = scmp.ne.s32.totalorder %s34, %s37
    %p43 = scmp.eq.s32.totalorder %s10, 0
    %p44 = por %p42, %p43
    %p45 = scmp.ne.s32.totalorder %s34, %s37
    %p46 = scmp.eq.s32.totalorder %s15, 3
    %p47 = por %p45, %p46
    %p48 = scmp.ne.s32.totalorder %s37, %s38
    %p49 = scmp.eq.s32.totalorder %s15, 0
    %p50 = por %p48, %p49
    %p51 = scmp.ne.s32.totalorder %s37, %s38
    %p52 = scmp.eq.s32.totalorder %s16, 3
    %p53 = por %p51, %p52
    %p55 = scmp.ne.s32.totalorder %s38, %s54
    %p56 = scmp.eq.s32.totalorder %s16, 0
    %p57 = por %p55, %p56
    %s59 = sadd.s32 %s58, 1
    %p62 = scmp.eq.s32.totalorder %s10, 3
    %p63 = scmp.ne.s32.totalorder %s58, %s60
    %p64 = scmp.eq.s32.totalorder %s10, 0
    %p65 = por %p63, %p64
    %p66 = scmp.ne.s32.totalorder %s58, %s60
    %p67 = scmp.eq.s32.totalorder %s15, 3
    %p68 = por %p66, %p67
    %p69 = scmp.ne.s32.totalorder %s60, %s61
    %p70 = scmp.eq.s32.totalorder %s15, 0
    %p71 = por %p69, %p70
    %p72 = scmp.ne.s32.totalorder %s60, %s61
    %p73 = scmp.eq.s32.totalorder %s16, 3
    %p74 = por %p72, %p73
    %p76 = scmp.ne.s32.totalorder %s61, %s75
    %p77 = scmp.eq.s32.totalorder %s16, 0
    %p78 = por %p76, %p77
    %s79 = ssub.s32 %s17, %s29
    %s80 = ssub.s32 %s18, %s25
    %s81 = sor.u32 %s79, %s80
    %p82 = scmp.eq.s32.totalorder %s81, 0
    %s84 = sadd.s32 %s83, 1
    %s85 = scalar_select %p82, %s83, %s84
    %p88 = pneg %p82
    %p89 = scmp.eq.s32.totalorder %s10, 3
    %p90 = por %p88, %p89
    %p91 = scmp.ne.s32.totalorder %s83, %s86
    %p92 = scmp.eq.s32.totalorder %s10, 0
    %p93 = por %p91, %p92
    %p94 = scmp.ne.s32.totalorder %s83, %s86
    %p95 = scmp.eq.s32.totalorder %s15, 3
    %p96 = por %p94, %p95
    %p97 = scmp.ne.s32.totalorder %s86, %s87
    %p98 = scmp.eq.s32.totalorder %s15, 0
    %p99 = por %p97, %p98
    %p100 = scmp.ne.s32.totalorder %s86, %s87
    %p101 = scmp.eq.s32.totalorder %s16, 3
    %p102 = por %p100, %p101
    %p104 = scmp.ne.s32.totalorder %s87, %s103
    %p105 = scmp.eq.s32.totalorder %s16, 0
    %p106 = por %p104, %p105
    %s107 = ssub.s32 %s17, %s29
    %s108 = ssub.s32 %s18, %s25
    %s109 = sor.u32 %s107, %s108
    %p110 = scmp.eq.s32.totalorder %s109, 0
    %s112 = sadd.s32 %s111, 1
    %s113 = scalar_select %p110, %s111, %s112
    %p116 = pneg %p110
    %p117 = scmp.eq.s32.totalorder %s10, 3
    %p118 = por %p116, %p117
    %p119 = scmp.ne.s32.totalorder %s111, %s114
    %p120 = scmp.eq.s32.totalorder %s10, 0
    %p121 = por %p119, %p120
    %p122 = scmp.ne.s32.totalorder %s111, %s114
    %p123 = scmp.eq.s32.totalorder %s15, 3
    %p124 = por %p122, %p123
    %p125 = scmp.ne.s32.totalorder %s114, %s115
    %p126 = scmp.eq.s32.totalorder %s15, 0
    %p127 = por %p125, %p126
    %p128 = scmp.ne.s32.totalorder %s114, %s115
    %p129 = scmp.eq.s32.totalorder %s16, 3
    %p130 = por %p128, %p129
    %p132 = scmp.ne.s32.totalorder %s115, %s131
    %p133 = scmp.eq.s32.totalorder %s16, 0
    %p134 = por %p132, %p133
    %p135 = scmp.le.s32.totalorder 1, %s10
    %p136 = scmp.lt.s32.totalorder %s10, 5
    %p137 = pnand %p135, %p136
    %p138 = pneg %p137
    // Predicated region
    $region9: #{upsampling_block_forward.6} parent=5 // pred_check
      _
    $region10: #{upsampling_block_forward.6} parent=5 // pred_check_branch
      %140 = sbr.rel (%p137) target = $region12
    $region11: #{upsampling_block_forward.6} parent=5 // pred_region
      %s141 = ssub.s32 %s10, 1
      // Predicated region
      $region13: #{upsampling_block_forward.6} parent=11 // pred_check
        %p142 = pneg %p71
      $region14: #{upsampling_block_forward.6} parent=11 // pred_check_branch
        %144 = sbr.rel (%p142) target = $region16
      $region15: #{upsampling_block_forward.6} parent=11 // pred_region
        _
      $region16: #{upsampling_block_forward.6} parent=11 // pred_fallthru
        _
    $region12: #{upsampling_block_forward.6} parent=5 // pred_fallthru
      _
    %p145 = scmp.lt.s32.totalorder %s10, 4
    // Predicated region
    $region17: #{upsampling_block_forward.6} parent=5 // pred_check
      %p146 = pneg %p145
    $region18: #{upsampling_block_forward.6} parent=5 // pred_check_branch
      %148 = sbr.rel (%p146) target = $region20
    $region19: #{upsampling_block_forward.6} parent=5 // pred_region
      // Predicated region
      $region21: #{upsampling_block_forward.6} parent=19 // pred_check
        %p149 = pneg %p44
      $region22: #{upsampling_block_forward.6} parent=19 // pred_check_branch
        %151 = sbr.rel (%p149) target = $region24
      $region23: #{upsampling_block_forward.6} parent=19 // pred_region
        %s152 = smul.u32 64, %s18
        %p153 = scmp.lt.s32.totalorder %s17, 1
        %s154 = scalar_select %p153, %s17, 1
        %p155 = scmp.lt.s32.totalorder %s152, 127
        %s156 = scalar_select %p155, %s152, 127
        %s157 = smul.addr %s154, 128
        %s158 = sadd.s32 %s156, %s157
        %s159 = smul.addr %s158, 4
        %s160 = scalar_lea.vmem %s0, %s159
        %s161 = smul.u32 64, %s18
      $region24: #{upsampling_block_forward.6} parent=19 // pred_fallthru
        _
    $region20: #{upsampling_block_forward.6} parent=5 // pred_fallthru
      _
    %p162 = scmp.le.s32.totalorder 1, %s10
    %p163 = scmp.lt.s32.totalorder %s10, 5
    %p164 = pnand %p162, %p163
    %p165 = pneg %p164
    // Predicated region
    $region25: #{upsampling_block_forward.6} parent=5 // pred_check
      _
    $region26: #{upsampling_block_forward.6} parent=5 // pred_check_branch
      %167 = sbr.rel (%p164) target = $region28
    $region27: #{upsampling_block_forward.6} parent=5 // pred_region
      %s168 = ssub.s32 %s10, 1
      %s169 = smul.u32 64, %s20
      %p170 = scmp.lt.s32.totalorder %s19, 1
      %s171 = scalar_select %p170, %s19, 1
      %p172 = scmp.lt.s32.totalorder %s169, 127
      %s173 = scalar_select %p172, %s169, 127
      %s174 = smul.addr %s171, 128
      %s175 = sadd.s32 %s173, %s174
      %s176 = smul.addr %s175, 4
      %s177 = scalar_lea.vmem %s0, %s176
      %p178 = pneg %p50
      %p179 = pneg %p47
      %p180 = pneg %p71
      %p181 = pneg %p68
      %p182 = pneg %p99
      %p183 = pneg %p96
      %s184 = smul.u32 64, %s20
      %p185 = scmp.lt.s32.totalorder %s19, 1
      %s186 = scalar_select %p185, %s19, 1
      %p187 = scmp.lt.s32.totalorder %s184, 127
      %s188 = scalar_select %p187, %s184, 127
      %s189 = smul.addr %s186, 128
      %s190 = sadd.s32 %s188, %s189
      %s191 = smul.addr %s190, 8
      %s192 = scalar_lea.vmem %s2, %s191
      %p193 = pneg %p127
      %p194 = pneg %p124
      %p195 = scmp.lt.s32.totalorder %s19, 1
      %s196 = scalar_select %p195, %s19, 1
      %p197 = scmp.lt.s32.totalorder %s20, 1
      %s198 = scalar_select %p197, %s20, 1
      %s199 = smul.addr %s196, 2
      %s200 = sadd.s32 %s198, %s199
      %s201 = smul.addr %s200, 2
      %s202 = scalar_lea.vmem %s3, %s201
      %s203 = smul.u32 64, %s20
      %p204 = scmp.lt.s32.totalorder %s19, 1
      %s205 = scalar_select %p204, %s19, 1
      %p206 = scmp.lt.s32.totalorder %s203, 127
      %s207 = scalar_select %p206, %s203, 127
      %s208 = smul.addr %s205, 128
      %s209 = sadd.s32 %s207, %s208
      %s210 = smul.addr %s209, 4
      %s211 = scalar_lea.vmem %s0, %s210
      %s212 = smul.u32 64, %s20
      %s213 = smul.u32 64, %s20
      %p214 = scmp.lt.s32.totalorder %s19, 1
      %s215 = scalar_select %p214, %s19, 1
      %p216 = scmp.lt.s32.totalorder %s213, 127
      %s217 = scalar_select %p216, %s213, 127
      %s218 = smul.addr %s215, 128
      %s219 = sadd.s32 %s217, %s218
      %s220 = smul.addr %s219, 8
      %s221 = scalar_lea.vmem %s2, %s220
      %s222 = smul.u32 64, %s20
      %p223 = scmp.lt.s32.totalorder %s19, 1
      %s224 = scalar_select %p223, %s19, 1
      %p225 = scmp.lt.s32.totalorder %s20, 1
      %s226 = scalar_select %p225, %s20, 1
      %s227 = smul.addr %s224, 2
      %s228 = sadd.s32 %s226, %s227
      %s229 = smul.addr %s228, 2
      %s230 = scalar_lea.vmem %s3, %s229
      %v232 = vld [vmem:[%s211] sm:$0xf]
      %v233 = vld [vmem:[%s211 + $0x4] sm:$0xf]
      %v234 = vld [vmem:[%s211 + $0x8] sm:$0xf]
      %v235 = vld [vmem:[%s211 + $0xc] sm:$0xf]
      %v236 = vld [vmem:[%s211 + $0x10] sm:$0xf]
      %v237 = vld [vmem:[%s211 + $0x14] sm:$0xf]
      %v238 = vld [vmem:[%s211 + $0x18] sm:$0xf]
      %v239 = vld [vmem:[%s211 + $0x1c] sm:$0xf]
      %v240 = vld [vmem:[%s211 + $0x20] sm:$0xf]
      %v241 = vld [vmem:[%s211 + $0x24] sm:$0xf]
      %v242 = vld [vmem:[%s211 + $0x28] sm:$0xf]
      %v243 = vld [vmem:[%s211 + $0x2c] sm:$0xf]
      %v244 = vld [vmem:[%s211 + $0x30] sm:$0xf]
      %v245 = vld [vmem:[%s211 + $0x34] sm:$0xf]
      %v246 = vld [vmem:[%s211 + $0x38] sm:$0xf]
      %v247 = vld [vmem:[%s211 + $0x3c] sm:$0xf]
      %v248 = vld [vmem:[%s211 + $0x40] sm:$0xf]
      %v249 = vld [vmem:[%s211 + $0x44] sm:$0xf]
      %v250 = vld [vmem:[%s211 + $0x48] sm:$0xf]
      %v251 = vld [vmem:[%s211 + $0x4c] sm:$0xf]
      %v252 = vld [vmem:[%s211 + $0x50] sm:$0xf]
      %v253 = vld [vmem:[%s211 + $0x54] sm:$0xf]
      %v254 = vld [vmem:[%s211 + $0x58] sm:$0xf]
      %v255 = vld [vmem:[%s211 + $0x5c] sm:$0xf]
      %v256 = vld [vmem:[%s211 + $0x60] sm:$0xf]
      %v257 = vld [vmem:[%s211 + $0x64] sm:$0xf]
      %v258 = vld [vmem:[%s211 + $0x68] sm:$0xf]
      %v259 = vld [vmem:[%s211 + $0x6c] sm:$0xf]
      %v260 = vld [vmem:[%s211 + $0x70] sm:$0xf]
      %v261 = vld [vmem:[%s211 + $0x74] sm:$0xf]
      %v262 = vld [vmem:[%s211 + $0x78] sm:$0xf]
      %v263 = vld [vmem:[%s211 + $0x7c] sm:$0xf]
      %v264 = vld [vmem:[%s211 + $0x80] sm:$0xf]
      %v265 = vld [vmem:[%s211 + $0x84] sm:$0xf]
      %v266 = vld [vmem:[%s211 + $0x88] sm:$0xf]
      %v267 = vld [vmem:[%s211 + $0x8c] sm:$0xf]
      %v268 = vld [vmem:[%s211 + $0x90] sm:$0xf]
      %v269 = vld [vmem:[%s211 + $0x94] sm:$0xf]
      %v270 = vld [vmem:[%s211 + $0x98] sm:$0xf]
      %v271 = vld [vmem:[%s211 + $0x9c] sm:$0xf]
      %v272 = vld [vmem:[%s211 + $0xa0] sm:$0xf]
      %v273 = vld [vmem:[%s211 + $0xa4] sm:$0xf]
      %v274 = vld [vmem:[%s211 + $0xa8] sm:$0xf]
      %v275 = vld [vmem:[%s211 + $0xac] sm:$0xf]
      %v276 = vld [vmem:[%s211 + $0xb0] sm:$0xf]
      %v277 = vld [vmem:[%s211 + $0xb4] sm:$0xf]
      %v278 = vld [vmem:[%s211 + $0xb8] sm:$0xf]
      %v279 = vld [vmem:[%s211 + $0xbc] sm:$0xf]
      %v280 = vld [vmem:[%s211 + $0xc0] sm:$0xf]
      %v281 = vld [vmem:[%s211 + $0xc4] sm:$0xf]
      %v282 = vld [vmem:[%s211 + $0xc8] sm:$0xf]
      %v283 = vld [vmem:[%s211 + $0xcc] sm:$0xf]
      %v284 = vld [vmem:[%s211 + $0xd0] sm:$0xf]
      %v285 = vld [vmem:[%s211 + $0xd4] sm:$0xf]
      %v286 = vld [vmem:[%s211 + $0xd8] sm:$0xf]
      %v287 = vld [vmem:[%s211 + $0xdc] sm:$0xf]
      %v288 = vld [vmem:[%s211 + $0xe0] sm:$0xf]
      %v289 = vld [vmem:[%s211 + $0xe4] sm:$0xf]
      %v290 = vld [vmem:[%s211 + $0xe8] sm:$0xf]
      %v291 = vld [vmem:[%s211 + $0xec] sm:$0xf]
      %v292 = vld [vmem:[%s211 + $0xf0] sm:$0xf]
      %v293 = vld [vmem:[%s211 + $0xf4] sm:$0xf]
      %v294 = vld [vmem:[%s211 + $0xf8] sm:$0xf]
      %v295 = vld [vmem:[%s211 + $0xfc] sm:$0xf]
      %v296 = vld [vmem:[%s1] sm:$0xf]
      %v297 = vld [vmem:[%s1 + $0x4] sm:$0xf]
      %v298 = vld [vmem:[%s1 + $0x8] sm:$0xf]
      %v299 = vld [vmem:[%s1 + $0xc] sm:$0xf]
      %v300 = vld [vmem:[%s1 + $0x10] sm:$0x3]
      %v365 = vunpack.c.l.b16 %v232
      %v366 = vunpack.c.l.b16 %v233
      %v367 = vunpack.c.l.b16 %v234
      %v368 = vunpack.c.l.b16 %v235
      %v369 = vunpack.c.l.b16 %v236
      %v370 = vunpack.c.l.b16 %v237
      %v371 = vunpack.c.l.b16 %v238
      %v372 = vunpack.c.l.b16 %v239
      %v373 = vunpack.c.l.b16 %v240
      %v374 = vunpack.c.l.b16 %v241
      %v375 = vunpack.c.l.b16 %v242
      %v376 = vunpack.c.l.b16 %v243
      %v377 = vunpack.c.l.b16 %v244
      %v378 = vunpack.c.l.b16 %v245
      %v379 = vunpack.c.l.b16 %v246
      %v380 = vunpack.c.l.b16 %v247
      %v381 = vunpack.c.l.b16 %v248
      %v382 = vunpack.c.l.b16 %v249
      %v383 = vunpack.c.l.b16 %v250
      %v384 = vunpack.c.l.b16 %v251
      %v385 = vunpack.c.l.b16 %v252
      %v386 = vunpack.c.l.b16 %v253
      %v387 = vunpack.c.l.b16 %v254
      %v388 = vunpack.c.l.b16 %v255
      %v389 = vunpack.c.l.b16 %v256
      %v390 = vunpack.c.l.b16 %v257
      %v391 = vunpack.c.l.b16 %v258
      %v392 = vunpack.c.l.b16 %v259
      %v393 = vunpack.c.l.b16 %v260
      %v394 = vunpack.c.l.b16 %v261
      %v395 = vunpack.c.l.b16 %v262
      %v396 = vunpack.c.l.b16 %v263
      %v397 = vunpack.c.l.b16 %v264
      %v398 = vunpack.c.l.b16 %v265
      %v399 = vunpack.c.l.b16 %v266
      %v400 = vunpack.c.l.b16 %v267
      %v401 = vunpack.c.l.b16 %v268
      %v402 = vunpack.c.l.b16 %v269
      %v403 = vunpack.c.l.b16 %v270
      %v404 = vunpack.c.l.b16 %v271
      %v405 = vunpack.c.l.b16 %v272
      %v406 = vunpack.c.l.b16 %v273
      %v407 = vunpack.c.l.b16 %v274
      %v408 = vunpack.c.l.b16 %v275
      %v409 = vunpack.c.l.b16 %v276
      %v410 = vunpack.c.l.b16 %v277
      %v411 = vunpack.c.l.b16 %v278
      %v412 = vunpack.c.l.b16 %v279
      %v413 = vunpack.c.l.b16 %v280
      %v414 = vunpack.c.l.b16 %v281
      %v415 = vunpack.c.l.b16 %v282
      %v416 = vunpack.c.l.b16 %v283
      %v417 = vunpack.c.l.b16 %v284
      %v418 = vunpack.c.l.b16 %v285
      %v419 = vunpack.c.l.b16 %v286
      %v420 = vunpack.c.l.b16 %v287
      %v421 = vunpack.c.l.b16 %v288
      %v422 = vunpack.c.l.b16 %v289
      %v423 = vunpack.c.l.b16 %v290
      %v424 = vunpack.c.l.b16 %v291
      %v425 = vunpack.c.l.b16 %v292
      %v426 = vunpack.c.l.b16 %v293
      %v427 = vunpack.c.l.b16 %v294
      %v428 = vunpack.c.l.b16 %v295
      %v429 = vpack.c.b16 %v366, %v365
      %v430 = vpack.c.b16 %v368, %v367
      %v431 = vpack.c.b16 %v370, %v369
      %v432 = vpack.c.b16 %v372, %v371
      %v433 = vpack.c.b16 %v374, %v373
      %v434 = vpack.c.b16 %v376, %v375
      %v435 = vpack.c.b16 %v378, %v377
      %v436 = vpack.c.b16 %v380, %v379
      %v437 = vpack.c.b16 %v382, %v381
      %v438 = vpack.c.b16 %v384, %v383
      %v439 = vpack.c.b16 %v386, %v385
      %v440 = vpack.c.b16 %v388, %v387
      %v441 = vpack.c.b16 %v390, %v389
      %v442 = vpack.c.b16 %v392, %v391
      %v443 = vpack.c.b16 %v394, %v393
      %v444 = vpack.c.b16 %v396, %v395
      %v445 = vpack.c.b16 %v398, %v397
      %v446 = vpack.c.b16 %v400, %v399
      %v447 = vpack.c.b16 %v402, %v401
      %v448 = vpack.c.b16 %v404, %v403
      %v449 = vpack.c.b16 %v406, %v405
      %v450 = vpack.c.b16 %v408, %v407
      %v451 = vpack.c.b16 %v410, %v409
      %v452 = vpack.c.b16 %v412, %v411
      %v453 = vpack.c.b16 %v414, %v413
      %v454 = vpack.c.b16 %v416, %v415
      %v455 = vpack.c.b16 %v418, %v417
      %v456 = vpack.c.b16 %v420, %v419
      %v457 = vpack.c.b16 %v422, %v421
      %v458 = vpack.c.b16 %v424, %v423
      %v459 = vpack.c.b16 %v426, %v425
      %v460 = vpack.c.b16 %v428, %v427
      %v466 = vunpack.c.l.b16 %v296
      %v467 = vunpack.c.l.b16 %v297
      %v468 = vunpack.c.l.b16 %v298
      %v469 = vunpack.c.l.b16 %v299
      %v470 = vunpack.c.l.b16 %v300
      %v471 = vpack.c.b16 %v467, %v466
      %v472 = vpack.c.b16 %v469, %v468
      %v473 = vpack.c.b16 %v470, %v470
      %vm476 = vcmask 293888
      %v478 = vsel %vm476, %v429, 0
      %v481 = vsel %vm476, %v430, 0
      %v484 = vsel %vm476, %v431, 0
      %v487 = vsel %vm476, %v432, 0
      %v490 = vsel %vm476, %v433, 0
      %v493 = vsel %vm476, %v434, 0
      %v496 = vsel %vm476, %v435, 0
      %v499 = vsel %vm476, %v436, 0
      %v502 = vsel %vm476, %v437, 0
      %v505 = vsel %vm476, %v438, 0
      %v508 = vsel %vm476, %v439, 0
      %v511 = vsel %vm476, %v440, 0
      %v514 = vsel %vm476, %v441, 0
      %v517 = vsel %vm476, %v442, 0
      %v520 = vsel %vm476, %v443, 0
      %v523 = vsel %vm476, %v444, 0
      %v526 = vsel %vm476, %v445, 0
      %v529 = vsel %vm476, %v446, 0
      %v532 = vsel %vm476, %v447, 0
      %v535 = vsel %vm476, %v448, 0
      %v538 = vsel %vm476, %v449, 0
      %v541 = vsel %vm476, %v450, 0
      %v544 = vsel %vm476, %v451, 0
      %v547 = vsel %vm476, %v452, 0
      %v550 = vsel %vm476, %v453, 0
      %v553 = vsel %vm476, %v454, 0
      %v556 = vsel %vm476, %v455, 0
      %v559 = vsel %vm476, %v456, 0
      %v562 = vsel %vm476, %v457, 0
      %v565 = vsel %vm476, %v458, 0
      %v568 = vsel %vm476, %v459, 0
      %v571 = vsel %vm476, %v460, 0
      %vm573 = vcmask 1041408
      %v575 = vsel %vm573, %v473, 0
      %577 = vmatprep.subr.bf16.mxu0 0
      %578 = vmatpush1.bf16.msra.mxu0 %v471
      %579 = vmatprep.subr.bf16.mxu0 0
      %580 = vmatpush1.bf16.msra.mxu0 %v472
      %581 = vmatprep.subr.bf16.mxu0 0
      %582 = vmatpush1.bf16.msra.mxu0 %v575
      %583 = vmatprep.subr.bf16.mxu0 0
      %584 = vmatpush1.bf16.msra.mxu0 0
      %585 = vmatprep.subr.bf16.mxu0 0
      %586 = vmatpush1.bf16.msra.mxu0 0
      %587 = vmatprep.subr.bf16.mxu0 0
      %588 = vmatpush1.bf16.msra.mxu0 0
      %589 = vmatprep.subr.bf16.mxu0 0
      %590 = vmatpush1.bf16.msra.mxu0 0
      %591 = vmatprep.subr.bf16.mxu0 0
      %592 = vmatpush1.bf16.msra.mxu0 0
      %593 = vmatprep.subr.bf16.mxu0 0
      %594 = vmatpush1.bf16.msra.mxu0 0
      %595 = vmatprep.subr.bf16.mxu0 0
      %596 = vmatpush1.bf16.msra.mxu0 0
      %597 = vmatprep.subr.bf16.mxu0 0
      %598 = vmatpush1.bf16.msra.mxu0 0
      %599 = vmatprep.subr.bf16.mxu0 0
      %600 = vmatpush1.bf16.msra.mxu0 0
      %601 = vmatprep.subr.bf16.mxu0 0
      %602 = vmatpush1.bf16.msra.mxu0 0
      %603 = vmatprep.subr.bf16.mxu0 0
      %604 = vmatpush1.bf16.msra.mxu0 0
      %605 = vmatprep.subr.bf16.mxu0 0
      %606 = vmatpush1.bf16.msra.mxu0 0
      %607 = vmatprep.subr.bf16.mxu0 0
      %608 = vmatpush1.bf16.msra.mxu0 0
      %609 = vmatprep.mubr.bf16.mxu0 0
      %610 = vmatmul.mubr.bf16.gmra.mrb[0].mxu0 %v478
      %v611 = vpop.f32.mrb[0].mxu0
      %v612 = vadd.f32 0.0, %v611
      %v613 = vpop.f32.mrb[0].mxu0
      %v614 = vpop.f32.mrb[0].mxu0
      %v615 = vadd.f32 0.0, %v614
      %v616 = vpop.f32.mrb[0].mxu0
      %617 = vmatprep.mubr.bf16.mxu0 0
      %618 = vmatmul.mubr.bf16.gmra.mrb[0].mxu0 %v481
      %v619 = vpop.f32.mrb[0].mxu0
      %v620 = vadd.f32 0.0, %v619
      %v621 = vpop.f32.mrb[0].mxu0
      %v622 = vpop.f32.mrb[0].mxu0
      %v623 = vadd.f32 0.0, %v622
      %v624 = vpop.f32.mrb[0].mxu0
      %625 = vmatprep.mubr.bf16.mxu0 0
      %626 = vmatmul.mubr.bf16.gmra.mrb[0].mxu0 %v484
      %v627 = vpop.f32.mrb[0].mxu0
      %v628 = vadd.f32 0.0, %v627
      %v629 = vpop.f32.mrb[0].mxu0
      %v630 = vpop.f32.mrb[0].mxu0
      %v631 = vadd.f32 0.0, %v630
      %v632 = vpop.f32.mrb[0].mxu0
      %633 = vmatprep.mubr.bf16.mxu0 0
      %634 = vmatmul.mubr.bf16.gmra.mrb[0].mxu0 %v487
      %v635 = vpop.f32.mrb[0].mxu0
      %v636 = vadd.f32 0.0, %v635
      %v637 = vpop.f32.mrb[0].mxu0
      %v638 = vpop.f32.mrb[0].mxu0
      %v639 = vadd.f32 0.0, %v638
      %v640 = vpop.f32.mrb[0].mxu0
      %641 = vmatprep.mubr.bf16.mxu0 0
      %642 = vmatmul.mubr.bf16.gmra.mrb[0].mxu0 %v490
      %v643 = vpop.f32.mrb[0].mxu0
      %v644 = vadd.f32 0.0, %v643
      %v645 = vpop.f32.mrb[0].mxu0
      %v646 = vpop.f32.mrb[0].mxu0
      %v647 = vadd.f32 0.0, %v646
      %v648 = vpop.f32.mrb[0].mxu0
      %649 = vmatprep.mubr.bf16.mxu0 0
      %650 = vmatmul.mubr.bf16.gmra.mrb[0].mxu0 %v493
      %v651 = vpop.f32.mrb[0].mxu0
      %v652 = vadd.f32 0.0, %v651
      %v653 = vpop.f32.mrb[0].mxu0
      %v654 = vpop.f32.mrb[0].mxu0
      %v655 = vadd.f32 0.0, %v654
      %v656 = vpop.f32.mrb[0].mxu0
      %657 = vmatprep.mubr.bf16.mxu0 0
      %658 = vmatmul.mubr.bf16.gmra.mrb[0].mxu0 %v496
      %v659 = vpop.f32.mrb[0].mxu0
      %v660 = vadd.f32 0.0, %v659
      %v661 = vpop.f32.mrb[0].mxu0
      %v662 = vpop.f32.mrb[0].mxu0
      %v663 = vadd.f32 0.0, %v662
      %v664 = vpop.f32.mrb[0].mxu0
      %665 = vmatprep.mubr.bf16.mxu0 0
      %666 = vmatmul.mubr.bf16.gmra.mrb[0].mxu0 %v499
      %v667 = vpop.f32.mrb[0].mxu0
      %v668 = vadd.f32 0.0, %v667
      %v669 = vpop.f32.mrb[0].mxu0
      %v670 = vpop.f32.mrb[0].mxu0
      %v671 = vadd.f32 0.0, %v670
      %v672 = vpop.f32.mrb[0].mxu0
      %673 = vmatprep.mubr.bf16.mxu0 0
      %674 = vmatmul.mubr.bf16.gmra.mrb[0].mxu0 %v502
      %v675 = vpop.f32.mrb[0].mxu0
      %v676 = vadd.f32 0.0, %v675
      %v677 = vpop.f32.mrb[0].mxu0
      %v678 = vpop.f32.mrb[0].mxu0
      %v679 = vadd.f32 0.0, %v678
      %v680 = vpop.f32.mrb[0].mxu0
      %681 = vmatprep.mubr.bf16.mxu0 0
      %682 = vmatmul.mubr.bf16.gmra.mrb[0].mxu0 %v505
      %v683 = vpop.f32.mrb[0].mxu0
      %v684 = vadd.f32 0.0, %v683
      %v685 = vpop.f32.mrb[0].mxu0
      %v686 = vpop.f32.mrb[0].mxu0
      %v687 = vadd.f32 0.0, %v686
      %v688 = vpop.f32.mrb[0].mxu0
      %689 = vmatprep.mubr.bf16.mxu0 0
      %690 = vmatmul.mubr.bf16.gmra.mrb[0].mxu0 %v508
      %v691 = vpop.f32.mrb[0].mxu0
      %v692 = vadd.f32 0.0, %v691
      %v693 = vpop.f32.mrb[0].mxu0
      %v694 = vpop.f32.mrb[0].mxu0
      %v695 = vadd.f32 0.0, %v694
      %v696 = vpop.f32.mrb[0].mxu0
      %697 = vmatprep.mubr.bf16.mxu0 0
      %698 = vmatmul.mubr.bf16.gmra.mrb[0].mxu0 %v511
      %v699 = vpop.f32.mrb[0].mxu0
      %v700 = vadd.f32 0.0, %v699
      %v701 = vpop.f32.mrb[0].mxu0
      %v702 = vpop.f32.mrb[0].mxu0
      %v703 = vadd.f32 0.0, %v702
      %v704 = vpop.f32.mrb[0].mxu0
      %705 = vmatprep.mubr.bf16.mxu0 0
      %706 = vmatmul.mubr.bf16.gmra.mrb[0].mxu0 %v514
      %v707 = vpop.f32.mrb[0].mxu0
      %v708 = vadd.f32 0.0, %v707
      %v709 = vpop.f32.mrb[0].mxu0
      %v710 = vpop.f32.mrb[0].mxu0
      %v711 = vadd.f32 0.0, %v710
      %v712 = vpop.f32.mrb[0].mxu0
      %713 = vmatprep.mubr.bf16.mxu0 0
      %714 = vmatmul.mubr.bf16.gmra.mrb[0].mxu0 %v517
      %v715 = vpop.f32.mrb[0].mxu0
      %v716 = vadd.f32 0.0, %v715
      %v717 = vpop.f32.mrb[0].mxu0
      %v718 = vpop.f32.mrb[0].mxu0
      %v719 = vadd.f32 0.0, %v718
      %v720 = vpop.f32.mrb[0].mxu0
      %721 = vmatprep.mubr.bf16.mxu0 0
      %722 = vmatmul.mubr.bf16.gmra.mrb[0].mxu0 %v520
      %v723 = vpop.f32.mrb[0].mxu0
      %v724 = vadd.f32 0.0, %v723
      %v725 = vpop.f32.mrb[0].mxu0
      %v726 = vpop.f32.mrb[0].mxu0
      %v727 = vadd.f32 0.0, %v726
      %v728 = vpop.f32.mrb[0].mxu0
      %729 = vmatprep.mubr.bf16.mxu0 0
      %730 = vmatmul.mubr.bf16.gmra.mrb[0].mxu0 %v523
      %v731 = vpop.f32.mrb[0].mxu0
      %v732 = vadd.f32 0.0, %v731
      %v733 = vpop.f32.mrb[0].mxu0
      %v734 = vpop.f32.mrb[0].mxu0
      %v735 = vadd.f32 0.0, %v734
      %v736 = vpop.f32.mrb[0].mxu0
      %737 = vmatprep.mubr.bf16.mxu0 0
      %738 = vmatmul.mubr.bf16.gmra.mrb[0].mxu0 %v526
      %v739 = vpop.f32.mrb[0].mxu0
      %v740 = vadd.f32 0.0, %v739
      %v741 = vpop.f32.mrb[0].mxu0
      %v742 = vpop.f32.mrb[0].mxu0
      %v743 = vadd.f32 0.0, %v742
      %v744 = vpop.f32.mrb[0].mxu0
      %745 = vmatprep.mubr.bf16.mxu0 0
      %746 = vmatmul.mubr.bf16.gmra.mrb[0].mxu0 %v529
      %v747 = vpop.f32.mrb[0].mxu0
      %v748 = vadd.f32 0.0, %v747
      %v749 = vpop.f32.mrb[0].mxu0
      %v750 = vpop.f32.mrb[0].mxu0
      %v751 = vadd.f32 0.0, %v750
      %v752 = vpop.f32.mrb[0].mxu0
      %753 = vmatprep.mubr.bf16.mxu0 0
      %754 = vmatmul.mubr.bf16.gmra.mrb[0].mxu0 %v532
      %v755 = vpop.f32.mrb[0].mxu0
      %v756 = vadd.f32 0.0, %v755
      %v757 = vpop.f32.mrb[0].mxu0
      %v758 = vpop.f32.mrb[0].mxu0
      %v759 = vadd.f32 0.0, %v758
      %v760 = vpop.f32.mrb[0].mxu0
      %761 = vmatprep.mubr.bf16.mxu0 0
      %762 = vmatmul.mubr.bf16.gmra.mrb[0].mxu0 %v535
      %v763 = vpop.f32.mrb[0].mxu0
      %v764 = vadd.f32 0.0, %v763
      %v765 = vpop.f32.mrb[0].mxu0
      %v766 = vpop.f32.mrb[0].mxu0
      %v767 = vadd.f32 0.0, %v766
      %v768 = vpop.f32.mrb[0].mxu0
      %769 = vmatprep.mubr.bf16.mxu0 0
      %770 = vmatmul.mubr.bf16.gmra.mrb[0].mxu0 %v538
      %v771 = vpop.f32.mrb[0].mxu0
      %v772 = vadd.f32 0.0, %v771
      %v773 = vpop.f32.mrb[0].mxu0
      %v774 = vpop.f32.mrb[0].mxu0
      %v775 = vadd.f32 0.0, %v774
      %v776 = vpop.f32.mrb[0].mxu0
      %777 = vmatprep.mubr.bf16.mxu0 0
      %778 = vmatmul.mubr.bf16.gmra.mrb[0].mxu0 %v541
      %v779 = vpop.f32.mrb[0].mxu0
      %v780 = vadd.f32 0.0, %v779
      %v781 = vpop.f32.mrb[0].mxu0
      %v782 = vpop.f32.mrb[0].mxu0
      %v783 = vadd.f32 0.0, %v782
      %v784 = vpop.f32.mrb[0].mxu0
      %785 = vmatprep.mubr.bf16.mxu0 0
      %786 = vmatmul.mubr.bf16.gmra.mrb[0].mxu0 %v544
      %v787 = vpop.f32.mrb[0].mxu0
      %v788 = vadd.f32 0.0, %v787
      %v789 = vpop.f32.mrb[0].mxu0
      %v790 = vpop.f32.mrb[0].mxu0
      %v791 = vadd.f32 0.0, %v790
      %v792 = vpop.f32.mrb[0].mxu0
      %793 = vmatprep.mubr.bf16.mxu0 0
      %794 = vmatmul.mubr.bf16.gmra.mrb[0].mxu0 %v547
      %v795 = vpop.f32.mrb[0].mxu0
      %v796 = vadd.f32 0.0, %v795
      %v797 = vpop.f32.mrb[0].mxu0
      %v798 = vpop.f32.mrb[0].mxu0
      %v799 = vadd.f32 0.0, %v798
      %v800 = vpop.f32.mrb[0].mxu0
      %801 = vmatprep.mubr.bf16.mxu0 0
      %802 = vmatmul.mubr.bf16.gmra.mrb[0].mxu0 %v550
      %v803 = vpop.f32.mrb[0].mxu0
      %v804 = vadd.f32 0.0, %v803
      %v805 = vpop.f32.mrb[0].mxu0
      %v806 = vpop.f32.mrb[0].mxu0
      %v807 = vadd.f32 0.0, %v806
      %v808 = vpop.f32.mrb[0].mxu0
      %809 = vmatprep.mubr.bf16.mxu0 0
      %810 = vmatmul.mubr.bf16.gmra.mrb[0].mxu0 %v553
      %v811 = vpop.f32.mrb[0].mxu0
      %v812 = vadd.f32 0.0, %v811
      %v813 = vpop.f32.mrb[0].mxu0
      %v814 = vpop.f32.mrb[0].mxu0
      %v815 = vadd.f32 0.0, %v814
      %v816 = vpop.f32.mrb[0].mxu0
      %817 = vmatprep.mubr.bf16.mxu0 0
      %818 = vmatmul.mubr.bf16.gmra.mrb[0].mxu0 %v556
      %v819 = vpop.f32.mrb[0].mxu0
      %v820 = vadd.f32 0.0, %v819
      %v821 = vpop.f32.mrb[0].mxu0
      %v822 = vpop.f32.mrb[0].mxu0
      %v823 = vadd.f32 0.0, %v822
      %v824 = vpop.f32.mrb[0].mxu0
      %825 = vmatprep.mubr.bf16.mxu0 0
      %826 = vmatmul.mubr.bf16.gmra.mrb[0].mxu0 %v559
      %v827 = vpop.f32.mrb[0].mxu0
      %v828 = vadd.f32 0.0, %v827
      %v829 = vpop.f32.mrb[0].mxu0
      %v830 = vpop.f32.mrb[0].mxu0
      %v831 = vadd.f32 0.0, %v830
      %v832 = vpop.f32.mrb[0].mxu0
      %833 = vmatprep.mubr.bf16.mxu0 0
      %834 = vmatmul.mubr.bf16.gmra.mrb[0].mxu0 %v562
      %v835 = vpop.f32.mrb[0].mxu0
      %v836 = vadd.f32 0.0, %v835
      %v837 = vpop.f32.mrb[0].mxu0
      %v838 = vpop.f32.mrb[0].mxu0
      %v839 = vadd.f32 0.0, %v838
      %v840 = vpop.f32.mrb[0].mxu0
      %841 = vmatprep.mubr.bf16.mxu0 0
      %842 = vmatmul.mubr.bf16.gmra.mrb[0].mxu0 %v565
      %v843 = vpop.f32.mrb[0].mxu0
      %v844 = vadd.f32 0.0, %v843
      %v845 = vpop.f32.mrb[0].mxu0
      %v846 = vpop.f32.mrb[0].mxu0
      %v847 = vadd.f32 0.0, %v846
      %v848 = vpop.f32.mrb[0].mxu0
      %849 = vmatprep.mubr.bf16.mxu0 0
      %850 = vmatmul.mubr.bf16.gmra.mrb[0].mxu0 %v568
      %v851 = vpop.f32.mrb[0].mxu0
      %v852 = vadd.f32 0.0, %v851
      %v853 = vpop.f32.mrb[0].mxu0
      %v854 = vpop.f32.mrb[0].mxu0
      %v855 = vadd.f32 0.0, %v854
      %v856 = vpop.f32.mrb[0].mxu0
      %857 = vmatprep.mubr.bf16.mxu0 0
      %858 = vmatmul.mubr.bf16.gmra.mrb[0].mxu0 %v571
      %v859 = vpop.f32.mrb[0].mxu0
      %v860 = vadd.f32 0.0, %v859
      %v861 = vpop.f32.mrb[0].mxu0
      %v862 = vpop.f32.mrb[0].mxu0
      %v863 = vadd.f32 0.0, %v862
      %v864 = vpop.f32.mrb[0].mxu0
      %865 = vdwg.mxu0
      %866 = vst [vmem:[%s221] sm:$0xff] %v612
      %867 = vst [vmem:[%s221 + $0x8] sm:$0xff] %v615
      %868 = vst [vmem:[%s221 + $0x10] sm:$0xff] %v620
      %869 = vst [vmem:[%s221 + $0x18] sm:$0xff] %v623
      %870 = vst [vmem:[%s221 + $0x20] sm:$0xff] %v628
      %871 = vst [vmem:[%s221 + $0x28] sm:$0xff] %v631
      %872 = vst [vmem:[%s221 + $0x30] sm:$0xff] %v636
      %873 = vst [vmem:[%s221 + $0x38] sm:$0xff] %v639
      %874 = vst [vmem:[%s221 + $0x40] sm:$0xff] %v644
      %875 = vst [vmem:[%s221 + $0x48] sm:$0xff] %v647
      %876 = vst [vmem:[%s221 + $0x50] sm:$0xff] %v652
      %877 = vst [vmem:[%s221 + $0x58] sm:$0xff] %v655
      %878 = vst [vmem:[%s221 + $0x60] sm:$0xff] %v660
      %879 = vst [vmem:[%s221 + $0x68] sm:$0xff] %v663
      %880 = vst [vmem:[%s221 + $0x70] sm:$0xff] %v668
      %881 = vst [vmem:[%s221 + $0x78] sm:$0xff] %v671
      %882 = vst [vmem:[%s221 + $0x80] sm:$0xff] %v676
      %883 = vst [vmem:[%s221 + $0x88] sm:$0xff] %v679
      %884 = vst [vmem:[%s221 + $0x90] sm:$0xff] %v684
      %885 = vst [vmem:[%s221 + $0x98] sm:$0xff] %v687
      %886 = vst [vmem:[%s221 + $0xa0] sm:$0xff] %v692
      %887 = vst [vmem:[%s221 + $0xa8] sm:$0xff] %v695
      %888 = vst [vmem:[%s221 + $0xb0] sm:$0xff] %v700
      %889 = vst [vmem:[%s221 + $0xb8] sm:$0xff] %v703
      %890 = vst [vmem:[%s221 + $0xc0] sm:$0xff] %v708
      %891 = vst [vmem:[%s221 + $0xc8] sm:$0xff] %v711
      %892 = vst [vmem:[%s221 + $0xd0] sm:$0xff] %v716
      %893 = vst [vmem:[%s221 + $0xd8] sm:$0xff] %v719
      %894 = vst [vmem:[%s221 + $0xe0] sm:$0xff] %v724
      %895 = vst [vmem:[%s221 + $0xe8] sm:$0xff] %v727
      %896 = vst [vmem:[%s221 + $0xf0] sm:$0xff] %v732
      %897 = vst [vmem:[%s221 + $0xf8] sm:$0xff] %v735
      %898 = vst [vmem:[%s221 + $0x100] sm:$0xff] %v740
      %899 = vst [vmem:[%s221 + $0x108] sm:$0xff] %v743
      %900 = vst [vmem:[%s221 + $0x110] sm:$0xff] %v748
      %901 = vst [vmem:[%s221 + $0x118] sm:$0xff] %v751
      %902 = vst [vmem:[%s221 + $0x120] sm:$0xff] %v756
      %903 = vst [vmem:[%s221 + $0x128] sm:$0xff] %v759
      %904 = vst [vmem:[%s221 + $0x130] sm:$0xff] %v764
      %905 = vst [vmem:[%s221 + $0x138] sm:$0xff] %v767
      %906 = vst [vmem:[%s221 + $0x140] sm:$0xff] %v772
      %907 = vst [vmem:[%s221 + $0x148] sm:$0xff] %v775
      %908 = vst [vmem:[%s221 + $0x150] sm:$0xff] %v780
      %909 = vst [vmem:[%s221 + $0x158] sm:$0xff] %v783
      %910 = vst [vmem:[%s221 + $0x160] sm:$0xff] %v788
      %911 = vst [vmem:[%s221 + $0x168] sm:$0xff] %v791
      %912 = vst [vmem:[%s221 + $0x170] sm:$0xff] %v796
      %913 = vst [vmem:[%s221 + $0x178] sm:$0xff] %v799
      %914 = vst [vmem:[%s221 + $0x180] sm:$0xff] %v804
      %915 = vst [vmem:[%s221 + $0x188] sm:$0xff] %v807
      %916 = vst [vmem:[%s221 + $0x190] sm:$0xff] %v812
      %917 = vst [vmem:[%s221 + $0x198] sm:$0xff] %v815
      %918 = vst [vmem:[%s221 + $0x1a0] sm:$0xff] %v820
      %919 = vst [vmem:[%s221 + $0x1a8] sm:$0xff] %v823
      %920 = vst [vmem:[%s221 + $0x1b0] sm:$0xff] %v828
      %921 = vst [vmem:[%s221 + $0x1b8] sm:$0xff] %v831
      %922 = vst [vmem:[%s221 + $0x1c0] sm:$0xff] %v836
      %923 = vst [vmem:[%s221 + $0x1c8] sm:$0xff] %v839
      %924 = vst [vmem:[%s221 + $0x1d0] sm:$0xff] %v844
      %925 = vst [vmem:[%s221 + $0x1d8] sm:$0xff] %v847
      %926 = vst [vmem:[%s221 + $0x1e0] sm:$0xff] %v852
      %927 = vst [vmem:[%s221 + $0x1e8] sm:$0xff] %v855
      %928 = vst [vmem:[%s221 + $0x1f0] sm:$0xff] %v860
      %929 = vst [vmem:[%s221 + $0x1f8] sm:$0xff] %v863
      %v930 = vadd.f32 %v612, %v615
      %v931 = vadd.f32 %v930, %v620
      %v932 = vadd.f32 %v931, %v623
      %v933 = vadd.f32 %v932, %v628
      %v934 = vadd.f32 %v933, %v631
      %v935 = vadd.f32 %v934, %v636
      %v936 = vadd.f32 %v935, %v639
      %v937 = vadd.f32 %v936, %v644
      %v938 = vadd.f32 %v937, %v647
      %v939 = vadd.f32 %v938, %v652
      %v940 = vadd.f32 %v939, %v655
      %v941 = vadd.f32 %v940, %v660
      %v942 = vadd.f32 %v941, %v663
      %v943 = vadd.f32 %v942, %v668
      %v944 = vadd.f32 %v943, %v671
      %v945 = vadd.f32 %v944, %v676
      %v946 = vadd.f32 %v945, %v679
      %v947 = vadd.f32 %v946, %v684
      %v948 = vadd.f32 %v947, %v687
      %v949 = vadd.f32 %v948, %v692
      %v950 = vadd.f32 %v949, %v695
      %v951 = vadd.f32 %v950, %v700
      %v952 = vadd.f32 %v951, %v703
      %v953 = vadd.f32 %v952, %v708
      %v954 = vadd.f32 %v953, %v711
      %v955 = vadd.f32 %v954, %v716
      %v956 = vadd.f32 %v955, %v719
      %v957 = vadd.f32 %v956, %v724
      %v958 = vadd.f32 %v957, %v727
      %v959 = vadd.f32 %v958, %v732
      %v960 = vadd.f32 %v959, %v735
      %v961 = vadd.f32 %v960, %v740
      %v962 = vadd.f32 %v961, %v743
      %v963 = vadd.f32 %v962, %v748
      %v964 = vadd.f32 %v963, %v751
      %v965 = vadd.f32 %v964, %v756
      %v966 = vadd.f32 %v965, %v759
      %v967 = vadd.f32 %v966, %v764
      %v968 = vadd.f32 %v967, %v767
      %v969 = vadd.f32 %v968, %v772
      %v970 = vadd.f32 %v969, %v775
      %v971 = vadd.f32 %v970, %v780
      %v972 = vadd.f32 %v971, %v783
      %v973 = vadd.f32 %v972, %v788
      %v974 = vadd.f32 %v973, %v791
      %v975 = vadd.f32 %v974, %v796
      %v976 = vadd.f32 %v975, %v799
      %v977 = vadd.f32 %v976, %v804
      %v978 = vadd.f32 %v977, %v807
      %v979 = vadd.f32 %v978, %v812
      %v980 = vadd.f32 %v979, %v815
      %v981 = vadd.f32 %v980, %v820
      %v982 = vadd.f32 %v981, %v823
      %v983 = vadd.f32 %v982, %v828
      %v984 = vadd.f32 %v983, %v831
      %v985 = vadd.f32 %v984, %v836
      %v986 = vadd.f32 %v985, %v839
      %v987 = vadd.f32 %v986, %v844
      %v988 = vadd.f32 %v987, %v847
      %v989 = vadd.f32 %v988, %v852
      %v990 = vadd.f32 %v989, %v855
      %v991 = vadd.f32 %v990, %v860
      %v992 = vadd.f32 %v991, %v863
      %v993 = vrot.slane %v992, 4
      %v994 = vadd.f32 %v992, %v993
      %v995 = vrot.slane %v994, 2
      %v996 = vadd.f32 %v994, %v995
      %v997 = vrot.slane %v996, 1
      %v998 = vadd.f32 %v996, %v997
      %v999 = vmul.f32 %v612, %v612
      %v1000 = vmul.f32 %v615, %v615
      %v1001 = vmul.f32 %v620, %v620
      %v1002 = vmul.f32 %v623, %v623
      %v1003 = vmul.f32 %v628, %v628
      %v1004 = vmul.f32 %v631, %v631
      %v1005 = vmul.f32 %v636, %v636
      %v1006 = vmul.f32 %v639, %v639
      %v1007 = vmul.f32 %v644, %v644
      %v1008 = vmul.f32 %v647, %v647
      %v1009 = vmul.f32 %v652, %v652
      %v1010 = vmul.f32 %v655, %v655
      %v1011 = vmul.f32 %v660, %v660
      %v1012 = vmul.f32 %v663, %v663
      %v1013 = vmul.f32 %v668, %v668
      %v1014 = vmul.f32 %v671, %v671
      %v1015 = vmul.f32 %v676, %v676
      %v1016 = vmul.f32 %v679, %v679
      %v1017 = vmul.f32 %v684, %v684
      %v1018 = vmul.f32 %v687, %v687
      %v1019 = vmul.f32 %v692, %v692
      %v1020 = vmul.f32 %v695, %v695
      %v1021 = vmul.f32 %v700, %v700
      %v1022 = vmul.f32 %v703, %v703
      %v1023 = vmul.f32 %v708, %v708
      %v1024 = vmul.f32 %v711, %v711
      %v1025 = vmul.f32 %v716, %v716
      %v1026 = vmul.f32 %v719, %v719
      %v1027 = vmul.f32 %v724, %v724
      %v1028 = vmul.f32 %v727, %v727
      %v1029 = vmul.f32 %v732, %v732
      %v1030 = vmul.f32 %v735, %v735
      %v1031 = vmul.f32 %v740, %v740
      %v1032 = vmul.f32 %v743, %v743
      %v1033 = vmul.f32 %v748, %v748
      %v1034 = vmul.f32 %v751, %v751
      %v1035 = vmul.f32 %v756, %v756
      %v1036 = vmul.f32 %v759, %v759
      %v1037 = vmul.f32 %v764, %v764
      %v1038 = vmul.f32 %v767, %v767
      %v1039 = vmul.f32 %v772, %v772
      %v1040 = vmul.f32 %v775, %v775
      %v1041 = vmul.f32 %v780, %v780
      %v1042 = vmul.f32 %v783, %v783
      %v1043 = vmul.f32 %v788, %v788
      %v1044 = vmul.f32 %v791, %v791
      %v1045 = vmul.f32 %v796, %v796
      %v1046 = vmul.f32 %v799, %v799
      %v1047 = vmul.f32 %v804, %v804
      %v1048 = vmul.f32 %v807, %v807
      %v1049 = vmul.f32 %v812, %v812
      %v1050 = vmul.f32 %v815, %v815
      %v1051 = vmul.f32 %v820, %v820
      %v1052 = vmul.f32 %v823, %v823
      %v1053 = vmul.f32 %v828, %v828
      %v1054 = vmul.f32 %v831, %v831
      %v1055 = vmul.f32 %v836, %v836
      %v1056 = vmul.f32 %v839, %v839
      %v1057 = vmul.f32 %v844, %v844
      %v1058 = vmul.f32 %v847, %v847
      %v1059 = vmul.f32 %v852, %v852
      %v1060 = vmul.f32 %v855, %v855
      %v1061 = vmul.f32 %v860, %v860
      %v1062 = vmul.f32 %v863, %v863
      %v1063 = vadd.f32 %v999, %v1000
      %v1064 = vadd.f32 %v1063, %v1001
      %v1065 = vadd.f32 %v1064, %v1002
      %v1066 = vadd.f32 %v1065, %v1003
      %v1067 = vadd.f32 %v1066, %v1004
      %v1068 = vadd.f32 %v1067, %v1005
      %v1069 = vadd.f32 %v1068, %v1006
      %v1070 = vadd.f32 %v1069, %v1007
      %v1071 = vadd.f32 %v1070, %v1008
      %v1072 = vadd.f32 %v1071, %v1009
      %v1073 = vadd.f32 %v1072, %v1010
      %v1074 = vadd.f32 %v1073, %v1011
      %v1075 = vadd.f32 %v1074, %v1012
      %v1076 = vadd.f32 %v1075, %v1013
      %v1077 = vadd.f32 %v1076, %v1014
      %v1078 = vadd.f32 %v1077, %v1015
      %v1079 = vadd.f32 %v1078, %v1016
      %v1080 = vadd.f32 %v1079, %v1017
      %v1081 = vadd.f32 %v1080, %v1018
      %v1082 = vadd.f32 %v1081, %v1019
      %v1083 = vadd.f32 %v1082, %v1020
      %v1084 = vadd.f32 %v1083, %v1021
      %v1085 = vadd.f32 %v1084, %v1022
      %v1086 = vadd.f32 %v1085, %v1023
      %v1087 = vadd.f32 %v1086, %v1024
      %v1088 = vadd.f32 %v1087, %v1025
      %v1089 = vadd.f32 %v1088, %v1026
      %v1090 = vadd.f32 %v1089, %v1027
      %v1091 = vadd.f32 %v1090, %v1028
      %v1092 = vadd.f32 %v1091, %v1029
      %v1093 = vadd.f32 %v1092, %v1030
      %v1094 = vadd.f32 %v1093, %v1031
      %v1095 = vadd.f32 %v1094, %v1032
      %v1096 = vadd.f32 %v1095, %v1033
      %v1097 = vadd.f32 %v1096, %v1034
      %v1098 = vadd.f32 %v1097, %v1035
      %v1099 = vadd.f32 %v1098, %v1036
      %v1100 = vadd.f32 %v1099, %v1037
      %v1101 = vadd.f32 %v1100, %v1038
      %v1102 = vadd.f32 %v1101, %v1039
      %v1103 = vadd.f32 %v1102, %v1040
      %v1104 = vadd.f32 %v1103, %v1041
      %v1105 = vadd.f32 %v1104, %v1042
      %v1106 = vadd.f32 %v1105, %v1043
      %v1107 = vadd.f32 %v1106, %v1044
      %v1108 = vadd.f32 %v1107, %v1045
      %v1109 = vadd.f32 %v1108, %v1046
      %v1110 = vadd.f32 %v1109, %v1047
      %v1111 = vadd.f32 %v1110, %v1048
      %v1112 = vadd.f32 %v1111, %v1049
      %v1113 = vadd.f32 %v1112, %v1050
      %v1114 = vadd.f32 %v1113, %v1051
      %v1115 = vadd.f32 %v1114, %v1052
      %v1116 = vadd.f32 %v1115, %v1053
      %v1117 = vadd.f32 %v1116, %v1054
      %v1118 = vadd.f32 %v1117, %v1055
      %v1119 = vadd.f32 %v1118, %v1056
      %v1120 = vadd.f32 %v1119, %v1057
      %v1121 = vadd.f32 %v1120, %v1058
      %v1122 = vadd.f32 %v1121, %v1059
      %v1123 = vadd.f32 %v1122, %v1060
      %v1124 = vadd.f32 %v1123, %v1061
      %v1125 = vadd.f32 %v1124, %v1062
      %v1126 = vrot.slane %v1125, 4
      %v1127 = vadd.f32 %v1125, %v1126
      %v1128 = vrot.slane %v1127, 2
      %v1129 = vadd.f32 %v1127, %v1128
      %v1130 = vrot.slane %v1129, 1
      %v1131 = vadd.f32 %v1129, %v1130
      %vm1132 = vcmask 1040384
      %v1133 = vsel %vm1132, %v998, %v1131
      %1134 = vst [vmem:[%s230] sm:$0x3] %v1133
      %s1135 = smul.u32 64, %s20
      %p1136 = scmp.lt.s32.totalorder %s19, 1
      %s1137 = scalar_select %p1136, %s19, 1
      %p1138 = scmp.lt.s32.totalorder %s1135, 127
      %s1139 = scalar_select %p1138, %s1135, 127
      %s1140 = smul.addr %s1137, 128
      %s1141 = sadd.s32 %s1139, %s1140
      %s1142 = smul.addr %s1141, 8
      %s1143 = scalar_lea.vmem %s2, %s1142
      %p1144 = scmp.lt.s32.totalorder %s19, 1
      %s1145 = scalar_select %p1144, %s19, 1
      %p1146 = scmp.lt.s32.totalorder %s20, 1
      %s1147 = scalar_select %p1146, %s20, 1
      %s1148 = smul.addr %s1145, 2
      %s1149 = sadd.s32 %s1147, %s1148
      %s1150 = smul.addr %s1149, 2
      %s1151 = scalar_lea.vmem %s3, %s1150
      // Predicated region
      $region29: #{upsampling_block_forward.6} parent=27 // pred_check
        %p1152 = pneg %p96
      $region30: #{upsampling_block_forward.6} parent=27 // pred_check_branch
        %1154 = sbr.rel (%p1152) target = $region32
      $region31: #{upsampling_block_forward.6} parent=27 // pred_region
        %s1155 = smul.u32 64, %s20
      $region32: #{upsampling_block_forward.6} parent=27 // pred_fallthru
        _
      // Predicated region
      $region33: #{upsampling_block_forward.6} parent=27 // pred_check
        %p1156 = pneg %p124
      $region34: #{upsampling_block_forward.6} parent=27 // pred_check_branch
        %1158 = sbr.rel (%p1156) target = $region36
      $region35: #{upsampling_block_forward.6} parent=27 // pred_region
        _
      $region36: #{upsampling_block_forward.6} parent=27 // pred_fallthru
        _
    $region28: #{upsampling_block_forward.6} parent=5 // pred_fallthru
      _
    %p1159 = scmp.le.s32.totalorder 2, %s10
    // Predicated region
    $region37: #{upsampling_block_forward.6} parent=5 // pred_check
      %p1160 = pneg %p1159
    $region38: #{upsampling_block_forward.6} parent=5 // pred_check_branch
      %1162 = sbr.rel (%p1160) target = $region40
    $region39: #{upsampling_block_forward.6} parent=5 // pred_region
      %s1163 = ssub.s32 %s10, 2
      // Predicated region
      $region41: #{upsampling_block_forward.6} parent=39 // pred_check
        %p1164 = pneg %p102
      $region42: #{upsampling_block_forward.6} parent=39 // pred_check_branch
        %1166 = sbr.rel (%p1164) target = $region44
      $region43: #{upsampling_block_forward.6} parent=39 // pred_region
        %s1167 = smul.u32 64, %s22
        %p1168 = scmp.lt.s32.totalorder %s21, 1
        %s1169 = scalar_select %p1168, %s21, 1
        %p1170 = scmp.lt.s32.totalorder %s1167, 127
        %s1171 = scalar_select %p1170, %s1167, 127
        %s1172 = smul.addr %s1169, 128
        %s1173 = sadd.s32 %s1171, %s1172
        %s1174 = smul.addr %s1173, 8
        %s1175 = scalar_lea.vmem %s2, %s1174
      $region44: #{upsampling_block_forward.6} parent=39 // pred_fallthru
        _
      // Predicated region
      $region45: #{upsampling_block_forward.6} parent=39 // pred_check
        %p1176 = pneg %p130
      $region46: #{upsampling_block_forward.6} parent=39 // pred_check_branch
        %1178 = sbr.rel (%p1176) target = $region48
      $region47: #{upsampling_block_forward.6} parent=39 // pred_region
        %p1179 = scmp.lt.s32.totalorder %s21, 1
        %s1180 = scalar_select %p1179, %s21, 1
        %p1181 = scmp.lt.s32.totalorder %s22, 1
        %s1182 = scalar_select %p1181, %s22, 1
        %s1183 = smul.addr %s1180, 2
        %s1184 = sadd.s32 %s1182, %s1183
        %s1185 = smul.addr %s1184, 2
        %s1186 = scalar_lea.vmem %s3, %s1185
      $region48: #{upsampling_block_forward.6} parent=39 // pred_fallthru
        _
    $region40: #{upsampling_block_forward.6} parent=5 // pred_fallthru
      _
  $region6: #{upsampling_block_forward.6} parent=0 // loop_footer
    %s14 = sadd.s32 1, %s10
  $region7: #{upsampling_block_forward.6} parent=0 // loop_footer_branch
    %9 = sbr.rel target = $region3
  $region8: #{upsampling_block_forward.6} parent=0 // loop_exit
    _

// kernel: upsampling_block_forward.7
$region0: #{upsampling_block_forward.7}
  #allocation0 [shape = 'u32[]', space=smem, size = 0x4, offset = 0x4, fixed_abs, tag = 'smem constant byte address 0x4 - core index']
  #allocation1 [shape = 'u32[144,128]{1,0:T(1,128)}', space=vmem, size = 0x12000, scoped, tag = 'internal scratch']
  %s0 = inlined_call_operand.vmem [shape: f32[2,1024,128], index: 0, kind: input, shape index: {}]
  %s1 = inlined_call_operand.vmem [shape: f32[1,128], index: 1, kind: input, shape index: {}]
  %s2 = inlined_call_operand.vmem [shape: f32[1,128], index: 2, kind: input, shape index: {}]
  %s3 = inlined_call_operand.vmem [shape: f32[2,1,128], index: 3, kind: input, shape index: {}]
  %s4 = inlined_call_operand.vmem [shape: bf16[2,1024,128], index: 4, kind: output, shape index: {}]
  %s5 = sld [smem:[#allocation0]]
  $region49: #{upsampling_block_forward.7} parent=0
    _
  %s7 = ssub.s32 1, %s5
  %s8 = scalar_select 0, %s7, %s5
  loop: start=0, step=1, limit=6
  $region2: #{upsampling_block_forward.7} parent=0 // loop_pre_header
    _
  $region3: #{upsampling_block_forward.7} parent=0 // loop_header
    %s10 = sphi 0, %s14
    %p11 = scmp.ge.s32.totalorder %s10, 6
    %s17 = sphi 0, %s29
    %s18 = sphi 0, %s25
    %s19 = sphi 0, %s17
    %s20 = sphi 0, %s18
    %s21 = sphi 0, %s19
    %s22 = sphi 0, %s20
    %s34 = sphi 0, %s36
    %s37 = sphi 0, %s34
    %s38 = sphi 0, %s37
    %s54 = sphi 0, %s38
    %s58 = sphi 0, %s58
    %s60 = sphi 0, %s58
    %s61 = sphi 0, %s60
    %s75 = sphi 0, %s61
    %s79 = sphi 0, %s79
    %s81 = sphi 0, %s79
    %s82 = sphi 0, %s81
    %s96 = sphi 0, %s82
    %s102 = sphi 0, %s104
    %s105 = sphi 0, %s102
    %s106 = sphi 0, %s105
    %s122 = sphi 0, %s106
    %s130 = sphi 0, %s132
    %s133 = sphi 0, %s130
    %s134 = sphi 0, %s133
    %s150 = sphi 0, %s134
  $region4: #{upsampling_block_forward.7} parent=0 // loop_header_branch
    %13 = sbr.rel (%p11) target = $region8
  $region5: #{upsampling_block_forward.7} parent=0 // loop_body
    %s15 = ssub.s32 %s10, 1
    %s16 = ssub.s32 %s10, 2
    %s23 = sadd.s32 1, %s18
    %p24 = scmp.ge.s32.totalorder %s23, 2
    %s25 = scalar_select %p24, 0, %s23
    %s26 = sadd.s32 1, %s17
    %s27 = scalar_select %p24, %s26, %s17
    %p28 = scmp.ge.s32.totalorder %s27, 2
    %s29 = scalar_select %p28, 0, %s27
    %s30 = ssub.s32 %s17, %s29
    %s31 = ssub.s32 %s18, %s25
    %s32 = sor.u32 %s30, %s31
    %p33 = scmp.eq.s32.totalorder %s32, 0
    %s35 = sadd.s32 %s34, 1
    %s36 = scalar_select %p33, %s34, %s35
    %p39 = pneg %p33
    %p40 = scmp.eq.s32.totalorder %s10, 3
    %p41 = por %p39, %p40
    %p42 = scmp.ne.s32.totalorder %s34, %s37
    %p43 = scmp.eq.s32.totalorder %s10, 0
    %p44 = por %p42, %p43
    %p45 = scmp.ne.s32.totalorder %s34, %s37
    %p46 = scmp.eq.s32.totalorder %s15, 3
    %p47 = por %p45, %p46
    %p48 = scmp.ne.s32.totalorder %s37, %s38
    %p49 = scmp.eq.s32.totalorder %s15, 0
    %p50 = por %p48, %p49
    %p51 = scmp.ne.s32.totalorder %s37, %s38
    %p52 = scmp.eq.s32.totalorder %s16, 3
    %p53 = por %p51, %p52
    %p55 = scmp.ne.s32.totalorder %s38, %s54
    %p56 = scmp.eq.s32.totalorder %s16, 0
    %p57 = por %p55, %p56
    %s59 = sadd.s32 %s58, 1
    %p62 = scmp.eq.s32.totalorder %s10, 3
    %p63 = scmp.ne.s32.totalorder %s58, %s60
    %p64 = scmp.eq.s32.totalorder %s10, 0
    %p65 = por %p63, %p64
    %p66 = scmp.ne.s32.totalorder %s58, %s60
    %p67 = scmp.eq.s32.totalorder %s15, 3
    %p68 = por %p66, %p67
    %p69 = scmp.ne.s32.totalorder %s60, %s61
    %p70 = scmp.eq.s32.totalorder %s15, 0
    %p71 = por %p69, %p70
    %p72 = scmp.ne.s32.totalorder %s60, %s61
    %p73 = scmp.eq.s32.totalorder %s16, 3
    %p74 = por %p72, %p73
    %p76 = scmp.ne.s32.totalorder %s61, %s75
    %p77 = scmp.eq.s32.totalorder %s16, 0
    %p78 = por %p76, %p77
    %s80 = sadd.s32 %s79, 1
    %p83 = scmp.eq.s32.totalorder %s10, 3
    %p84 = scmp.ne.s32.totalorder %s79, %s81
    %p85 = scmp.eq.s32.totalorder %s10, 0
    %p86 = por %p84, %p85
    %p87 = scmp.ne.s32.totalorder %s79, %s81
    %p88 = scmp.eq.s32.totalorder %s15, 3
    %p89 = por %p87, %p88
    %p90 = scmp.ne.s32.totalorder %s81, %s82
    %p91 = scmp.eq.s32.totalorder %s15, 0
    %p92 = por %p90, %p91
    %p93 = scmp.ne.s32.totalorder %s81, %s82
    %p94 = scmp.eq.s32.totalorder %s16, 3
    %p95 = por %p93, %p94
    %p97 = scmp.ne.s32.totalorder %s82, %s96
    %p98 = scmp.eq.s32.totalorder %s16, 0
    %p99 = por %p97, %p98
    %s100 = ssub.s32 %s17, %s29
    %p101 = scmp.eq.s32.totalorder %s100, 0
    %s103 = sadd.s32 %s102, 1
    %s104 = scalar_select %p101, %s102, %s103
    %p107 = pneg %p101
    %p108 = scmp.eq.s32.totalorder %s10, 3
    %p109 = por %p107, %p108
    %p110 = scmp.ne.s32.totalorder %s102, %s105
    %p111 = scmp.eq.s32.totalorder %s10, 0
    %p112 = por %p110, %p111
    %p113 = scmp.ne.s32.totalorder %s102, %s105
    %p114 = scmp.eq.s32.totalorder %s15, 3
    %p115 = por %p113, %p114
    %p116 = scmp.ne.s32.totalorder %s105, %s106
    %p117 = scmp.eq.s32.totalorder %s15, 0
    %p118 = por %p116, %p117
    %p119 = scmp.ne.s32.totalorder %s105, %s106
    %p120 = scmp.eq.s32.totalorder %s16, 3
    %p121 = por %p119, %p120
    %p123 = scmp.ne.s32.totalorder %s106, %s122
    %p124 = scmp.eq.s32.totalorder %s16, 0
    %p125 = por %p123, %p124
    %s126 = ssub.s32 %s17, %s29
    %s127 = ssub.s32 %s18, %s25
    %s128 = sor.u32 %s126, %s127
    %p129 = scmp.eq.s32.totalorder %s128, 0
    %s131 = sadd.s32 %s130, 1
    %s132 = scalar_select %p129, %s130, %s131
    %p135 = pneg %p129
    %p136 = scmp.eq.s32.totalorder %s10, 3
    %p137 = por %p135, %p136
    %p138 = scmp.ne.s32.totalorder %s130, %s133
    %p139 = scmp.eq.s32.totalorder %s10, 0
    %p140 = por %p138, %p139
    %p141 = scmp.ne.s32.totalorder %s130, %s133
    %p142 = scmp.eq.s32.totalorder %s15, 3
    %p143 = por %p141, %p142
    %p144 = scmp.ne.s32.totalorder %s133, %s134
    %p145 = scmp.eq.s32.totalorder %s15, 0
    %p146 = por %p144, %p145
    %p147 = scmp.ne.s32.totalorder %s133, %s134
    %p148 = scmp.eq.s32.totalorder %s16, 3
    %p149 = por %p147, %p148
    %p151 = scmp.ne.s32.totalorder %s134, %s150
    %p152 = scmp.eq.s32.totalorder %s16, 0
    %p153 = por %p151, %p152
    %p154 = scmp.le.s32.totalorder 1, %s10
    %p155 = scmp.lt.s32.totalorder %s10, 5
    %p156 = pnand %p154, %p155
    %p157 = pneg %p156
    // Predicated region
    $region9: #{upsampling_block_forward.7} parent=5 // pred_check
      _
    $region10: #{upsampling_block_forward.7} parent=5 // pred_check_branch
      %159 = sbr.rel (%p156) target = $region12
    $region11: #{upsampling_block_forward.7} parent=5 // pred_region
      %s160 = ssub.s32 %s10, 1
      // Predicated region
      $region13: #{upsampling_block_forward.7} parent=11 // pred_check
        %p161 = pneg %p71
      $region14: #{upsampling_block_forward.7} parent=11 // pred_check_branch
        %163 = sbr.rel (%p161) target = $region16
      $region15: #{upsampling_block_forward.7} parent=11 // pred_region
        _
      $region16: #{upsampling_block_forward.7} parent=11 // pred_fallthru
        _
      // Predicated region
      $region17: #{upsampling_block_forward.7} parent=11 // pred_check
        %p164 = pneg %p92
      $region18: #{upsampling_block_forward.7} parent=11 // pred_check_branch
        %166 = sbr.rel (%p164) target = $region20
      $region19: #{upsampling_block_forward.7} parent=11 // pred_region
        _
      $region20: #{upsampling_block_forward.7} parent=11 // pred_fallthru
        _
    $region12: #{upsampling_block_forward.7} parent=5 // pred_fallthru
      _
    %p167 = scmp.lt.s32.totalorder %s10, 4
    // Predicated region
    $region21: #{upsampling_block_forward.7} parent=5 // pred_check
      %p168 = pneg %p167
    $region22: #{upsampling_block_forward.7} parent=5 // pred_check_branch
      %170 = sbr.rel (%p168) target = $region24
    $region23: #{upsampling_block_forward.7} parent=5 // pred_region
      // Predicated region
      $region25: #{upsampling_block_forward.7} parent=23 // pred_check
        %p171 = pneg %p44
      $region26: #{upsampling_block_forward.7} parent=23 // pred_check_branch
        %173 = sbr.rel (%p171) target = $region28
      $region27: #{upsampling_block_forward.7} parent=23 // pred_region
        %s174 = smul.u32 64, %s18
        %p175 = scmp.lt.s32.totalorder %s17, 1
        %s176 = scalar_select %p175, %s17, 1
        %p177 = scmp.lt.s32.totalorder %s174, 127
        %s178 = scalar_select %p177, %s174, 127
        %s179 = smul.addr %s176, 128
        %s180 = sadd.s32 %s178, %s179
        %s181 = smul.addr %s180, 8
        %s182 = scalar_lea.vmem %s0, %s181
        %s183 = smul.u32 64, %s18
      $region28: #{upsampling_block_forward.7} parent=23 // pred_fallthru
        _
      // Predicated region
      $region29: #{upsampling_block_forward.7} parent=23 // pred_check
        %p184 = pneg %p112
      $region30: #{upsampling_block_forward.7} parent=23 // pred_check_branch
        %186 = sbr.rel (%p184) target = $region32
      $region31: #{upsampling_block_forward.7} parent=23 // pred_region
        %p187 = scmp.lt.s32.totalorder %s17, 1
        %s188 = scalar_select %p187, %s17, 1
        %s189 = scalar_lea.vmem %s3, %s188
      $region32: #{upsampling_block_forward.7} parent=23 // pred_fallthru
        _
    $region24: #{upsampling_block_forward.7} parent=5 // pred_fallthru
      _
    %p190 = scmp.le.s32.totalorder 1, %s10
    %p191 = scmp.lt.s32.totalorder %s10, 5
    %p192 = pnand %p190, %p191
    %p193 = pneg %p192
    // Predicated region
    $region33: #{upsampling_block_forward.7} parent=5 // pred_check
      _
    $region34: #{upsampling_block_forward.7} parent=5 // pred_check_branch
      %195 = sbr.rel (%p192) target = $region36
    $region35: #{upsampling_block_forward.7} parent=5 // pred_region
      %s196 = ssub.s32 %s10, 1
      %s197 = smul.u32 64, %s20
      %p198 = scmp.lt.s32.totalorder %s19, 1
      %s199 = scalar_select %p198, %s19, 1
      %p200 = scmp.lt.s32.totalorder %s197, 127
      %s201 = scalar_select %p200, %s197, 127
      %s202 = smul.addr %s199, 128
      %s203 = sadd.s32 %s201, %s202
      %s204 = smul.addr %s203, 8
      %s205 = scalar_lea.vmem %s0, %s204
      %p206 = pneg %p50
      %p207 = pneg %p47
      %p208 = pneg %p71
      %p209 = pneg %p68
      %p210 = pneg %p92
      %p211 = pneg %p89
      %p212 = scmp.lt.s32.totalorder %s19, 1
      %s213 = scalar_select %p212, %s19, 1
      %s214 = scalar_lea.vmem %s3, %s213
      %p215 = pneg %p118
      %p216 = pneg %p115
      %p217 = pneg %p146
      %p218 = pneg %p143
      %s219 = smul.u32 64, %s20
      %p220 = scmp.lt.s32.totalorder %s19, 1
      %s221 = scalar_select %p220, %s19, 1
      %p222 = scmp.lt.s32.totalorder %s219, 127
      %s223 = scalar_select %p222, %s219, 127
      %s224 = smul.addr %s221, 128
      %s225 = sadd.s32 %s223, %s224
      %s226 = smul.addr %s225, 4
      %s227 = scalar_lea.vmem %s4, %s226
      %s228 = smul.u32 64, %s20
      %p229 = scmp.lt.s32.totalorder %s19, 1
      %s230 = scalar_select %p229, %s19, 1
      %p231 = scmp.lt.s32.totalorder %s228, 127
      %s232 = scalar_select %p231, %s228, 127
      %s233 = smul.addr %s230, 128
      %s234 = sadd.s32 %s232, %s233
      %s235 = smul.addr %s234, 8
      %s236 = scalar_lea.vmem %s0, %s235
      %s237 = smul.u32 64, %s20
      %p238 = scmp.lt.s32.totalorder %s19, 1
      %s239 = scalar_select %p238, %s19, 1
      %s240 = scalar_lea.vmem %s3, %s239
      %s241 = smul.u32 64, %s20
      %p242 = scmp.lt.s32.totalorder %s19, 1
      %s243 = scalar_select %p242, %s19, 1
      %p244 = scmp.lt.s32.totalorder %s241, 127
      %s245 = scalar_select %p244, %s241, 127
      %s246 = smul.addr %s243, 128
      %s247 = sadd.s32 %s245, %s246
      %s248 = smul.addr %s247, 4
      %s249 = scalar_lea.vmem %s4, %s248
      %s250 = smul.u32 64, %s20
      %v251 = vld [vmem:[%s236] sm:$0xff]
      %v252 = vld [vmem:[%s236 + $0x8] sm:$0xff]
      %v253 = vld [vmem:[%s236 + $0x10] sm:$0xff]
      %v254 = vld [vmem:[%s236 + $0x18] sm:$0xff]
      %v255 = vld [vmem:[%s236 + $0x20] sm:$0xff]
      %v256 = vld [vmem:[%s236 + $0x28] sm:$0xff]
      %v257 = vld [vmem:[%s236 + $0x30] sm:$0xff]
      %v258 = vld [vmem:[%s236 + $0x38] sm:$0xff]
      %v259 = vld [vmem:[%s236 + $0x40] sm:$0xff]
      %v260 = vld [vmem:[%s236 + $0x48] sm:$0xff]
      %v261 = vld [vmem:[%s236 + $0x50] sm:$0xff]
      %v262 = vld [vmem:[%s236 + $0x58] sm:$0xff]
      %v263 = vld [vmem:[%s236 + $0x60] sm:$0xff]
      %v264 = vld [vmem:[%s236 + $0x68] sm:$0xff]
      %v265 = vld [vmem:[%s236 + $0x70] sm:$0xff]
      %v266 = vld [vmem:[%s236 + $0x78] sm:$0xff]
      %v267 = vld [vmem:[%s236 + $0x80] sm:$0xff]
      %v268 = vld [vmem:[%s236 + $0x88] sm:$0xff]
      %v269 = vld [vmem:[%s236 + $0x90] sm:$0xff]
      %v270 = vld [vmem:[%s236 + $0x98] sm:$0xff]
      %v271 = vld [vmem:[%s236 + $0xa0] sm:$0xff]
      %v272 = vld [vmem:[%s236 + $0xa8] sm:$0xff]
      %v273 = vld [vmem:[%s236 + $0xb0] sm:$0xff]
      %v274 = vld [vmem:[%s236 + $0xb8] sm:$0xff]
      %v275 = vld [vmem:[%s236 + $0xc0] sm:$0xff]
      %v276 = vld [vmem:[%s236 + $0xc8] sm:$0xff]
      %v277 = vld [vmem:[%s236 + $0xd0] sm:$0xff]
      %v278 = vld [vmem:[%s236 + $0xd8] sm:$0xff]
      %v279 = vld [vmem:[%s236 + $0xe0] sm:$0xff]
      %v280 = vld [vmem:[%s236 + $0xe8] sm:$0xff]
      %v281 = vld [vmem:[%s236 + $0xf0] sm:$0xff]
      %v282 = vld [vmem:[%s236 + $0xf8] sm:$0xff]
      %v283 = vld [vmem:[%s236 + $0x100] sm:$0xff]
      %v284 = vld [vmem:[%s236 + $0x108] sm:$0xff]
      %v285 = vld [vmem:[%s236 + $0x110] sm:$0xff]
      %v286 = vld [vmem:[%s236 + $0x118] sm:$0xff]
      %v287 = vld [vmem:[%s236 + $0x120] sm:$0xff]
      %v288 = vld [vmem:[%s236 + $0x128] sm:$0xff]
      %v289 = vld [vmem:[%s236 + $0x130] sm:$0xff]
      %v290 = vld [vmem:[%s236 + $0x138] sm:$0xff]
      %v291 = vld [vmem:[%s236 + $0x140] sm:$0xff]
      %v292 = vld [vmem:[%s236 + $0x148] sm:$0xff]
      %v293 = vld [vmem:[%s236 + $0x150] sm:$0xff]
      %v294 = vld [vmem:[%s236 + $0x158] sm:$0xff]
      %v295 = vld [vmem:[%s236 + $0x160] sm:$0xff]
      %v296 = vld [vmem:[%s236 + $0x168] sm:$0xff]
      %v297 = vld [vmem:[%s236 + $0x170] sm:$0xff]
      %v298 = vld [vmem:[%s236 + $0x178] sm:$0xff]
      %v299 = vld [vmem:[%s236 + $0x180] sm:$0xff]
      %v300 = vld [vmem:[%s236 + $0x188] sm:$0xff]
      %v301 = vld [vmem:[%s236 + $0x190] sm:$0xff]
      %v302 = vld [vmem:[%s236 + $0x198] sm:$0xff]
      %v303 = vld [vmem:[%s236 + $0x1a0] sm:$0xff]
      %v304 = vld [vmem:[%s236 + $0x1a8] sm:$0xff]
      %v305 = vld [vmem:[%s236 + $0x1b0] sm:$0xff]
      %v306 = vld [vmem:[%s236 + $0x1b8] sm:$0xff]
      %v307 = vld [vmem:[%s236 + $0x1c0] sm:$0xff]
      %v308 = vld [vmem:[%s236 + $0x1c8] sm:$0xff]
      %v309 = vld [vmem:[%s236 + $0x1d0] sm:$0xff]
      %v310 = vld [vmem:[%s236 + $0x1d8] sm:$0xff]
      %v311 = vld [vmem:[%s236 + $0x1e0] sm:$0xff]
      %v312 = vld [vmem:[%s236 + $0x1e8] sm:$0xff]
      %v313 = vld [vmem:[%s236 + $0x1f0] sm:$0xff]
      %v314 = vld [vmem:[%s236 + $0x1f8] sm:$0xff]
      %v315 = vld [vmem:[%s1] sm:$0x1]
      %v317 = vlaneseq
      %v318 = vshrl.u32 %v317, 7
      %v319 = vsub.s32 0, %v318
      %v320 = vrot.slane %v315, %v319
      %v322 = vmul.f32 %v251, %v320
      %v323 = vmul.f32 %v252, %v320
      %v324 = vmul.f32 %v253, %v320
      %v325 = vmul.f32 %v254, %v320
      %v326 = vmul.f32 %v255, %v320
      %v327 = vmul.f32 %v256, %v320
      %v328 = vmul.f32 %v257, %v320
      %v329 = vmul.f32 %v258, %v320
      %v330 = vmul.f32 %v259, %v320
      %v331 = vmul.f32 %v260, %v320
      %v332 = vmul.f32 %v261, %v320
      %v333 = vmul.f32 %v262, %v320
      %v334 = vmul.f32 %v263, %v320
      %v335 = vmul.f32 %v264, %v320
      %v336 = vmul.f32 %v265, %v320
      %v337 = vmul.f32 %v266, %v320
      %v338 = vmul.f32 %v267, %v320
      %v339 = vmul.f32 %v268, %v320
      %v340 = vmul.f32 %v269, %v320
      %v341 = vmul.f32 %v270, %v320
      %v342 = vmul.f32 %v271, %v320
      %v343 = vmul.f32 %v272, %v320
      %v344 = vmul.f32 %v273, %v320
      %v345 = vmul.f32 %v274, %v320
      %v346 = vmul.f32 %v275, %v320
      %v347 = vmul.f32 %v276, %v320
      %v348 = vmul.f32 %v277, %v320
      %v349 = vmul.f32 %v278, %v320
      %v350 = vmul.f32 %v279, %v320
      %v351 = vmul.f32 %v280, %v320
      %v352 = vmul.f32 %v281, %v320
      %v353 = vmul.f32 %v282, %v320
      %v354 = vmul.f32 %v283, %v320
      %v355 = vmul.f32 %v284, %v320
      %v356 = vmul.f32 %v285, %v320
      %v357 = vmul.f32 %v286, %v320
      %v358 = vmul.f32 %v287, %v320
      %v359 = vmul.f32 %v288, %v320
      %v360 = vmul.f32 %v289, %v320
      %v361 = vmul.f32 %v290, %v320
      %v362 = vmul.f32 %v291, %v320
      %v363 = vmul.f32 %v292, %v320
      %v364 = vmul.f32 %v293, %v320
      %v365 = vmul.f32 %v294, %v320
      %v366 = vmul.f32 %v295, %v320
      %v367 = vmul.f32 %v296, %v320
      %v368 = vmul.f32 %v297, %v320
      %v369 = vmul.f32 %v298, %v320
      %v370 = vmul.f32 %v299, %v320
      %v371 = vmul.f32 %v300, %v320
      %v372 = vmul.f32 %v301, %v320
      %v373 = vmul.f32 %v302, %v320
      %v374 = vmul.f32 %v303, %v320
      %v375 = vmul.f32 %v304, %v320
      %v376 = vmul.f32 %v305, %v320
      %v377 = vmul.f32 %v306, %v320
      %v378 = vmul.f32 %v307, %v320
      %v379 = vmul.f32 %v308, %v320
      %v380 = vmul.f32 %v309, %v320
      %v381 = vmul.f32 %v310, %v320
      %v382 = vmul.f32 %v311, %v320
      %v383 = vmul.f32 %v312, %v320
      %v384 = vmul.f32 %v313, %v320
      %v385 = vmul.f32 %v314, %v320
      %v386 = vld [vmem:[%s2] sm:$0x1]
      %v388 = vlaneseq
      %v389 = vshrl.u32 %v388, 7
      %v390 = vsub.s32 0, %v389
      %v391 = vrot.slane %v386, %v390
      %v393 = vadd.f32 %v322, %v391
      %v394 = vadd.f32 %v323, %v391
      %v395 = vadd.f32 %v324, %v391
      %v396 = vadd.f32 %v325, %v391
      %v397 = vadd.f32 %v326, %v391
      %v398 = vadd.f32 %v327, %v391
      %v399 = vadd.f32 %v328, %v391
      %v400 = vadd.f32 %v329, %v391
      %v401 = vadd.f32 %v330, %v391
      %v402 = vadd.f32 %v331, %v391
      %v403 = vadd.f32 %v332, %v391
      %v404 = vadd.f32 %v333, %v391
      %v405 = vadd.f32 %v334, %v391
      %v406 = vadd.f32 %v335, %v391
      %v407 = vadd.f32 %v336, %v391
      %v408 = vadd.f32 %v337, %v391
      %v409 = vadd.f32 %v338, %v391
      %v410 = vadd.f32 %v339, %v391
      %v411 = vadd.f32 %v340, %v391
      %v412 = vadd.f32 %v341, %v391
      %v413 = vadd.f32 %v342, %v391
      %v414 = vadd.f32 %v343, %v391
      %v415 = vadd.f32 %v344, %v391
      %v416 = vadd.f32 %v345, %v391
      %v417 = vadd.f32 %v346, %v391
      %v418 = vadd.f32 %v347, %v391
      %v419 = vadd.f32 %v348, %v391
      %v420 = vadd.f32 %v349, %v391
      %v421 = vadd.f32 %v350, %v391
      %v422 = vadd.f32 %v351, %v391
      %v423 = vadd.f32 %v352, %v391
      %v424 = vadd.f32 %v353, %v391
      %v425 = vadd.f32 %v354, %v391
      %v426 = vadd.f32 %v355, %v391
      %v427 = vadd.f32 %v356, %v391
      %v428 = vadd.f32 %v357, %v391
      %v429 = vadd.f32 %v358, %v391
      %v430 = vadd.f32 %v359, %v391
      %v431 = vadd.f32 %v360, %v391
      %v432 = vadd.f32 %v361, %v391
      %v433 = vadd.f32 %v362, %v391
      %v434 = vadd.f32 %v363, %v391
      %v435 = vadd.f32 %v364, %v391
      %v436 = vadd.f32 %v365, %v391
      %v437 = vadd.f32 %v366, %v391
      %v438 = vadd.f32 %v367, %v391
      %v439 = vadd.f32 %v368, %v391
      %v440 = vadd.f32 %v369, %v391
      %v441 = vadd.f32 %v370, %v391
      %v442 = vadd.f32 %v371, %v391
      %v443 = vadd.f32 %v372, %v391
      %v444 = vadd.f32 %v373, %v391
      %v445 = vadd.f32 %v374, %v391
      %v446 = vadd.f32 %v375, %v391
      %v447 = vadd.f32 %v376, %v391
      %v448 = vadd.f32 %v377, %v391
      %v449 = vadd.f32 %v378, %v391
      %v450 = vadd.f32 %v379, %v391
      %v451 = vadd.f32 %v380, %v391
      %v452 = vadd.f32 %v381, %v391
      %v453 = vadd.f32 %v382, %v391
      %v454 = vadd.f32 %v383, %v391
      %v455 = vadd.f32 %v384, %v391
      %v456 = vadd.f32 %v385, %v391
      %v457 = vmax.f32 %v393, 0.0
      %v458 = vmax.f32 %v394, 0.0
      %v459 = vmax.f32 %v395, 0.0
      %v460 = vmax.f32 %v396, 0.0
      %v461 = vmax.f32 %v397, 0.0
      %v462 = vmax.f32 %v398, 0.0
      %v463 = vmax.f32 %v399, 0.0
      %v464 = vmax.f32 %v400, 0.0
      %v465 = vmax.f32 %v401, 0.0
      %v466 = vmax.f32 %v402, 0.0
      %v467 = vmax.f32 %v403, 0.0
      %v468 = vmax.f32 %v404, 0.0
      %v469 = vmax.f32 %v405, 0.0
      %v470 = vmax.f32 %v406, 0.0
      %v471 = vmax.f32 %v407, 0.0
      %v472 = vmax.f32 %v408, 0.0
      %v473 = vmax.f32 %v409, 0.0
      %v474 = vmax.f32 %v410, 0.0
      %v475 = vmax.f32 %v411, 0.0
      %v476 = vmax.f32 %v412, 0.0
      %v477 = vmax.f32 %v413, 0.0
      %v478 = vmax.f32 %v414, 0.0
      %v479 = vmax.f32 %v415, 0.0
      %v480 = vmax.f32 %v416, 0.0
      %v481 = vmax.f32 %v417, 0.0
      %v482 = vmax.f32 %v418, 0.0
      %v483 = vmax.f32 %v419, 0.0
      %v484 = vmax.f32 %v420, 0.0
      %v485 = vmax.f32 %v421, 0.0
      %v486 = vmax.f32 %v422, 0.0
      %v487 = vmax.f32 %v423, 0.0
      %v488 = vmax.f32 %v424, 0.0
      %v489 = vmax.f32 %v425, 0.0
      %v490 = vmax.f32 %v426, 0.0
      %v491 = vmax.f32 %v427, 0.0
      %v492 = vmax.f32 %v428, 0.0
      %v493 = vmax.f32 %v429, 0.0
      %v494 = vmax.f32 %v430, 0.0
      %v495 = vmax.f32 %v431, 0.0
      %v496 = vmax.f32 %v432, 0.0
      %v497 = vmax.f32 %v433, 0.0
      %v498 = vmax.f32 %v434, 0.0
      %v499 = vmax.f32 %v435, 0.0
      %v500 = vmax.f32 %v436, 0.0
      %v501 = vmax.f32 %v437, 0.0
      %v502 = vmax.f32 %v438, 0.0
      %v503 = vmax.f32 %v439, 0.0
      %v504 = vmax.f32 %v440, 0.0
      %v505 = vmax.f32 %v441, 0.0
      %v506 = vmax.f32 %v442, 0.0
      %v507 = vmax.f32 %v443, 0.0
      %v508 = vmax.f32 %v444, 0.0
      %v509 = vmax.f32 %v445, 0.0
      %v510 = vmax.f32 %v446, 0.0
      %v511 = vmax.f32 %v447, 0.0
      %v512 = vmax.f32 %v448, 0.0
      %v513 = vmax.f32 %v449, 0.0
      %v514 = vmax.f32 %v450, 0.0
      %v515 = vmax.f32 %v451, 0.0
      %v516 = vmax.f32 %v452, 0.0
      %v517 = vmax.f32 %v453, 0.0
      %v518 = vmax.f32 %v454, 0.0
      %v519 = vmax.f32 %v455, 0.0
      %v520 = vmax.f32 %v456, 0.0
      %v521 = vld [vmem:[%s240] sm:$0x1]
      %v523 = vlaneseq
      %v524 = vshrl.u32 %v523, 7
      %v525 = vsub.s32 0, %v524
      %v526 = vrot.slane %v521, %v525
      %v528 = vadd.f32 %v457, %v526
      %v529 = vadd.f32 %v458, %v526
      %v530 = vadd.f32 %v459, %v526
      %v531 = vadd.f32 %v460, %v526
      %v532 = vadd.f32 %v461, %v526
      %v533 = vadd.f32 %v462, %v526
      %v534 = vadd.f32 %v463, %v526
      %v535 = vadd.f32 %v464, %v526
      %v536 = vadd.f32 %v465, %v526
      %v537 = vadd.f32 %v466, %v526
      %v538 = vadd.f32 %v467, %v526
      %v539 = vadd.f32 %v468, %v526
      %v540 = vadd.f32 %v469, %v526
      %v541 = vadd.f32 %v470, %v526
      %v542 = vadd.f32 %v471, %v526
      %v543 = vadd.f32 %v472, %v526
      %v544 = vadd.f32 %v473, %v526
      %v545 = vadd.f32 %v474, %v526
      %v546 = vadd.f32 %v475, %v526
      %v547 = vadd.f32 %v476, %v526
      %v548 = vadd.f32 %v477, %v526
      %v549 = vadd.f32 %v478, %v526
      %v550 = vadd.f32 %v479, %v526
      %v551 = vadd.f32 %v480, %v526
      %v552 = vadd.f32 %v481, %v526
      %v553 = vadd.f32 %v482, %v526
      %v554 = vadd.f32 %v483, %v526
      %v555 = vadd.f32 %v484, %v526
      %v556 = vadd.f32 %v485, %v526
      %v557 = vadd.f32 %v486, %v526
      %v558 = vadd.f32 %v487, %v526
      %v559 = vadd.f32 %v488, %v526
      %v560 = vadd.f32 %v489, %v526
      %v561 = vadd.f32 %v490, %v526
      %v562 = vadd.f32 %v491, %v526
      %v563 = vadd.f32 %v492, %v526
      %v564 = vadd.f32 %v493, %v526
      %v565 = vadd.f32 %v494, %v526
      %v566 = vadd.f32 %v495, %v526
      %v567 = vadd.f32 %v496, %v526
      %v568 = vadd.f32 %v497, %v526
      %v569 = vadd.f32 %v498, %v526
      %v570 = vadd.f32 %v499, %v526
      %v571 = vadd.f32 %v500, %v526
      %v572 = vadd.f32 %v501, %v526
      %v573 = vadd.f32 %v502, %v526
      %v574 = vadd.f32 %v503, %v526
      %v575 = vadd.f32 %v504, %v526
      %v576 = vadd.f32 %v505, %v526
      %v577 = vadd.f32 %v506, %v526
      %v578 = vadd.f32 %v507, %v526
      %v579 = vadd.f32 %v508, %v526
      %v580 = vadd.f32 %v509, %v526
      %v581 = vadd.f32 %v510, %v526
      %v582 = vadd.f32 %v511, %v526
      %v583 = vadd.f32 %v512, %v526
      %v584 = vadd.f32 %v513, %v526
      %v585 = vadd.f32 %v514, %v526
      %v586 = vadd.f32 %v515, %v526
      %v587 = vadd.f32 %v516, %v526
      %v588 = vadd.f32 %v517, %v526
      %v589 = vadd.f32 %v518, %v526
      %v590 = vadd.f32 %v519, %v526
      %v591 = vadd.f32 %v520, %v526
      %v592 = vpack.c.bf16 %v529, %v528
      %v593 = vpack.c.bf16 %v531, %v530
      %v594 = vpack.c.bf16 %v533, %v532
      %v595 = vpack.c.bf16 %v535, %v534
      %v596 = vpack.c.bf16 %v537, %v536
      %v597 = vpack.c.bf16 %v539, %v538
      %v598 = vpack.c.bf16 %v541, %v540
      %v599 = vpack.c.bf16 %v543, %v542
      %v600 = vpack.c.bf16 %v545, %v544
      %v601 = vpack.c.bf16 %v547, %v546
      %v602 = vpack.c.bf16 %v549, %v548
      %v603 = vpack.c.bf16 %v551, %v550
      %v604 = vpack.c.bf16 %v553, %v552
      %v605 = vpack.c.bf16 %v555, %v554
      %v606 = vpack.c.bf16 %v557, %v556
      %v607 = vpack.c.bf16 %v559, %v558
      %v608 = vpack.c.bf16 %v561, %v560
      %v609 = vpack.c.bf16 %v563, %v562
      %v610 = vpack.c.bf16 %v565, %v564
      %v611 = vpack.c.bf16 %v567, %v566
      %v612 = vpack.c.bf16 %v569, %v568
      %v613 = vpack.c.bf16 %v571, %v570
      %v614 = vpack.c.bf16 %v573, %v572
      %v615 = vpack.c.bf16 %v575, %v574
      %v616 = vpack.c.bf16 %v577, %v576
      %v617 = vpack.c.bf16 %v579, %v578
      %v618 = vpack.c.bf16 %v581, %v580
      %v619 = vpack.c.bf16 %v583, %v582
      %v620 = vpack.c.bf16 %v585, %v584
      %v621 = vpack.c.bf16 %v587, %v586
      %v622 = vpack.c.bf16 %v589, %v588
      %v623 = vpack.c.bf16 %v591, %v590
      %v656 = vunpack.c.l.b16 %v592
      %v657 = vunpack.c.h.b16 %v592
      %v658 = vunpack.c.l.b16 %v593
      %v659 = vunpack.c.h.b16 %v593
      %v660 = vunpack.c.l.b16 %v594
      %v661 = vunpack.c.h.b16 %v594
      %v662 = vunpack.c.l.b16 %v595
      %v663 = vunpack.c.h.b16 %v595
      %v664 = vunpack.c.l.b16 %v596
      %v665 = vunpack.c.h.b16 %v596
      %v666 = vunpack.c.l.b16 %v597
      %v667 = vunpack.c.h.b16 %v597
      %v668 = vunpack.c.l.b16 %v598
      %v669 = vunpack.c.h.b16 %v598
      %v670 = vunpack.c.l.b16 %v599
      %v671 = vunpack.c.h.b16 %v599
      %v672 = vunpack.c.l.b16 %v600
      %v673 = vunpack.c.h.b16 %v600
      %v674 = vunpack.c.l.b16 %v601
      %v675 = vunpack.c.h.b16 %v601
      %v676 = vunpack.c.l.b16 %v602
      %v677 = vunpack.c.h.b16 %v602
      %v678 = vunpack.c.l.b16 %v603
      %v679 = vunpack.c.h.b16 %v603
      %v680 = vunpack.c.l.b16 %v604
      %v681 = vunpack.c.h.b16 %v604
      %v682 = vunpack.c.l.b16 %v605
      %v683 = vunpack.c.h.b16 %v605
      %v684 = vunpack.c.l.b16 %v606
      %v685 = vunpack.c.h.b16 %v606
      %v686 = vunpack.c.l.b16 %v607
      %v687 = vunpack.c.h.b16 %v607
      %v688 = vunpack.c.l.b16 %v608
      %v689 = vunpack.c.h.b16 %v608
      %v690 = vunpack.c.l.b16 %v609
      %v691 = vunpack.c.h.b16 %v609
      %v692 = vunpack.c.l.b16 %v610
      %v693 = vunpack.c.h.b16 %v610
      %v694 = vunpack.c.l.b16 %v611
      %v695 = vunpack.c.h.b16 %v611
      %v696 = vunpack.c.l.b16 %v612
      %v697 = vunpack.c.h.b16 %v612
      %v698 = vunpack.c.l.b16 %v613
      %v699 = vunpack.c.h.b16 %v613
      %v700 = vunpack.c.l.b16 %v614
      %v701 = vunpack.c.h.b16 %v614
      %v702 = vunpack.c.l.b16 %v615
      %v703 = vunpack.c.h.b16 %v615
      %v704 = vunpack.c.l.b16 %v616
      %v705 = vunpack.c.h.b16 %v616
      %v706 = vunpack.c.l.b16 %v617
      %v707 = vunpack.c.h.b16 %v617
      %v708 = vunpack.c.l.b16 %v618
      %v709 = vunpack.c.h.b16 %v618
      %v710 = vunpack.c.l.b16 %v619
      %v711 = vunpack.c.h.b16 %v619
      %v712 = vunpack.c.l.b16 %v620
      %v713 = vunpack.c.h.b16 %v620
      %v714 = vunpack.c.l.b16 %v621
      %v715 = vunpack.c.h.b16 %v621
      %v716 = vunpack.c.l.b16 %v622
      %v717 = vunpack.c.h.b16 %v622
      %v718 = vunpack.c.l.b16 %v623
      %v719 = vunpack.c.h.b16 %v623
      %v720 = vpack.c.b16 %v656, %v656
      %v721 = vpack.c.b16 %v657, %v657
      %v722 = vpack.c.b16 %v658, %v658
      %v723 = vpack.c.b16 %v659, %v659
      %v724 = vpack.c.b16 %v660, %v660
      %v725 = vpack.c.b16 %v661, %v661
      %v726 = vpack.c.b16 %v662, %v662
      %v727 = vpack.c.b16 %v663, %v663
      %v728 = vpack.c.b16 %v664, %v664
      %v729 = vpack.c.b16 %v665, %v665
      %v730 = vpack.c.b16 %v666, %v666
      %v731 = vpack.c.b16 %v667, %v667
      %v732 = vpack.c.b16 %v668, %v668
      %v733 = vpack.c.b16 %v669, %v669
      %v734 = vpack.c.b16 %v670, %v670
      %v735 = vpack.c.b16 %v671, %v671
      %v736 = vpack.c.b16 %v672, %v672
      %v737 = vpack.c.b16 %v673, %v673
      %v738 = vpack.c.b16 %v674, %v674
      %v739 = vpack.c.b16 %v675, %v675
      %v740 = vpack.c.b16 %v676, %v676
      %v741 = vpack.c.b16 %v677, %v677
      %v742 = vpack.c.b16 %v678, %v678
      %v743 = vpack.c.b16 %v679, %v679
      %v744 = vpack.c.b16 %v680, %v680
      %v745 = vpack.c.b16 %v681, %v681
      %v746 = vpack.c.b16 %v682, %v682
      %v747 = vpack.c.b16 %v683, %v683
      %v748 = vpack.c.b16 %v684, %v684
      %v749 = vpack.c.b16 %v685, %v685
      %v750 = vpack.c.b16 %v686, %v686
      %v751 = vpack.c.b16 %v687, %v687
      %v752 = vpack.c.b16 %v688, %v688
      %v753 = vpack.c.b16 %v689, %v689
      %v754 = vpack.c.b16 %v690, %v690
      %v755 = vpack.c.b16 %v691, %v691
      %v756 = vpack.c.b16 %v692, %v692
      %v757 = vpack.c.b16 %v693, %v693
      %v758 = vpack.c.b16 %v694, %v694
      %v759 = vpack.c.b16 %v695, %v695
      %v760 = vpack.c.b16 %v696, %v696
      %v761 = vpack.c.b16 %v697, %v697
      %v762 = vpack.c.b16 %v698, %v698
      %v763 = vpack.c.b16 %v699, %v699
      %v764 = vpack.c.b16 %v700, %v700
      %v765 = vpack.c.b16 %v701, %v701
      %v766 = vpack.c.b16 %v702, %v702
      %v767 = vpack.c.b16 %v703, %v703
      %v768 = vpack.c.b16 %v704, %v704
      %v769 = vpack.c.b16 %v705, %v705
      %v770 = vpack.c.b16 %v706, %v706
      %v771 = vpack.c.b16 %v707, %v707
      %v772 = vpack.c.b16 %v708, %v708
      %v773 = vpack.c.b16 %v709, %v709
      %v774 = vpack.c.b16 %v710, %v710
      %v775 = vpack.c.b16 %v711, %v711
      %v776 = vpack.c.b16 %v712, %v712
      %v777 = vpack.c.b16 %v713, %v713
      %v778 = vpack.c.b16 %v714, %v714
      %v779 = vpack.c.b16 %v715, %v715
      %v780 = vpack.c.b16 %v716, %v716
      %v781 = vpack.c.b16 %v717, %v717
      %v782 = vpack.c.b16 %v718, %v718
      %v783 = vpack.c.b16 %v719, %v719
      %848 = vst [vmem:[%s249] sm:$0xf] %v720
      %849 = vst [vmem:[%s249 + $0x4] sm:$0xf] %v721
      %850 = vst [vmem:[%s249 + $0x8] sm:$0xf] %v722
      %851 = vst [vmem:[%s249 + $0xc] sm:$0xf] %v723
      %852 = vst [vmem:[%s249 + $0x10] sm:$0xf] %v724
      %853 = vst [vmem:[%s249 + $0x14] sm:$0xf] %v725
      %854 = vst [vmem:[%s249 + $0x18] sm:$0xf] %v726
      %855 = vst [vmem:[%s249 + $0x1c] sm:$0xf] %v727
      %856 = vst [vmem:[%s249 + $0x20] sm:$0xf] %v728
      %857 = vst [vmem:[%s249 + $0x24] sm:$0xf] %v729
      %858 = vst [vmem:[%s249 + $0x28] sm:$0xf] %v730
      %859 = vst [vmem:[%s249 + $0x2c] sm:$0xf] %v731
      %860 = vst [vmem:[%s249 + $0x30] sm:$0xf] %v732
      %861 = vst [vmem:[%s249 + $0x34] sm:$0xf] %v733
      %862 = vst [vmem:[%s249 + $0x38] sm:$0xf] %v734
      %863 = vst [vmem:[%s249 + $0x3c] sm:$0xf] %v735
      %864 = vst [vmem:[%s249 + $0x40] sm:$0xf] %v736
      %865 = vst [vmem:[%s249 + $0x44] sm:$0xf] %v737
      %866 = vst [vmem:[%s249 + $0x48] sm:$0xf] %v738
      %867 = vst [vmem:[%s249 + $0x4c] sm:$0xf] %v739
      %868 = vst [vmem:[%s249 + $0x50] sm:$0xf] %v740
      %869 = vst [vmem:[%s249 + $0x54] sm:$0xf] %v741
      %870 = vst [vmem:[%s249 + $0x58] sm:$0xf] %v742
      %871 = vst [vmem:[%s249 + $0x5c] sm:$0xf] %v743
      %872 = vst [vmem:[%s249 + $0x60] sm:$0xf] %v744
      %873 = vst [vmem:[%s249 + $0x64] sm:$0xf] %v745
      %874 = vst [vmem:[%s249 + $0x68] sm:$0xf] %v746
      %875 = vst [vmem:[%s249 + $0x6c] sm:$0xf] %v747
      %876 = vst [vmem:[%s249 + $0x70] sm:$0xf] %v748
      %877 = vst [vmem:[%s249 + $0x74] sm:$0xf] %v749
      %878 = vst [vmem:[%s249 + $0x78] sm:$0xf] %v750
      %879 = vst [vmem:[%s249 + $0x7c] sm:$0xf] %v751
      %880 = vst [vmem:[%s249 + $0x80] sm:$0xf] %v752
      %881 = vst [vmem:[%s249 + $0x84] sm:$0xf] %v753
      %882 = vst [vmem:[%s249 + $0x88] sm:$0xf] %v754
      %883 = vst [vmem:[%s249 + $0x8c] sm:$0xf] %v755
      %884 = vst [vmem:[%s249 + $0x90] sm:$0xf] %v756
      %885 = vst [vmem:[%s249 + $0x94] sm:$0xf] %v757
      %886 = vst [vmem:[%s249 + $0x98] sm:$0xf] %v758
      %887 = vst [vmem:[%s249 + $0x9c] sm:$0xf] %v759
      %888 = vst [vmem:[%s249 + $0xa0] sm:$0xf] %v760
      %889 = vst [vmem:[%s249 + $0xa4] sm:$0xf] %v761
      %890 = vst [vmem:[%s249 + $0xa8] sm:$0xf] %v762
      %891 = vst [vmem:[%s249 + $0xac] sm:$0xf] %v763
      %892 = vst [vmem:[%s249 + $0xb0] sm:$0xf] %v764
      %893 = vst [vmem:[%s249 + $0xb4] sm:$0xf] %v765
      %894 = vst [vmem:[%s249 + $0xb8] sm:$0xf] %v766
      %895 = vst [vmem:[%s249 + $0xbc] sm:$0xf] %v767
      %896 = vst [vmem:[%s249 + $0xc0] sm:$0xf] %v768
      %897 = vst [vmem:[%s249 + $0xc4] sm:$0xf] %v769
      %898 = vst [vmem:[%s249 + $0xc8] sm:$0xf] %v770
      %899 = vst [vmem:[%s249 + $0xcc] sm:$0xf] %v771
      %900 = vst [vmem:[%s249 + $0xd0] sm:$0xf] %v772
      %901 = vst [vmem:[%s249 + $0xd4] sm:$0xf] %v773
      %902 = vst [vmem:[%s249 + $0xd8] sm:$0xf] %v774
      %903 = vst [vmem:[%s249 + $0xdc] sm:$0xf] %v775
      %904 = vst [vmem:[%s249 + $0xe0] sm:$0xf] %v776
      %905 = vst [vmem:[%s249 + $0xe4] sm:$0xf] %v777
      %906 = vst [vmem:[%s249 + $0xe8] sm:$0xf] %v778
      %907 = vst [vmem:[%s249 + $0xec] sm:$0xf] %v779
      %908 = vst [vmem:[%s249 + $0xf0] sm:$0xf] %v780
      %909 = vst [vmem:[%s249 + $0xf4] sm:$0xf] %v781
      %910 = vst [vmem:[%s249 + $0xf8] sm:$0xf] %v782
      %911 = vst [vmem:[%s249 + $0xfc] sm:$0xf] %v783
      %s912 = smul.u32 64, %s20
      %p913 = scmp.lt.s32.totalorder %s19, 1
      %s914 = scalar_select %p913, %s19, 1
      %p915 = scmp.lt.s32.totalorder %s912, 127
      %s916 = scalar_select %p915, %s912, 127
      %s917 = smul.addr %s914, 128
      %s918 = sadd.s32 %s916, %s917
      %s919 = smul.addr %s918, 4
      %s920 = scalar_lea.vmem %s4, %s919
      // Predicated region
      $region37: #{upsampling_block_forward.7} parent=35 // pred_check
        %p921 = pneg %p143
      $region38: #{upsampling_block_forward.7} parent=35 // pred_check_branch
        %923 = sbr.rel (%p921) target = $region40
      $region39: #{upsampling_block_forward.7} parent=35 // pred_region
        %s924 = smul.u32 64, %s20
      $region40: #{upsampling_block_forward.7} parent=35 // pred_fallthru
        _
    $region36: #{upsampling_block_forward.7} parent=5 // pred_fallthru
      _
    %p925 = scmp.le.s32.totalorder 2, %s10
    // Predicated region
    $region41: #{upsampling_block_forward.7} parent=5 // pred_check
      %p926 = pneg %p925
    $region42: #{upsampling_block_forward.7} parent=5 // pred_check_branch
      %928 = sbr.rel (%p926) target = $region44
    $region43: #{upsampling_block_forward.7} parent=5 // pred_region
      %s929 = ssub.s32 %s10, 2
      // Predicated region
      $region45: #{upsampling_block_forward.7} parent=43 // pred_check
        %p930 = pneg %p149
      $region46: #{upsampling_block_forward.7} parent=43 // pred_check_branch
        %932 = sbr.rel (%p930) target = $region48
      $region47: #{upsampling_block_forward.7} parent=43 // pred_region
        %s933 = smul.u32 64, %s22
        %p934 = scmp.lt.s32.totalorder %s21, 1
        %s935 = scalar_select %p934, %s21, 1
        %p936 = scmp.lt.s32.totalorder %s933, 127
        %s937 = scalar_select %p936, %s933, 127
        %s938 = smul.addr %s935, 128
        %s939 = sadd.s32 %s937, %s938
        %s940 = smul.addr %s939, 4
        %s941 = scalar_lea.vmem %s4, %s940
      $region48: #{upsampling_block_forward.7} parent=43 // pred_fallthru
        _
    $region44: #{upsampling_block_forward.7} parent=5 // pred_fallthru
      _
  $region6: #{upsampling_block_forward.7} parent=0 // loop_footer
    %s14 = sadd.s32 1, %s10
  $region7: #{upsampling_block_forward.7} parent=0 // loop_footer_branch
    %9 = sbr.rel target = $region3
  $region8: #{upsampling_block_forward.7} parent=0 // loop_exit
    _

// kernel: upsampling_block_forward.8
$region0: #{upsampling_block_forward.8}
  #allocation0 [shape = 'u32[]', space=smem, size = 0x4, offset = 0x4, fixed_abs, tag = 'smem constant byte address 0x4 - core index']
  #allocation1 [shape = 'u32[144,128]{1,0:T(1,128)}', space=vmem, size = 0x12000, scoped, tag = 'internal scratch']
  %s0 = inlined_call_operand.vmem [shape: bf16[2,1024,1152], index: 0, kind: input, shape index: {}]
  %s1 = inlined_call_operand.vmem [shape: bf16[1152,128], index: 1, kind: input, shape index: {}]
  %s2 = inlined_call_operand.vmem [shape: f32[2,1024,128], index: 2, kind: output, shape index: {0}]
  %s3 = inlined_call_operand.vmem [shape: f32[2,2,2,128], index: 3, kind: output, shape index: {1}]
  %4 = xla_tuple %s2, %s3
  %s5 = sld [smem:[#allocation0]]
  $region49: #{upsampling_block_forward.8} parent=0
    _
  %s7 = ssub.s32 1, %s5
  %s8 = scalar_select 0, %s7, %s5
  loop: start=0, step=1, limit=6
  $region2: #{upsampling_block_forward.8} parent=0 // loop_pre_header
    _
  $region3: #{upsampling_block_forward.8} parent=0 // loop_header
    %s10 = sphi 0, %s14
    %p11 = scmp.ge.s32.totalorder %s10, 6
    %s17 = sphi 0, %s29
    %s18 = sphi 0, %s25
    %s19 = sphi 0, %s17
    %s20 = sphi 0, %s18
    %s21 = sphi 0, %s19
    %s22 = sphi 0, %s20
    %s34 = sphi 0, %s36
    %s37 = sphi 0, %s34
    %s38 = sphi 0, %s37
    %s54 = sphi 0, %s38
    %s58 = sphi 0, %s58
    %s60 = sphi 0, %s58
    %s61 = sphi 0, %s60
    %s75 = sphi 0, %s61
    %s83 = sphi 0, %s85
    %s86 = sphi 0, %s83
    %s87 = sphi 0, %s86
    %s103 = sphi 0, %s87
    %s111 = sphi 0, %s113
    %s114 = sphi 0, %s111
    %s115 = sphi 0, %s114
    %s131 = sphi 0, %s115
  $region4: #{upsampling_block_forward.8} parent=0 // loop_header_branch
    %13 = sbr.rel (%p11) target = $region8
  $region5: #{upsampling_block_forward.8} parent=0 // loop_body
    %s15 = ssub.s32 %s10, 1
    %s16 = ssub.s32 %s10, 2
    %s23 = sadd.s32 1, %s18
    %p24 = scmp.ge.s32.totalorder %s23, 2
    %s25 = scalar_select %p24, 0, %s23
    %s26 = sadd.s32 1, %s17
    %s27 = scalar_select %p24, %s26, %s17
    %p28 = scmp.ge.s32.totalorder %s27, 2
    %s29 = scalar_select %p28, 0, %s27
    %s30 = ssub.s32 %s17, %s29
    %s31 = ssub.s32 %s18, %s25
    %s32 = sor.u32 %s30, %s31
    %p33 = scmp.eq.s32.totalorder %s32, 0
    %s35 = sadd.s32 %s34, 1
    %s36 = scalar_select %p33, %s34, %s35
    %p39 = pneg %p33
    %p40 = scmp.eq.s32.totalorder %s10, 3
    %p41 = por %p39, %p40
    %p42 = scmp.ne.s32.totalorder %s34, %s37
    %p43 = scmp.eq.s32.totalorder %s10, 0
    %p44 = por %p42, %p43
    %p45 = scmp.ne.s32.totalorder %s34, %s37
    %p46 = scmp.eq.s32.totalorder %s15, 3
    %p47 = por %p45, %p46
    %p48 = scmp.ne.s32.totalorder %s37, %s38
    %p49 = scmp.eq.s32.totalorder %s15, 0
    %p50 = por %p48, %p49
    %p51 = scmp.ne.s32.totalorder %s37, %s38
    %p52 = scmp.eq.s32.totalorder %s16, 3
    %p53 = por %p51, %p52
    %p55 = scmp.ne.s32.totalorder %s38, %s54
    %p56 = scmp.eq.s32.totalorder %s16, 0
    %p57 = por %p55, %p56
    %s59 = sadd.s32 %s58, 1
    %p62 = scmp.eq.s32.totalorder %s10, 3
    %p63 = scmp.ne.s32.totalorder %s58, %s60
    %p64 = scmp.eq.s32.totalorder %s10, 0
    %p65 = por %p63, %p64
    %p66 = scmp.ne.s32.totalorder %s58, %s60
    %p67 = scmp.eq.s32.totalorder %s15, 3
    %p68 = por %p66, %p67
    %p69 = scmp.ne.s32.totalorder %s60, %s61
    %p70 = scmp.eq.s32.totalorder %s15, 0
    %p71 = por %p69, %p70
    %p72 = scmp.ne.s32.totalorder %s60, %s61
    %p73 = scmp.eq.s32.totalorder %s16, 3
    %p74 = por %p72, %p73
    %p76 = scmp.ne.s32.totalorder %s61, %s75
    %p77 = scmp.eq.s32.totalorder %s16, 0
    %p78 = por %p76, %p77
    %s79 = ssub.s32 %s17, %s29
    %s80 = ssub.s32 %s18, %s25
    %s81 = sor.u32 %s79, %s80
    %p82 = scmp.eq.s32.totalorder %s81, 0
    %s84 = sadd.s32 %s83, 1
    %s85 = scalar_select %p82, %s83, %s84
    %p88 = pneg %p82
    %p89 = scmp.eq.s32.totalorder %s10, 3
    %p90 = por %p88, %p89
    %p91 = scmp.ne.s32.totalorder %s83, %s86
    %p92 = scmp.eq.s32.totalorder %s10, 0
    %p93 = por %p91, %p92
    %p94 = scmp.ne.s32.totalorder %s83, %s86
    %p95 = scmp.eq.s32.totalorder %s15, 3
    %p96 = por %p94, %p95
    %p97 = scmp.ne.s32.totalorder %s86, %s87
    %p98 = scmp.eq.s32.totalorder %s15, 0
    %p99 = por %p97, %p98
    %p100 = scmp.ne.s32.totalorder %s86, %s87
    %p101 = scmp.eq.s32.totalorder %s16, 3
    %p102 = por %p100, %p101
    %p104 = scmp.ne.s32.totalorder %s87, %s103
    %p105 = scmp.eq.s32.totalorder %s16, 0
    %p106 = por %p104, %p105
    %s107 = ssub.s32 %s17, %s29
    %s108 = ssub.s32 %s18, %s25
    %s109 = sor.u32 %s107, %s108
    %p110 = scmp.eq.s32.totalorder %s109, 0
    %s112 = sadd.s32 %s111, 1
    %s113 = scalar_select %p110, %s111, %s112
    %p116 = pneg %p110
    %p117 = scmp.eq.s32.totalorder %s10, 3
    %p118 = por %p116, %p117
    %p119 = scmp.ne.s32.totalorder %s111, %s114
    %p120 = scmp.eq.s32.totalorder %s10, 0
    %p121 = por %p119, %p120
    %p122 = scmp.ne.s32.totalorder %s111, %s114
    %p123 = scmp.eq.s32.totalorder %s15, 3
    %p124 = por %p122, %p123
    %p125 = scmp.ne.s32.totalorder %s114, %s115
    %p126 = scmp.eq.s32.totalorder %s15, 0
    %p127 = por %p125, %p126
    %p128 = scmp.ne.s32.totalorder %s114, %s115
    %p129 = scmp.eq.s32.totalorder %s16, 3
    %p130 = por %p128, %p129
    %p132 = scmp.ne.s32.totalorder %s115, %s131
    %p133 = scmp.eq.s32.totalorder %s16, 0
    %p134 = por %p132, %p133
    %p135 = scmp.le.s32.totalorder 1, %s10
    %p136 = scmp.lt.s32.totalorder %s10, 5
    %p137 = pnand %p135, %p136
    %p138 = pneg %p137
    // Predicated region
    $region9: #{upsampling_block_forward.8} parent=5 // pred_check
      _
    $region10: #{upsampling_block_forward.8} parent=5 // pred_check_branch
      %140 = sbr.rel (%p137) target = $region12
    $region11: #{upsampling_block_forward.8} parent=5 // pred_region
      %s141 = ssub.s32 %s10, 1
      // Predicated region
      $region13: #{upsampling_block_forward.8} parent=11 // pred_check
        %p142 = pneg %p71
      $region14: #{upsampling_block_forward.8} parent=11 // pred_check_branch
        %144 = sbr.rel (%p142) target = $region16
      $region15: #{upsampling_block_forward.8} parent=11 // pred_region
        _
      $region16: #{upsampling_block_forward.8} parent=11 // pred_fallthru
        _
    $region12: #{upsampling_block_forward.8} parent=5 // pred_fallthru
      _
    %p145 = scmp.lt.s32.totalorder %s10, 4
    // Predicated region
    $region17: #{upsampling_block_forward.8} parent=5 // pred_check
      %p146 = pneg %p145
    $region18: #{upsampling_block_forward.8} parent=5 // pred_check_branch
      %148 = sbr.rel (%p146) target = $region20
    $region19: #{upsampling_block_forward.8} parent=5 // pred_region
      // Predicated region
      $region21: #{upsampling_block_forward.8} parent=19 // pred_check
        %p149 = pneg %p44
      $region22: #{upsampling_block_forward.8} parent=19 // pred_check_branch
        %151 = sbr.rel (%p149) target = $region24
      $region23: #{upsampling_block_forward.8} parent=19 // pred_region
        %s152 = smul.u32 64, %s18
        %p153 = scmp.lt.s32.totalorder %s17, 1
        %s154 = scalar_select %p153, %s17, 1
        %p155 = scmp.lt.s32.totalorder %s152, 127
        %s156 = scalar_select %p155, %s152, 127
        %s157 = smul.addr %s156, 9
        %s158 = smul.addr %s154, 1152
        %s159 = sadd.s32 %s157, %s158
        %s160 = smul.addr %s159, 4
        %s161 = scalar_lea.vmem %s0, %s160
        %s162 = smul.u32 64, %s18
      $region24: #{upsampling_block_forward.8} parent=19 // pred_fallthru
        _
    $region20: #{upsampling_block_forward.8} parent=5 // pred_fallthru
      _
    %p163 = scmp.le.s32.totalorder 1, %s10
    %p164 = scmp.lt.s32.totalorder %s10, 5
    %p165 = pnand %p163, %p164
    %p166 = pneg %p165
    // Predicated region
    $region25: #{upsampling_block_forward.8} parent=5 // pred_check
      _
    $region26: #{upsampling_block_forward.8} parent=5 // pred_check_branch
      %168 = sbr.rel (%p165) target = $region28
    $region27: #{upsampling_block_forward.8} parent=5 // pred_region
      %s169 = ssub.s32 %s10, 1
      %s170 = smul.u32 64, %s20
      %p171 = scmp.lt.s32.totalorder %s19, 1
      %s172 = scalar_select %p171, %s19, 1
      %p173 = scmp.lt.s32.totalorder %s170, 127
      %s174 = scalar_select %p173, %s170, 127
      %s175 = smul.addr %s174, 9
      %s176 = smul.addr %s172, 1152
      %s177 = sadd.s32 %s175, %s176
      %s178 = smul.addr %s177, 4
      %s179 = scalar_lea.vmem %s0, %s178
      %p180 = pneg %p50
      %p181 = pneg %p47
      %p182 = pneg %p71
      %p183 = pneg %p68
      %p184 = pneg %p99
      %p185 = pneg %p96
      %s186 = smul.u32 64, %s20
      %p187 = scmp.lt.s32.totalorder %s19, 1
      %s188 = scalar_select %p187, %s19, 1
      %p189 = scmp.lt.s32.totalorder %s186, 127
      %s190 = scalar_select %p189, %s186, 127
      %s191 = smul.addr %s188, 128
      %s192 = sadd.s32 %s190, %s191
      %s193 = smul.addr %s192, 8
      %s194 = scalar_lea.vmem %s2, %s193
      %p195 = pneg %p127
      %p196 = pneg %p124
      %p197 = scmp.lt.s32.totalorder %s19, 1
      %s198 = scalar_select %p197, %s19, 1
      %p199 = scmp.lt.s32.totalorder %s20, 1
      %s200 = scalar_select %p199, %s20, 1
      %s201 = smul.addr %s198, 2
      %s202 = sadd.s32 %s200, %s201
      %s203 = smul.addr %s202, 2
      %s204 = scalar_lea.vmem %s3, %s203
      %s205 = smul.u32 64, %s20
      %p206 = scmp.lt.s32.totalorder %s19, 1
      %s207 = scalar_select %p206, %s19, 1
      %p208 = scmp.lt.s32.totalorder %s205, 127
      %s209 = scalar_select %p208, %s205, 127
      %s210 = smul.addr %s209, 9
      %s211 = smul.addr %s207, 1152
      %s212 = sadd.s32 %s210, %s211
      %s213 = smul.addr %s212, 4
      %s214 = scalar_lea.vmem %s0, %s213
      %s215 = smul.u32 64, %s20
      %s216 = smul.u32 64, %s20
      %p217 = scmp.lt.s32.totalorder %s19, 1
      %s218 = scalar_select %p217, %s19, 1
      %p219 = scmp.lt.s32.totalorder %s216, 127
      %s220 = scalar_select %p219, %s216, 127
      %s221 = smul.addr %s218, 128
      %s222 = sadd.s32 %s220, %s221
      %s223 = smul.addr %s222, 8
      %s224 = scalar_lea.vmem %s2, %s223
      %s225 = smul.u32 64, %s20
      %p226 = scmp.lt.s32.totalorder %s19, 1
      %s227 = scalar_select %p226, %s19, 1
      %p228 = scmp.lt.s32.totalorder %s20, 1
      %s229 = scalar_select %p228, %s20, 1
      %s230 = smul.addr %s227, 2
      %s231 = sadd.s32 %s229, %s230
      %s232 = smul.addr %s231, 2
      %s233 = scalar_lea.vmem %s3, %s232
      %v235 = vld [vmem:[%s214] sm:$0xff]
      %v236 = vld [vmem:[%s214 + $0x8] sm:$0xff]
      %v237 = vld [vmem:[%s214 + $0x10] sm:$0xff]
      %v238 = vld [vmem:[%s214 + $0x18] sm:$0xff]
      %v239 = vld [vmem:[%s214 + $0x20] sm:$0xf]
      %v240 = vld [vmem:[%s214 + $0x24] sm:$0xff]
      %v241 = vld [vmem:[%s214 + $0x2c] sm:$0xff]
      %v242 = vld [vmem:[%s214 + $0x34] sm:$0xff]
      %v243 = vld [vmem:[%s214 + $0x3c] sm:$0xff]
      %v244 = vld [vmem:[%s214 + $0x44] sm:$0xf]
      %v245 = vld [vmem:[%s214 + $0x48] sm:$0xff]
      %v246 = vld [vmem:[%s214 + $0x50] sm:$0xff]
      %v247 = vld [vmem:[%s214 + $0x58] sm:$0xff]
      %v248 = vld [vmem:[%s214 + $0x60] sm:$0xff]
      %v249 = vld [vmem:[%s214 + $0x68] sm:$0xf]
      %v250 = vld [vmem:[%s214 + $0x6c] sm:$0xff]
      %v251 = vld [vmem:[%s214 + $0x74] sm:$0xff]
      %v252 = vld [vmem:[%s214 + $0x7c] sm:$0xff]
      %v253 = vld [vmem:[%s214 + $0x84] sm:$0xff]
      %v254 = vld [vmem:[%s214 + $0x8c] sm:$0xf]
      %v255 = vld [vmem:[%s214 + $0x90] sm:$0xff]
      %v256 = vld [vmem:[%s214 + $0x98] sm:$0xff]
      %v257 = vld [vmem:[%s214 + $0xa0] sm:$0xff]
      %v258 = vld [vmem:[%s214 + $0xa8] sm:$0xff]
      %v259 = vld [vmem:[%s214 + $0xb0] sm:$0xf]
      %v260 = vld [vmem:[%s214 + $0xb4] sm:$0xff]
      %v261 = vld [vmem:[%s214 + $0xbc] sm:$0xff]
      %v262 = vld [vmem:[%s214 + $0xc4] sm:$0xff]
      %v263 = vld [vmem:[%s214 + $0xcc] sm:$0xff]
      %v264 = vld [vmem:[%s214 + $0xd4] sm:$0xf]
      %v265 = vld [vmem:[%s214 + $0xd8] sm:$0xff]
      %v266 = vld [vmem:[%s214 + $0xe0] sm:$0xff]
      %v267 = vld [vmem:[%s214 + $0xe8] sm:$0xff]
      %v268 = vld [vmem:[%s214 + $0xf0] sm:$0xff]
      %v269 = vld [vmem:[%s214 + $0xf8] sm:$0xf]
      %v270 = vld [vmem:[%s214 + $0xfc] sm:$0xff]
      %v271 = vld [vmem:[%s214 + $0x104] sm:$0xff]
      %v272 = vld [vmem:[%s214 + $0x10c] sm:$0xff]
      %v273 = vld [vmem:[%s214 + $0x114] sm:$0xff]
      %v274 = vld [vmem:[%s214 + $0x11c] sm:$0xf]
      %v275 = vld [vmem:[%s214 + $0x120] sm:$0xff]
      %v276 = vld [vmem:[%s214 + $0x128] sm:$0xff]
      %v277 = vld [vmem:[%s214 + $0x130] sm:$0xff]
      %v278 = vld [vmem:[%s214 + $0x138] sm:$0xff]
      %v279 = vld [vmem:[%s214 + $0x140] sm:$0xf]
      %v280 = vld [vmem:[%s214 + $0x144] sm:$0xff]
      %v281 = vld [vmem:[%s214 + $0x14c] sm:$0xff]
      %v282 = vld [vmem:[%s214 + $0x154] sm:$0xff]
      %v283 = vld [vmem:[%s214 + $0x15c] sm:$0xff]
      %v284 = vld [vmem:[%s214 + $0x164] sm:$0xf]
      %v285 = vld [vmem:[%s214 + $0x168] sm:$0xff]
      %v286 = vld [vmem:[%s214 + $0x170] sm:$0xff]
      %v287 = vld [vmem:[%s214 + $0x178] sm:$0xff]
      %v288 = vld [vmem:[%s214 + $0x180] sm:$0xff]
      %v289 = vld [vmem:[%s214 + $0x188] sm:$0xf]
      %v290 = vld [vmem:[%s214 + $0x18c] sm:$0xff]
      %v291 = vld [vmem:[%s214 + $0x194] sm:$0xff]
      %v292 = vld [vmem:[%s214 + $0x19c] sm:$0xff]
      %v293 = vld [vmem:[%s214 + $0x1a4] sm:$0xff]
      %v294 = vld [vmem:[%s214 + $0x1ac] sm:$0xf]
      %v295 = vld [vmem:[%s214 + $0x1b0] sm:$0xff]
      %v296 = vld [vmem:[%s214 + $0x1b8] sm:$0xff]
      %v297 = vld [vmem:[%s214 + $0x1c0] sm:$0xff]
      %v298 = vld [vmem:[%s214 + $0x1c8] sm:$0xff]
      %v299 = vld [vmem:[%s214 + $0x1d0] sm:$0xf]
      %v300 = vld [vmem:[%s214 + $0x1d4] sm:$0xff]
      %v301 = vld [vmem:[%s214 + $0x1dc] sm:$0xff]
      %v302 = vld [vmem:[%s214 + $0x1e4] sm:$0xff]
      %v303 = vld [vmem:[%s214 + $0x1ec] sm:$0xff]
      %v304 = vld [vmem:[%s214 + $0x1f4] sm:$0xf]
      %v305 = vld [vmem:[%s214 + $0x1f8] sm:$0xff]
      %v306 = vld [vmem:[%s214 + $0x200] sm:$0xff]
      %v307 = vld [vmem:[%s214 + $0x208] sm:$0xff]
      %v308 = vld [vmem:[%s214 + $0x210] sm:$0xff]
      %v309 = vld [vmem:[%s214 + $0x218] sm:$0xf]
      %v310 = vld [vmem:[%s214 + $0x21c] sm:$0xff]
      %v311 = vld [vmem:[%s214 + $0x224] sm:$0xff]
      %v312 = vld [vmem:[%s214 + $0x22c] sm:$0xff]
      %v313 = vld [vmem:[%s214 + $0x234] sm:$0xff]
      %v314 = vld [vmem:[%s214 + $0x23c] sm:$0xf]
      %v315 = vld [vmem:[%s214 + $0x240] sm:$0xff]
      %v316 = vld [vmem:[%s214 + $0x248] sm:$0xff]
      %v317 = vld [vmem:[%s214 + $0x250] sm:$0xff]
      %v318 = vld [vmem:[%s214 + $0x258] sm:$0xff]
      %v319 = vld [vmem:[%s214 + $0x260] sm:$0xf]
      %v320 = vld [vmem:[%s214 + $0x264] sm:$0xff]
      %v321 = vld [vmem:[%s214 + $0x26c] sm:$0xff]
      %v322 = vld [vmem:[%s214 + $0x274] sm:$0xff]
      %v323 = vld [vmem:[%s214 + $0x27c] sm:$0xff]
      %v324 = vld [vmem:[%s214 + $0x284] sm:$0xf]
      %v325 = vld [vmem:[%s214 + $0x288] sm:$0xff]
      %v326 = vld [vmem:[%s214 + $0x290] sm:$0xff]
      %v327 = vld [vmem:[%s214 + $0x298] sm:$0xff]
      %v328 = vld [vmem:[%s214 + $0x2a0] sm:$0xff]
      %v329 = vld [vmem:[%s214 + $0x2a8] sm:$0xf]
      %v330 = vld [vmem:[%s214 + $0x2ac] sm:$0xff]
      %v331 = vld [vmem:[%s214 + $0x2b4] sm:$0xff]
      %v332 = vld [vmem:[%s214 + $0x2bc] sm:$0xff]
      %v333 = vld [vmem:[%s214 + $0x2c4] sm:$0xff]
      %v334 = vld [vmem:[%s214 + $0x2cc] sm:$0xf]
      %v335 = vld [vmem:[%s214 + $0x2d0] sm:$0xff]
      %v336 = vld [vmem:[%s214 + $0x2d8] sm:$0xff]
      %v337 = vld [vmem:[%s214 + $0x2e0] sm:$0xff]
      %v338 = vld [vmem:[%s214 + $0x2e8] sm:$0xff]
      %v339 = vld [vmem:[%s214 + $0x2f0] sm:$0xf]
      %v340 = vld [vmem:[%s214 + $0x2f4] sm:$0xff]
      %v341 = vld [vmem:[%s214 + $0x2fc] sm:$0xff]
      %v342 = vld [vmem:[%s214 + $0x304] sm:$0xff]
      %v343 = vld [vmem:[%s214 + $0x30c] sm:$0xff]
      %v344 = vld [vmem:[%s214 + $0x314] sm:$0xf]
      %v345 = vld [vmem:[%s214 + $0x318] sm:$0xff]
      %v346 = vld [vmem:[%s214 + $0x320] sm:$0xff]
      %v347 = vld [vmem:[%s214 + $0x328] sm:$0xff]
      %v348 = vld [vmem:[%s214 + $0x330] sm:$0xff]
      %v349 = vld [vmem:[%s214 + $0x338] sm:$0xf]
      %v350 = vld [vmem:[%s214 + $0x33c] sm:$0xff]
      %v351 = vld [vmem:[%s214 + $0x344] sm:$0xff]
      %v352 = vld [vmem:[%s214 + $0x34c] sm:$0xff]
      %v353 = vld [vmem:[%s214 + $0x354] sm:$0xff]
      %v354 = vld [vmem:[%s214 + $0x35c] sm:$0xf]
      %v355 = vld [vmem:[%s214 + $0x360] sm:$0xff]
      %v356 = vld [vmem:[%s214 + $0x368] sm:$0xff]
      %v357 = vld [vmem:[%s214 + $0x370] sm:$0xff]
      %v358 = vld [vmem:[%s214 + $0x378] sm:$0xff]
      %v359 = vld [vmem:[%s214 + $0x380] sm:$0xf]
      %v360 = vld [vmem:[%s214 + $0x384] sm:$0xff]
      %v361 = vld [vmem:[%s214 + $0x38c] sm:$0xff]
      %v362 = vld [vmem:[%s214 + $0x394] sm:$0xff]
      %v363 = vld [vmem:[%s214 + $0x39c] sm:$0xff]
      %v364 = vld [vmem:[%s214 + $0x3a4] sm:$0xf]
      %v365 = vld [vmem:[%s214 + $0x3a8] sm:$0xff]
      %v366 = vld [vmem:[%s214 + $0x3b0] sm:$0xff]
      %v367 = vld [vmem:[%s214 + $0x3b8] sm:$0xff]
      %v368 = vld [vmem:[%s214 + $0x3c0] sm:$0xff]
      %v369 = vld [vmem:[%s214 + $0x3c8] sm:$0xf]
      %v370 = vld [vmem:[%s214 + $0x3cc] sm:$0xff]
      %v371 = vld [vmem:[%s214 + $0x3d4] sm:$0xff]
      %v372 = vld [vmem:[%s214 + $0x3dc] sm:$0xff]
      %v373 = vld [vmem:[%s214 + $0x3e4] sm:$0xff]
      %v374 = vld [vmem:[%s214 + $0x3ec] sm:$0xf]
      %v375 = vld [vmem:[%s214 + $0x3f0] sm:$0xff]
      %v376 = vld [vmem:[%s214 + $0x3f8] sm:$0xff]
      %v377 = vld [vmem:[%s214 + $0x400] sm:$0xff]
      %v378 = vld [vmem:[%s214 + $0x408] sm:$0xff]
      %v379 = vld [vmem:[%s214 + $0x410] sm:$0xf]
      %v380 = vld [vmem:[%s214 + $0x414] sm:$0xff]
      %v381 = vld [vmem:[%s214 + $0x41c] sm:$0xff]
      %v382 = vld [vmem:[%s214 + $0x424] sm:$0xff]
      %v383 = vld [vmem:[%s214 + $0x42c] sm:$0xff]
      %v384 = vld [vmem:[%s214 + $0x434] sm:$0xf]
      %v385 = vld [vmem:[%s214 + $0x438] sm:$0xff]
      %v386 = vld [vmem:[%s214 + $0x440] sm:$0xff]
      %v387 = vld [vmem:[%s214 + $0x448] sm:$0xff]
      %v388 = vld [vmem:[%s214 + $0x450] sm:$0xff]
      %v389 = vld [vmem:[%s214 + $0x458] sm:$0xf]
      %v390 = vld [vmem:[%s214 + $0x45c] sm:$0xff]
      %v391 = vld [vmem:[%s214 + $0x464] sm:$0xff]
      %v392 = vld [vmem:[%s214 + $0x46c] sm:$0xff]
      %v393 = vld [vmem:[%s214 + $0x474] sm:$0xff]
      %v394 = vld [vmem:[%s214 + $0x47c] sm:$0xf]
      %v395 = vld [vmem:[%s214 + $0x480] sm:$0xff]
      %v396 = vld [vmem:[%s214 + $0x488] sm:$0xff]
      %v397 = vld [vmem:[%s214 + $0x490] sm:$0xff]
      %v398 = vld [vmem:[%s214 + $0x498] sm:$0xff]
      %v399 = vld [vmem:[%s214 + $0x4a0] sm:$0xf]
      %v400 = vld [vmem:[%s214 + $0x4a4] sm:$0xff]
      %v401 = vld [vmem:[%s214 + $0x4ac] sm:$0xff]
      %v402 = vld [vmem:[%s214 + $0x4b4] sm:$0xff]
      %v403 = vld [vmem:[%s214 + $0x4bc] sm:$0xff]
      %v404 = vld [vmem:[%s214 + $0x4c4] sm:$0xf]
      %v405 = vld [vmem:[%s214 + $0x4c8] sm:$0xff]
      %v406 = vld [vmem:[%s214 + $0x4d0] sm:$0xff]
      %v407 = vld [vmem:[%s214 + $0x4d8] sm:$0xff]
      %v408 = vld [vmem:[%s214 + $0x4e0] sm:$0xff]
      %v409 = vld [vmem:[%s214 + $0x4e8] sm:$0xf]
      %v410 = vld [vmem:[%s214 + $0x4ec] sm:$0xff]
      %v411 = vld [vmem:[%s214 + $0x4f4] sm:$0xff]
      %v412 = vld [vmem:[%s214 + $0x4fc] sm:$0xff]
      %v413 = vld [vmem:[%s214 + $0x504] sm:$0xff]
      %v414 = vld [vmem:[%s214 + $0x50c] sm:$0xf]
      %v415 = vld [vmem:[%s214 + $0x510] sm:$0xff]
      %v416 = vld [vmem:[%s214 + $0x518] sm:$0xff]
      %v417 = vld [vmem:[%s214 + $0x520] sm:$0xff]
      %v418 = vld [vmem:[%s214 + $0x528] sm:$0xff]
      %v419 = vld [vmem:[%s214 + $0x530] sm:$0xf]
      %v420 = vld [vmem:[%s214 + $0x534] sm:$0xff]
      %v421 = vld [vmem:[%s214 + $0x53c] sm:$0xff]
      %v422 = vld [vmem:[%s214 + $0x544] sm:$0xff]
      %v423 = vld [vmem:[%s214 + $0x54c] sm:$0xff]
      %v424 = vld [vmem:[%s214 + $0x554] sm:$0xf]
      %v425 = vld [vmem:[%s214 + $0x558] sm:$0xff]
      %v426 = vld [vmem:[%s214 + $0x560] sm:$0xff]
      %v427 = vld [vmem:[%s214 + $0x568] sm:$0xff]
      %v428 = vld [vmem:[%s214 + $0x570] sm:$0xff]
      %v429 = vld [vmem:[%s214 + $0x578] sm:$0xf]
      %v430 = vld [vmem:[%s214 + $0x57c] sm:$0xff]
      %v431 = vld [vmem:[%s214 + $0x584] sm:$0xff]
      %v432 = vld [vmem:[%s214 + $0x58c] sm:$0xff]
      %v433 = vld [vmem:[%s214 + $0x594] sm:$0xff]
      %v434 = vld [vmem:[%s214 + $0x59c] sm:$0xf]
      %v435 = vld [vmem:[%s214 + $0x5a0] sm:$0xff]
      %v436 = vld [vmem:[%s214 + $0x5a8] sm:$0xff]
      %v437 = vld [vmem:[%s214 + $0x5b0] sm:$0xff]
      %v438 = vld [vmem:[%s214 + $0x5b8] sm:$0xff]
      %v439 = vld [vmem:[%s214 + $0x5c0] sm:$0xf]
      %v440 = vld [vmem:[%s214 + $0x5c4] sm:$0xff]
      %v441 = vld [vmem:[%s214 + $0x5cc] sm:$0xff]
      %v442 = vld [vmem:[%s214 + $0x5d4] sm:$0xff]
      %v443 = vld [vmem:[%s214 + $0x5dc] sm:$0xff]
      %v444 = vld [vmem:[%s214 + $0x5e4] sm:$0xf]
      %v445 = vld [vmem:[%s214 + $0x5e8] sm:$0xff]
      %v446 = vld [vmem:[%s214 + $0x5f0] sm:$0xff]
      %v447 = vld [vmem:[%s214 + $0x5f8] sm:$0xff]
      %v448 = vld [vmem:[%s214 + $0x600] sm:$0xff]
      %v449 = vld [vmem:[%s214 + $0x608] sm:$0xf]
      %v450 = vld [vmem:[%s214 + $0x60c] sm:$0xff]
      %v451 = vld [vmem:[%s214 + $0x614] sm:$0xff]
      %v452 = vld [vmem:[%s214 + $0x61c] sm:$0xff]
      %v453 = vld [vmem:[%s214 + $0x624] sm:$0xff]
      %v454 = vld [vmem:[%s214 + $0x62c] sm:$0xf]
      %v455 = vld [vmem:[%s214 + $0x630] sm:$0xff]
      %v456 = vld [vmem:[%s214 + $0x638] sm:$0xff]
      %v457 = vld [vmem:[%s214 + $0x640] sm:$0xff]
      %v458 = vld [vmem:[%s214 + $0x648] sm:$0xff]
      %v459 = vld [vmem:[%s214 + $0x650] sm:$0xf]
      %v460 = vld [vmem:[%s214 + $0x654] sm:$0xff]
      %v461 = vld [vmem:[%s214 + $0x65c] sm:$0xff]
      %v462 = vld [vmem:[%s214 + $0x664] sm:$0xff]
      %v463 = vld [vmem:[%s214 + $0x66c] sm:$0xff]
      %v464 = vld [vmem:[%s214 + $0x674] sm:$0xf]
      %v465 = vld [vmem:[%s214 + $0x678] sm:$0xff]
      %v466 = vld [vmem:[%s214 + $0x680] sm:$0xff]
      %v467 = vld [vmem:[%s214 + $0x688] sm:$0xff]
      %v468 = vld [vmem:[%s214 + $0x690] sm:$0xff]
      %v469 = vld [vmem:[%s214 + $0x698] sm:$0xf]
      %v470 = vld [vmem:[%s214 + $0x69c] sm:$0xff]
      %v471 = vld [vmem:[%s214 + $0x6a4] sm:$0xff]
      %v472 = vld [vmem:[%s214 + $0x6ac] sm:$0xff]
      %v473 = vld [vmem:[%s214 + $0x6b4] sm:$0xff]
      %v474 = vld [vmem:[%s214 + $0x6bc] sm:$0xf]
      %v475 = vld [vmem:[%s214 + $0x6c0] sm:$0xff]
      %v476 = vld [vmem:[%s214 + $0x6c8] sm:$0xff]
      %v477 = vld [vmem:[%s214 + $0x6d0] sm:$0xff]
      %v478 = vld [vmem:[%s214 + $0x6d8] sm:$0xff]
      %v479 = vld [vmem:[%s214 + $0x6e0] sm:$0xf]
      %v480 = vld [vmem:[%s214 + $0x6e4] sm:$0xff]
      %v481 = vld [vmem:[%s214 + $0x6ec] sm:$0xff]
      %v482 = vld [vmem:[%s214 + $0x6f4] sm:$0xff]
      %v483 = vld [vmem:[%s214 + $0x6fc] sm:$0xff]
      %v484 = vld [vmem:[%s214 + $0x704] sm:$0xf]
      %v485 = vld [vmem:[%s214 + $0x708] sm:$0xff]
      %v486 = vld [vmem:[%s214 + $0x710] sm:$0xff]
      %v487 = vld [vmem:[%s214 + $0x718] sm:$0xff]
      %v488 = vld [vmem:[%s214 + $0x720] sm:$0xff]
      %v489 = vld [vmem:[%s214 + $0x728] sm:$0xf]
      %v490 = vld [vmem:[%s214 + $0x72c] sm:$0xff]
      %v491 = vld [vmem:[%s214 + $0x734] sm:$0xff]
      %v492 = vld [vmem:[%s214 + $0x73c] sm:$0xff]
      %v493 = vld [vmem:[%s214 + $0x744] sm:$0xff]
      %v494 = vld [vmem:[%s214 + $0x74c] sm:$0xf]
      %v495 = vld [vmem:[%s214 + $0x750] sm:$0xff]
      %v496 = vld [vmem:[%s214 + $0x758] sm:$0xff]
      %v497 = vld [vmem:[%s214 + $0x760] sm:$0xff]
      %v498 = vld [vmem:[%s214 + $0x768] sm:$0xff]
      %v499 = vld [vmem:[%s214 + $0x770] sm:$0xf]
      %v500 = vld [vmem:[%s214 + $0x774] sm:$0xff]
      %v501 = vld [vmem:[%s214 + $0x77c] sm:$0xff]
      %v502 = vld [vmem:[%s214 + $0x784] sm:$0xff]
      %v503 = vld [vmem:[%s214 + $0x78c] sm:$0xff]
      %v504 = vld [vmem:[%s214 + $0x794] sm:$0xf]
      %v505 = vld [vmem:[%s214 + $0x798] sm:$0xff]
      %v506 = vld [vmem:[%s214 + $0x7a0] sm:$0xff]
      %v507 = vld [vmem:[%s214 + $0x7a8] sm:$0xff]
      %v508 = vld [vmem:[%s214 + $0x7b0] sm:$0xff]
      %v509 = vld [vmem:[%s214 + $0x7b8] sm:$0xf]
      %v510 = vld [vmem:[%s214 + $0x7bc] sm:$0xff]
      %v511 = vld [vmem:[%s214 + $0x7c4] sm:$0xff]
      %v512 = vld [vmem:[%s214 + $0x7cc] sm:$0xff]
      %v513 = vld [vmem:[%s214 + $0x7d4] sm:$0xff]
      %v514 = vld [vmem:[%s214 + $0x7dc] sm:$0xf]
      %v515 = vld [vmem:[%s214 + $0x7e0] sm:$0xff]
      %v516 = vld [vmem:[%s214 + $0x7e8] sm:$0xff]
      %v517 = vld [vmem:[%s214 + $0x7f0] sm:$0xff]
      %v518 = vld [vmem:[%s214 + $0x7f8] sm:$0xff]
      %v519 = vld [vmem:[%s214 + $0x800] sm:$0xf]
      %v520 = vld [vmem:[%s214 + $0x804] sm:$0xff]
      %v521 = vld [vmem:[%s214 + $0x80c] sm:$0xff]
      %v522 = vld [vmem:[%s214 + $0x814] sm:$0xff]
      %v523 = vld [vmem:[%s214 + $0x81c] sm:$0xff]
      %v524 = vld [vmem:[%s214 + $0x824] sm:$0xf]
      %v525 = vld [vmem:[%s214 + $0x828] sm:$0xff]
      %v526 = vld [vmem:[%s214 + $0x830] sm:$0xff]
      %v527 = vld [vmem:[%s214 + $0x838] sm:$0xff]
      %v528 = vld [vmem:[%s214 + $0x840] sm:$0xff]
      %v529 = vld [vmem:[%s214 + $0x848] sm:$0xf]
      %v530 = vld [vmem:[%s214 + $0x84c] sm:$0xff]
      %v531 = vld [vmem:[%s214 + $0x854] sm:$0xff]
      %v532 = vld [vmem:[%s214 + $0x85c] sm:$0xff]
      %v533 = vld [vmem:[%s214 + $0x864] sm:$0xff]
      %v534 = vld [vmem:[%s214 + $0x86c] sm:$0xf]
      %v535 = vld [vmem:[%s214 + $0x870] sm:$0xff]
      %v536 = vld [vmem:[%s214 + $0x878] sm:$0xff]
      %v537 = vld [vmem:[%s214 + $0x880] sm:$0xff]
      %v538 = vld [vmem:[%s214 + $0x888] sm:$0xff]
      %v539 = vld [vmem:[%s214 + $0x890] sm:$0xf]
      %v540 = vld [vmem:[%s214 + $0x894] sm:$0xff]
      %v541 = vld [vmem:[%s214 + $0x89c] sm:$0xff]
      %v542 = vld [vmem:[%s214 + $0x8a4] sm:$0xff]
      %v543 = vld [vmem:[%s214 + $0x8ac] sm:$0xff]
      %v544 = vld [vmem:[%s214 + $0x8b4] sm:$0xf]
      %v545 = vld [vmem:[%s214 + $0x8b8] sm:$0xff]
      %v546 = vld [vmem:[%s214 + $0x8c0] sm:$0xff]
      %v547 = vld [vmem:[%s214 + $0x8c8] sm:$0xff]
      %v548 = vld [vmem:[%s214 + $0x8d0] sm:$0xff]
      %v549 = vld [vmem:[%s214 + $0x8d8] sm:$0xf]
      %v550 = vld [vmem:[%s214 + $0x8dc] sm:$0xff]
      %v551 = vld [vmem:[%s214 + $0x8e4] sm:$0xff]
      %v552 = vld [vmem:[%s214 + $0x8ec] sm:$0xff]
      %v553 = vld [vmem:[%s214 + $0x8f4] sm:$0xff]
      %v554 = vld [vmem:[%s214 + $0x8fc] sm:$0xf]
      %v555 = vld [vmem:[%s1] sm:$0xf]
      %v556 = vld [vmem:[%s1 + $0x4] sm:$0xf]
      %v557 = vld [vmem:[%s1 + $0x8] sm:$0xf]
      %v558 = vld [vmem:[%s1 + $0xc] sm:$0xf]
      %v559 = vld [vmem:[%s1 + $0x10] sm:$0xf]
      %v560 = vld [vmem:[%s1 + $0x14] sm:$0xf]
      %v561 = vld [vmem:[%s1 + $0x18] sm:$0xf]
      %v562 = vld [vmem:[%s1 + $0x1c] sm:$0xf]
      %v563 = vld [vmem:[%s1 + $0x20] sm:$0xf]
      %v564 = vld [vmem:[%s1 + $0x24] sm:$0xf]
      %v565 = vld [vmem:[%s1 + $0x28] sm:$0xf]
      %v566 = vld [vmem:[%s1 + $0x2c] sm:$0xf]
      %v567 = vld [vmem:[%s1 + $0x30] sm:$0xf]
      %v568 = vld [vmem:[%s1 + $0x34] sm:$0xf]
      %v569 = vld [vmem:[%s1 + $0x38] sm:$0xf]
      %v570 = vld [vmem:[%s1 + $0x3c] sm:$0xf]
      %v571 = vld [vmem:[%s1 + $0x40] sm:$0xf]
      %v572 = vld [vmem:[%s1 + $0x44] sm:$0xf]
      %v573 = vld [vmem:[%s1 + $0x48] sm:$0xf]
      %v574 = vld [vmem:[%s1 + $0x4c] sm:$0xf]
      %v575 = vld [vmem:[%s1 + $0x50] sm:$0xf]
      %v576 = vld [vmem:[%s1 + $0x54] sm:$0xf]
      %v577 = vld [vmem:[%s1 + $0x58] sm:$0xf]
      %v578 = vld [vmem:[%s1 + $0x5c] sm:$0xf]
      %v579 = vld [vmem:[%s1 + $0x60] sm:$0xf]
      %v580 = vld [vmem:[%s1 + $0x64] sm:$0xf]
      %v581 = vld [vmem:[%s1 + $0x68] sm:$0xf]
      %v582 = vld [vmem:[%s1 + $0x6c] sm:$0xf]
      %v583 = vld [vmem:[%s1 + $0x70] sm:$0xf]
      %v584 = vld [vmem:[%s1 + $0x74] sm:$0xf]
      %v585 = vld [vmem:[%s1 + $0x78] sm:$0xf]
      %v586 = vld [vmem:[%s1 + $0x7c] sm:$0xf]
      %v587 = vld [vmem:[%s1 + $0x80] sm:$0xf]
      %v588 = vld [vmem:[%s1 + $0x84] sm:$0xf]
      %v589 = vld [vmem:[%s1 + $0x88] sm:$0xf]
      %v590 = vld [vmem:[%s1 + $0x8c] sm:$0xf]
      %v591 = vld [vmem:[%s1 + $0x90] sm:$0xf]
      %v592 = vld [vmem:[%s1 + $0x94] sm:$0xf]
      %v593 = vld [vmem:[%s1 + $0x98] sm:$0xf]
      %v594 = vld [vmem:[%s1 + $0x9c] sm:$0xf]
      %v595 = vld [vmem:[%s1 + $0xa0] sm:$0xf]
      %v596 = vld [vmem:[%s1 + $0xa4] sm:$0xf]
      %v597 = vld [vmem:[%s1 + $0xa8] sm:$0xf]
      %v598 = vld [vmem:[%s1 + $0xac] sm:$0xf]
      %v599 = vld [vmem:[%s1 + $0xb0] sm:$0xf]
      %v600 = vld [vmem:[%s1 + $0xb4] sm:$0xf]
      %v601 = vld [vmem:[%s1 + $0xb8] sm:$0xf]
      %v602 = vld [vmem:[%s1 + $0xbc] sm:$0xf]
      %v603 = vld [vmem:[%s1 + $0xc0] sm:$0xf]
      %v604 = vld [vmem:[%s1 + $0xc4] sm:$0xf]
      %v605 = vld [vmem:[%s1 + $0xc8] sm:$0xf]
      %v606 = vld [vmem:[%s1 + $0xcc] sm:$0xf]
      %v607 = vld [vmem:[%s1 + $0xd0] sm:$0xf]
      %v608 = vld [vmem:[%s1 + $0xd4] sm:$0xf]
      %v609 = vld [vmem:[%s1 + $0xd8] sm:$0xf]
      %v610 = vld [vmem:[%s1 + $0xdc] sm:$0xf]
      %v611 = vld [vmem:[%s1 + $0xe0] sm:$0xf]
      %v612 = vld [vmem:[%s1 + $0xe4] sm:$0xf]
      %v613 = vld [vmem:[%s1 + $0xe8] sm:$0xf]
      %v614 = vld [vmem:[%s1 + $0xec] sm:$0xf]
      %v615 = vld [vmem:[%s1 + $0xf0] sm:$0xf]
      %v616 = vld [vmem:[%s1 + $0xf4] sm:$0xf]
      %v617 = vld [vmem:[%s1 + $0xf8] sm:$0xf]
      %v618 = vld [vmem:[%s1 + $0xfc] sm:$0xf]
      %v619 = vld [vmem:[%s1 + $0x100] sm:$0xf]
      %v620 = vld [vmem:[%s1 + $0x104] sm:$0xf]
      %v621 = vld [vmem:[%s1 + $0x108] sm:$0xf]
      %v622 = vld [vmem:[%s1 + $0x10c] sm:$0xf]
      %v623 = vld [vmem:[%s1 + $0x110] sm:$0xf]
      %v624 = vld [vmem:[%s1 + $0x114] sm:$0xf]
      %v625 = vld [vmem:[%s1 + $0x118] sm:$0xf]
      %v626 = vld [vmem:[%s1 + $0x11c] sm:$0xf]
      %v627 = vld [vmem:[%s1 + $0x120] sm:$0xf]
      %v628 = vld [vmem:[%s1 + $0x124] sm:$0xf]
      %v629 = vld [vmem:[%s1 + $0x128] sm:$0xf]
      %v630 = vld [vmem:[%s1 + $0x12c] sm:$0xf]
      %v631 = vld [vmem:[%s1 + $0x130] sm:$0xf]
      %v632 = vld [vmem:[%s1 + $0x134] sm:$0xf]
      %v633 = vld [vmem:[%s1 + $0x138] sm:$0xf]
      %v634 = vld [vmem:[%s1 + $0x13c] sm:$0xf]
      %v635 = vld [vmem:[%s1 + $0x140] sm:$0xf]
      %v636 = vld [vmem:[%s1 + $0x144] sm:$0xf]
      %v637 = vld [vmem:[%s1 + $0x148] sm:$0xf]
      %v638 = vld [vmem:[%s1 + $0x14c] sm:$0xf]
      %v639 = vld [vmem:[%s1 + $0x150] sm:$0xf]
      %v640 = vld [vmem:[%s1 + $0x154] sm:$0xf]
      %v641 = vld [vmem:[%s1 + $0x158] sm:$0xf]
      %v642 = vld [vmem:[%s1 + $0x15c] sm:$0xf]
      %v643 = vld [vmem:[%s1 + $0x160] sm:$0xf]
      %v644 = vld [vmem:[%s1 + $0x164] sm:$0xf]
      %v645 = vld [vmem:[%s1 + $0x168] sm:$0xf]
      %v646 = vld [vmem:[%s1 + $0x16c] sm:$0xf]
      %v647 = vld [vmem:[%s1 + $0x170] sm:$0xf]
      %v648 = vld [vmem:[%s1 + $0x174] sm:$0xf]
      %v649 = vld [vmem:[%s1 + $0x178] sm:$0xf]
      %v650 = vld [vmem:[%s1 + $0x17c] sm:$0xf]
      %v651 = vld [vmem:[%s1 + $0x180] sm:$0xf]
      %v652 = vld [vmem:[%s1 + $0x184] sm:$0xf]
      %v653 = vld [vmem:[%s1 + $0x188] sm:$0xf]
      %v654 = vld [vmem:[%s1 + $0x18c] sm:$0xf]
      %v655 = vld [vmem:[%s1 + $0x190] sm:$0xf]
      %v656 = vld [vmem:[%s1 + $0x194] sm:$0xf]
      %v657 = vld [vmem:[%s1 + $0x198] sm:$0xf]
      %v658 = vld [vmem:[%s1 + $0x19c] sm:$0xf]
      %v659 = vld [vmem:[%s1 + $0x1a0] sm:$0xf]
      %v660 = vld [vmem:[%s1 + $0x1a4] sm:$0xf]
      %v661 = vld [vmem:[%s1 + $0x1a8] sm:$0xf]
      %v662 = vld [vmem:[%s1 + $0x1ac] sm:$0xf]
      %v663 = vld [vmem:[%s1 + $0x1b0] sm:$0xf]
      %v664 = vld [vmem:[%s1 + $0x1b4] sm:$0xf]
      %v665 = vld [vmem:[%s1 + $0x1b8] sm:$0xf]
      %v666 = vld [vmem:[%s1 + $0x1bc] sm:$0xf]
      %v667 = vld [vmem:[%s1 + $0x1c0] sm:$0xf]
      %v668 = vld [vmem:[%s1 + $0x1c4] sm:$0xf]
      %v669 = vld [vmem:[%s1 + $0x1c8] sm:$0xf]
      %v670 = vld [vmem:[%s1 + $0x1cc] sm:$0xf]
      %v671 = vld [vmem:[%s1 + $0x1d0] sm:$0xf]
      %v672 = vld [vmem:[%s1 + $0x1d4] sm:$0xf]
      %v673 = vld [vmem:[%s1 + $0x1d8] sm:$0xf]
      %v674 = vld [vmem:[%s1 + $0x1dc] sm:$0xf]
      %v675 = vld [vmem:[%s1 + $0x1e0] sm:$0xf]
      %v676 = vld [vmem:[%s1 + $0x1e4] sm:$0xf]
      %v677 = vld [vmem:[%s1 + $0x1e8] sm:$0xf]
      %v678 = vld [vmem:[%s1 + $0x1ec] sm:$0xf]
      %v679 = vld [vmem:[%s1 + $0x1f0] sm:$0xf]
      %v680 = vld [vmem:[%s1 + $0x1f4] sm:$0xf]
      %v681 = vld [vmem:[%s1 + $0x1f8] sm:$0xf]
      %v682 = vld [vmem:[%s1 + $0x1fc] sm:$0xf]
      %v683 = vld [vmem:[%s1 + $0x200] sm:$0xf]
      %v684 = vld [vmem:[%s1 + $0x204] sm:$0xf]
      %v685 = vld [vmem:[%s1 + $0x208] sm:$0xf]
      %v686 = vld [vmem:[%s1 + $0x20c] sm:$0xf]
      %v687 = vld [vmem:[%s1 + $0x210] sm:$0xf]
      %v688 = vld [vmem:[%s1 + $0x214] sm:$0xf]
      %v689 = vld [vmem:[%s1 + $0x218] sm:$0xf]
      %v690 = vld [vmem:[%s1 + $0x21c] sm:$0xf]
      %v691 = vld [vmem:[%s1 + $0x220] sm:$0xf]
      %v692 = vld [vmem:[%s1 + $0x224] sm:$0xf]
      %v693 = vld [vmem:[%s1 + $0x228] sm:$0xf]
      %v694 = vld [vmem:[%s1 + $0x22c] sm:$0xf]
      %v695 = vld [vmem:[%s1 + $0x230] sm:$0xf]
      %v696 = vld [vmem:[%s1 + $0x234] sm:$0xf]
      %v697 = vld [vmem:[%s1 + $0x238] sm:$0xf]
      %v698 = vld [vmem:[%s1 + $0x23c] sm:$0xf]
      %v1019 = vunpack.c.l.b16 %v235
      %v1020 = vunpack.c.h.b16 %v235
      %v1021 = vunpack.c.l.b16 %v236
      %v1022 = vunpack.c.h.b16 %v236
      %v1023 = vunpack.c.l.b16 %v237
      %v1024 = vunpack.c.h.b16 %v237
      %v1025 = vunpack.c.l.b16 %v238
      %v1026 = vunpack.c.h.b16 %v238
      %v1027 = vunpack.c.l.b16 %v239
      %v1028 = vunpack.c.l.b16 %v240
      %v1029 = vunpack.c.h.b16 %v240
      %v1030 = vunpack.c.l.b16 %v241
      %v1031 = vunpack.c.h.b16 %v241
      %v1032 = vunpack.c.l.b16 %v242
      %v1033 = vunpack.c.h.b16 %v242
      %v1034 = vunpack.c.l.b16 %v243
      %v1035 = vunpack.c.h.b16 %v243
      %v1036 = vunpack.c.l.b16 %v244
      %v1037 = vunpack.c.l.b16 %v245
      %v1038 = vunpack.c.h.b16 %v245
      %v1039 = vunpack.c.l.b16 %v246
      %v1040 = vunpack.c.h.b16 %v246
      %v1041 = vunpack.c.l.b16 %v247
      %v1042 = vunpack.c.h.b16 %v247
      %v1043 = vunpack.c.l.b16 %v248
      %v1044 = vunpack.c.h.b16 %v248
      %v1045 = vunpack.c.l.b16 %v249
      %v1046 = vunpack.c.l.b16 %v250
      %v1047 = vunpack.c.h.b16 %v250
      %v1048 = vunpack.c.l.b16 %v251
      %v1049 = vunpack.c.h.b16 %v251
      %v1050 = vunpack.c.l.b16 %v252
      %v1051 = vunpack.c.h.b16 %v252
      %v1052 = vunpack.c.l.b16 %v253
      %v1053 = vunpack.c.h.b16 %v253
      %v1054 = vunpack.c.l.b16 %v254
      %v1055 = vunpack.c.l.b16 %v255
      %v1056 = vunpack.c.h.b16 %v255
      %v1057 = vunpack.c.l.b16 %v256
      %v1058 = vunpack.c.h.b16 %v256
      %v1059 = vunpack.c.l.b16 %v257
      %v1060 = vunpack.c.h.b16 %v257
      %v1061 = vunpack.c.l.b16 %v258
      %v1062 = vunpack.c.h.b16 %v258
      %v1063 = vunpack.c.l.b16 %v259
      %v1064 = vunpack.c.l.b16 %v260
      %v1065 = vunpack.c.h.b16 %v260
      %v1066 = vunpack.c.l.b16 %v261
      %v1067 = vunpack.c.h.b16 %v261
      %v1068 = vunpack.c.l.b16 %v262
      %v1069 = vunpack.c.h.b16 %v262
      %v1070 = vunpack.c.l.b16 %v263
      %v1071 = vunpack.c.h.b16 %v263
      %v1072 = vunpack.c.l.b16 %v264
      %v1073 = vunpack.c.l.b16 %v265
      %v1074 = vunpack.c.h.b16 %v265
      %v1075 = vunpack.c.l.b16 %v266
      %v1076 = vunpack.c.h.b16 %v266
      %v1077 = vunpack.c.l.b16 %v267
      %v1078 = vunpack.c.h.b16 %v267
      %v1079 = vunpack.c.l.b16 %v268
      %v1080 = vunpack.c.h.b16 %v268
      %v1081 = vunpack.c.l.b16 %v269
      %v1082 = vunpack.c.l.b16 %v270
      %v1083 = vunpack.c.h.b16 %v270
      %v1084 = vunpack.c.l.b16 %v271
      %v1085 = vunpack.c.h.b16 %v271
      %v1086 = vunpack.c.l.b16 %v272
      %v1087 = vunpack.c.h.b16 %v272
      %v1088 = vunpack.c.l.b16 %v273
      %v1089 = vunpack.c.h.b16 %v273
      %v1090 = vunpack.c.l.b16 %v274
      %v1091 = vunpack.c.l.b16 %v275
      %v1092 = vunpack.c.h.b16 %v275
      %v1093 = vunpack.c.l.b16 %v276
      %v1094 = vunpack.c.h.b16 %v276
      %v1095 = vunpack.c.l.b16 %v277
      %v1096 = vunpack.c.h.b16 %v277
      %v1097 = vunpack.c.l.b16 %v278
      %v1098 = vunpack.c.h.b16 %v278
      %v1099 = vunpack.c.l.b16 %v279
      %v1100 = vunpack.c.l.b16 %v280
      %v1101 = vunpack.c.h.b16 %v280
      %v1102 = vunpack.c.l.b16 %v281
      %v1103 = vunpack.c.h.b16 %v281
      %v1104 = vunpack.c.l.b16 %v282
      %v1105 = vunpack.c.h.b16 %v282
      %v1106 = vunpack.c.l.b16 %v283
      %v1107 = vunpack.c.h.b16 %v283
      %v1108 = vunpack.c.l.b16 %v284
      %v1109 = vunpack.c.l.b16 %v285
      %v1110 = vunpack.c.h.b16 %v285
      %v1111 = vunpack.c.l.b16 %v286
      %v1112 = vunpack.c.h.b16 %v286
      %v1113 = vunpack.c.l.b16 %v287
      %v1114 = vunpack.c.h.b16 %v287
      %v1115 = vunpack.c.l.b16 %v288
      %v1116 = vunpack.c.h.b16 %v288
      %v1117 = vunpack.c.l.b16 %v289
      %v1118 = vunpack.c.l.b16 %v290
      %v1119 = vunpack.c.h.b16 %v290
      %v1120 = vunpack.c.l.b16 %v291
      %v1121 = vunpack.c.h.b16 %v291
      %v1122 = vunpack.c.l.b16 %v292
      %v1123 = vunpack.c.h.b16 %v292
      %v1124 = vunpack.c.l.b16 %v293
      %v1125 = vunpack.c.h.b16 %v293
      %v1126 = vunpack.c.l.b16 %v294
      %v1127 = vunpack.c.l.b16 %v295
      %v1128 = vunpack.c.h.b16 %v295
      %v1129 = vunpack.c.l.b16 %v296
      %v1130 = vunpack.c.h.b16 %v296
      %v1131 = vunpack.c.l.b16 %v297
      %v1132 = vunpack.c.h.b16 %v297
      %v1133 = vunpack.c.l.b16 %v298
      %v1134 = vunpack.c.h.b16 %v298
      %v1135 = vunpack.c.l.b16 %v299
      %v1136 = vunpack.c.l.b16 %v300
      %v1137 = vunpack.c.h.b16 %v300
      %v1138 = vunpack.c.l.b16 %v301
      %v1139 = vunpack.c.h.b16 %v301
      %v1140 = vunpack.c.l.b16 %v302
      %v1141 = vunpack.c.h.b16 %v302
      %v1142 = vunpack.c.l.b16 %v303
      %v1143 = vunpack.c.h.b16 %v303
      %v1144 = vunpack.c.l.b16 %v304
      %v1145 = vunpack.c.l.b16 %v305
      %v1146 = vunpack.c.h.b16 %v305
      %v1147 = vunpack.c.l.b16 %v306
      %v1148 = vunpack.c.h.b16 %v306
      %v1149 = vunpack.c.l.b16 %v307
      %v1150 = vunpack.c.h.b16 %v307
      %v1151 = vunpack.c.l.b16 %v308
      %v1152 = vunpack.c.h.b16 %v308
      %v1153 = vunpack.c.l.b16 %v309
      %v1154 = vunpack.c.l.b16 %v310
      %v1155 = vunpack.c.h.b16 %v310
      %v1156 = vunpack.c.l.b16 %v311
      %v1157 = vunpack.c.h.b16 %v311
      %v1158 = vunpack.c.l.b16 %v312
      %v1159 = vunpack.c.h.b16 %v312
      %v1160 = vunpack.c.l.b16 %v313
      %v1161 = vunpack.c.h.b16 %v313
      %v1162 = vunpack.c.l.b16 %v314
      %v1163 = vunpack.c.l.b16 %v315
      %v1164 = vunpack.c.h.b16 %v315
      %v1165 = vunpack.c.l.b16 %v316
      %v1166 = vunpack.c.h.b16 %v316
      %v1167 = vunpack.c.l.b16 %v317
      %v1168 = vunpack.c.h.b16 %v317
      %v1169 = vunpack.c.l.b16 %v318
      %v1170 = vunpack.c.h.b16 %v318
      %v1171 = vunpack.c.l.b16 %v319
      %v1172 = vunpack.c.l.b16 %v320
      %v1173 = vunpack.c.h.b16 %v320
      %v1174 = vunpack.c.l.b16 %v321
      %v1175 = vunpack.c.h.b16 %v321
      %v1176 = vunpack.c.l.b16 %v322
      %v1177 = vunpack.c.h.b16 %v322
      %v1178 = vunpack.c.l.b16 %v323
      %v1179 = vunpack.c.h.b16 %v323
      %v1180 = vunpack.c.l.b16 %v324
      %v1181 = vunpack.c.l.b16 %v325
      %v1182 = vunpack.c.h.b16 %v325
      %v1183 = vunpack.c.l.b16 %v326
      %v1184 = vunpack.c.h.b16 %v326
      %v1185 = vunpack.c.l.b16 %v327
      %v1186 = vunpack.c.h.b16 %v327
      %v1187 = vunpack.c.l.b16 %v328
      %v1188 = vunpack.c.h.b16 %v328
      %v1189 = vunpack.c.l.b16 %v329
      %v1190 = vunpack.c.l.b16 %v330
      %v1191 = vunpack.c.h.b16 %v330
      %v1192 = vunpack.c.l.b16 %v331
      %v1193 = vunpack.c.h.b16 %v331
      %v1194 = vunpack.c.l.b16 %v332
      %v1195 = vunpack.c.h.b16 %v332
      %v1196 = vunpack.c.l.b16 %v333
      %v1197 = vunpack.c.h.b16 %v333
      %v1198 = vunpack.c.l.b16 %v334
      %v1199 = vunpack.c.l.b16 %v335
      %v1200 = vunpack.c.h.b16 %v335
      %v1201 = vunpack.c.l.b16 %v336
      %v1202 = vunpack.c.h.b16 %v336
      %v1203 = vunpack.c.l.b16 %v337
      %v1204 = vunpack.c.h.b16 %v337
      %v1205 = vunpack.c.l.b16 %v338
      %v1206 = vunpack.c.h.b16 %v338
      %v1207 = vunpack.c.l.b16 %v339
      %v1208 = vunpack.c.l.b16 %v340
      %v1209 = vunpack.c.h.b16 %v340
      %v1210 = vunpack.c.l.b16 %v341
      %v1211 = vunpack.c.h.b16 %v341
      %v1212 = vunpack.c.l.b16 %v342
      %v1213 = vunpack.c.h.b16 %v342
      %v1214 = vunpack.c.l.b16 %v343
      %v1215 = vunpack.c.h.b16 %v343
      %v1216 = vunpack.c.l.b16 %v344
      %v1217 = vunpack.c.l.b16 %v345
      %v1218 = vunpack.c.h.b16 %v345
      %v1219 = vunpack.c.l.b16 %v346
      %v1220 = vunpack.c.h.b16 %v346
      %v1221 = vunpack.c.l.b16 %v347
      %v1222 = vunpack.c.h.b16 %v347
      %v1223 = vunpack.c.l.b16 %v348
      %v1224 = vunpack.c.h.b16 %v348
      %v1225 = vunpack.c.l.b16 %v349
      %v1226 = vunpack.c.l.b16 %v350
      %v1227 = vunpack.c.h.b16 %v350
      %v1228 = vunpack.c.l.b16 %v351
      %v1229 = vunpack.c.h.b16 %v351
      %v1230 = vunpack.c.l.b16 %v352
      %v1231 = vunpack.c.h.b16 %v352
      %v1232 = vunpack.c.l.b16 %v353
      %v1233 = vunpack.c.h.b16 %v353
      %v1234 = vunpack.c.l.b16 %v354
      %v1235 = vunpack.c.l.b16 %v355
      %v1236 = vunpack.c.h.b16 %v355
      %v1237 = vunpack.c.l.b16 %v356
      %v1238 = vunpack.c.h.b16 %v356
      %v1239 = vunpack.c.l.b16 %v357
      %v1240 = vunpack.c.h.b16 %v357
      %v1241 = vunpack.c.l.b16 %v358
      %v1242 = vunpack.c.h.b16 %v358
      %v1243 = vunpack.c.l.b16 %v359
      %v1244 = vunpack.c.l.b16 %v360
      %v1245 = vunpack.c.h.b16 %v360
      %v1246 = vunpack.c.l.b16 %v361
      %v1247 = vunpack.c.h.b16 %v361
      %v1248 = vunpack.c.l.b16 %v362
      %v1249 = vunpack.c.h.b16 %v362
      %v1250 = vunpack.c.l.b16 %v363
      %v1251 = vunpack.c.h.b16 %v363
      %v1252 = vunpack.c.l.b16 %v364
      %v1253 = vunpack.c.l.b16 %v365
      %v1254 = vunpack.c.h.b16 %v365
      %v1255 = vunpack.c.l.b16 %v366
      %v1256 = vunpack.c.h.b16 %v366
      %v1257 = vunpack.c.l.b16 %v367
      %v1258 = vunpack.c.h.b16 %v367
      %v1259 = vunpack.c.l.b16 %v368
      %v1260 = vunpack.c.h.b16 %v368
      %v1261 = vunpack.c.l.b16 %v369
      %v1262 = vunpack.c.l.b16 %v370
      %v1263 = vunpack.c.h.b16 %v370
      %v1264 = vunpack.c.l.b16 %v371
      %v1265 = vunpack.c.h.b16 %v371
      %v1266 = vunpack.c.l.b16 %v372
      %v1267 = vunpack.c.h.b16 %v372
      %v1268 = vunpack.c.l.b16 %v373
      %v1269 = vunpack.c.h.b16 %v373
      %v1270 = vunpack.c.l.b16 %v374
      %v1271 = vunpack.c.l.b16 %v375
      %v1272 = vunpack.c.h.b16 %v375
      %v1273 = vunpack.c.l.b16 %v376
      %v1274 = vunpack.c.h.b16 %v376
      %v1275 = vunpack.c.l.b16 %v377
      %v1276 = vunpack.c.h.b16 %v377
      %v1277 = vunpack.c.l.b16 %v378
      %v1278 = vunpack.c.h.b16 %v378
      %v1279 = vunpack.c.l.b16 %v379
      %v1280 = vunpack.c.l.b16 %v380
      %v1281 = vunpack.c.h.b16 %v380
      %v1282 = vunpack.c.l.b16 %v381
      %v1283 = vunpack.c.h.b16 %v381
      %v1284 = vunpack.c.l.b16 %v382
      %v1285 = vunpack.c.h.b16 %v382
      %v1286 = vunpack.c.l.b16 %v383
      %v1287 = vunpack.c.h.b16 %v383
      %v1288 = vunpack.c.l.b16 %v384
      %v1289 = vunpack.c.l.b16 %v385
      %v1290 = vunpack.c.h.b16 %v385
      %v1291 = vunpack.c.l.b16 %v386
      %v1292 = vunpack.c.h.b16 %v386
      %v1293 = vunpack.c.l.b16 %v387
      %v1294 = vunpack.c.h.b16 %v387
      %v1295 = vunpack.c.l.b16 %v388
      %v1296 = vunpack.c.h.b16 %v388
      %v1297 = vunpack.c.l.b16 %v389
      %v1298 = vunpack.c.l.b16 %v390
      %v1299 = vunpack.c.h.b16 %v390
      %v1300 = vunpack.c.l.b16 %v391
      %v1301 = vunpack.c.h.b16 %v391
      %v1302 = vunpack.c.l.b16 %v392
      %v1303 = vunpack.c.h.b16 %v392
      %v1304 = vunpack.c.l.b16 %v393
      %v1305 = vunpack.c.h.b16 %v393
      %v1306 = vunpack.c.l.b16 %v394
      %v1307 = vunpack.c.l.b16 %v395
      %v1308 = vunpack.c.h.b16 %v395
      %v1309 = vunpack.c.l.b16 %v396
      %v1310 = vunpack.c.h.b16 %v396
      %v1311 = vunpack.c.l.b16 %v397
      %v1312 = vunpack.c.h.b16 %v397
      %v1313 = vunpack.c.l.b16 %v398
      %v1314 = vunpack.c.h.b16 %v398
      %v1315 = vunpack.c.l.b16 %v399
      %v1316 = vunpack.c.l.b16 %v400
      %v1317 = vunpack.c.h.b16 %v400
      %v1318 = vunpack.c.l.b16 %v401
      %v1319 = vunpack.c.h.b16 %v401
      %v1320 = vunpack.c.l.b16 %v402
      %v1321 = vunpack.c.h.b16 %v402
      %v1322 = vunpack.c.l.b16 %v403
      %v1323 = vunpack.c.h.b16 %v403
      %v1324 = vunpack.c.l.b16 %v404
      %v1325 = vunpack.c.l.b16 %v405
      %v1326 = vunpack.c.h.b16 %v405
      %v1327 = vunpack.c.l.b16 %v406
      %v1328 = vunpack.c.h.b16 %v406
      %v1329 = vunpack.c.l.b16 %v407
      %v1330 = vunpack.c.h.b16 %v407
      %v1331 = vunpack.c.l.b16 %v408
      %v1332 = vunpack.c.h.b16 %v408
      %v1333 = vunpack.c.l.b16 %v409
      %v1334 = vunpack.c.l.b16 %v410
      %v1335 = vunpack.c.h.b16 %v410
      %v1336 = vunpack.c.l.b16 %v411
      %v1337 = vunpack.c.h.b16 %v411
      %v1338 = vunpack.c.l.b16 %v412
      %v1339 = vunpack.c.h.b16 %v412
      %v1340 = vunpack.c.l.b16 %v413
      %v1341 = vunpack.c.h.b16 %v413
      %v1342 = vunpack.c.l.b16 %v414
      %v1343 = vunpack.c.l.b16 %v415
      %v1344 = vunpack.c.h.b16 %v415
      %v1345 = vunpack.c.l.b16 %v416
      %v1346 = vunpack.c.h.b16 %v416
      %v1347 = vunpack.c.l.b16 %v417
      %v1348 = vunpack.c.h.b16 %v417
      %v1349 = vunpack.c.l.b16 %v418
      %v1350 = vunpack.c.h.b16 %v418
      %v1351 = vunpack.c.l.b16 %v419
      %v1352 = vunpack.c.l.b16 %v420
      %v1353 = vunpack.c.h.b16 %v420
      %v1354 = vunpack.c.l.b16 %v421
      %v1355 = vunpack.c.h.b16 %v421
      %v1356 = vunpack.c.l.b16 %v422
      %v1357 = vunpack.c.h.b16 %v422
      %v1358 = vunpack.c.l.b16 %v423
      %v1359 = vunpack.c.h.b16 %v423
      %v1360 = vunpack.c.l.b16 %v424
      %v1361 = vunpack.c.l.b16 %v425
      %v1362 = vunpack.c.h.b16 %v425
      %v1363 = vunpack.c.l.b16 %v426
      %v1364 = vunpack.c.h.b16 %v426
      %v1365 = vunpack.c.l.b16 %v427
      %v1366 = vunpack.c.h.b16 %v427
      %v1367 = vunpack.c.l.b16 %v428
      %v1368 = vunpack.c.h.b16 %v428
      %v1369 = vunpack.c.l.b16 %v429
      %v1370 = vunpack.c.l.b16 %v430
      %v1371 = vunpack.c.h.b16 %v430
      %v1372 = vunpack.c.l.b16 %v431
      %v1373 = vunpack.c.h.b16 %v431
      %v1374 = vunpack.c.l.b16 %v432
      %v1375 = vunpack.c.h.b16 %v432
      %v1376 = vunpack.c.l.b16 %v433
      %v1377 = vunpack.c.h.b16 %v433
      %v1378 = vunpack.c.l.b16 %v434
      %v1379 = vunpack.c.l.b16 %v435
      %v1380 = vunpack.c.h.b16 %v435
      %v1381 = vunpack.c.l.b16 %v436
      %v1382 = vunpack.c.h.b16 %v436
      %v1383 = vunpack.c.l.b16 %v437
      %v1384 = vunpack.c.h.b16 %v437
      %v1385 = vunpack.c.l.b16 %v438
      %v1386 = vunpack.c.h.b16 %v438
      %v1387 = vunpack.c.l.b16 %v439
      %v1388 = vunpack.c.l.b16 %v440
      %v1389 = vunpack.c.h.b16 %v440
      %v1390 = vunpack.c.l.b16 %v441
      %v1391 = vunpack.c.h.b16 %v441
      %v1392 = vunpack.c.l.b16 %v442
      %v1393 = vunpack.c.h.b16 %v442
      %v1394 = vunpack.c.l.b16 %v443
      %v1395 = vunpack.c.h.b16 %v443
      %v1396 = vunpack.c.l.b16 %v444
      %v1397 = vunpack.c.l.b16 %v445
      %v1398 = vunpack.c.h.b16 %v445
      %v1399 = vunpack.c.l.b16 %v446
      %v1400 = vunpack.c.h.b16 %v446
      %v1401 = vunpack.c.l.b16 %v447
      %v1402 = vunpack.c.h.b16 %v447
      %v1403 = vunpack.c.l.b16 %v448
      %v1404 = vunpack.c.h.b16 %v448
      %v1405 = vunpack.c.l.b16 %v449
      %v1406 = vunpack.c.l.b16 %v450
      %v1407 = vunpack.c.h.b16 %v450
      %v1408 = vunpack.c.l.b16 %v451
      %v1409 = vunpack.c.h.b16 %v451
      %v1410 = vunpack.c.l.b16 %v452
      %v1411 = vunpack.c.h.b16 %v452
      %v1412 = vunpack.c.l.b16 %v453
      %v1413 = vunpack.c.h.b16 %v453
      %v1414 = vunpack.c.l.b16 %v454
      %v1415 = vunpack.c.l.b16 %v455
      %v1416 = vunpack.c.h.b16 %v455
      %v1417 = vunpack.c.l.b16 %v456
      %v1418 = vunpack.c.h.b16 %v456
      %v1419 = vunpack.c.l.b16 %v457
      %v1420 = vunpack.c.h.b16 %v457
      %v1421 = vunpack.c.l.b16 %v458
      %v1422 = vunpack.c.h.b16 %v458
      %v1423 = vunpack.c.l.b16 %v459
      %v1424 = vunpack.c.l.b16 %v460
      %v1425 = vunpack.c.h.b16 %v460
      %v1426 = vunpack.c.l.b16 %v461
      %v1427 = vunpack.c.h.b16 %v461
      %v1428 = vunpack.c.l.b16 %v462
      %v1429 = vunpack.c.h.b16 %v462
      %v1430 = vunpack.c.l.b16 %v463
      %v1431 = vunpack.c.h.b16 %v463
      %v1432 = vunpack.c.l.b16 %v464
      %v1433 = vunpack.c.l.b16 %v465
      %v1434 = vunpack.c.h.b16 %v465
      %v1435 = vunpack.c.l.b16 %v466
      %v1436 = vunpack.c.h.b16 %v466
      %v1437 = vunpack.c.l.b16 %v467
      %v1438 = vunpack.c.h.b16 %v467
      %v1439 = vunpack.c.l.b16 %v468
      %v1440 = vunpack.c.h.b16 %v468
      %v1441 = vunpack.c.l.b16 %v469
      %v1442 = vunpack.c.l.b16 %v470
      %v1443 = vunpack.c.h.b16 %v470
      %v1444 = vunpack.c.l.b16 %v471
      %v1445 = vunpack.c.h.b16 %v471
      %v1446 = vunpack.c.l.b16 %v472
      %v1447 = vunpack.c.h.b16 %v472
      %v1448 = vunpack.c.l.b16 %v473
      %v1449 = vunpack.c.h.b16 %v473
      %v1450 = vunpack.c.l.b16 %v474
      %v1451 = vunpack.c.l.b16 %v475
      %v1452 = vunpack.c.h.b16 %v475
      %v1453 = vunpack.c.l.b16 %v476
      %v1454 = vunpack.c.h.b16 %v476
      %v1455 = vunpack.c.l.b16 %v477
      %v1456 = vunpack.c.h.b16 %v477
      %v1457 = vunpack.c.l.b16 %v478
      %v1458 = vunpack.c.h.b16 %v478
      %v1459 = vunpack.c.l.b16 %v479
      %v1460 = vunpack.c.l.b16 %v480
      %v1461 = vunpack.c.h.b16 %v480
      %v1462 = vunpack.c.l.b16 %v481
      %v1463 = vunpack.c.h.b16 %v481
      %v1464 = vunpack.c.l.b16 %v482
      %v1465 = vunpack.c.h.b16 %v482
      %v1466 = vunpack.c.l.b16 %v483
      %v1467 = vunpack.c.h.b16 %v483
      %v1468 = vunpack.c.l.b16 %v484
      %v1469 = vunpack.c.l.b16 %v485
      %v1470 = vunpack.c.h.b16 %v485
      %v1471 = vunpack.c.l.b16 %v486
      %v1472 = vunpack.c.h.b16 %v486
      %v1473 = vunpack.c.l.b16 %v487
      %v1474 = vunpack.c.h.b16 %v487
      %v1475 = vunpack.c.l.b16 %v488
      %v1476 = vunpack.c.h.b16 %v488
      %v1477 = vunpack.c.l.b16 %v489
      %v1478 = vunpack.c.l.b16 %v490
      %v1479 = vunpack.c.h.b16 %v490
      %v1480 = vunpack.c.l.b16 %v491
      %v1481 = vunpack.c.h.b16 %v491
      %v1482 = vunpack.c.l.b16 %v492
      %v1483 = vunpack.c.h.b16 %v492
      %v1484 = vunpack.c.l.b16 %v493
      %v1485 = vunpack.c.h.b16 %v493
      %v1486 = vunpack.c.l.b16 %v494
      %v1487 = vunpack.c.l.b16 %v495
      %v1488 = vunpack.c.h.b16 %v495
      %v1489 = vunpack.c.l.b16 %v496
      %v1490 = vunpack.c.h.b16 %v496
      %v1491 = vunpack.c.l.b16 %v497
      %v1492 = vunpack.c.h.b16 %v497
      %v1493 = vunpack.c.l.b16 %v498
      %v1494 = vunpack.c.h.b16 %v498
      %v1495 = vunpack.c.l.b16 %v499
      %v1496 = vunpack.c.l.b16 %v500
      %v1497 = vunpack.c.h.b16 %v500
      %v1498 = vunpack.c.l.b16 %v501
      %v1499 = vunpack.c.h.b16 %v501
      %v1500 = vunpack.c.l.b16 %v502
      %v1501 = vunpack.c.h.b16 %v502
      %v1502 = vunpack.c.l.b16 %v503
      %v1503 = vunpack.c.h.b16 %v503
      %v1504 = vunpack.c.l.b16 %v504
      %v1505 = vunpack.c.l.b16 %v505
      %v1506 = vunpack.c.h.b16 %v505
      %v1507 = vunpack.c.l.b16 %v506
      %v1508 = vunpack.c.h.b16 %v506
      %v1509 = vunpack.c.l.b16 %v507
      %v1510 = vunpack.c.h.b16 %v507
      %v1511 = vunpack.c.l.b16 %v508
      %v1512 = vunpack.c.h.b16 %v508
      %v1513 = vunpack.c.l.b16 %v509
      %v1514 = vunpack.c.l.b16 %v510
      %v1515 = vunpack.c.h.b16 %v510
      %v1516 = vunpack.c.l.b16 %v511
      %v1517 = vunpack.c.h.b16 %v511
      %v1518 = vunpack.c.l.b16 %v512
      %v1519 = vunpack.c.h.b16 %v512
      %v1520 = vunpack.c.l.b16 %v513
      %v1521 = vunpack.c.h.b16 %v513
      %v1522 = vunpack.c.l.b16 %v514
      %v1523 = vunpack.c.l.b16 %v515
      %v1524 = vunpack.c.h.b16 %v515
      %v1525 = vunpack.c.l.b16 %v516
      %v1526 = vunpack.c.h.b16 %v516
      %v1527 = vunpack.c.l.b16 %v517
      %v1528 = vunpack.c.h.b16 %v517
      %v1529 = vunpack.c.l.b16 %v518
      %v1530 = vunpack.c.h.b16 %v518
      %v1531 = vunpack.c.l.b16 %v519
      %v1532 = vunpack.c.l.b16 %v520
      %v1533 = vunpack.c.h.b16 %v520
      %v1534 = vunpack.c.l.b16 %v521
      %v1535 = vunpack.c.h.b16 %v521
      %v1536 = vunpack.c.l.b16 %v522
      %v1537 = vunpack.c.h.b16 %v522
      %v1538 = vunpack.c.l.b16 %v523
      %v1539 = vunpack.c.h.b16 %v523
      %v1540 = vunpack.c.l.b16 %v524
      %v1541 = vunpack.c.l.b16 %v525
      %v1542 = vunpack.c.h.b16 %v525
      %v1543 = vunpack.c.l.b16 %v526
      %v1544 = vunpack.c.h.b16 %v526
      %v1545 = vunpack.c.l.b16 %v527
      %v1546 = vunpack.c.h.b16 %v527
      %v1547 = vunpack.c.l.b16 %v528
      %v1548 = vunpack.c.h.b16 %v528
      %v1549 = vunpack.c.l.b16 %v529
      %v1550 = vunpack.c.l.b16 %v530
      %v1551 = vunpack.c.h.b16 %v530
      %v1552 = vunpack.c.l.b16 %v531
      %v1553 = vunpack.c.h.b16 %v531
      %v1554 = vunpack.c.l.b16 %v532
      %v1555 = vunpack.c.h.b16 %v532
      %v1556 = vunpack.c.l.b16 %v533
      %v1557 = vunpack.c.h.b16 %v533
      %v1558 = vunpack.c.l.b16 %v534
      %v1559 = vunpack.c.l.b16 %v535
      %v1560 = vunpack.c.h.b16 %v535
      %v1561 = vunpack.c.l.b16 %v536
      %v1562 = vunpack.c.h.b16 %v536
      %v1563 = vunpack.c.l.b16 %v537
      %v1564 = vunpack.c.h.b16 %v537
      %v1565 = vunpack.c.l.b16 %v538
      %v1566 = vunpack.c.h.b16 %v538
      %v1567 = vunpack.c.l.b16 %v539
      %v1568 = vunpack.c.l.b16 %v540
      %v1569 = vunpack.c.h.b16 %v540
      %v1570 = vunpack.c.l.b16 %v541
      %v1571 = vunpack.c.h.b16 %v541
      %v1572 = vunpack.c.l.b16 %v542
      %v1573 = vunpack.c.h.b16 %v542
      %v1574 = vunpack.c.l.b16 %v543
      %v1575 = vunpack.c.h.b16 %v543
      %v1576 = vunpack.c.l.b16 %v544
      %v1577 = vunpack.c.l.b16 %v545
      %v1578 = vunpack.c.h.b16 %v545
      %v1579 = vunpack.c.l.b16 %v546
      %v1580 = vunpack.c.h.b16 %v546
      %v1581 = vunpack.c.l.b16 %v547
      %v1582 = vunpack.c.h.b16 %v547
      %v1583 = vunpack.c.l.b16 %v548
      %v1584 = vunpack.c.h.b16 %v548
      %v1585 = vunpack.c.l.b16 %v549
      %v1586 = vunpack.c.l.b16 %v550
      %v1587 = vunpack.c.h.b16 %v550
      %v1588 = vunpack.c.l.b16 %v551
      %v1589 = vunpack.c.h.b16 %v551
      %v1590 = vunpack.c.l.b16 %v552
      %v1591 = vunpack.c.h.b16 %v552
      %v1592 = vunpack.c.l.b16 %v553
      %v1593 = vunpack.c.h.b16 %v553
      %v1594 = vunpack.c.l.b16 %v554
      %v1595 = vpack.c.b16 %v1028, %v1019
      %v1596 = vpack.c.b16 %v1029, %v1020
      %v1597 = vpack.c.b16 %v1030, %v1021
      %v1598 = vpack.c.b16 %v1031, %v1022
      %v1599 = vpack.c.b16 %v1032, %v1023
      %v1600 = vpack.c.b16 %v1033, %v1024
      %v1601 = vpack.c.b16 %v1034, %v1025
      %v1602 = vpack.c.b16 %v1035, %v1026
      %v1603 = vpack.c.b16 %v1036, %v1027
      %v1604 = vpack.c.b16 %v1046, %v1037
      %v1605 = vpack.c.b16 %v1047, %v1038
      %v1606 = vpack.c.b16 %v1048, %v1039
      %v1607 = vpack.c.b16 %v1049, %v1040
      %v1608 = vpack.c.b16 %v1050, %v1041
      %v1609 = vpack.c.b16 %v1051, %v1042
      %v1610 = vpack.c.b16 %v1052, %v1043
      %v1611 = vpack.c.b16 %v1053, %v1044
      %v1612 = vpack.c.b16 %v1054, %v1045
      %v1613 = vpack.c.b16 %v1064, %v1055
      %v1614 = vpack.c.b16 %v1065, %v1056
      %v1615 = vpack.c.b16 %v1066, %v1057
      %v1616 = vpack.c.b16 %v1067, %v1058
      %v1617 = vpack.c.b16 %v1068, %v1059
      %v1618 = vpack.c.b16 %v1069, %v1060
      %v1619 = vpack.c.b16 %v1070, %v1061
      %v1620 = vpack.c.b16 %v1071, %v1062
      %v1621 = vpack.c.b16 %v1072, %v1063
      %v1622 = vpack.c.b16 %v1082, %v1073
      %v1623 = vpack.c.b16 %v1083, %v1074
      %v1624 = vpack.c.b16 %v1084, %v1075
      %v1625 = vpack.c.b16 %v1085, %v1076
      %v1626 = vpack.c.b16 %v1086, %v1077
      %v1627 = vpack.c.b16 %v1087, %v1078
      %v1628 = vpack.c.b16 %v1088, %v1079
      %v1629 = vpack.c.b16 %v1089, %v1080
      %v1630 = vpack.c.b16 %v1090, %v1081
      %v1631 = vpack.c.b16 %v1100, %v1091
      %v1632 = vpack.c.b16 %v1101, %v1092
      %v1633 = vpack.c.b16 %v1102, %v1093
      %v1634 = vpack.c.b16 %v1103, %v1094
      %v1635 = vpack.c.b16 %v1104, %v1095
      %v1636 = vpack.c.b16 %v1105, %v1096
      %v1637 = vpack.c.b16 %v1106, %v1097
      %v1638 = vpack.c.b16 %v1107, %v1098
      %v1639 = vpack.c.b16 %v1108, %v1099
      %v1640 = vpack.c.b16 %v1118, %v1109
      %v1641 = vpack.c.b16 %v1119, %v1110
      %v1642 = vpack.c.b16 %v1120, %v1111
      %v1643 = vpack.c.b16 %v1121, %v1112
      %v1644 = vpack.c.b16 %v1122, %v1113
      %v1645 = vpack.c.b16 %v1123, %v1114
      %v1646 = vpack.c.b16 %v1124, %v1115
      %v1647 = vpack.c.b16 %v1125, %v1116
      %v1648 = vpack.c.b16 %v1126, %v1117
      %v1649 = vpack.c.b16 %v1136, %v1127
      %v1650 = vpack.c.b16 %v1137, %v1128
      %v1651 = vpack.c.b16 %v1138, %v1129
      %v1652 = vpack.c.b16 %v1139, %v1130
      %v1653 = vpack.c.b16 %v1140, %v1131
      %v1654 = vpack.c.b16 %v1141, %v1132
      %v1655 = vpack.c.b16 %v1142, %v1133
      %v1656 = vpack.c.b16 %v1143, %v1134
      %v1657 = vpack.c.b16 %v1144, %v1135
      %v1658 = vpack.c.b16 %v1154, %v1145
      %v1659 = vpack.c.b16 %v1155, %v1146
      %v1660 = vpack.c.b16 %v1156, %v1147
      %v1661 = vpack.c.b16 %v1157, %v1148
      %v1662 = vpack.c.b16 %v1158, %v1149
      %v1663 = vpack.c.b16 %v1159, %v1150
      %v1664 = vpack.c.b16 %v1160, %v1151
      %v1665 = vpack.c.b16 %v1161, %v1152
      %v1666 = vpack.c.b16 %v1162, %v1153
      %v1667 = vpack.c.b16 %v1172, %v1163
      %v1668 = vpack.c.b16 %v1173, %v1164
      %v1669 = vpack.c.b16 %v1174, %v1165
      %v1670 = vpack.c.b16 %v1175, %v1166
      %v1671 = vpack.c.b16 %v1176, %v1167
      %v1672 = vpack.c.b16 %v1177, %v1168
      %v1673 = vpack.c.b16 %v1178, %v1169
      %v1674 = vpack.c.b16 %v1179, %v1170
      %v1675 = vpack.c.b16 %v1180, %v1171
      %v1676 = vpack.c.b16 %v1190, %v1181
      %v1677 = vpack.c.b16 %v1191, %v1182
      %v1678 = vpack.c.b16 %v1192, %v1183
      %v1679 = vpack.c.b16 %v1193, %v1184
      %v1680 = vpack.c.b16 %v1194, %v1185
      %v1681 = vpack.c.b16 %v1195, %v1186
      %v1682 = vpack.c.b16 %v1196, %v1187
      %v1683 = vpack.c.b16 %v1197, %v1188
      %v1684 = vpack.c.b16 %v1198, %v1189
      %v1685 = vpack.c.b16 %v1208, %v1199
      %v1686 = vpack.c.b16 %v1209, %v1200
      %v1687 = vpack.c.b16 %v1210, %v1201
      %v1688 = vpack.c.b16 %v1211, %v1202
      %v1689 = vpack.c.b16 %v1212, %v1203
      %v1690 = vpack.c.b16 %v1213, %v1204
      %v1691 = vpack.c.b16 %v1214, %v1205
      %v1692 = vpack.c.b16 %v1215, %v1206
      %v1693 = vpack.c.b16 %v1216, %v1207
      %v1694 = vpack.c.b16 %v1226, %v1217
      %v1695 = vpack.c.b16 %v1227, %v1218
      %v1696 = vpack.c.b16 %v1228, %v1219
      %v1697 = vpack.c.b16 %v1229, %v1220
      %v1698 = vpack.c.b16 %v1230, %v1221
      %v1699 = vpack.c.b16 %v1231, %v1222
      %v1700 = vpack.c.b16 %v1232, %v1223
      %v1701 = vpack.c.b16 %v1233, %v1224
      %v1702 = vpack.c.b16 %v1234, %v1225
      %v1703 = vpack.c.b16 %v1244, %v1235
      %v1704 = vpack.c.b16 %v1245, %v1236
      %v1705 = vpack.c.b16 %v1246, %v1237
      %v1706 = vpack.c.b16 %v1247, %v1238
      %v1707 = vpack.c.b16 %v1248, %v1239
      %v1708 = vpack.c.b16 %v1249, %v1240
      %v1709 = vpack.c.b16 %v1250, %v1241
      %v1710 = vpack.c.b16 %v1251, %v1242
      %v1711 = vpack.c.b16 %v1252, %v1243
      %v1712 = vpack.c.b16 %v1262, %v1253
      %v1713 = vpack.c.b16 %v1263, %v1254
      %v1714 = vpack.c.b16 %v1264, %v1255
      %v1715 = vpack.c.b16 %v1265, %v1256
      %v1716 = vpack.c.b16 %v1266, %v1257
      %v1717 = vpack.c.b16 %v1267, %v1258
      %v1718 = vpack.c.b16 %v1268, %v1259
      %v1719 = vpack.c.b16 %v1269, %v1260
      %v1720 = vpack.c.b16 %v1270, %v1261
      %v1721 = vpack.c.b16 %v1280, %v1271
      %v1722 = vpack.c.b16 %v1281, %v1272
      %v1723 = vpack.c.b16 %v1282, %v1273
      %v1724 = vpack.c.b16 %v1283, %v1274
      %v1725 = vpack.c.b16 %v1284, %v1275
      %v1726 = vpack.c.b16 %v1285, %v1276
      %v1727 = vpack.c.b16 %v1286, %v1277
      %v1728 = vpack.c.b16 %v1287, %v1278
      %v1729 = vpack.c.b16 %v1288, %v1279
      %v1730 = vpack.c.b16 %v1298, %v1289
      %v1731 = vpack.c.b16 %v1299, %v1290
      %v1732 = vpack.c.b16 %v1300, %v1291
      %v1733 = vpack.c.b16 %v1301, %v1292
      %v1734 = vpack.c.b16 %v1302, %v1293
      %v1735 = vpack.c.b16 %v1303, %v1294
      %v1736 = vpack.c.b16 %v1304, %v1295
      %v1737 = vpack.c.b16 %v1305, %v1296
      %v1738 = vpack.c.b16 %v1306, %v1297
      %v1739 = vpack.c.b16 %v1316, %v1307
      %v1740 = vpack.c.b16 %v1317, %v1308
      %v1741 = vpack.c.b16 %v1318, %v1309
      %v1742 = vpack.c.b16 %v1319, %v1310
      %v1743 = vpack.c.b16 %v1320, %v1311
      %v1744 = vpack.c.b16 %v1321, %v1312
      %v1745 = vpack.c.b16 %v1322, %v1313
      %v1746 = vpack.c.b16 %v1323, %v1314
      %v1747 = vpack.c.b16 %v1324, %v1315
      %v1748 = vpack.c.b16 %v1334, %v1325
      %v1749 = vpack.c.b16 %v1335, %v1326
      %v1750 = vpack.c.b16 %v1336, %v1327
      %v1751 = vpack.c.b16 %v1337, %v1328
      %v1752 = vpack.c.b16 %v1338, %v1329
      %v1753 = vpack.c.b16 %v1339, %v1330
      %v1754 = vpack.c.b16 %v1340, %v1331
      %v1755 = vpack.c.b16 %v1341, %v1332
      %v1756 = vpack.c.b16 %v1342, %v1333
      %v1757 = vpack.c.b16 %v1352, %v1343
      %v1758 = vpack.c.b16 %v1353, %v1344
      %v1759 = vpack.c.b16 %v1354, %v1345
      %v1760 = vpack.c.b16 %v1355, %v1346
      %v1761 = vpack.c.b16 %v1356, %v1347
      %v1762 = vpack.c.b16 %v1357, %v1348
      %v1763 = vpack.c.b16 %v1358, %v1349
      %v1764 = vpack.c.b16 %v1359, %v1350
      %v1765 = vpack.c.b16 %v1360, %v1351
      %v1766 = vpack.c.b16 %v1370, %v1361
      %v1767 = vpack.c.b16 %v1371, %v1362
      %v1768 = vpack.c.b16 %v1372, %v1363
      %v1769 = vpack.c.b16 %v1373, %v1364
      %v1770 = vpack.c.b16 %v1374, %v1365
      %v1771 = vpack.c.b16 %v1375, %v1366
      %v1772 = vpack.c.b16 %v1376, %v1367
      %v1773 = vpack.c.b16 %v1377, %v1368
      %v1774 = vpack.c.b16 %v1378, %v1369
      %v1775 = vpack.c.b16 %v1388, %v1379
      %v1776 = vpack.c.b16 %v1389, %v1380
      %v1777 = vpack.c.b16 %v1390, %v1381
      %v1778 = vpack.c.b16 %v1391, %v1382
      %v1779 = vpack.c.b16 %v1392, %v1383
      %v1780 = vpack.c.b16 %v1393, %v1384
      %v1781 = vpack.c.b16 %v1394, %v1385
      %v1782 = vpack.c.b16 %v1395, %v1386
      %v1783 = vpack.c.b16 %v1396, %v1387
      %v1784 = vpack.c.b16 %v1406, %v1397
      %v1785 = vpack.c.b16 %v1407, %v1398
      %v1786 = vpack.c.b16 %v1408, %v1399
      %v1787 = vpack.c.b16 %v1409, %v1400
      %v1788 = vpack.c.b16 %v1410, %v1401
      %v1789 = vpack.c.b16 %v1411, %v1402
      %v1790 = vpack.c.b16 %v1412, %v1403
      %v1791 = vpack.c.b16 %v1413, %v1404
      %v1792 = vpack.c.b16 %v1414, %v1405
      %v1793 = vpack.c.b16 %v1424, %v1415
      %v1794 = vpack.c.b16 %v1425, %v1416
      %v1795 = vpack.c.b16 %v1426, %v1417
      %v1796 = vpack.c.b16 %v1427, %v1418
      %v1797 = vpack.c.b16 %v1428, %v1419
      %v1798 = vpack.c.b16 %v1429, %v1420
      %v1799 = vpack.c.b16 %v1430, %v1421
      %v1800 = vpack.c.b16 %v1431, %v1422
      %v1801 = vpack.c.b16 %v1432, %v1423
      %v1802 = vpack.c.b16 %v1442, %v1433
      %v1803 = vpack.c.b16 %v1443, %v1434
      %v1804 = vpack.c.b16 %v1444, %v1435
      %v1805 = vpack.c.b16 %v1445, %v1436
      %v1806 = vpack.c.b16 %v1446, %v1437
      %v1807 = vpack.c.b16 %v1447, %v1438
      %v1808 = vpack.c.b16 %v1448, %v1439
      %v1809 = vpack.c.b16 %v1449, %v1440
      %v1810 = vpack.c.b16 %v1450, %v1441
      %v1811 = vpack.c.b16 %v1460, %v1451
      %v1812 = vpack.c.b16 %v1461, %v1452
      %v1813 = vpack.c.b16 %v1462, %v1453
      %v1814 = vpack.c.b16 %v1463, %v1454
      %v1815 = vpack.c.b16 %v1464, %v1455
      %v1816 = vpack.c.b16 %v1465, %v1456
      %v1817 = vpack.c.b16 %v1466, %v1457
      %v1818 = vpack.c.b16 %v1467, %v1458
      %v1819 = vpack.c.b16 %v1468, %v1459
      %v1820 = vpack.c.b16 %v1478, %v1469
      %v1821 = vpack.c.b16 %v1479, %v1470
      %v1822 = vpack.c.b16 %v1480, %v1471
      %v1823 = vpack.c.b16 %v1481, %v1472
      %v1824 = vpack.c.b16 %v1482, %v1473
      %v1825 = vpack.c.b16 %v1483, %v1474
      %v1826 = vpack.c.b16 %v1484, %v1475
      %v1827 = vpack.c.b16 %v1485, %v1476
      %v1828 = vpack.c.b16 %v1486, %v1477
      %v1829 = vpack.c.b16 %v1496, %v1487
      %v1830 = vpack.c.b16 %v1497, %v1488
      %v1831 = vpack.c.b16 %v1498, %v1489
      %v1832 = vpack.c.b16 %v1499, %v1490
      %v1833 = vpack.c.b16 %v1500, %v1491
      %v1834 = vpack.c.b16 %v1501, %v1492
      %v1835 = vpack.c.b16 %v1502, %v1493
      %v1836 = vpack.c.b16 %v1503, %v1494
      %v1837 = vpack.c.b16 %v1504, %v1495
      %v1838 = vpack.c.b16 %v1514, %v1505
      %v1839 = vpack.c.b16 %v1515, %v1506
      %v1840 = vpack.c.b16 %v1516, %v1507
      %v1841 = vpack.c.b16 %v1517, %v1508
      %v1842 = vpack.c.b16 %v1518, %v1509
      %v1843 = vpack.c.b16 %v1519, %v1510
      %v1844 = vpack.c.b16 %v1520, %v1511
      %v1845 = vpack.c.b16 %v1521, %v1512
      %v1846 = vpack.c.b16 %v1522, %v1513
      %v1847 = vpack.c.b16 %v1532, %v1523
      %v1848 = vpack.c.b16 %v1533, %v1524
      %v1849 = vpack.c.b16 %v1534, %v1525
      %v1850 = vpack.c.b16 %v1535, %v1526
      %v1851 = vpack.c.b16 %v1536, %v1527
      %v1852 = vpack.c.b16 %v1537, %v1528
      %v1853 = vpack.c.b16 %v1538, %v1529
      %v1854 = vpack.c.b16 %v1539, %v1530
      %v1855 = vpack.c.b16 %v1540, %v1531
      %v1856 = vpack.c.b16 %v1550, %v1541
      %v1857 = vpack.c.b16 %v1551, %v1542
      %v1858 = vpack.c.b16 %v1552, %v1543
      %v1859 = vpack.c.b16 %v1553, %v1544
      %v1860 = vpack.c.b16 %v1554, %v1545
      %v1861 = vpack.c.b16 %v1555, %v1546
      %v1862 = vpack.c.b16 %v1556, %v1547
      %v1863 = vpack.c.b16 %v1557, %v1548
      %v1864 = vpack.c.b16 %v1558, %v1549
      %v1865 = vpack.c.b16 %v1568, %v1559
      %v1866 = vpack.c.b16 %v1569, %v1560
      %v1867 = vpack.c.b16 %v1570, %v1561
      %v1868 = vpack.c.b16 %v1571, %v1562
      %v1869 = vpack.c.b16 %v1572, %v1563
      %v1870 = vpack.c.b16 %v1573, %v1564
      %v1871 = vpack.c.b16 %v1574, %v1565
      %v1872 = vpack.c.b16 %v1575, %v1566
      %v1873 = vpack.c.b16 %v1576, %v1567
      %v1874 = vpack.c.b16 %v1586, %v1577
      %v1875 = vpack.c.b16 %v1587, %v1578
      %v1876 = vpack.c.b16 %v1588, %v1579
      %v1877 = vpack.c.b16 %v1589, %v1580
      %v1878 = vpack.c.b16 %v1590, %v1581
      %v1879 = vpack.c.b16 %v1591, %v1582
      %v1880 = vpack.c.b16 %v1592, %v1583
      %v1881 = vpack.c.b16 %v1593, %v1584
      %v1882 = vpack.c.b16 %v1594, %v1585
      %v2315 = vunpack.c.l.b16 %v555
      %v2316 = vunpack.c.l.b16 %v556
      %v2317 = vunpack.c.l.b16 %v557
      %v2318 = vunpack.c.l.b16 %v558
      %v2319 = vunpack.c.l.b16 %v559
      %v2320 = vunpack.c.l.b16 %v560
      %v2321 = vunpack.c.l.b16 %v561
      %v2322 = vunpack.c.l.b16 %v562
      %v2323 = vunpack.c.l.b16 %v563
      %v2324 = vunpack.c.l.b16 %v564
      %v2325 = vunpack.c.l.b16 %v565
      %v2326 = vunpack.c.l.b16 %v566
      %v2327 = vunpack.c.l.b16 %v567
      %v2328 = vunpack.c.l.b16 %v568
      %v2329 = vunpack.c.l.b16 %v569
      %v2330 = vunpack.c.l.b16 %v570
      %v2331 = vunpack.c.l.b16 %v571
      %v2332 = vunpack.c.l.b16 %v572
      %v2333 = vunpack.c.l.b16 %v573
      %v2334 = vunpack.c.l.b16 %v574
      %v2335 = vunpack.c.l.b16 %v575
      %v2336 = vunpack.c.l.b16 %v576
      %v2337 = vunpack.c.l.b16 %v577
      %v2338 = vunpack.c.l.b16 %v578
      %v2339 = vunpack.c.l.b16 %v579
      %v2340 = vunpack.c.l.b16 %v580
      %v2341 = vunpack.c.l.b16 %v581
      %v2342 = vunpack.c.l.b16 %v582
      %v2343 = vunpack.c.l.b16 %v583
      %v2344 = vunpack.c.l.b16 %v584
      %v2345 = vunpack.c.l.b16 %v585
      %v2346 = vunpack.c.l.b16 %v586
      %v2347 = vunpack.c.l.b16 %v587
      %v2348 = vunpack.c.l.b16 %v588
      %v2349 = vunpack.c.l.b16 %v589
      %v2350 = vunpack.c.l.b16 %v590
      %v2351 = vunpack.c.l.b16 %v591
      %v2352 = vunpack.c.l.b16 %v592
      %v2353 = vunpack.c.l.b16 %v593
      %v2354 = vunpack.c.l.b16 %v594
      %v2355 = vunpack.c.l.b16 %v595
      %v2356 = vunpack.c.l.b16 %v596
      %v2357 = vunpack.c.l.b16 %v597
      %v2358 = vunpack.c.l.b16 %v598
      %v2359 = vunpack.c.l.b16 %v599
      %v2360 = vunpack.c.l.b16 %v600
      %v2361 = vunpack.c.l.b16 %v601
      %v2362 = vunpack.c.l.b16 %v602
      %v2363 = vunpack.c.l.b16 %v603
      %v2364 = vunpack.c.l.b16 %v604
      %v2365 = vunpack.c.l.b16 %v605
      %v2366 = vunpack.c.l.b16 %v606
      %v2367 = vunpack.c.l.b16 %v607
      %v2368 = vunpack.c.l.b16 %v608
      %v2369 = vunpack.c.l.b16 %v609
      %v2370 = vunpack.c.l.b16 %v610
      %v2371 = vunpack.c.l.b16 %v611
      %v2372 = vunpack.c.l.b16 %v612
      %v2373 = vunpack.c.l.b16 %v613
      %v2374 = vunpack.c.l.b16 %v614
      %v2375 = vunpack.c.l.b16 %v615
      %v2376 = vunpack.c.l.b16 %v616
      %v2377 = vunpack.c.l.b16 %v617
      %v2378 = vunpack.c.l.b16 %v618
      %v2379 = vunpack.c.l.b16 %v619
      %v2380 = vunpack.c.l.b16 %v620
      %v2381 = vunpack.c.l.b16 %v621
      %v2382 = vunpack.c.l.b16 %v622
      %v2383 = vunpack.c.l.b16 %v623
      %v2384 = vunpack.c.l.b16 %v624
      %v2385 = vunpack.c.l.b16 %v625
      %v2386 = vunpack.c.l.b16 %v626
      %v2387 = vunpack.c.l.b16 %v627
      %v2388 = vunpack.c.l.b16 %v628
      %v2389 = vunpack.c.l.b16 %v629
      %v2390 = vunpack.c.l.b16 %v630
      %v2391 = vunpack.c.l.b16 %v631
      %v2392 = vunpack.c.l.b16 %v632
      %v2393 = vunpack.c.l.b16 %v633
      %v2394 = vunpack.c.l.b16 %v634
      %v2395 = vunpack.c.l.b16 %v635
      %v2396 = vunpack.c.l.b16 %v636
      %v2397 = vunpack.c.l.b16 %v637
      %v2398 = vunpack.c.l.b16 %v638
      %v2399 = vunpack.c.l.b16 %v639
      %v2400 = vunpack.c.l.b16 %v640
      %v2401 = vunpack.c.l.b16 %v641
      %v2402 = vunpack.c.l.b16 %v642
      %v2403 = vunpack.c.l.b16 %v643
      %v2404 = vunpack.c.l.b16 %v644
      %v2405 = vunpack.c.l.b16 %v645
      %v2406 = vunpack.c.l.b16 %v646
      %v2407 = vunpack.c.l.b16 %v647
      %v2408 = vunpack.c.l.b16 %v648
      %v2409 = vunpack.c.l.b16 %v649
      %v2410 = vunpack.c.l.b16 %v650
      %v2411 = vunpack.c.l.b16 %v651
      %v2412 = vunpack.c.l.b16 %v652
      %v2413 = vunpack.c.l.b16 %v653
      %v2414 = vunpack.c.l.b16 %v654
      %v2415 = vunpack.c.l.b16 %v655
      %v2416 = vunpack.c.l.b16 %v656
      %v2417 = vunpack.c.l.b16 %v657
      %v2418 = vunpack.c.l.b16 %v658
      %v2419 = vunpack.c.l.b16 %v659
      %v2420 = vunpack.c.l.b16 %v660
      %v2421 = vunpack.c.l.b16 %v661
      %v2422 = vunpack.c.l.b16 %v662
      %v2423 = vunpack.c.l.b16 %v663
      %v2424 = vunpack.c.l.b16 %v664
      %v2425 = vunpack.c.l.b16 %v665
      %v2426 = vunpack.c.l.b16 %v666
      %v2427 = vunpack.c.l.b16 %v667
      %v2428 = vunpack.c.l.b16 %v668
      %v2429 = vunpack.c.l.b16 %v669
      %v2430 = vunpack.c.l.b16 %v670
      %v2431 = vunpack.c.l.b16 %v671
      %v2432 = vunpack.c.l.b16 %v672
      %v2433 = vunpack.c.l.b16 %v673
      %v2434 = vunpack.c.l.b16 %v674
      %v2435 = vunpack.c.l.b16 %v675
      %v2436 = vunpack.c.l.b16 %v676
      %v2437 = vunpack.c.l.b16 %v677
      %v2438 = vunpack.c.l.b16 %v678
      %v2439 = vunpack.c.l.b16 %v679
      %v2440 = vunpack.c.l.b16 %v680
      %v2441 = vunpack.c.l.b16 %v681
      %v2442 = vunpack.c.l.b16 %v682
      %v2443 = vunpack.c.l.b16 %v683
      %v2444 = vunpack.c.l.b16 %v684
      %v2445 = vunpack.c.l.b16 %v685
      %v2446 = vunpack.c.l.b16 %v686
      %v2447 = vunpack.c.l.b16 %v687
      %v2448 = vunpack.c.l.b16 %v688
      %v2449 = vunpack.c.l.b16 %v689
      %v2450 = vunpack.c.l.b16 %v690
      %v2451 = vunpack.c.l.b16 %v691
      %v2452 = vunpack.c.l.b16 %v692
      %v2453 = vunpack.c.l.b16 %v693
      %v2454 = vunpack.c.l.b16 %v694
      %v2455 = vunpack.c.l.b16 %v695
      %v2456 = vunpack.c.l.b16 %v696
      %v2457 = vunpack.c.l.b16 %v697
      %v2458 = vunpack.c.l.b16 %v698
      %v2459 = vpack.c.b16 %v2316, %v2315
      %v2460 = vpack.c.b16 %v2318, %v2317
      %v2461 = vpack.c.b16 %v2320, %v2319
      %v2462 = vpack.c.b16 %v2322, %v2321
      %v2463 = vpack.c.b16 %v2324, %v2323
      %v2464 = vpack.c.b16 %v2326, %v2325
      %v2465 = vpack.c.b16 %v2328, %v2327
      %v2466 = vpack.c.b16 %v2330, %v2329
      %v2467 = vpack.c.b16 %v2332, %v2331
      %v2468 = vpack.c.b16 %v2334, %v2333
      %v2469 = vpack.c.b16 %v2336, %v2335
      %v2470 = vpack.c.b16 %v2338, %v2337
      %v2471 = vpack.c.b16 %v2340, %v2339
      %v2472 = vpack.c.b16 %v2342, %v2341
      %v2473 = vpack.c.b16 %v2344, %v2343
      %v2474 = vpack.c.b16 %v2346, %v2345
      %v2475 = vpack.c.b16 %v2348, %v2347
      %v2476 = vpack.c.b16 %v2350, %v2349
      %v2477 = vpack.c.b16 %v2352, %v2351
      %v2478 = vpack.c.b16 %v2354, %v2353
      %v2479 = vpack.c.b16 %v2356, %v2355
      %v2480 = vpack.c.b16 %v2358, %v2357
      %v2481 = vpack.c.b16 %v2360, %v2359
      %v2482 = vpack.c.b16 %v2362, %v2361
      %v2483 = vpack.c.b16 %v2364, %v2363
      %v2484 = vpack.c.b16 %v2366, %v2365
      %v2485 = vpack.c.b16 %v2368, %v2367
      %v2486 = vpack.c.b16 %v2370, %v2369
      %v2487 = vpack.c.b16 %v2372, %v2371
      %v2488 = vpack.c.b16 %v2374, %v2373
      %v2489 = vpack.c.b16 %v2376, %v2375
      %v2490 = vpack.c.b16 %v2378, %v2377
      %v2491 = vpack.c.b16 %v2380, %v2379
      %v2492 = vpack.c.b16 %v2382, %v2381
      %v2493 = vpack.c.b16 %v2384, %v2383
      %v2494 = vpack.c.b16 %v2386, %v2385
      %v2495 = vpack.c.b16 %v2388, %v2387
      %v2496 = vpack.c.b16 %v2390, %v2389
      %v2497 = vpack.c.b16 %v2392, %v2391
      %v2498 = vpack.c.b16 %v2394, %v2393
      %v2499 = vpack.c.b16 %v2396, %v2395
      %v2500 = vpack.c.b16 %v2398, %v2397
      %v2501 = vpack.c.b16 %v2400, %v2399
      %v2502 = vpack.c.b16 %v2402, %v2401
      %v2503 = vpack.c.b16 %v2404, %v2403
      %v2504 = vpack.c.b16 %v2406, %v2405
      %v2505 = vpack.c.b16 %v2408, %v2407
      %v2506 = vpack.c.b16 %v2410, %v2409
      %v2507 = vpack.c.b16 %v2412, %v2411
      %v2508 = vpack.c.b16 %v2414, %v2413
      %v2509 = vpack.c.b16 %v2416, %v2415
      %v2510 = vpack.c.b16 %v2418, %v2417
      %v2511 = vpack.c.b16 %v2420, %v2419
      %v2512 = vpack.c.b16 %v2422, %v2421
      %v2513 = vpack.c.b16 %v2424, %v2423
      %v2514 = vpack.c.b16 %v2426, %v2425
      %v2515 = vpack.c.b16 %v2428, %v2427
      %v2516 = vpack.c.b16 %v2430, %v2429
      %v2517 = vpack.c.b16 %v2432, %v2431
      %v2518 = vpack.c.b16 %v2434, %v2433
      %v2519 = vpack.c.b16 %v2436, %v2435
      %v2520 = vpack.c.b16 %v2438, %v2437
      %v2521 = vpack.c.b16 %v2440, %v2439
      %v2522 = vpack.c.b16 %v2442, %v2441
      %v2523 = vpack.c.b16 %v2444, %v2443
      %v2524 = vpack.c.b16 %v2446, %v2445
      %v2525 = vpack.c.b16 %v2448, %v2447
      %v2526 = vpack.c.b16 %v2450, %v2449
      %v2527 = vpack.c.b16 %v2452, %v2451
      %v2528 = vpack.c.b16 %v2454, %v2453
      %v2529 = vpack.c.b16 %v2456, %v2455
      %v2530 = vpack.c.b16 %v2458, %v2457
      %2603 = vmatprep.subr.bf16.mxu0 0
      %2604 = vmatpush1.bf16.msra.mxu0 %v2459
      %2605 = vmatprep.subr.bf16.mxu0 0
      %2606 = vmatpush1.bf16.msra.mxu0 %v2460
      %2607 = vmatprep.subr.bf16.mxu0 0
      %2608 = vmatpush1.bf16.msra.mxu0 %v2461
      %2609 = vmatprep.subr.bf16.mxu0 0
      %2610 = vmatpush1.bf16.msra.mxu0 %v2462
      %2611 = vmatprep.subr.bf16.mxu0 0
      %2612 = vmatpush1.bf16.msra.mxu0 %v2463
      %2613 = vmatprep.subr.bf16.mxu0 0
      %2614 = vmatpush1.bf16.msra.mxu0 %v2464
      %2615 = vmatprep.subr.bf16.mxu0 0
      %2616 = vmatpush1.bf16.msra.mxu0 %v2465
      %2617 = vmatprep.subr.bf16.mxu0 0
      %2618 = vmatpush1.bf16.msra.mxu0 %v2466
      %2619 = vmatprep.subr.bf16.mxu0 0
      %2620 = vmatpush1.bf16.msra.mxu0 %v2467
      %2621 = vmatprep.subr.bf16.mxu0 0
      %2622 = vmatpush1.bf16.msra.mxu0 %v2468
      %2623 = vmatprep.subr.bf16.mxu0 0
      %2624 = vmatpush1.bf16.msra.mxu0 %v2469
      %2625 = vmatprep.subr.bf16.mxu0 0
      %2626 = vmatpush1.bf16.msra.mxu0 %v2470
      %2627 = vmatprep.subr.bf16.mxu0 0
      %2628 = vmatpush1.bf16.msra.mxu0 %v2471
      %2629 = vmatprep.subr.bf16.mxu0 0
      %2630 = vmatpush1.bf16.msra.mxu0 %v2472
      %2631 = vmatprep.subr.bf16.mxu0 0
      %2632 = vmatpush1.bf16.msra.mxu0 %v2473
      %2633 = vmatprep.subr.bf16.mxu0 0
      %2634 = vmatpush1.bf16.msra.mxu0 %v2474
      %2635 = vmatprep.mubr.bf16.mxu0 %v1596
      %2636 = vmatmul.mubr.bf16.gmra.mrb[0].mxu0 %v1595
      %v2637 = vpop.f32.mrb[0].mxu0
      %v2638 = vadd.f32 0.0, %v2637
      %v2639 = vpop.f32.mrb[0].mxu0
      %v2640 = vpop.f32.mrb[0].mxu0
      %v2641 = vadd.f32 0.0, %v2640
      %v2642 = vpop.f32.mrb[0].mxu0
      %2643 = vmatprep.mubr.bf16.mxu0 %v1605
      %2644 = vmatmul.mubr.bf16.gmra.mrb[0].mxu0 %v1604
      %v2645 = vpop.f32.mrb[0].mxu0
      %v2646 = vadd.f32 0.0, %v2645
      %v2647 = vpop.f32.mrb[0].mxu0
      %v2648 = vpop.f32.mrb[0].mxu0
      %v2649 = vadd.f32 0.0, %v2648
      %v2650 = vpop.f32.mrb[0].mxu0
      %2651 = vmatprep.mubr.bf16.mxu0 %v1614
      %2652 = vmatmul.mubr.bf16.gmra.mrb[0].mxu0 %v1613
      %v2653 = vpop.f32.mrb[0].mxu0
      %v2654 = vadd.f32 0.0, %v2653
      %v2655 = vpop.f32.mrb[0].mxu0
      %v2656 = vpop.f32.mrb[0].mxu0
      %v2657 = vadd.f32 0.0, %v2656
      %v2658 = vpop.f32.mrb[0].mxu0
      %2659 = vmatprep.mubr.bf16.mxu0 %v1623
      %2660 = vmatmul.mubr.bf16.gmra.mrb[0].mxu0 %v1622
      %v2661 = vpop.f32.mrb[0].mxu0
      %v2662 = vadd.f32 0.0, %v2661
      %v2663 = vpop.f32.mrb[0].mxu0
      %v2664 = vpop.f32.mrb[0].mxu0
      %v2665 = vadd.f32 0.0, %v2664
      %v2666 = vpop.f32.mrb[0].mxu0
      %2667 = vmatprep.mubr.bf16.mxu0 %v1632
      %2668 = vmatmul.mubr.bf16.gmra.mrb[0].mxu0 %v1631
      %v2669 = vpop.f32.mrb[0].mxu0
      %v2670 = vadd.f32 0.0, %v2669
      %v2671 = vpop.f32.mrb[0].mxu0
      %v2672 = vpop.f32.mrb[0].mxu0
      %v2673 = vadd.f32 0.0, %v2672
      %v2674 = vpop.f32.mrb[0].mxu0
      %2675 = vmatprep.mubr.bf16.mxu0 %v1641
      %2676 = vmatmul.mubr.bf16.gmra.mrb[0].mxu0 %v1640
      %v2677 = vpop.f32.mrb[0].mxu0
      %v2678 = vadd.f32 0.0, %v2677
      %v2679 = vpop.f32.mrb[0].mxu0
      %v2680 = vpop.f32.mrb[0].mxu0
      %v2681 = vadd.f32 0.0, %v2680
      %v2682 = vpop.f32.mrb[0].mxu0
      %2683 = vmatprep.mubr.bf16.mxu0 %v1650
      %2684 = vmatmul.mubr.bf16.gmra.mrb[0].mxu0 %v1649
      %v2685 = vpop.f32.mrb[0].mxu0
      %v2686 = vadd.f32 0.0, %v2685
      %v2687 = vpop.f32.mrb[0].mxu0
      %v2688 = vpop.f32.mrb[0].mxu0
      %v2689 = vadd.f32 0.0, %v2688
      %v2690 = vpop.f32.mrb[0].mxu0
      %2691 = vmatprep.mubr.bf16.mxu0 %v1659
      %2692 = vmatmul.mubr.bf16.gmra.mrb[0].mxu0 %v1658
      %v2693 = vpop.f32.mrb[0].mxu0
      %v2694 = vadd.f32 0.0, %v2693
      %v2695 = vpop.f32.mrb[0].mxu0
      %v2696 = vpop.f32.mrb[0].mxu0
      %v2697 = vadd.f32 0.0, %v2696
      %v2698 = vpop.f32.mrb[0].mxu0
      %2699 = vmatprep.mubr.bf16.mxu0 %v1668
      %2700 = vmatmul.mubr.bf16.gmra.mrb[0].mxu0 %v1667
      %v2701 = vpop.f32.mrb[0].mxu0
      %v2702 = vadd.f32 0.0, %v2701
      %v2703 = vpop.f32.mrb[0].mxu0
      %v2704 = vpop.f32.mrb[0].mxu0
      %v2705 = vadd.f32 0.0, %v2704
      %v2706 = vpop.f32.mrb[0].mxu0
      %2707 = vmatprep.mubr.bf16.mxu0 %v1677
      %2708 = vmatmul.mubr.bf16.gmra.mrb[0].mxu0 %v1676
      %v2709 = vpop.f32.mrb[0].mxu0
      %v2710 = vadd.f32 0.0, %v2709
      %v2711 = vpop.f32.mrb[0].mxu0
      %v2712 = vpop.f32.mrb[0].mxu0
      %v2713 = vadd.f32 0.0, %v2712
      %v2714 = vpop.f32.mrb[0].mxu0
      %2715 = vmatprep.mubr.bf16.mxu0 %v1686
      %2716 = vmatmul.mubr.bf16.gmra.mrb[0].mxu0 %v1685
      %v2717 = vpop.f32.mrb[0].mxu0
      %v2718 = vadd.f32 0.0, %v2717
      %v2719 = vpop.f32.mrb[0].mxu0
      %v2720 = vpop.f32.mrb[0].mxu0
      %v2721 = vadd.f32 0.0, %v2720
      %v2722 = vpop.f32.mrb[0].mxu0
      %2723 = vmatprep.mubr.bf16.mxu0 %v1695
      %2724 = vmatmul.mubr.bf16.gmra.mrb[0].mxu0 %v1694
      %v2725 = vpop.f32.mrb[0].mxu0
      %v2726 = vadd.f32 0.0, %v2725
      %v2727 = vpop.f32.mrb[0].mxu0
      %v2728 = vpop.f32.mrb[0].mxu0
      %v2729 = vadd.f32 0.0, %v2728
      %v2730 = vpop.f32.mrb[0].mxu0
      %2731 = vmatprep.mubr.bf16.mxu0 %v1704
      %2732 = vmatmul.mubr.bf16.gmra.mrb[0].mxu0 %v1703
      %v2733 = vpop.f32.mrb[0].mxu0
      %v2734 = vadd.f32 0.0, %v2733
      %v2735 = vpop.f32.mrb[0].mxu0
      %v2736 = vpop.f32.mrb[0].mxu0
      %v2737 = vadd.f32 0.0, %v2736
      %v2738 = vpop.f32.mrb[0].mxu0
      %2739 = vmatprep.mubr.bf16.mxu0 %v1713
      %2740 = vmatmul.mubr.bf16.gmra.mrb[0].mxu0 %v1712
      %v2741 = vpop.f32.mrb[0].mxu0
      %v2742 = vadd.f32 0.0, %v2741
      %v2743 = vpop.f32.mrb[0].mxu0
      %v2744 = vpop.f32.mrb[0].mxu0
      %v2745 = vadd.f32 0.0, %v2744
      %v2746 = vpop.f32.mrb[0].mxu0
      %2747 = vmatprep.mubr.bf16.mxu0 %v1722
      %2748 = vmatmul.mubr.bf16.gmra.mrb[0].mxu0 %v1721
      %v2749 = vpop.f32.mrb[0].mxu0
      %v2750 = vadd.f32 0.0, %v2749
      %v2751 = vpop.f32.mrb[0].mxu0
      %v2752 = vpop.f32.mrb[0].mxu0
      %v2753 = vadd.f32 0.0, %v2752
      %v2754 = vpop.f32.mrb[0].mxu0
      %2755 = vmatprep.mubr.bf16.mxu0 %v1731
      %2756 = vmatmul.mubr.bf16.gmra.mrb[0].mxu0 %v1730
      %v2757 = vpop.f32.mrb[0].mxu0
      %v2758 = vadd.f32 0.0, %v2757
      %v2759 = vpop.f32.mrb[0].mxu0
      %v2760 = vpop.f32.mrb[0].mxu0
      %v2761 = vadd.f32 0.0, %v2760
      %v2762 = vpop.f32.mrb[0].mxu0
      %2763 = vmatprep.mubr.bf16.mxu0 %v1740
      %2764 = vmatmul.mubr.bf16.gmra.mrb[0].mxu0 %v1739
      %v2765 = vpop.f32.mrb[0].mxu0
      %v2766 = vadd.f32 0.0, %v2765
      %v2767 = vpop.f32.mrb[0].mxu0
      %v2768 = vpop.f32.mrb[0].mxu0
      %v2769 = vadd.f32 0.0, %v2768
      %v2770 = vpop.f32.mrb[0].mxu0
      %2771 = vmatprep.mubr.bf16.mxu0 %v1749
      %2772 = vmatmul.mubr.bf16.gmra.mrb[0].mxu0 %v1748
      %v2773 = vpop.f32.mrb[0].mxu0
      %v2774 = vadd.f32 0.0, %v2773
      %v2775 = vpop.f32.mrb[0].mxu0
      %v2776 = vpop.f32.mrb[0].mxu0
      %v2777 = vadd.f32 0.0, %v2776
      %v2778 = vpop.f32.mrb[0].mxu0
      %2779 = vmatprep.mubr.bf16.mxu0 %v1758
      %2780 = vmatmul.mubr.bf16.gmra.mrb[0].mxu0 %v1757
      %v2781 = vpop.f32.mrb[0].mxu0
      %v2782 = vadd.f32 0.0, %v2781
      %v2783 = vpop.f32.mrb[0].mxu0
      %v2784 = vpop.f32.mrb[0].mxu0
      %v2785 = vadd.f32 0.0, %v2784
      %v2786 = vpop.f32.mrb[0].mxu0
      %2787 = vmatprep.mubr.bf16.mxu0 %v1767
      %2788 = vmatmul.mubr.bf16.gmra.mrb[0].mxu0 %v1766
      %v2789 = vpop.f32.mrb[0].mxu0
      %v2790 = vadd.f32 0.0, %v2789
      %v2791 = vpop.f32.mrb[0].mxu0
      %v2792 = vpop.f32.mrb[0].mxu0
      %v2793 = vadd.f32 0.0, %v2792
      %v2794 = vpop.f32.mrb[0].mxu0
      %2795 = vmatprep.mubr.bf16.mxu0 %v1776
      %2796 = vmatmul.mubr.bf16.gmra.mrb[0].mxu0 %v1775
      %v2797 = vpop.f32.mrb[0].mxu0
      %v2798 = vadd.f32 0.0, %v2797
      %v2799 = vpop.f32.mrb[0].mxu0
      %v2800 = vpop.f32.mrb[0].mxu0
      %v2801 = vadd.f32 0.0, %v2800
      %v2802 = vpop.f32.mrb[0].mxu0
      %2803 = vmatprep.mubr.bf16.mxu0 %v1785
      %2804 = vmatmul.mubr.bf16.gmra.mrb[0].mxu0 %v1784
      %v2805 = vpop.f32.mrb[0].mxu0
      %v2806 = vadd.f32 0.0, %v2805
      %v2807 = vpop.f32.mrb[0].mxu0
      %v2808 = vpop.f32.mrb[0].mxu0
      %v2809 = vadd.f32 0.0, %v2808
      %v2810 = vpop.f32.mrb[0].mxu0
      %2811 = vmatprep.mubr.bf16.mxu0 %v1794
      %2812 = vmatmul.mubr.bf16.gmra.mrb[0].mxu0 %v1793
      %v2813 = vpop.f32.mrb[0].mxu0
      %v2814 = vadd.f32 0.0, %v2813
      %v2815 = vpop.f32.mrb[0].mxu0
      %v2816 = vpop.f32.mrb[0].mxu0
      %v2817 = vadd.f32 0.0, %v2816
      %v2818 = vpop.f32.mrb[0].mxu0
      %2819 = vmatprep.mubr.bf16.mxu0 %v1803
      %2820 = vmatmul.mubr.bf16.gmra.mrb[0].mxu0 %v1802
      %v2821 = vpop.f32.mrb[0].mxu0
      %v2822 = vadd.f32 0.0, %v2821
      %v2823 = vpop.f32.mrb[0].mxu0
      %v2824 = vpop.f32.mrb[0].mxu0
      %v2825 = vadd.f32 0.0, %v2824
      %v2826 = vpop.f32.mrb[0].mxu0
      %2827 = vmatprep.mubr.bf16.mxu0 %v1812
      %2828 = vmatmul.mubr.bf16.gmra.mrb[0].mxu0 %v1811
      %v2829 = vpop.f32.mrb[0].mxu0
      %v2830 = vadd.f32 0.0, %v2829
      %v2831 = vpop.f32.mrb[0].mxu0
      %v2832 = vpop.f32.mrb[0].mxu0
      %v2833 = vadd.f32 0.0, %v2832
      %v2834 = vpop.f32.mrb[0].mxu0
      %2835 = vmatprep.mubr.bf16.mxu0 %v1821
      %2836 = vmatmul.mubr.bf16.gmra.mrb[0].mxu0 %v1820
      %v2837 = vpop.f32.mrb[0].mxu0
      %v2838 = vadd.f32 0.0, %v2837
      %v2839 = vpop.f32.mrb[0].mxu0
      %v2840 = vpop.f32.mrb[0].mxu0
      %v2841 = vadd.f32 0.0, %v2840
      %v2842 = vpop.f32.mrb[0].mxu0
      %2843 = vmatprep.mubr.bf16.mxu0 %v1830
      %2844 = vmatmul.mubr.bf16.gmra.mrb[0].mxu0 %v1829
      %v2845 = vpop.f32.mrb[0].mxu0
      %v2846 = vadd.f32 0.0, %v2845
      %v2847 = vpop.f32.mrb[0].mxu0
      %v2848 = vpop.f32.mrb[0].mxu0
      %v2849 = vadd.f32 0.0, %v2848
      %v2850 = vpop.f32.mrb[0].mxu0
      %2851 = vmatprep.mubr.bf16.mxu0 %v1839
      %2852 = vmatmul.mubr.bf16.gmra.mrb[0].mxu0 %v1838
      %v2853 = vpop.f32.mrb[0].mxu0
      %v2854 = vadd.f32 0.0, %v2853
      %v2855 = vpop.f32.mrb[0].mxu0
      %v2856 = vpop.f32.mrb[0].mxu0
      %v2857 = vadd.f32 0.0, %v2856
      %v2858 = vpop.f32.mrb[0].mxu0
      %2859 = vmatprep.mubr.bf16.mxu0 %v1848
      %2860 = vmatmul.mubr.bf16.gmra.mrb[0].mxu0 %v1847
      %v2861 = vpop.f32.mrb[0].mxu0
      %v2862 = vadd.f32 0.0, %v2861
      %v2863 = vpop.f32.mrb[0].mxu0
      %v2864 = vpop.f32.mrb[0].mxu0
      %v2865 = vadd.f32 0.0, %v2864
      %v2866 = vpop.f32.mrb[0].mxu0
      %2867 = vmatprep.mubr.bf16.mxu0 %v1857
      %2868 = vmatmul.mubr.bf16.gmra.mrb[0].mxu0 %v1856
      %v2869 = vpop.f32.mrb[0].mxu0
      %v2870 = vadd.f32 0.0, %v2869
      %v2871 = vpop.f32.mrb[0].mxu0
      %v2872 = vpop.f32.mrb[0].mxu0
      %v2873 = vadd.f32 0.0, %v2872
      %v2874 = vpop.f32.mrb[0].mxu0
      %2875 = vmatprep.mubr.bf16.mxu0 %v1866
      %2876 = vmatmul.mubr.bf16.gmra.mrb[0].mxu0 %v1865
      %v2877 = vpop.f32.mrb[0].mxu0
      %v2878 = vadd.f32 0.0, %v2877
      %v2879 = vpop.f32.mrb[0].mxu0
      %v2880 = vpop.f32.mrb[0].mxu0
      %v2881 = vadd.f32 0.0, %v2880
      %v2882 = vpop.f32.mrb[0].mxu0
      %2883 = vmatprep.mubr.bf16.mxu0 %v1875
      %2884 = vmatmul.mubr.bf16.gmra.mrb[0].mxu0 %v1874
      %v2885 = vpop.f32.mrb[0].mxu0
      %v2886 = vadd.f32 0.0, %v2885
      %v2887 = vpop.f32.mrb[0].mxu0
      %v2888 = vpop.f32.mrb[0].mxu0
      %v2889 = vadd.f32 0.0, %v2888
      %v2890 = vpop.f32.mrb[0].mxu0
      %2891 = vdwg.mxu0
      %2892 = vmatprep.subr.bf16.mxu0 0
      %2893 = vmatpush1.bf16.msra.mxu0 %v2475
      %2894 = vmatprep.subr.bf16.mxu0 0
      %2895 = vmatpush1.bf16.msra.mxu0 %v2476
      %2896 = vmatprep.subr.bf16.mxu0 0
      %2897 = vmatpush1.bf16.msra.mxu0 %v2477
      %2898 = vmatprep.subr.bf16.mxu0 0
      %2899 = vmatpush1.bf16.msra.mxu0 %v2478
      %2900 = vmatprep.subr.bf16.mxu0 0
      %2901 = vmatpush1.bf16.msra.mxu0 %v2479
      %2902 = vmatprep.subr.bf16.mxu0 0
      %2903 = vmatpush1.bf16.msra.mxu0 %v2480
      %2904 = vmatprep.subr.bf16.mxu0 0
      %2905 = vmatpush1.bf16.msra.mxu0 %v2481
      %2906 = vmatprep.subr.bf16.mxu0 0
      %2907 = vmatpush1.bf16.msra.mxu0 %v2482
      %2908 = vmatprep.subr.bf16.mxu0 0
      %2909 = vmatpush1.bf16.msra.mxu0 %v2483
      %2910 = vmatprep.subr.bf16.mxu0 0
      %2911 = vmatpush1.bf16.msra.mxu0 %v2484
      %2912 = vmatprep.subr.bf16.mxu0 0
      %2913 = vmatpush1.bf16.msra.mxu0 %v2485
      %2914 = vmatprep.subr.bf16.mxu0 0
      %2915 = vmatpush1.bf16.msra.mxu0 %v2486
      %2916 = vmatprep.subr.bf16.mxu0 0
      %2917 = vmatpush1.bf16.msra.mxu0 %v2487
      %2918 = vmatprep.subr.bf16.mxu0 0
      %2919 = vmatpush1.bf16.msra.mxu0 %v2488
      %2920 = vmatprep.subr.bf16.mxu0 0
      %2921 = vmatpush1.bf16.msra.mxu0 %v2489
      %2922 = vmatprep.subr.bf16.mxu0 0
      %2923 = vmatpush1.bf16.msra.mxu0 %v2490
      %2924 = vmatprep.mubr.bf16.mxu0 %v1598
      %2925 = vmatmul.mubr.bf16.gmra.mrb[0].mxu0 %v1597
      %v2926 = vpop.f32.mrb[0].mxu0
      %v2927 = vadd.f32 %v2638, %v2926
      %v2928 = vpop.f32.mrb[0].mxu0
      %v2929 = vpop.f32.mrb[0].mxu0
      %v2930 = vadd.f32 %v2641, %v2929
      %v2931 = vpop.f32.mrb[0].mxu0
      %2932 = vmatprep.mubr.bf16.mxu0 %v1607
      %2933 = vmatmul.mubr.bf16.gmra.mrb[0].mxu0 %v1606
      %v2934 = vpop.f32.mrb[0].mxu0
      %v2935 = vadd.f32 %v2646, %v2934
      %v2936 = vpop.f32.mrb[0].mxu0
      %v2937 = vpop.f32.mrb[0].mxu0
      %v2938 = vadd.f32 %v2649, %v2937
      %v2939 = vpop.f32.mrb[0].mxu0
      %2940 = vmatprep.mubr.bf16.mxu0 %v1616
      %2941 = vmatmul.mubr.bf16.gmra.mrb[0].mxu0 %v1615
      %v2942 = vpop.f32.mrb[0].mxu0
      %v2943 = vadd.f32 %v2654, %v2942
      %v2944 = vpop.f32.mrb[0].mxu0
      %v2945 = vpop.f32.mrb[0].mxu0
      %v2946 = vadd.f32 %v2657, %v2945
      %v2947 = vpop.f32.mrb[0].mxu0
      %2948 = vmatprep.mubr.bf16.mxu0 %v1625
      %2949 = vmatmul.mubr.bf16.gmra.mrb[0].mxu0 %v1624
      %v2950 = vpop.f32.mrb[0].mxu0
      %v2951 = vadd.f32 %v2662, %v2950
      %v2952 = vpop.f32.mrb[0].mxu0
      %v2953 = vpop.f32.mrb[0].mxu0
      %v2954 = vadd.f32 %v2665, %v2953
      %v2955 = vpop.f32.mrb[0].mxu0
      %2956 = vmatprep.mubr.bf16.mxu0 %v1634
      %2957 = vmatmul.mubr.bf16.gmra.mrb[0].mxu0 %v1633
      %v2958 = vpop.f32.mrb[0].mxu0
      %v2959 = vadd.f32 %v2670, %v2958
      %v2960 = vpop.f32.mrb[0].mxu0
      %v2961 = vpop.f32.mrb[0].mxu0
      %v2962 = vadd.f32 %v2673, %v2961
      %v2963 = vpop.f32.mrb[0].mxu0
      %2964 = vmatprep.mubr.bf16.mxu0 %v1643
      %2965 = vmatmul.mubr.bf16.gmra.mrb[0].mxu0 %v1642
      %v2966 = vpop.f32.mrb[0].mxu0
      %v2967 = vadd.f32 %v2678, %v2966
      %v2968 = vpop.f32.mrb[0].mxu0
      %v2969 = vpop.f32.mrb[0].mxu0
      %v2970 = vadd.f32 %v2681, %v2969
      %v2971 = vpop.f32.mrb[0].mxu0
      %2972 = vmatprep.mubr.bf16.mxu0 %v1652
      %2973 = vmatmul.mubr.bf16.gmra.mrb[0].mxu0 %v1651
      %v2974 = vpop.f32.mrb[0].mxu0
      %v2975 = vadd.f32 %v2686, %v2974
      %v2976 = vpop.f32.mrb[0].mxu0
      %v2977 = vpop.f32.mrb[0].mxu0
      %v2978 = vadd.f32 %v2689, %v2977
      %v2979 = vpop.f32.mrb[0].mxu0
      %2980 = vmatprep.mubr.bf16.mxu0 %v1661
      %2981 = vmatmul.mubr.bf16.gmra.mrb[0].mxu0 %v1660
      %v2982 = vpop.f32.mrb[0].mxu0
      %v2983 = vadd.f32 %v2694, %v2982
      %v2984 = vpop.f32.mrb[0].mxu0
      %v2985 = vpop.f32.mrb[0].mxu0
      %v2986 = vadd.f32 %v2697, %v2985
      %v2987 = vpop.f32.mrb[0].mxu0
      %2988 = vmatprep.mubr.bf16.mxu0 %v1670
      %2989 = vmatmul.mubr.bf16.gmra.mrb[0].mxu0 %v1669
      %v2990 = vpop.f32.mrb[0].mxu0
      %v2991 = vadd.f32 %v2702, %v2990
      %v2992 = vpop.f32.mrb[0].mxu0
      %v2993 = vpop.f32.mrb[0].mxu0
      %v2994 = vadd.f32 %v2705, %v2993
      %v2995 = vpop.f32.mrb[0].mxu0
      %2996 = vmatprep.mubr.bf16.mxu0 %v1679
      %2997 = vmatmul.mubr.bf16.gmra.mrb[0].mxu0 %v1678
      %v2998 = vpop.f32.mrb[0].mxu0
      %v2999 = vadd.f32 %v2710, %v2998
      %v3000 = vpop.f32.mrb[0].mxu0
      %v3001 = vpop.f32.mrb[0].mxu0
      %v3002 = vadd.f32 %v2713, %v3001
      %v3003 = vpop.f32.mrb[0].mxu0
      %3004 = vmatprep.mubr.bf16.mxu0 %v1688
      %3005 = vmatmul.mubr.bf16.gmra.mrb[0].mxu0 %v1687
      %v3006 = vpop.f32.mrb[0].mxu0
      %v3007 = vadd.f32 %v2718, %v3006
      %v3008 = vpop.f32.mrb[0].mxu0
      %v3009 = vpop.f32.mrb[0].mxu0
      %v3010 = vadd.f32 %v2721, %v3009
      %v3011 = vpop.f32.mrb[0].mxu0
      %3012 = vmatprep.mubr.bf16.mxu0 %v1697
      %3013 = vmatmul.mubr.bf16.gmra.mrb[0].mxu0 %v1696
      %v3014 = vpop.f32.mrb[0].mxu0
      %v3015 = vadd.f32 %v2726, %v3014
      %v3016 = vpop.f32.mrb[0].mxu0
      %v3017 = vpop.f32.mrb[0].mxu0
      %v3018 = vadd.f32 %v2729, %v3017
      %v3019 = vpop.f32.mrb[0].mxu0
      %3020 = vmatprep.mubr.bf16.mxu0 %v1706
      %3021 = vmatmul.mubr.bf16.gmra.mrb[0].mxu0 %v1705
      %v3022 = vpop.f32.mrb[0].mxu0
      %v3023 = vadd.f32 %v2734, %v3022
      %v3024 = vpop.f32.mrb[0].mxu0
      %v3025 = vpop.f32.mrb[0].mxu0
      %v3026 = vadd.f32 %v2737, %v3025
      %v3027 = vpop.f32.mrb[0].mxu0
      %3028 = vmatprep.mubr.bf16.mxu0 %v1715
      %3029 = vmatmul.mubr.bf16.gmra.mrb[0].mxu0 %v1714
      %v3030 = vpop.f32.mrb[0].mxu0
      %v3031 = vadd.f32 %v2742, %v3030
      %v3032 = vpop.f32.mrb[0].mxu0
      %v3033 = vpop.f32.mrb[0].mxu0
      %v3034 = vadd.f32 %v2745, %v3033
      %v3035 = vpop.f32.mrb[0].mxu0
      %3036 = vmatprep.mubr.bf16.mxu0 %v1724
      %3037 = vmatmul.mubr.bf16.gmra.mrb[0].mxu0 %v1723
      %v3038 = vpop.f32.mrb[0].mxu0
      %v3039 = vadd.f32 %v2750, %v3038
      %v3040 = vpop.f32.mrb[0].mxu0
      %v3041 = vpop.f32.mrb[0].mxu0
      %v3042 = vadd.f32 %v2753, %v3041
      %v3043 = vpop.f32.mrb[0].mxu0
      %3044 = vmatprep.mubr.bf16.mxu0 %v1733
      %3045 = vmatmul.mubr.bf16.gmra.mrb[0].mxu0 %v1732
      %v3046 = vpop.f32.mrb[0].mxu0
      %v3047 = vadd.f32 %v2758, %v3046
      %v3048 = vpop.f32.mrb[0].mxu0
      %v3049 = vpop.f32.mrb[0].mxu0
      %v3050 = vadd.f32 %v2761, %v3049
      %v3051 = vpop.f32.mrb[0].mxu0
      %3052 = vmatprep.mubr.bf16.mxu0 %v1742
      %3053 = vmatmul.mubr.bf16.gmra.mrb[0].mxu0 %v1741
      %v3054 = vpop.f32.mrb[0].mxu0
      %v3055 = vadd.f32 %v2766, %v3054
      %v3056 = vpop.f32.mrb[0].mxu0
      %v3057 = vpop.f32.mrb[0].mxu0
      %v3058 = vadd.f32 %v2769, %v3057
      %v3059 = vpop.f32.mrb[0].mxu0
      %3060 = vmatprep.mubr.bf16.mxu0 %v1751
      %3061 = vmatmul.mubr.bf16.gmra.mrb[0].mxu0 %v1750
      %v3062 = vpop.f32.mrb[0].mxu0
      %v3063 = vadd.f32 %v2774, %v3062
      %v3064 = vpop.f32.mrb[0].mxu0
      %v3065 = vpop.f32.mrb[0].mxu0
      %v3066 = vadd.f32 %v2777, %v3065
      %v3067 = vpop.f32.mrb[0].mxu0
      %3068 = vmatprep.mubr.bf16.mxu0 %v1760
      %3069 = vmatmul.mubr.bf16.gmra.mrb[0].mxu0 %v1759
      %v3070 = vpop.f32.mrb[0].mxu0
      %v3071 = vadd.f32 %v2782, %v3070
      %v3072 = vpop.f32.mrb[0].mxu0
      %v3073 = vpop.f32.mrb[0].mxu0
      %v3074 = vadd.f32 %v2785, %v3073
      %v3075 = vpop.f32.mrb[0].mxu0
      %3076 = vmatprep.mubr.bf16.mxu0 %v1769
      %3077 = vmatmul.mubr.bf16.gmra.mrb[0].mxu0 %v1768
      %v3078 = vpop.f32.mrb[0].mxu0
      %v3079 = vadd.f32 %v2790, %v3078
      %v3080 = vpop.f32.mrb[0].mxu0
      %v3081 = vpop.f32.mrb[0].mxu0
      %v3082 = vadd.f32 %v2793, %v3081
      %v3083 = vpop.f32.mrb[0].mxu0
      %3084 = vmatprep.mubr.bf16.mxu0 %v1778
      %3085 = vmatmul.mubr.bf16.gmra.mrb[0].mxu0 %v1777
      %v3086 = vpop.f32.mrb[0].mxu0
      %v3087 = vadd.f32 %v2798, %v3086
      %v3088 = vpop.f32.mrb[0].mxu0
      %v3089 = vpop.f32.mrb[0].mxu0
      %v3090 = vadd.f32 %v2801, %v3089
      %v3091 = vpop.f32.mrb[0].mxu0
      %3092 = vmatprep.mubr.bf16.mxu0 %v1787
      %3093 = vmatmul.mubr.bf16.gmra.mrb[0].mxu0 %v1786
      %v3094 = vpop.f32.mrb[0].mxu0
      %v3095 = vadd.f32 %v2806, %v3094
      %v3096 = vpop.f32.mrb[0].mxu0
      %v3097 = vpop.f32.mrb[0].mxu0
      %v3098 = vadd.f32 %v2809, %v3097
      %v3099 = vpop.f32.mrb[0].mxu0
      %3100 = vmatprep.mubr.bf16.mxu0 %v1796
      %3101 = vmatmul.mubr.bf16.gmra.mrb[0].mxu0 %v1795
      %v3102 = vpop.f32.mrb[0].mxu0
      %v3103 = vadd.f32 %v2814, %v3102
      %v3104 = vpop.f32.mrb[0].mxu0
      %v3105 = vpop.f32.mrb[0].mxu0
      %v3106 = vadd.f32 %v2817, %v3105
      %v3107 = vpop.f32.mrb[0].mxu0
      %3108 = vmatprep.mubr.bf16.mxu0 %v1805
      %3109 = vmatmul.mubr.bf16.gmra.mrb[0].mxu0 %v1804
      %v3110 = vpop.f32.mrb[0].mxu0
      %v3111 = vadd.f32 %v2822, %v3110
      %v3112 = vpop.f32.mrb[0].mxu0
      %v3113 = vpop.f32.mrb[0].mxu0
      %v3114 = vadd.f32 %v2825, %v3113
      %v3115 = vpop.f32.mrb[0].mxu0
      %3116 = vmatprep.mubr.bf16.mxu0 %v1814
      %3117 = vmatmul.mubr.bf16.gmra.mrb[0].mxu0 %v1813
      %v3118 = vpop.f32.mrb[0].mxu0
      %v3119 = vadd.f32 %v2830, %v3118
      %v3120 = vpop.f32.mrb[0].mxu0
      %v3121 = vpop.f32.mrb[0].mxu0
      %v3122 = vadd.f32 %v2833, %v3121
      %v3123 = vpop.f32.mrb[0].mxu0
      %3124 = vmatprep.mubr.bf16.mxu0 %v1823
      %3125 = vmatmul.mubr.bf16.gmra.mrb[0].mxu0 %v1822
      %v3126 = vpop.f32.mrb[0].mxu0
      %v3127 = vadd.f32 %v2838, %v3126
      %v3128 = vpop.f32.mrb[0].mxu0
      %v3129 = vpop.f32.mrb[0].mxu0
      %v3130 = vadd.f32 %v2841, %v3129
      %v3131 = vpop.f32.mrb[0].mxu0
      %3132 = vmatprep.mubr.bf16.mxu0 %v1832
      %3133 = vmatmul.mubr.bf16.gmra.mrb[0].mxu0 %v1831
      %v3134 = vpop.f32.mrb[0].mxu0
      %v3135 = vadd.f32 %v2846, %v3134
      %v3136 = vpop.f32.mrb[0].mxu0
      %v3137 = vpop.f32.mrb[0].mxu0
      %v3138 = vadd.f32 %v2849, %v3137
      %v3139 = vpop.f32.mrb[0].mxu0
      %3140 = vmatprep.mubr.bf16.mxu0 %v1841
      %3141 = vmatmul.mubr.bf16.gmra.mrb[0].mxu0 %v1840
      %v3142 = vpop.f32.mrb[0].mxu0
      %v3143 = vadd.f32 %v2854, %v3142
      %v3144 = vpop.f32.mrb[0].mxu0
      %v3145 = vpop.f32.mrb[0].mxu0
      %v3146 = vadd.f32 %v2857, %v3145
      %v3147 = vpop.f32.mrb[0].mxu0
      %3148 = vmatprep.mubr.bf16.mxu0 %v1850
      %3149 = vmatmul.mubr.bf16.gmra.mrb[0].mxu0 %v1849
      %v3150 = vpop.f32.mrb[0].mxu0
      %v3151 = vadd.f32 %v2862, %v3150
      %v3152 = vpop.f32.mrb[0].mxu0
      %v3153 = vpop.f32.mrb[0].mxu0
      %v3154 = vadd.f32 %v2865, %v3153
      %v3155 = vpop.f32.mrb[0].mxu0
      %3156 = vmatprep.mubr.bf16.mxu0 %v1859
      %3157 = vmatmul.mubr.bf16.gmra.mrb[0].mxu0 %v1858
      %v3158 = vpop.f32.mrb[0].mxu0
      %v3159 = vadd.f32 %v2870, %v3158
      %v3160 = vpop.f32.mrb[0].mxu0
      %v3161 = vpop.f32.mrb[0].mxu0
      %v3162 = vadd.f32 %v2873, %v3161
      %v3163 = vpop.f32.mrb[0].mxu0
      %3164 = vmatprep.mubr.bf16.mxu0 %v1868
      %3165 = vmatmul.mubr.bf16.gmra.mrb[0].mxu0 %v1867
      %v3166 = vpop.f32.mrb[0].mxu0
      %v3167 = vadd.f32 %v2878, %v3166
      %v3168 = vpop.f32.mrb[0].mxu0
      %v3169 = vpop.f32.mrb[0].mxu0
      %v3170 = vadd.f32 %v2881, %v3169
      %v3171 = vpop.f32.mrb[0].mxu0
      %3172 = vmatprep.mubr.bf16.mxu0 %v1877
      %3173 = vmatmul.mubr.bf16.gmra.mrb[0].mxu0 %v1876
      %v3174 = vpop.f32.mrb[0].mxu0
      %v3175 = vadd.f32 %v2886, %v3174
      %v3176 = vpop.f32.mrb[0].mxu0
      %v3177 = vpop.f32.mrb[0].mxu0
      %v3178 = vadd.f32 %v2889, %v3177
      %v3179 = vpop.f32.mrb[0].mxu0
      %3180 = vdwg.mxu0
      %3181 = vmatprep.subr.bf16.mxu0 0
      %3182 = vmatpush1.bf16.msra.mxu0 %v2491
      %3183 = vmatprep.subr.bf16.mxu0 0
      %3184 = vmatpush1.bf16.msra.mxu0 %v2492
      %3185 = vmatprep.subr.bf16.mxu0 0
      %3186 = vmatpush1.bf16.msra.mxu0 %v2493
      %3187 = vmatprep.subr.bf16.mxu0 0
      %3188 = vmatpush1.bf16.msra.mxu0 %v2494
      %3189 = vmatprep.subr.bf16.mxu0 0
      %3190 = vmatpush1.bf16.msra.mxu0 %v2495
      %3191 = vmatprep.subr.bf16.mxu0 0
      %3192 = vmatpush1.bf16.msra.mxu0 %v2496
      %3193 = vmatprep.subr.bf16.mxu0 0
      %3194 = vmatpush1.bf16.msra.mxu0 %v2497
      %3195 = vmatprep.subr.bf16.mxu0 0
      %3196 = vmatpush1.bf16.msra.mxu0 %v2498
      %3197 = vmatprep.subr.bf16.mxu0 0
      %3198 = vmatpush1.bf16.msra.mxu0 %v2499
      %3199 = vmatprep.subr.bf16.mxu0 0
      %3200 = vmatpush1.bf16.msra.mxu0 %v2500
      %3201 = vmatprep.subr.bf16.mxu0 0
      %3202 = vmatpush1.bf16.msra.mxu0 %v2501
      %3203 = vmatprep.subr.bf16.mxu0 0
      %3204 = vmatpush1.bf16.msra.mxu0 %v2502
      %3205 = vmatprep.subr.bf16.mxu0 0
      %3206 = vmatpush1.bf16.msra.mxu0 %v2503
      %3207 = vmatprep.subr.bf16.mxu0 0
      %3208 = vmatpush1.bf16.msra.mxu0 %v2504
      %3209 = vmatprep.subr.bf16.mxu0 0
      %3210 = vmatpush1.bf16.msra.mxu0 %v2505
      %3211 = vmatprep.subr.bf16.mxu0 0
      %3212 = vmatpush1.bf16.msra.mxu0 %v2506
      %3213 = vmatprep.mubr.bf16.mxu0 %v1600
      %3214 = vmatmul.mubr.bf16.gmra.mrb[0].mxu0 %v1599
      %v3215 = vpop.f32.mrb[0].mxu0
      %v3216 = vadd.f32 %v2927, %v3215
      %v3217 = vpop.f32.mrb[0].mxu0
      %v3218 = vpop.f32.mrb[0].mxu0
      %v3219 = vadd.f32 %v2930, %v3218
      %v3220 = vpop.f32.mrb[0].mxu0
      %3221 = vmatprep.mubr.bf16.mxu0 %v1609
      %3222 = vmatmul.mubr.bf16.gmra.mrb[0].mxu0 %v1608
      %v3223 = vpop.f32.mrb[0].mxu0
      %v3224 = vadd.f32 %v2935, %v3223
      %v3225 = vpop.f32.mrb[0].mxu0
      %v3226 = vpop.f32.mrb[0].mxu0
      %v3227 = vadd.f32 %v2938, %v3226
      %v3228 = vpop.f32.mrb[0].mxu0
      %3229 = vmatprep.mubr.bf16.mxu0 %v1618
      %3230 = vmatmul.mubr.bf16.gmra.mrb[0].mxu0 %v1617
      %v3231 = vpop.f32.mrb[0].mxu0
      %v3232 = vadd.f32 %v2943, %v3231
      %v3233 = vpop.f32.mrb[0].mxu0
      %v3234 = vpop.f32.mrb[0].mxu0
      %v3235 = vadd.f32 %v2946, %v3234
      %v3236 = vpop.f32.mrb[0].mxu0
      %3237 = vmatprep.mubr.bf16.mxu0 %v1627
      %3238 = vmatmul.mubr.bf16.gmra.mrb[0].mxu0 %v1626
      %v3239 = vpop.f32.mrb[0].mxu0
      %v3240 = vadd.f32 %v2951, %v3239
      %v3241 = vpop.f32.mrb[0].mxu0
      %v3242 = vpop.f32.mrb[0].mxu0
      %v3243 = vadd.f32 %v2954, %v3242
      %v3244 = vpop.f32.mrb[0].mxu0
      %3245 = vmatprep.mubr.bf16.mxu0 %v1636
      %3246 = vmatmul.mubr.bf16.gmra.mrb[0].mxu0 %v1635
      %v3247 = vpop.f32.mrb[0].mxu0
      %v3248 = vadd.f32 %v2959, %v3247
      %v3249 = vpop.f32.mrb[0].mxu0
      %v3250 = vpop.f32.mrb[0].mxu0
      %v3251 = vadd.f32 %v2962, %v3250
      %v3252 = vpop.f32.mrb[0].mxu0
      %3253 = vmatprep.mubr.bf16.mxu0 %v1645
      %3254 = vmatmul.mubr.bf16.gmra.mrb[0].mxu0 %v1644
      %v3255 = vpop.f32.mrb[0].mxu0
      %v3256 = vadd.f32 %v2967, %v3255
      %v3257 = vpop.f32.mrb[0].mxu0
      %v3258 = vpop.f32.mrb[0].mxu0
      %v3259 = vadd.f32 %v2970, %v3258
      %v3260 = vpop.f32.mrb[0].mxu0
      %3261 = vmatprep.mubr.bf16.mxu0 %v1654
      %3262 = vmatmul.mubr.bf16.gmra.mrb[0].mxu0 %v1653
      %v3263 = vpop.f32.mrb[0].mxu0
      %v3264 = vadd.f32 %v2975, %v3263
      %v3265 = vpop.f32.mrb[0].mxu0
      %v3266 = vpop.f32.mrb[0].mxu0
      %v3267 = vadd.f32 %v2978, %v3266
      %v3268 = vpop.f32.mrb[0].mxu0
      %3269 = vmatprep.mubr.bf16.mxu0 %v1663
      %3270 = vmatmul.mubr.bf16.gmra.mrb[0].mxu0 %v1662
      %v3271 = vpop.f32.mrb[0].mxu0
      %v3272 = vadd.f32 %v2983, %v3271
      %v3273 = vpop.f32.mrb[0].mxu0
      %v3274 = vpop.f32.mrb[0].mxu0
      %v3275 = vadd.f32 %v2986, %v3274
      %v3276 = vpop.f32.mrb[0].mxu0
      %3277 = vmatprep.mubr.bf16.mxu0 %v1672
      %3278 = vmatmul.mubr.bf16.gmra.mrb[0].mxu0 %v1671
      %v3279 = vpop.f32.mrb[0].mxu0
      %v3280 = vadd.f32 %v2991, %v3279
      %v3281 = vpop.f32.mrb[0].mxu0
      %v3282 = vpop.f32.mrb[0].mxu0
      %v3283 = vadd.f32 %v2994, %v3282
      %v3284 = vpop.f32.mrb[0].mxu0
      %3285 = vmatprep.mubr.bf16.mxu0 %v1681
      %3286 = vmatmul.mubr.bf16.gmra.mrb[0].mxu0 %v1680
      %v3287 = vpop.f32.mrb[0].mxu0
      %v3288 = vadd.f32 %v2999, %v3287
      %v3289 = vpop.f32.mrb[0].mxu0
      %v3290 = vpop.f32.mrb[0].mxu0
      %v3291 = vadd.f32 %v3002, %v3290
      %v3292 = vpop.f32.mrb[0].mxu0
      %3293 = vmatprep.mubr.bf16.mxu0 %v1690
      %3294 = vmatmul.mubr.bf16.gmra.mrb[0].mxu0 %v1689
      %v3295 = vpop.f32.mrb[0].mxu0
      %v3296 = vadd.f32 %v3007, %v3295
      %v3297 = vpop.f32.mrb[0].mxu0
      %v3298 = vpop.f32.mrb[0].mxu0
      %v3299 = vadd.f32 %v3010, %v3298
      %v3300 = vpop.f32.mrb[0].mxu0
      %3301 = vmatprep.mubr.bf16.mxu0 %v1699
      %3302 = vmatmul.mubr.bf16.gmra.mrb[0].mxu0 %v1698
      %v3303 = vpop.f32.mrb[0].mxu0
      %v3304 = vadd.f32 %v3015, %v3303
      %v3305 = vpop.f32.mrb[0].mxu0
      %v3306 = vpop.f32.mrb[0].mxu0
      %v3307 = vadd.f32 %v3018, %v3306
      %v3308 = vpop.f32.mrb[0].mxu0
      %3309 = vmatprep.mubr.bf16.mxu0 %v1708
      %3310 = vmatmul.mubr.bf16.gmra.mrb[0].mxu0 %v1707
      %v3311 = vpop.f32.mrb[0].mxu0
      %v3312 = vadd.f32 %v3023, %v3311
      %v3313 = vpop.f32.mrb[0].mxu0
      %v3314 = vpop.f32.mrb[0].mxu0
      %v3315 = vadd.f32 %v3026, %v3314
      %v3316 = vpop.f32.mrb[0].mxu0
      %3317 = vmatprep.mubr.bf16.mxu0 %v1717
      %3318 = vmatmul.mubr.bf16.gmra.mrb[0].mxu0 %v1716
      %v3319 = vpop.f32.mrb[0].mxu0
      %v3320 = vadd.f32 %v3031, %v3319
      %v3321 = vpop.f32.mrb[0].mxu0
      %v3322 = vpop.f32.mrb[0].mxu0
      %v3323 = vadd.f32 %v3034, %v3322
      %v3324 = vpop.f32.mrb[0].mxu0
      %3325 = vmatprep.mubr.bf16.mxu0 %v1726
      %3326 = vmatmul.mubr.bf16.gmra.mrb[0].mxu0 %v1725
      %v3327 = vpop.f32.mrb[0].mxu0
      %v3328 = vadd.f32 %v3039, %v3327
      %v3329 = vpop.f32.mrb[0].mxu0
      %v3330 = vpop.f32.mrb[0].mxu0
      %v3331 = vadd.f32 %v3042, %v3330
      %v3332 = vpop.f32.mrb[0].mxu0
      %3333 = vmatprep.mubr.bf16.mxu0 %v1735
      %3334 = vmatmul.mubr.bf16.gmra.mrb[0].mxu0 %v1734
      %v3335 = vpop.f32.mrb[0].mxu0
      %v3336 = vadd.f32 %v3047, %v3335
      %v3337 = vpop.f32.mrb[0].mxu0
      %v3338 = vpop.f32.mrb[0].mxu0
      %v3339 = vadd.f32 %v3050, %v3338
      %v3340 = vpop.f32.mrb[0].mxu0
      %3341 = vmatprep.mubr.bf16.mxu0 %v1744
      %3342 = vmatmul.mubr.bf16.gmra.mrb[0].mxu0 %v1743
      %v3343 = vpop.f32.mrb[0].mxu0
      %v3344 = vadd.f32 %v3055, %v3343
      %v3345 = vpop.f32.mrb[0].mxu0
      %v3346 = vpop.f32.mrb[0].mxu0
      %v3347 = vadd.f32 %v3058, %v3346
      %v3348 = vpop.f32.mrb[0].mxu0
      %3349 = vmatprep.mubr.bf16.mxu0 %v1753
      %3350 = vmatmul.mubr.bf16.gmra.mrb[0].mxu0 %v1752
      %v3351 = vpop.f32.mrb[0].mxu0
      %v3352 = vadd.f32 %v3063, %v3351
      %v3353 = vpop.f32.mrb[0].mxu0
      %v3354 = vpop.f32.mrb[0].mxu0
      %v3355 = vadd.f32 %v3066, %v3354
      %v3356 = vpop.f32.mrb[0].mxu0
      %3357 = vmatprep.mubr.bf16.mxu0 %v1762
      %3358 = vmatmul.mubr.bf16.gmra.mrb[0].mxu0 %v1761
      %v3359 = vpop.f32.mrb[0].mxu0
      %v3360 = vadd.f32 %v3071, %v3359
      %v3361 = vpop.f32.mrb[0].mxu0
      %v3362 = vpop.f32.mrb[0].mxu0
      %v3363 = vadd.f32 %v3074, %v3362
      %v3364 = vpop.f32.mrb[0].mxu0
      %3365 = vmatprep.mubr.bf16.mxu0 %v1771
      %3366 = vmatmul.mubr.bf16.gmra.mrb[0].mxu0 %v1770
      %v3367 = vpop.f32.mrb[0].mxu0
      %v3368 = vadd.f32 %v3079, %v3367
      %v3369 = vpop.f32.mrb[0].mxu0
      %v3370 = vpop.f32.mrb[0].mxu0
      %v3371 = vadd.f32 %v3082, %v3370
      %v3372 = vpop.f32.mrb[0].mxu0
      %3373 = vmatprep.mubr.bf16.mxu0 %v1780
      %3374 = vmatmul.mubr.bf16.gmra.mrb[0].mxu0 %v1779
      %v3375 = vpop.f32.mrb[0].mxu0
      %v3376 = vadd.f32 %v3087, %v3375
      %v3377 = vpop.f32.mrb[0].mxu0
      %v3378 = vpop.f32.mrb[0].mxu0
      %v3379 = vadd.f32 %v3090, %v3378
      %v3380 = vpop.f32.mrb[0].mxu0
      %3381 = vmatprep.mubr.bf16.mxu0 %v1789
      %3382 = vmatmul.mubr.bf16.gmra.mrb[0].mxu0 %v1788
      %v3383 = vpop.f32.mrb[0].mxu0
      %v3384 = vadd.f32 %v3095, %v3383
      %v3385 = vpop.f32.mrb[0].mxu0
      %v3386 = vpop.f32.mrb[0].mxu0
      %v3387 = vadd.f32 %v3098, %v3386
      %v3388 = vpop.f32.mrb[0].mxu0
      %3389 = vmatprep.mubr.bf16.mxu0 %v1798
      %3390 = vmatmul.mubr.bf16.gmra.mrb[0].mxu0 %v1797
      %v3391 = vpop.f32.mrb[0].mxu0
      %v3392 = vadd.f32 %v3103, %v3391
      %v3393 = vpop.f32.mrb[0].mxu0
      %v3394 = vpop.f32.mrb[0].mxu0
      %v3395 = vadd.f32 %v3106, %v3394
      %v3396 = vpop.f32.mrb[0].mxu0
      %3397 = vmatprep.mubr.bf16.mxu0 %v1807
      %3398 = vmatmul.mubr.bf16.gmra.mrb[0].mxu0 %v1806
      %v3399 = vpop.f32.mrb[0].mxu0
      %v3400 = vadd.f32 %v3111, %v3399
      %v3401 = vpop.f32.mrb[0].mxu0
      %v3402 = vpop.f32.mrb[0].mxu0
      %v3403 = vadd.f32 %v3114, %v3402
      %v3404 = vpop.f32.mrb[0].mxu0
      %3405 = vmatprep.mubr.bf16.mxu0 %v1816
      %3406 = vmatmul.mubr.bf16.gmra.mrb[0].mxu0 %v1815
      %v3407 = vpop.f32.mrb[0].mxu0
      %v3408 = vadd.f32 %v3119, %v3407
      %v3409 = vpop.f32.mrb[0].mxu0
      %v3410 = vpop.f32.mrb[0].mxu0
      %v3411 = vadd.f32 %v3122, %v3410
      %v3412 = vpop.f32.mrb[0].mxu0
      %3413 = vmatprep.mubr.bf16.mxu0 %v1825
      %3414 = vmatmul.mubr.bf16.gmra.mrb[0].mxu0 %v1824
      %v3415 = vpop.f32.mrb[0].mxu0
      %v3416 = vadd.f32 %v3127, %v3415
      %v3417 = vpop.f32.mrb[0].mxu0
      %v3418 = vpop.f32.mrb[0].mxu0
      %v3419 = vadd.f32 %v3130, %v3418
      %v3420 = vpop.f32.mrb[0].mxu0
      %3421 = vmatprep.mubr.bf16.mxu0 %v1834
      %3422 = vmatmul.mubr.bf16.gmra.mrb[0].mxu0 %v1833
      %v3423 = vpop.f32.mrb[0].mxu0
      %v3424 = vadd.f32 %v3135, %v3423
      %v3425 = vpop.f32.mrb[0].mxu0
      %v3426 = vpop.f32.mrb[0].mxu0
      %v3427 = vadd.f32 %v3138, %v3426
      %v3428 = vpop.f32.mrb[0].mxu0
      %3429 = vmatprep.mubr.bf16.mxu0 %v1843
      %3430 = vmatmul.mubr.bf16.gmra.mrb[0].mxu0 %v1842
      %v3431 = vpop.f32.mrb[0].mxu0
      %v3432 = vadd.f32 %v3143, %v3431
      %v3433 = vpop.f32.mrb[0].mxu0
      %v3434 = vpop.f32.mrb[0].mxu0
      %v3435 = vadd.f32 %v3146, %v3434
      %v3436 = vpop.f32.mrb[0].mxu0
      %3437 = vmatprep.mubr.bf16.mxu0 %v1852
      %3438 = vmatmul.mubr.bf16.gmra.mrb[0].mxu0 %v1851
      %v3439 = vpop.f32.mrb[0].mxu0
      %v3440 = vadd.f32 %v3151, %v3439
      %v3441 = vpop.f32.mrb[0].mxu0
      %v3442 = vpop.f32.mrb[0].mxu0
      %v3443 = vadd.f32 %v3154, %v3442
      %v3444 = vpop.f32.mrb[0].mxu0
      %3445 = vmatprep.mubr.bf16.mxu0 %v1861
      %3446 = vmatmul.mubr.bf16.gmra.mrb[0].mxu0 %v1860
      %v3447 = vpop.f32.mrb[0].mxu0
      %v3448 = vadd.f32 %v3159, %v3447
      %v3449 = vpop.f32.mrb[0].mxu0
      %v3450 = vpop.f32.mrb[0].mxu0
      %v3451 = vadd.f32 %v3162, %v3450
      %v3452 = vpop.f32.mrb[0].mxu0
      %3453 = vmatprep.mubr.bf16.mxu0 %v1870
      %3454 = vmatmul.mubr.bf16.gmra.mrb[0].mxu0 %v1869
      %v3455 = vpop.f32.mrb[0].mxu0
      %v3456 = vadd.f32 %v3167, %v3455
      %v3457 = vpop.f32.mrb[0].mxu0
      %v3458 = vpop.f32.mrb[0].mxu0
      %v3459 = vadd.f32 %v3170, %v3458
      %v3460 = vpop.f32.mrb[0].mxu0
      %3461 = vmatprep.mubr.bf16.mxu0 %v1879
      %3462 = vmatmul.mubr.bf16.gmra.mrb[0].mxu0 %v1878
      %v3463 = vpop.f32.mrb[0].mxu0
      %v3464 = vadd.f32 %v3175, %v3463
      %v3465 = vpop.f32.mrb[0].mxu0
      %v3466 = vpop.f32.mrb[0].mxu0
      %v3467 = vadd.f32 %v3178, %v3466
      %v3468 = vpop.f32.mrb[0].mxu0
      %3469 = vdwg.mxu0
      %3470 = vmatprep.subr.bf16.mxu0 0
      %3471 = vmatpush1.bf16.msra.mxu0 %v2507
      %3472 = vmatprep.subr.bf16.mxu0 0
      %3473 = vmatpush1.bf16.msra.mxu0 %v2508
      %3474 = vmatprep.subr.bf16.mxu0 0
      %3475 = vmatpush1.bf16.msra.mxu0 %v2509
      %3476 = vmatprep.subr.bf16.mxu0 0
      %3477 = vmatpush1.bf16.msra.mxu0 %v2510
      %3478 = vmatprep.subr.bf16.mxu0 0
      %3479 = vmatpush1.bf16.msra.mxu0 %v2511
      %3480 = vmatprep.subr.bf16.mxu0 0
      %3481 = vmatpush1.bf16.msra.mxu0 %v2512
      %3482 = vmatprep.subr.bf16.mxu0 0
      %3483 = vmatpush1.bf16.msra.mxu0 %v2513
      %3484 = vmatprep.subr.bf16.mxu0 0
      %3485 = vmatpush1.bf16.msra.mxu0 %v2514
      %3486 = vmatprep.subr.bf16.mxu0 0
      %3487 = vmatpush1.bf16.msra.mxu0 %v2515
      %3488 = vmatprep.subr.bf16.mxu0 0
      %3489 = vmatpush1.bf16.msra.mxu0 %v2516
      %3490 = vmatprep.subr.bf16.mxu0 0
      %3491 = vmatpush1.bf16.msra.mxu0 %v2517
      %3492 = vmatprep.subr.bf16.mxu0 0
      %3493 = vmatpush1.bf16.msra.mxu0 %v2518
      %3494 = vmatprep.subr.bf16.mxu0 0
      %3495 = vmatpush1.bf16.msra.mxu0 %v2519
      %3496 = vmatprep.subr.bf16.mxu0 0
      %3497 = vmatpush1.bf16.msra.mxu0 %v2520
      %3498 = vmatprep.subr.bf16.mxu0 0
      %3499 = vmatpush1.bf16.msra.mxu0 %v2521
      %3500 = vmatprep.subr.bf16.mxu0 0
      %3501 = vmatpush1.bf16.msra.mxu0 %v2522
      %3502 = vmatprep.mubr.bf16.mxu0 %v1602
      %3503 = vmatmul.mubr.bf16.gmra.mrb[0].mxu0 %v1601
      %v3504 = vpop.f32.mrb[0].mxu0
      %v3505 = vadd.f32 %v3216, %v3504
      %v3506 = vpop.f32.mrb[0].mxu0
      %v3507 = vpop.f32.mrb[0].mxu0
      %v3508 = vadd.f32 %v3219, %v3507
      %v3509 = vpop.f32.mrb[0].mxu0
      %3510 = vmatprep.mubr.bf16.mxu0 %v1611
      %3511 = vmatmul.mubr.bf16.gmra.mrb[0].mxu0 %v1610
      %v3512 = vpop.f32.mrb[0].mxu0
      %v3513 = vadd.f32 %v3224, %v3512
      %v3514 = vpop.f32.mrb[0].mxu0
      %v3515 = vpop.f32.mrb[0].mxu0
      %v3516 = vadd.f32 %v3227, %v3515
      %v3517 = vpop.f32.mrb[0].mxu0
      %3518 = vmatprep.mubr.bf16.mxu0 %v1620
      %3519 = vmatmul.mubr.bf16.gmra.mrb[0].mxu0 %v1619
      %v3520 = vpop.f32.mrb[0].mxu0
      %v3521 = vadd.f32 %v3232, %v3520
      %v3522 = vpop.f32.mrb[0].mxu0
      %v3523 = vpop.f32.mrb[0].mxu0
      %v3524 = vadd.f32 %v3235, %v3523
      %v3525 = vpop.f32.mrb[0].mxu0
      %3526 = vmatprep.mubr.bf16.mxu0 %v1629
      %3527 = vmatmul.mubr.bf16.gmra.mrb[0].mxu0 %v1628
      %v3528 = vpop.f32.mrb[0].mxu0
      %v3529 = vadd.f32 %v3240, %v3528
      %v3530 = vpop.f32.mrb[0].mxu0
      %v3531 = vpop.f32.mrb[0].mxu0
      %v3532 = vadd.f32 %v3243, %v3531
      %v3533 = vpop.f32.mrb[0].mxu0
      %3534 = vmatprep.mubr.bf16.mxu0 %v1638
      %3535 = vmatmul.mubr.bf16.gmra.mrb[0].mxu0 %v1637
      %v3536 = vpop.f32.mrb[0].mxu0
      %v3537 = vadd.f32 %v3248, %v3536
      %v3538 = vpop.f32.mrb[0].mxu0
      %v3539 = vpop.f32.mrb[0].mxu0
      %v3540 = vadd.f32 %v3251, %v3539
      %v3541 = vpop.f32.mrb[0].mxu0
      %3542 = vmatprep.mubr.bf16.mxu0 %v1647
      %3543 = vmatmul.mubr.bf16.gmra.mrb[0].mxu0 %v1646
      %v3544 = vpop.f32.mrb[0].mxu0
      %v3545 = vadd.f32 %v3256, %v3544
      %v3546 = vpop.f32.mrb[0].mxu0
      %v3547 = vpop.f32.mrb[0].mxu0
      %v3548 = vadd.f32 %v3259, %v3547
      %v3549 = vpop.f32.mrb[0].mxu0
      %3550 = vmatprep.mubr.bf16.mxu0 %v1656
      %3551 = vmatmul.mubr.bf16.gmra.mrb[0].mxu0 %v1655
      %v3552 = vpop.f32.mrb[0].mxu0
      %v3553 = vadd.f32 %v3264, %v3552
      %v3554 = vpop.f32.mrb[0].mxu0
      %v3555 = vpop.f32.mrb[0].mxu0
      %v3556 = vadd.f32 %v3267, %v3555
      %v3557 = vpop.f32.mrb[0].mxu0
      %3558 = vmatprep.mubr.bf16.mxu0 %v1665
      %3559 = vmatmul.mubr.bf16.gmra.mrb[0].mxu0 %v1664
      %v3560 = vpop.f32.mrb[0].mxu0
      %v3561 = vadd.f32 %v3272, %v3560
      %v3562 = vpop.f32.mrb[0].mxu0
      %v3563 = vpop.f32.mrb[0].mxu0
      %v3564 = vadd.f32 %v3275, %v3563
      %v3565 = vpop.f32.mrb[0].mxu0
      %3566 = vmatprep.mubr.bf16.mxu0 %v1674
      %3567 = vmatmul.mubr.bf16.gmra.mrb[0].mxu0 %v1673
      %v3568 = vpop.f32.mrb[0].mxu0
      %v3569 = vadd.f32 %v3280, %v3568
      %v3570 = vpop.f32.mrb[0].mxu0
      %v3571 = vpop.f32.mrb[0].mxu0
      %v3572 = vadd.f32 %v3283, %v3571
      %v3573 = vpop.f32.mrb[0].mxu0
      %3574 = vmatprep.mubr.bf16.mxu0 %v1683
      %3575 = vmatmul.mubr.bf16.gmra.mrb[0].mxu0 %v1682
      %v3576 = vpop.f32.mrb[0].mxu0
      %v3577 = vadd.f32 %v3288, %v3576
      %v3578 = vpop.f32.mrb[0].mxu0
      %v3579 = vpop.f32.mrb[0].mxu0
      %v3580 = vadd.f32 %v3291, %v3579
      %v3581 = vpop.f32.mrb[0].mxu0
      %3582 = vmatprep.mubr.bf16.mxu0 %v1692
      %3583 = vmatmul.mubr.bf16.gmra.mrb[0].mxu0 %v1691
      %v3584 = vpop.f32.mrb[0].mxu0
      %v3585 = vadd.f32 %v3296, %v3584
      %v3586 = vpop.f32.mrb[0].mxu0
      %v3587 = vpop.f32.mrb[0].mxu0
      %v3588 = vadd.f32 %v3299, %v3587
      %v3589 = vpop.f32.mrb[0].mxu0
      %3590 = vmatprep.mubr.bf16.mxu0 %v1701
      %3591 = vmatmul.mubr.bf16.gmra.mrb[0].mxu0 %v1700
      %v3592 = vpop.f32.mrb[0].mxu0
      %v3593 = vadd.f32 %v3304, %v3592
      %v3594 = vpop.f32.mrb[0].mxu0
      %v3595 = vpop.f32.mrb[0].mxu0
      %v3596 = vadd.f32 %v3307, %v3595
      %v3597 = vpop.f32.mrb[0].mxu0
      %3598 = vmatprep.mubr.bf16.mxu0 %v1710
      %3599 = vmatmul.mubr.bf16.gmra.mrb[0].mxu0 %v1709
      %v3600 = vpop.f32.mrb[0].mxu0
      %v3601 = vadd.f32 %v3312, %v3600
      %v3602 = vpop.f32.mrb[0].mxu0
      %v3603 = vpop.f32.mrb[0].mxu0
      %v3604 = vadd.f32 %v3315, %v3603
      %v3605 = vpop.f32.mrb[0].mxu0
      %3606 = vmatprep.mubr.bf16.mxu0 %v1719
      %3607 = vmatmul.mubr.bf16.gmra.mrb[0].mxu0 %v1718
      %v3608 = vpop.f32.mrb[0].mxu0
      %v3609 = vadd.f32 %v3320, %v3608
      %v3610 = vpop.f32.mrb[0].mxu0
      %v3611 = vpop.f32.mrb[0].mxu0
      %v3612 = vadd.f32 %v3323, %v3611
      %v3613 = vpop.f32.mrb[0].mxu0
      %3614 = vmatprep.mubr.bf16.mxu0 %v1728
      %3615 = vmatmul.mubr.bf16.gmra.mrb[0].mxu0 %v1727
      %v3616 = vpop.f32.mrb[0].mxu0
      %v3617 = vadd.f32 %v3328, %v3616
      %v3618 = vpop.f32.mrb[0].mxu0
      %v3619 = vpop.f32.mrb[0].mxu0
      %v3620 = vadd.f32 %v3331, %v3619
      %v3621 = vpop.f32.mrb[0].mxu0
      %3622 = vmatprep.mubr.bf16.mxu0 %v1737
      %3623 = vmatmul.mubr.bf16.gmra.mrb[0].mxu0 %v1736
      %v3624 = vpop.f32.mrb[0].mxu0
      %v3625 = vadd.f32 %v3336, %v3624
      %v3626 = vpop.f32.mrb[0].mxu0
      %v3627 = vpop.f32.mrb[0].mxu0
      %v3628 = vadd.f32 %v3339, %v3627
      %v3629 = vpop.f32.mrb[0].mxu0
      %3630 = vmatprep.mubr.bf16.mxu0 %v1746
      %3631 = vmatmul.mubr.bf16.gmra.mrb[0].mxu0 %v1745
      %v3632 = vpop.f32.mrb[0].mxu0
      %v3633 = vadd.f32 %v3344, %v3632
      %v3634 = vpop.f32.mrb[0].mxu0
      %v3635 = vpop.f32.mrb[0].mxu0
      %v3636 = vadd.f32 %v3347, %v3635
      %v3637 = vpop.f32.mrb[0].mxu0
      %3638 = vmatprep.mubr.bf16.mxu0 %v1755
      %3639 = vmatmul.mubr.bf16.gmra.mrb[0].mxu0 %v1754
      %v3640 = vpop.f32.mrb[0].mxu0
      %v3641 = vadd.f32 %v3352, %v3640
      %v3642 = vpop.f32.mrb[0].mxu0
      %v3643 = vpop.f32.mrb[0].mxu0
      %v3644 = vadd.f32 %v3355, %v3643
      %v3645 = vpop.f32.mrb[0].mxu0
      %3646 = vmatprep.mubr.bf16.mxu0 %v1764
      %3647 = vmatmul.mubr.bf16.gmra.mrb[0].mxu0 %v1763
      %v3648 = vpop.f32.mrb[0].mxu0
      %v3649 = vadd.f32 %v3360, %v3648
      %v3650 = vpop.f32.mrb[0].mxu0
      %v3651 = vpop.f32.mrb[0].mxu0
      %v3652 = vadd.f32 %v3363, %v3651
      %v3653 = vpop.f32.mrb[0].mxu0
      %3654 = vmatprep.mubr.bf16.mxu0 %v1773
      %3655 = vmatmul.mubr.bf16.gmra.mrb[0].mxu0 %v1772
      %v3656 = vpop.f32.mrb[0].mxu0
      %v3657 = vadd.f32 %v3368, %v3656
      %v3658 = vpop.f32.mrb[0].mxu0
      %v3659 = vpop.f32.mrb[0].mxu0
      %v3660 = vadd.f32 %v3371, %v3659
      %v3661 = vpop.f32.mrb[0].mxu0
      %3662 = vmatprep.mubr.bf16.mxu0 %v1782
      %3663 = vmatmul.mubr.bf16.gmra.mrb[0].mxu0 %v1781
      %v3664 = vpop.f32.mrb[0].mxu0
      %v3665 = vadd.f32 %v3376, %v3664
      %v3666 = vpop.f32.mrb[0].mxu0
      %v3667 = vpop.f32.mrb[0].mxu0
      %v3668 = vadd.f32 %v3379, %v3667
      %v3669 = vpop.f32.mrb[0].mxu0
      %3670 = vmatprep.mubr.bf16.mxu0 %v1791
      %3671 = vmatmul.mubr.bf16.gmra.mrb[0].mxu0 %v1790
      %v3672 = vpop.f32.mrb[0].mxu0
      %v3673 = vadd.f32 %v3384, %v3672
      %v3674 = vpop.f32.mrb[0].mxu0
      %v3675 = vpop.f32.mrb[0].mxu0
      %v3676 = vadd.f32 %v3387, %v3675
      %v3677 = vpop.f32.mrb[0].mxu0
      %3678 = vmatprep.mubr.bf16.mxu0 %v1800
      %3679 = vmatmul.mubr.bf16.gmra.mrb[0].mxu0 %v1799
      %v3680 = vpop.f32.mrb[0].mxu0
      %v3681 = vadd.f32 %v3392, %v3680
      %v3682 = vpop.f32.mrb[0].mxu0
      %v3683 = vpop.f32.mrb[0].mxu0
      %v3684 = vadd.f32 %v3395, %v3683
      %v3685 = vpop.f32.mrb[0].mxu0
      %3686 = vmatprep.mubr.bf16.mxu0 %v1809
      %3687 = vmatmul.mubr.bf16.gmra.mrb[0].mxu0 %v1808
      %v3688 = vpop.f32.mrb[0].mxu0
      %v3689 = vadd.f32 %v3400, %v3688
      %v3690 = vpop.f32.mrb[0].mxu0
      %v3691 = vpop.f32.mrb[0].mxu0
      %v3692 = vadd.f32 %v3403, %v3691
      %v3693 = vpop.f32.mrb[0].mxu0
      %3694 = vmatprep.mubr.bf16.mxu0 %v1818
      %3695 = vmatmul.mubr.bf16.gmra.mrb[0].mxu0 %v1817
      %v3696 = vpop.f32.mrb[0].mxu0
      %v3697 = vadd.f32 %v3408, %v3696
      %v3698 = vpop.f32.mrb[0].mxu0
      %v3699 = vpop.f32.mrb[0].mxu0
      %v3700 = vadd.f32 %v3411, %v3699
      %v3701 = vpop.f32.mrb[0].mxu0
      %3702 = vmatprep.mubr.bf16.mxu0 %v1827
      %3703 = vmatmul.mubr.bf16.gmra.mrb[0].mxu0 %v1826
      %v3704 = vpop.f32.mrb[0].mxu0
      %v3705 = vadd.f32 %v3416, %v3704
      %v3706 = vpop.f32.mrb[0].mxu0
      %v3707 = vpop.f32.mrb[0].mxu0
      %v3708 = vadd.f32 %v3419, %v3707
      %v3709 = vpop.f32.mrb[0].mxu0
      %3710 = vmatprep.mubr.bf16.mxu0 %v1836
      %3711 = vmatmul.mubr.bf16.gmra.mrb[0].mxu0 %v1835
      %v3712 = vpop.f32.mrb[0].mxu0
      %v3713 = vadd.f32 %v3424, %v3712
      %v3714 = vpop.f32.mrb[0].mxu0
      %v3715 = vpop.f32.mrb[0].mxu0
      %v3716 = vadd.f32 %v3427, %v3715
      %v3717 = vpop.f32.mrb[0].mxu0
      %3718 = vmatprep.mubr.bf16.mxu0 %v1845
      %3719 = vmatmul.mubr.bf16.gmra.mrb[0].mxu0 %v1844
      %v3720 = vpop.f32.mrb[0].mxu0
      %v3721 = vadd.f32 %v3432, %v3720
      %v3722 = vpop.f32.mrb[0].mxu0
      %v3723 = vpop.f32.mrb[0].mxu0
      %v3724 = vadd.f32 %v3435, %v3723
      %v3725 = vpop.f32.mrb[0].mxu0
      %3726 = vmatprep.mubr.bf16.mxu0 %v1854
      %3727 = vmatmul.mubr.bf16.gmra.mrb[0].mxu0 %v1853
      %v3728 = vpop.f32.mrb[0].mxu0
      %v3729 = vadd.f32 %v3440, %v3728
      %v3730 = vpop.f32.mrb[0].mxu0
      %v3731 = vpop.f32.mrb[0].mxu0
      %v3732 = vadd.f32 %v3443, %v3731
      %v3733 = vpop.f32.mrb[0].mxu0
      %3734 = vmatprep.mubr.bf16.mxu0 %v1863
      %3735 = vmatmul.mubr.bf16.gmra.mrb[0].mxu0 %v1862
      %v3736 = vpop.f32.mrb[0].mxu0
      %v3737 = vadd.f32 %v3448, %v3736
      %v3738 = vpop.f32.mrb[0].mxu0
      %v3739 = vpop.f32.mrb[0].mxu0
      %v3740 = vadd.f32 %v3451, %v3739
      %v3741 = vpop.f32.mrb[0].mxu0
      %3742 = vmatprep.mubr.bf16.mxu0 %v1872
      %3743 = vmatmul.mubr.bf16.gmra.mrb[0].mxu0 %v1871
      %v3744 = vpop.f32.mrb[0].mxu0
      %v3745 = vadd.f32 %v3456, %v3744
      %v3746 = vpop.f32.mrb[0].mxu0
      %v3747 = vpop.f32.mrb[0].mxu0
      %v3748 = vadd.f32 %v3459, %v3747
      %v3749 = vpop.f32.mrb[0].mxu0
      %3750 = vmatprep.mubr.bf16.mxu0 %v1881
      %3751 = vmatmul.mubr.bf16.gmra.mrb[0].mxu0 %v1880
      %v3752 = vpop.f32.mrb[0].mxu0
      %v3753 = vadd.f32 %v3464, %v3752
      %v3754 = vpop.f32.mrb[0].mxu0
      %v3755 = vpop.f32.mrb[0].mxu0
      %v3756 = vadd.f32 %v3467, %v3755
      %v3757 = vpop.f32.mrb[0].mxu0
      %3758 = vdwg.mxu0
      %3759 = vmatprep.subr.bf16.mxu0 0
      %3760 = vmatpush1.bf16.msra.mxu0 %v2523
      %3761 = vmatprep.subr.bf16.mxu0 0
      %3762 = vmatpush1.bf16.msra.mxu0 %v2524
      %3763 = vmatprep.subr.bf16.mxu0 0
      %3764 = vmatpush1.bf16.msra.mxu0 %v2525
      %3765 = vmatprep.subr.bf16.mxu0 0
      %3766 = vmatpush1.bf16.msra.mxu0 %v2526
      %3767 = vmatprep.subr.bf16.mxu0 0
      %3768 = vmatpush1.bf16.msra.mxu0 %v2527
      %3769 = vmatprep.subr.bf16.mxu0 0
      %3770 = vmatpush1.bf16.msra.mxu0 %v2528
      %3771 = vmatprep.subr.bf16.mxu0 0
      %3772 = vmatpush1.bf16.msra.mxu0 %v2529
      %3773 = vmatprep.subr.bf16.mxu0 0
      %3774 = vmatpush1.bf16.msra.mxu0 %v2530
      %3775 = vmatprep.subr.bf16.mxu0 0
      %3776 = vmatpush1.bf16.msra.mxu0 0
      %3777 = vmatprep.subr.bf16.mxu0 0
      %3778 = vmatpush1.bf16.msra.mxu0 0
      %3779 = vmatprep.subr.bf16.mxu0 0
      %3780 = vmatpush1.bf16.msra.mxu0 0
      %3781 = vmatprep.subr.bf16.mxu0 0
      %3782 = vmatpush1.bf16.msra.mxu0 0
      %3783 = vmatprep.subr.bf16.mxu0 0
      %3784 = vmatpush1.bf16.msra.mxu0 0
      %3785 = vmatprep.subr.bf16.mxu0 0
      %3786 = vmatpush1.bf16.msra.mxu0 0
      %3787 = vmatprep.subr.bf16.mxu0 0
      %3788 = vmatpush1.bf16.msra.mxu0 0
      %3789 = vmatprep.subr.bf16.mxu0 0
      %3790 = vmatpush1.bf16.msra.mxu0 0
      %3791 = vmatprep.mubr.bf16.mxu0 0
      %3792 = vmatmul.mubr.bf16.gmra.mrb[0].mxu0 %v1603
      %v3793 = vpop.f32.mrb[0].mxu0
      %v3794 = vadd.f32 %v3505, %v3793
      %v3795 = vpop.f32.mrb[0].mxu0
      %v3796 = vpop.f32.mrb[0].mxu0
      %v3797 = vadd.f32 %v3508, %v3796
      %v3798 = vpop.f32.mrb[0].mxu0
      %3799 = vmatprep.mubr.bf16.mxu0 0
      %3800 = vmatmul.mubr.bf16.gmra.mrb[0].mxu0 %v1612
      %v3801 = vpop.f32.mrb[0].mxu0
      %v3802 = vadd.f32 %v3513, %v3801
      %v3803 = vpop.f32.mrb[0].mxu0
      %v3804 = vpop.f32.mrb[0].mxu0
      %v3805 = vadd.f32 %v3516, %v3804
      %v3806 = vpop.f32.mrb[0].mxu0
      %3807 = vmatprep.mubr.bf16.mxu0 0
      %3808 = vmatmul.mubr.bf16.gmra.mrb[0].mxu0 %v1621
      %v3809 = vpop.f32.mrb[0].mxu0
      %v3810 = vadd.f32 %v3521, %v3809
      %v3811 = vpop.f32.mrb[0].mxu0
      %v3812 = vpop.f32.mrb[0].mxu0
      %v3813 = vadd.f32 %v3524, %v3812
      %v3814 = vpop.f32.mrb[0].mxu0
      %3815 = vmatprep.mubr.bf16.mxu0 0
      %3816 = vmatmul.mubr.bf16.gmra.mrb[0].mxu0 %v1630
      %v3817 = vpop.f32.mrb[0].mxu0
      %v3818 = vadd.f32 %v3529, %v3817
      %v3819 = vpop.f32.mrb[0].mxu0
      %v3820 = vpop.f32.mrb[0].mxu0
      %v3821 = vadd.f32 %v3532, %v3820
      %v3822 = vpop.f32.mrb[0].mxu0
      %3823 = vmatprep.mubr.bf16.mxu0 0
      %3824 = vmatmul.mubr.bf16.gmra.mrb[0].mxu0 %v1639
      %v3825 = vpop.f32.mrb[0].mxu0
      %v3826 = vadd.f32 %v3537, %v3825
      %v3827 = vpop.f32.mrb[0].mxu0
      %v3828 = vpop.f32.mrb[0].mxu0
      %v3829 = vadd.f32 %v3540, %v3828
      %v3830 = vpop.f32.mrb[0].mxu0
      %3831 = vmatprep.mubr.bf16.mxu0 0
      %3832 = vmatmul.mubr.bf16.gmra.mrb[0].mxu0 %v1648
      %v3833 = vpop.f32.mrb[0].mxu0
      %v3834 = vadd.f32 %v3545, %v3833
      %v3835 = vpop.f32.mrb[0].mxu0
      %v3836 = vpop.f32.mrb[0].mxu0
      %v3837 = vadd.f32 %v3548, %v3836
      %v3838 = vpop.f32.mrb[0].mxu0
      %3839 = vmatprep.mubr.bf16.mxu0 0
      %3840 = vmatmul.mubr.bf16.gmra.mrb[0].mxu0 %v1657
      %v3841 = vpop.f32.mrb[0].mxu0
      %v3842 = vadd.f32 %v3553, %v3841
      %v3843 = vpop.f32.mrb[0].mxu0
      %v3844 = vpop.f32.mrb[0].mxu0
      %v3845 = vadd.f32 %v3556, %v3844
      %v3846 = vpop.f32.mrb[0].mxu0
      %3847 = vmatprep.mubr.bf16.mxu0 0
      %3848 = vmatmul.mubr.bf16.gmra.mrb[0].mxu0 %v1666
      %v3849 = vpop.f32.mrb[0].mxu0
      %v3850 = vadd.f32 %v3561, %v3849
      %v3851 = vpop.f32.mrb[0].mxu0
      %v3852 = vpop.f32.mrb[0].mxu0
      %v3853 = vadd.f32 %v3564, %v3852
      %v3854 = vpop.f32.mrb[0].mxu0
      %3855 = vmatprep.mubr.bf16.mxu0 0
      %3856 = vmatmul.mubr.bf16.gmra.mrb[0].mxu0 %v1675
      %v3857 = vpop.f32.mrb[0].mxu0
      %v3858 = vadd.f32 %v3569, %v3857
      %v3859 = vpop.f32.mrb[0].mxu0
      %v3860 = vpop.f32.mrb[0].mxu0
      %v3861 = vadd.f32 %v3572, %v3860
      %v3862 = vpop.f32.mrb[0].mxu0
      %3863 = vmatprep.mubr.bf16.mxu0 0
      %3864 = vmatmul.mubr.bf16.gmra.mrb[0].mxu0 %v1684
      %v3865 = vpop.f32.mrb[0].mxu0
      %v3866 = vadd.f32 %v3577, %v3865
      %v3867 = vpop.f32.mrb[0].mxu0
      %v3868 = vpop.f32.mrb[0].mxu0
      %v3869 = vadd.f32 %v3580, %v3868
      %v3870 = vpop.f32.mrb[0].mxu0
      %3871 = vmatprep.mubr.bf16.mxu0 0
      %3872 = vmatmul.mubr.bf16.gmra.mrb[0].mxu0 %v1693
      %v3873 = vpop.f32.mrb[0].mxu0
      %v3874 = vadd.f32 %v3585, %v3873
      %v3875 = vpop.f32.mrb[0].mxu0
      %v3876 = vpop.f32.mrb[0].mxu0
      %v3877 = vadd.f32 %v3588, %v3876
      %v3878 = vpop.f32.mrb[0].mxu0
      %3879 = vmatprep.mubr.bf16.mxu0 0
      %3880 = vmatmul.mubr.bf16.gmra.mrb[0].mxu0 %v1702
      %v3881 = vpop.f32.mrb[0].mxu0
      %v3882 = vadd.f32 %v3593, %v3881
      %v3883 = vpop.f32.mrb[0].mxu0
      %v3884 = vpop.f32.mrb[0].mxu0
      %v3885 = vadd.f32 %v3596, %v3884
      %v3886 = vpop.f32.mrb[0].mxu0
      %3887 = vmatprep.mubr.bf16.mxu0 0
      %3888 = vmatmul.mubr.bf16.gmra.mrb[0].mxu0 %v1711
      %v3889 = vpop.f32.mrb[0].mxu0
      %v3890 = vadd.f32 %v3601, %v3889
      %v3891 = vpop.f32.mrb[0].mxu0
      %v3892 = vpop.f32.mrb[0].mxu0
      %v3893 = vadd.f32 %v3604, %v3892
      %v3894 = vpop.f32.mrb[0].mxu0
      %3895 = vmatprep.mubr.bf16.mxu0 0
      %3896 = vmatmul.mubr.bf16.gmra.mrb[0].mxu0 %v1720
      %v3897 = vpop.f32.mrb[0].mxu0
      %v3898 = vadd.f32 %v3609, %v3897
      %v3899 = vpop.f32.mrb[0].mxu0
      %v3900 = vpop.f32.mrb[0].mxu0
      %v3901 = vadd.f32 %v3612, %v3900
      %v3902 = vpop.f32.mrb[0].mxu0
      %3903 = vmatprep.mubr.bf16.mxu0 0
      %3904 = vmatmul.mubr.bf16.gmra.mrb[0].mxu0 %v1729
      %v3905 = vpop.f32.mrb[0].mxu0
      %v3906 = vadd.f32 %v3617, %v3905
      %v3907 = vpop.f32.mrb[0].mxu0
      %v3908 = vpop.f32.mrb[0].mxu0
      %v3909 = vadd.f32 %v3620, %v3908
      %v3910 = vpop.f32.mrb[0].mxu0
      %3911 = vmatprep.mubr.bf16.mxu0 0
      %3912 = vmatmul.mubr.bf16.gmra.mrb[0].mxu0 %v1738
      %v3913 = vpop.f32.mrb[0].mxu0
      %v3914 = vadd.f32 %v3625, %v3913
      %v3915 = vpop.f32.mrb[0].mxu0
      %v3916 = vpop.f32.mrb[0].mxu0
      %v3917 = vadd.f32 %v3628, %v3916
      %v3918 = vpop.f32.mrb[0].mxu0
      %3919 = vmatprep.mubr.bf16.mxu0 0
      %3920 = vmatmul.mubr.bf16.gmra.mrb[0].mxu0 %v1747
      %v3921 = vpop.f32.mrb[0].mxu0
      %v3922 = vadd.f32 %v3633, %v3921
      %v3923 = vpop.f32.mrb[0].mxu0
      %v3924 = vpop.f32.mrb[0].mxu0
      %v3925 = vadd.f32 %v3636, %v3924
      %v3926 = vpop.f32.mrb[0].mxu0
      %3927 = vmatprep.mubr.bf16.mxu0 0
      %3928 = vmatmul.mubr.bf16.gmra.mrb[0].mxu0 %v1756
      %v3929 = vpop.f32.mrb[0].mxu0
      %v3930 = vadd.f32 %v3641, %v3929
      %v3931 = vpop.f32.mrb[0].mxu0
      %v3932 = vpop.f32.mrb[0].mxu0
      %v3933 = vadd.f32 %v3644, %v3932
      %v3934 = vpop.f32.mrb[0].mxu0
      %3935 = vmatprep.mubr.bf16.mxu0 0
      %3936 = vmatmul.mubr.bf16.gmra.mrb[0].mxu0 %v1765
      %v3937 = vpop.f32.mrb[0].mxu0
      %v3938 = vadd.f32 %v3649, %v3937
      %v3939 = vpop.f32.mrb[0].mxu0
      %v3940 = vpop.f32.mrb[0].mxu0
      %v3941 = vadd.f32 %v3652, %v3940
      %v3942 = vpop.f32.mrb[0].mxu0
      %3943 = vmatprep.mubr.bf16.mxu0 0
      %3944 = vmatmul.mubr.bf16.gmra.mrb[0].mxu0 %v1774
      %v3945 = vpop.f32.mrb[0].mxu0
      %v3946 = vadd.f32 %v3657, %v3945
      %v3947 = vpop.f32.mrb[0].mxu0
      %v3948 = vpop.f32.mrb[0].mxu0
      %v3949 = vadd.f32 %v3660, %v3948
      %v3950 = vpop.f32.mrb[0].mxu0
      %3951 = vmatprep.mubr.bf16.mxu0 0
      %3952 = vmatmul.mubr.bf16.gmra.mrb[0].mxu0 %v1783
      %v3953 = vpop.f32.mrb[0].mxu0
      %v3954 = vadd.f32 %v3665, %v3953
      %v3955 = vpop.f32.mrb[0].mxu0
      %v3956 = vpop.f32.mrb[0].mxu0
      %v3957 = vadd.f32 %v3668, %v3956
      %v3958 = vpop.f32.mrb[0].mxu0
      %3959 = vmatprep.mubr.bf16.mxu0 0
      %3960 = vmatmul.mubr.bf16.gmra.mrb[0].mxu0 %v1792
      %v3961 = vpop.f32.mrb[0].mxu0
      %v3962 = vadd.f32 %v3673, %v3961
      %v3963 = vpop.f32.mrb[0].mxu0
      %v3964 = vpop.f32.mrb[0].mxu0
      %v3965 = vadd.f32 %v3676, %v3964
      %v3966 = vpop.f32.mrb[0].mxu0
      %3967 = vmatprep.mubr.bf16.mxu0 0
      %3968 = vmatmul.mubr.bf16.gmra.mrb[0].mxu0 %v1801
      %v3969 = vpop.f32.mrb[0].mxu0
      %v3970 = vadd.f32 %v3681, %v3969
      %v3971 = vpop.f32.mrb[0].mxu0
      %v3972 = vpop.f32.mrb[0].mxu0
      %v3973 = vadd.f32 %v3684, %v3972
      %v3974 = vpop.f32.mrb[0].mxu0
      %3975 = vmatprep.mubr.bf16.mxu0 0
      %3976 = vmatmul.mubr.bf16.gmra.mrb[0].mxu0 %v1810
      %v3977 = vpop.f32.mrb[0].mxu0
      %v3978 = vadd.f32 %v3689, %v3977
      %v3979 = vpop.f32.mrb[0].mxu0
      %v3980 = vpop.f32.mrb[0].mxu0
      %v3981 = vadd.f32 %v3692, %v3980
      %v3982 = vpop.f32.mrb[0].mxu0
      %3983 = vmatprep.mubr.bf16.mxu0 0
      %3984 = vmatmul.mubr.bf16.gmra.mrb[0].mxu0 %v1819
      %v3985 = vpop.f32.mrb[0].mxu0
      %v3986 = vadd.f32 %v3697, %v3985
      %v3987 = vpop.f32.mrb[0].mxu0
      %v3988 = vpop.f32.mrb[0].mxu0
      %v3989 = vadd.f32 %v3700, %v3988
      %v3990 = vpop.f32.mrb[0].mxu0
      %3991 = vmatprep.mubr.bf16.mxu0 0
      %3992 = vmatmul.mubr.bf16.gmra.mrb[0].mxu0 %v1828
      %v3993 = vpop.f32.mrb[0].mxu0
      %v3994 = vadd.f32 %v3705, %v3993
      %v3995 = vpop.f32.mrb[0].mxu0
      %v3996 = vpop.f32.mrb[0].mxu0
      %v3997 = vadd.f32 %v3708, %v3996
      %v3998 = vpop.f32.mrb[0].mxu0
      %3999 = vmatprep.mubr.bf16.mxu0 0
      %4000 = vmatmul.mubr.bf16.gmra.mrb[0].mxu0 %v1837
      %v4001 = vpop.f32.mrb[0].mxu0
      %v4002 = vadd.f32 %v3713, %v4001
      %v4003 = vpop.f32.mrb[0].mxu0
      %v4004 = vpop.f32.mrb[0].mxu0
      %v4005 = vadd.f32 %v3716, %v4004
      %v4006 = vpop.f32.mrb[0].mxu0
      %4007 = vmatprep.mubr.bf16.mxu0 0
      %4008 = vmatmul.mubr.bf16.gmra.mrb[0].mxu0 %v1846
      %v4009 = vpop.f32.mrb[0].mxu0
      %v4010 = vadd.f32 %v3721, %v4009
      %v4011 = vpop.f32.mrb[0].mxu0
      %v4012 = vpop.f32.mrb[0].mxu0
      %v4013 = vadd.f32 %v3724, %v4012
      %v4014 = vpop.f32.mrb[0].mxu0
      %4015 = vmatprep.mubr.bf16.mxu0 0
      %4016 = vmatmul.mubr.bf16.gmra.mrb[0].mxu0 %v1855
      %v4017 = vpop.f32.mrb[0].mxu0
      %v4018 = vadd.f32 %v3729, %v4017
      %v4019 = vpop.f32.mrb[0].mxu0
      %v4020 = vpop.f32.mrb[0].mxu0
      %v4021 = vadd.f32 %v3732, %v4020
      %v4022 = vpop.f32.mrb[0].mxu0
      %4023 = vmatprep.mubr.bf16.mxu0 0
      %4024 = vmatmul.mubr.bf16.gmra.mrb[0].mxu0 %v1864
      %v4025 = vpop.f32.mrb[0].mxu0
      %v4026 = vadd.f32 %v3737, %v4025
      %v4027 = vpop.f32.mrb[0].mxu0
      %v4028 = vpop.f32.mrb[0].mxu0
      %v4029 = vadd.f32 %v3740, %v4028
      %v4030 = vpop.f32.mrb[0].mxu0
      %4031 = vmatprep.mubr.bf16.mxu0 0
      %4032 = vmatmul.mubr.bf16.gmra.mrb[0].mxu0 %v1873
      %v4033 = vpop.f32.mrb[0].mxu0
      %v4034 = vadd.f32 %v3745, %v4033
      %v4035 = vpop.f32.mrb[0].mxu0
      %v4036 = vpop.f32.mrb[0].mxu0
      %v4037 = vadd.f32 %v3748, %v4036
      %v4038 = vpop.f32.mrb[0].mxu0
      %4039 = vmatprep.mubr.bf16.mxu0 0
      %4040 = vmatmul.mubr.bf16.gmra.mrb[0].mxu0 %v1882
      %v4041 = vpop.f32.mrb[0].mxu0
      %v4042 = vadd.f32 %v3753, %v4041
      %v4043 = vpop.f32.mrb[0].mxu0
      %v4044 = vpop.f32.mrb[0].mxu0
      %v4045 = vadd.f32 %v3756, %v4044
      %v4046 = vpop.f32.mrb[0].mxu0
      %4047 = vdwg.mxu0
      %4048 = vst [vmem:[%s224] sm:$0xff] %v3794
      %4049 = vst [vmem:[%s224 + $0x8] sm:$0xff] %v3797
      %4050 = vst [vmem:[%s224 + $0x10] sm:$0xff] %v3802
      %4051 = vst [vmem:[%s224 + $0x18] sm:$0xff] %v3805
      %4052 = vst [vmem:[%s224 + $0x20] sm:$0xff] %v3810
      %4053 = vst [vmem:[%s224 + $0x28] sm:$0xff] %v3813
      %4054 = vst [vmem:[%s224 + $0x30] sm:$0xff] %v3818
      %4055 = vst [vmem:[%s224 + $0x38] sm:$0xff] %v3821
      %4056 = vst [vmem:[%s224 + $0x40] sm:$0xff] %v3826
      %4057 = vst [vmem:[%s224 + $0x48] sm:$0xff] %v3829
      %4058 = vst [vmem:[%s224 + $0x50] sm:$0xff] %v3834
      %4059 = vst [vmem:[%s224 + $0x58] sm:$0xff] %v3837
      %4060 = vst [vmem:[%s224 + $0x60] sm:$0xff] %v3842
      %4061 = vst [vmem:[%s224 + $0x68] sm:$0xff] %v3845
      %4062 = vst [vmem:[%s224 + $0x70] sm:$0xff] %v3850
      %4063 = vst [vmem:[%s224 + $0x78] sm:$0xff] %v3853
      %4064 = vst [vmem:[%s224 + $0x80] sm:$0xff] %v3858
      %4065 = vst [vmem:[%s224 + $0x88] sm:$0xff] %v3861
      %4066 = vst [vmem:[%s224 + $0x90] sm:$0xff] %v3866
      %4067 = vst [vmem:[%s224 + $0x98] sm:$0xff] %v3869
      %4068 = vst [vmem:[%s224 + $0xa0] sm:$0xff] %v3874
      %4069 = vst [vmem:[%s224 + $0xa8] sm:$0xff] %v3877
      %4070 = vst [vmem:[%s224 + $0xb0] sm:$0xff] %v3882
      %4071 = vst [vmem:[%s224 + $0xb8] sm:$0xff] %v3885
      %4072 = vst [vmem:[%s224 + $0xc0] sm:$0xff] %v3890
      %4073 = vst [vmem:[%s224 + $0xc8] sm:$0xff] %v3893
      %4074 = vst [vmem:[%s224 + $0xd0] sm:$0xff] %v3898
      %4075 = vst [vmem:[%s224 + $0xd8] sm:$0xff] %v3901
      %4076 = vst [vmem:[%s224 + $0xe0] sm:$0xff] %v3906
      %4077 = vst [vmem:[%s224 + $0xe8] sm:$0xff] %v3909
      %4078 = vst [vmem:[%s224 + $0xf0] sm:$0xff] %v3914
      %4079 = vst [vmem:[%s224 + $0xf8] sm:$0xff] %v3917
      %4080 = vst [vmem:[%s224 + $0x100] sm:$0xff] %v3922
      %4081 = vst [vmem:[%s224 + $0x108] sm:$0xff] %v3925
      %4082 = vst [vmem:[%s224 + $0x110] sm:$0xff] %v3930
      %4083 = vst [vmem:[%s224 + $0x118] sm:$0xff] %v3933
      %4084 = vst [vmem:[%s224 + $0x120] sm:$0xff] %v3938
      %4085 = vst [vmem:[%s224 + $0x128] sm:$0xff] %v3941
      %4086 = vst [vmem:[%s224 + $0x130] sm:$0xff] %v3946
      %4087 = vst [vmem:[%s224 + $0x138] sm:$0xff] %v3949
      %4088 = vst [vmem:[%s224 + $0x140] sm:$0xff] %v3954
      %4089 = vst [vmem:[%s224 + $0x148] sm:$0xff] %v3957
      %4090 = vst [vmem:[%s224 + $0x150] sm:$0xff] %v3962
      %4091 = vst [vmem:[%s224 + $0x158] sm:$0xff] %v3965
      %4092 = vst [vmem:[%s224 + $0x160] sm:$0xff] %v3970
      %4093 = vst [vmem:[%s224 + $0x168] sm:$0xff] %v3973
      %4094 = vst [vmem:[%s224 + $0x170] sm:$0xff] %v3978
      %4095 = vst [vmem:[%s224 + $0x178] sm:$0xff] %v3981
      %4096 = vst [vmem:[%s224 + $0x180] sm:$0xff] %v3986
      %4097 = vst [vmem:[%s224 + $0x188] sm:$0xff] %v3989
      %4098 = vst [vmem:[%s224 + $0x190] sm:$0xff] %v3994
      %4099 = vst [vmem:[%s224 + $0x198] sm:$0xff] %v3997
      %4100 = vst [vmem:[%s224 + $0x1a0] sm:$0xff] %v4002
      %4101 = vst [vmem:[%s224 + $0x1a8] sm:$0xff] %v4005
      %4102 = vst [vmem:[%s224 + $0x1b0] sm:$0xff] %v4010
      %4103 = vst [vmem:[%s224 + $0x1b8] sm:$0xff] %v4013
      %4104 = vst [vmem:[%s224 + $0x1c0] sm:$0xff] %v4018
      %4105 = vst [vmem:[%s224 + $0x1c8] sm:$0xff] %v4021
      %4106 = vst [vmem:[%s224 + $0x1d0] sm:$0xff] %v4026
      %4107 = vst [vmem:[%s224 + $0x1d8] sm:$0xff] %v4029
      %4108 = vst [vmem:[%s224 + $0x1e0] sm:$0xff] %v4034
      %4109 = vst [vmem:[%s224 + $0x1e8] sm:$0xff] %v4037
      %4110 = vst [vmem:[%s224 + $0x1f0] sm:$0xff] %v4042
      %4111 = vst [vmem:[%s224 + $0x1f8] sm:$0xff] %v4045
      %v4112 = vadd.f32 %v3794, %v3797
      %v4113 = vadd.f32 %v4112, %v3802
      %v4114 = vadd.f32 %v4113, %v3805
      %v4115 = vadd.f32 %v4114, %v3810
      %v4116 = vadd.f32 %v4115, %v3813
      %v4117 = vadd.f32 %v4116, %v3818
      %v4118 = vadd.f32 %v4117, %v3821
      %v4119 = vadd.f32 %v4118, %v3826
      %v4120 = vadd.f32 %v4119, %v3829
      %v4121 = vadd.f32 %v4120, %v3834
      %v4122 = vadd.f32 %v4121, %v3837
      %v4123 = vadd.f32 %v4122, %v3842
      %v4124 = vadd.f32 %v4123, %v3845
      %v4125 = vadd.f32 %v4124, %v3850
      %v4126 = vadd.f32 %v4125, %v3853
      %v4127 = vadd.f32 %v4126, %v3858
      %v4128 = vadd.f32 %v4127, %v3861
      %v4129 = vadd.f32 %v4128, %v3866
      %v4130 = vadd.f32 %v4129, %v3869
      %v4131 = vadd.f32 %v4130, %v3874
      %v4132 = vadd.f32 %v4131, %v3877
      %v4133 = vadd.f32 %v4132, %v3882
      %v4134 = vadd.f32 %v4133, %v3885
      %v4135 = vadd.f32 %v4134, %v3890
      %v4136 = vadd.f32 %v4135, %v3893
      %v4137 = vadd.f32 %v4136, %v3898
      %v4138 = vadd.f32 %v4137, %v3901
      %v4139 = vadd.f32 %v4138, %v3906
      %v4140 = vadd.f32 %v4139, %v3909
      %v4141 = vadd.f32 %v4140, %v3914
      %v4142 = vadd.f32 %v4141, %v3917
      %v4143 = vadd.f32 %v4142, %v3922
      %v4144 = vadd.f32 %v4143, %v3925
      %v4145 = vadd.f32 %v4144, %v3930
      %v4146 = vadd.f32 %v4145, %v3933
      %v4147 = vadd.f32 %v4146, %v3938
      %v4148 = vadd.f32 %v4147, %v3941
      %v4149 = vadd.f32 %v4148, %v3946
      %v4150 = vadd.f32 %v4149, %v3949
      %v4151 = vadd.f32 %v4150, %v3954
      %v4152 = vadd.f32 %v4151, %v3957
      %v4153 = vadd.f32 %v4152, %v3962
      %v4154 = vadd.f32 %v4153, %v3965
      %v4155 = vadd.f32 %v4154, %v3970
      %v4156 = vadd.f32 %v4155, %v3973
      %v4157 = vadd.f32 %v4156, %v3978
      %v4158 = vadd.f32 %v4157, %v3981
      %v4159 = vadd.f32 %v4158, %v3986
      %v4160 = vadd.f32 %v4159, %v3989
      %v4161 = vadd.f32 %v4160, %v3994
      %v4162 = vadd.f32 %v4161, %v3997
      %v4163 = vadd.f32 %v4162, %v4002
      %v4164 = vadd.f32 %v4163, %v4005
      %v4165 = vadd.f32 %v4164, %v4010
      %v4166 = vadd.f32 %v4165, %v4013
      %v4167 = vadd.f32 %v4166, %v4018
      %v4168 = vadd.f32 %v4167, %v4021
      %v4169 = vadd.f32 %v4168, %v4026
      %v4170 = vadd.f32 %v4169, %v4029
      %v4171 = vadd.f32 %v4170, %v4034
      %v4172 = vadd.f32 %v4171, %v4037
      %v4173 = vadd.f32 %v4172, %v4042
      %v4174 = vadd.f32 %v4173, %v4045
      %v4175 = vrot.slane %v4174, 4
      %v4176 = vadd.f32 %v4174, %v4175
      %v4177 = vrot.slane %v4176, 2
      %v4178 = vadd.f32 %v4176, %v4177
      %v4179 = vrot.slane %v4178, 1
      %v4180 = vadd.f32 %v4178, %v4179
      %v4181 = vmul.f32 %v3794, %v3794
      %v4182 = vmul.f32 %v3797, %v3797
      %v4183 = vmul.f32 %v3802, %v3802
      %v4184 = vmul.f32 %v3805, %v3805
      %v4185 = vmul.f32 %v3810, %v3810
      %v4186 = vmul.f32 %v3813, %v3813
      %v4187 = vmul.f32 %v3818, %v3818
      %v4188 = vmul.f32 %v3821, %v3821
      %v4189 = vmul.f32 %v3826, %v3826
      %v4190 = vmul.f32 %v3829, %v3829
      %v4191 = vmul.f32 %v3834, %v3834
      %v4192 = vmul.f32 %v3837, %v3837
      %v4193 = vmul.f32 %v3842, %v3842
      %v4194 = vmul.f32 %v3845, %v3845
      %v4195 = vmul.f32 %v3850, %v3850
      %v4196 = vmul.f32 %v3853, %v3853
      %v4197 = vmul.f32 %v3858, %v3858
      %v4198 = vmul.f32 %v3861, %v3861
      %v4199 = vmul.f32 %v3866, %v3866
      %v4200 = vmul.f32 %v3869, %v3869
      %v4201 = vmul.f32 %v3874, %v3874
      %v4202 = vmul.f32 %v3877, %v3877
      %v4203 = vmul.f32 %v3882, %v3882
      %v4204 = vmul.f32 %v3885, %v3885
      %v4205 = vmul.f32 %v3890, %v3890
      %v4206 = vmul.f32 %v3893, %v3893
      %v4207 = vmul.f32 %v3898, %v3898
      %v4208 = vmul.f32 %v3901, %v3901
      %v4209 = vmul.f32 %v3906, %v3906
      %v4210 = vmul.f32 %v3909, %v3909
      %v4211 = vmul.f32 %v3914, %v3914
      %v4212 = vmul.f32 %v3917, %v3917
      %v4213 = vmul.f32 %v3922, %v3922
      %v4214 = vmul.f32 %v3925, %v3925
      %v4215 = vmul.f32 %v3930, %v3930
      %v4216 = vmul.f32 %v3933, %v3933
      %v4217 = vmul.f32 %v3938, %v3938
      %v4218 = vmul.f32 %v3941, %v3941
      %v4219 = vmul.f32 %v3946, %v3946
      %v4220 = vmul.f32 %v3949, %v3949
      %v4221 = vmul.f32 %v3954, %v3954
      %v4222 = vmul.f32 %v3957, %v3957
      %v4223 = vmul.f32 %v3962, %v3962
      %v4224 = vmul.f32 %v3965, %v3965
      %v4225 = vmul.f32 %v3970, %v3970
      %v4226 = vmul.f32 %v3973, %v3973
      %v4227 = vmul.f32 %v3978, %v3978
      %v4228 = vmul.f32 %v3981, %v3981
      %v4229 = vmul.f32 %v3986, %v3986
      %v4230 = vmul.f32 %v3989, %v3989
      %v4231 = vmul.f32 %v3994, %v3994
      %v4232 = vmul.f32 %v3997, %v3997
      %v4233 = vmul.f32 %v4002, %v4002
      %v4234 = vmul.f32 %v4005, %v4005
      %v4235 = vmul.f32 %v4010, %v4010
      %v4236 = vmul.f32 %v4013, %v4013
      %v4237 = vmul.f32 %v4018, %v4018
      %v4238 = vmul.f32 %v4021, %v4021
      %v4239 = vmul.f32 %v4026, %v4026
      %v4240 = vmul.f32 %v4029, %v4029
      %v4241 = vmul.f32 %v4034, %v4034
      %v4242 = vmul.f32 %v4037, %v4037
      %v4243 = vmul.f32 %v4042, %v4042
      %v4244 = vmul.f32 %v4045, %v4045
      %v4245 = vadd.f32 %v4181, %v4182
      %v4246 = vadd.f32 %v4245, %v4183
      %v4247 = vadd.f32 %v4246, %v4184
      %v4248 = vadd.f32 %v4247, %v4185
      %v4249 = vadd.f32 %v4248, %v4186
      %v4250 = vadd.f32 %v4249, %v4187
      %v4251 = vadd.f32 %v4250, %v4188
      %v4252 = vadd.f32 %v4251, %v4189
      %v4253 = vadd.f32 %v4252, %v4190
      %v4254 = vadd.f32 %v4253, %v4191
      %v4255 = vadd.f32 %v4254, %v4192
      %v4256 = vadd.f32 %v4255, %v4193
      %v4257 = vadd.f32 %v4256, %v4194
      %v4258 = vadd.f32 %v4257, %v4195
      %v4259 = vadd.f32 %v4258, %v4196
      %v4260 = vadd.f32 %v4259, %v4197
      %v4261 = vadd.f32 %v4260, %v4198
      %v4262 = vadd.f32 %v4261, %v4199
      %v4263 = vadd.f32 %v4262, %v4200
      %v4264 = vadd.f32 %v4263, %v4201
      %v4265 = vadd.f32 %v4264, %v4202
      %v4266 = vadd.f32 %v4265, %v4203
      %v4267 = vadd.f32 %v4266, %v4204
      %v4268 = vadd.f32 %v4267, %v4205
      %v4269 = vadd.f32 %v4268, %v4206
      %v4270 = vadd.f32 %v4269, %v4207
      %v4271 = vadd.f32 %v4270, %v4208
      %v4272 = vadd.f32 %v4271, %v4209
      %v4273 = vadd.f32 %v4272, %v4210
      %v4274 = vadd.f32 %v4273, %v4211
      %v4275 = vadd.f32 %v4274, %v4212
      %v4276 = vadd.f32 %v4275, %v4213
      %v4277 = vadd.f32 %v4276, %v4214
      %v4278 = vadd.f32 %v4277, %v4215
      %v4279 = vadd.f32 %v4278, %v4216
      %v4280 = vadd.f32 %v4279, %v4217
      %v4281 = vadd.f32 %v4280, %v4218
      %v4282 = vadd.f32 %v4281, %v4219
      %v4283 = vadd.f32 %v4282, %v4220
      %v4284 = vadd.f32 %v4283, %v4221
      %v4285 = vadd.f32 %v4284, %v4222
      %v4286 = vadd.f32 %v4285, %v4223
      %v4287 = vadd.f32 %v4286, %v4224
      %v4288 = vadd.f32 %v4287, %v4225
      %v4289 = vadd.f32 %v4288, %v4226
      %v4290 = vadd.f32 %v4289, %v4227
      %v4291 = vadd.f32 %v4290, %v4228
      %v4292 = vadd.f32 %v4291, %v4229
      %v4293 = vadd.f32 %v4292, %v4230
      %v4294 = vadd.f32 %v4293, %v4231
      %v4295 = vadd.f32 %v4294, %v4232
      %v4296 = vadd.f32 %v4295, %v4233
      %v4297 = vadd.f32 %v4296, %v4234
      %v4298 = vadd.f32 %v4297, %v4235
      %v4299 = vadd.f32 %v4298, %v4236
      %v4300 = vadd.f32 %v4299, %v4237
      %v4301 = vadd.f32 %v4300, %v4238
      %v4302 = vadd.f32 %v4301, %v4239
      %v4303 = vadd.f32 %v4302, %v4240
      %v4304 = vadd.f32 %v4303, %v4241
      %v4305 = vadd.f32 %v4304, %v4242
      %v4306 = vadd.f32 %v4305, %v4243
      %v4307 = vadd.f32 %v4306, %v4244
      %v4308 = vrot.slane %v4307, 4
      %v4309 = vadd.f32 %v4307, %v4308
      %v4310 = vrot.slane %v4309, 2
      %v4311 = vadd.f32 %v4309, %v4310
      %v4312 = vrot.slane %v4311, 1
      %v4313 = vadd.f32 %v4311, %v4312
      %vm4314 = vcmask 1040384
      %v4315 = vsel %vm4314, %v4180, %v4313
      %4316 = vst [vmem:[%s233] sm:$0x3] %v4315
      %s4317 = smul.u32 64, %s20
      %p4318 = scmp.lt.s32.totalorder %s19, 1
      %s4319 = scalar_select %p4318, %s19, 1
      %p4320 = scmp.lt.s32.totalorder %s4317, 127
      %s4321 = scalar_select %p4320, %s4317, 127
      %s4322 = smul.addr %s4319, 128
      %s4323 = sadd.s32 %s4321, %s4322
      %s4324 = smul.addr %s4323, 8
      %s4325 = scalar_lea.vmem %s2, %s4324
      %p4326 = scmp.lt.s32.totalorder %s19, 1
      %s4327 = scalar_select %p4326, %s19, 1
      %p4328 = scmp.lt.s32.totalorder %s20, 1
      %s4329 = scalar_select %p4328, %s20, 1
      %s4330 = smul.addr %s4327, 2
      %s4331 = sadd.s32 %s4329, %s4330
      %s4332 = smul.addr %s4331, 2
      %s4333 = scalar_lea.vmem %s3, %s4332
      // Predicated region
      $region29: #{upsampling_block_forward.8} parent=27 // pred_check
        %p4334 = pneg %p96
      $region30: #{upsampling_block_forward.8} parent=27 // pred_check_branch
        %4336 = sbr.rel (%p4334) target = $region32
      $region31: #{upsampling_block_forward.8} parent=27 // pred_region
        %s4337 = smul.u32 64, %s20
      $region32: #{upsampling_block_forward.8} parent=27 // pred_fallthru
        _
      // Predicated region
      $region33: #{upsampling_block_forward.8} parent=27 // pred_check
        %p4338 = pneg %p124
      $region34: #{upsampling_block_forward.8} parent=27 // pred_check_branch
        %4340 = sbr.rel (%p4338) target = $region36
      $region35: #{upsampling_block_forward.8} parent=27 // pred_region
        _
      $region36: #{upsampling_block_forward.8} parent=27 // pred_fallthru
        _
    $region28: #{upsampling_block_forward.8} parent=5 // pred_fallthru
      _
    %p4341 = scmp.le.s32.totalorder 2, %s10
    // Predicated region
    $region37: #{upsampling_block_forward.8} parent=5 // pred_check
      %p4342 = pneg %p4341
    $region38: #{upsampling_block_forward.8} parent=5 // pred_check_branch
      %4344 = sbr.rel (%p4342) target = $region40
    $region39: #{upsampling_block_forward.8} parent=5 // pred_region
      %s4345 = ssub.s32 %s10, 2
      // Predicated region
      $region41: #{upsampling_block_forward.8} parent=39 // pred_check
        %p4346 = pneg %p102
      $region42: #{upsampling_block_forward.8} parent=39 // pred_check_branch
        %4348 = sbr.rel (%p4346) target = $region44
      $region43: #{upsampling_block_forward.8} parent=39 // pred_region
        %s4349 = smul.u32 64, %s22
        %p4350 = scmp.lt.s32.totalorder %s21, 1
        %s4351 = scalar_select %p4350, %s21, 1
        %p4352 = scmp.lt.s32.totalorder %s4349, 127
        %s4353 = scalar_select %p4352, %s4349, 127
        %s4354 = smul.addr %s4351, 128
        %s4355 = sadd.s32 %s4353, %s4354
        %s4356 = smul.addr %s4355, 8
        %s4357 = scalar_lea.vmem %s2, %s4356
      $region44: #{upsampling_block_forward.8} parent=39 // pred_fallthru
        _
      // Predicated region
      $region45: #{upsampling_block_forward.8} parent=39 // pred_check
        %p4358 = pneg %p130
      $region46: #{upsampling_block_forward.8} parent=39 // pred_check_branch
        %4360 = sbr.rel (%p4358) target = $region48
      $region47: #{upsampling_block_forward.8} parent=39 // pred_region
        %p4361 = scmp.lt.s32.totalorder %s21, 1
        %s4362 = scalar_select %p4361, %s21, 1
        %p4363 = scmp.lt.s32.totalorder %s22, 1
        %s4364 = scalar_select %p4363, %s22, 1
        %s4365 = smul.addr %s4362, 2
        %s4366 = sadd.s32 %s4364, %s4365
        %s4367 = smul.addr %s4366, 2
        %s4368 = scalar_lea.vmem %s3, %s4367
      $region48: #{upsampling_block_forward.8} parent=39 // pred_fallthru
        _
    $region40: #{upsampling_block_forward.8} parent=5 // pred_fallthru
      _
  $region6: #{upsampling_block_forward.8} parent=0 // loop_footer
    %s14 = sadd.s32 1, %s10
  $region7: #{upsampling_block_forward.8} parent=0 // loop_footer_branch
    %9 = sbr.rel target = $region3
  $region8: #{upsampling_block_forward.8} parent=0 // loop_exit
    _

// kernel: upsampling_block_forward.9
$region0: #{upsampling_block_forward.9}
  #allocation0 [shape = 'u32[]', space=smem, size = 0x4, offset = 0x4, fixed_abs, tag = 'smem constant byte address 0x4 - core index']
  #allocation1 [shape = 'u32[144,128]{1,0:T(1,128)}', space=vmem, size = 0x12000, scoped, tag = 'internal scratch']
  %s0 = inlined_call_operand.vmem [shape: f32[2,1024,128], index: 0, kind: input, shape index: {}]
  %s1 = inlined_call_operand.vmem [shape: f32[1,128], index: 1, kind: input, shape index: {}]
  %s2 = inlined_call_operand.vmem [shape: f32[1,128], index: 2, kind: input, shape index: {}]
  %s3 = inlined_call_operand.vmem [shape: f32[2,1,128], index: 3, kind: input, shape index: {}]
  %s4 = inlined_call_operand.vmem [shape: f32[2,1024,128], index: 4, kind: output, shape index: {}]
  %s5 = sld [smem:[#allocation0]]
  $region49: #{upsampling_block_forward.9} parent=0
    _
  %s7 = ssub.s32 1, %s5
  %s8 = scalar_select 0, %s7, %s5
  loop: start=0, step=1, limit=6
  $region2: #{upsampling_block_forward.9} parent=0 // loop_pre_header
    _
  $region3: #{upsampling_block_forward.9} parent=0 // loop_header
    %s10 = sphi 0, %s14
    %p11 = scmp.ge.s32.totalorder %s10, 6
    %s17 = sphi 0, %s29
    %s18 = sphi 0, %s25
    %s19 = sphi 0, %s17
    %s20 = sphi 0, %s18
    %s21 = sphi 0, %s19
    %s22 = sphi 0, %s20
    %s34 = sphi 0, %s36
    %s37 = sphi 0, %s34
    %s38 = sphi 0, %s37
    %s54 = sphi 0, %s38
    %s58 = sphi 0, %s58
    %s60 = sphi 0, %s58
    %s61 = sphi 0, %s60
    %s75 = sphi 0, %s61
    %s79 = sphi 0, %s79
    %s81 = sphi 0, %s79
    %s82 = sphi 0, %s81
    %s96 = sphi 0, %s82
    %s102 = sphi 0, %s104
    %s105 = sphi 0, %s102
    %s106 = sphi 0, %s105
    %s122 = sphi 0, %s106
    %s130 = sphi 0, %s132
    %s133 = sphi 0, %s130
    %s134 = sphi 0, %s133
    %s150 = sphi 0, %s134
  $region4: #{upsampling_block_forward.9} parent=0 // loop_header_branch
    %13 = sbr.rel (%p11) target = $region8
  $region5: #{upsampling_block_forward.9} parent=0 // loop_body
    %s15 = ssub.s32 %s10, 1
    %s16 = ssub.s32 %s10, 2
    %s23 = sadd.s32 1, %s18
    %p24 = scmp.ge.s32.totalorder %s23, 2
    %s25 = scalar_select %p24, 0, %s23
    %s26 = sadd.s32 1, %s17
    %s27 = scalar_select %p24, %s26, %s17
    %p28 = scmp.ge.s32.totalorder %s27, 2
    %s29 = scalar_select %p28, 0, %s27
    %s30 = ssub.s32 %s17, %s29
    %s31 = ssub.s32 %s18, %s25
    %s32 = sor.u32 %s30, %s31
    %p33 = scmp.eq.s32.totalorder %s32, 0
    %s35 = sadd.s32 %s34, 1
    %s36 = scalar_select %p33, %s34, %s35
    %p39 = pneg %p33
    %p40 = scmp.eq.s32.totalorder %s10, 3
    %p41 = por %p39, %p40
    %p42 = scmp.ne.s32.totalorder %s34, %s37
    %p43 = scmp.eq.s32.totalorder %s10, 0
    %p44 = por %p42, %p43
    %p45 = scmp.ne.s32.totalorder %s34, %s37
    %p46 = scmp.eq.s32.totalorder %s15, 3
    %p47 = por %p45, %p46
    %p48 = scmp.ne.s32.totalorder %s37, %s38
    %p49 = scmp.eq.s32.totalorder %s15, 0
    %p50 = por %p48, %p49
    %p51 = scmp.ne.s32.totalorder %s37, %s38
    %p52 = scmp.eq.s32.totalorder %s16, 3
    %p53 = por %p51, %p52
    %p55 = scmp.ne.s32.totalorder %s38, %s54
    %p56 = scmp.eq.s32.totalorder %s16, 0
    %p57 = por %p55, %p56
    %s59 = sadd.s32 %s58, 1
    %p62 = scmp.eq.s32.totalorder %s10, 3
    %p63 = scmp.ne.s32.totalorder %s58, %s60
    %p64 = scmp.eq.s32.totalorder %s10, 0
    %p65 = por %p63, %p64
    %p66 = scmp.ne.s32.totalorder %s58, %s60
    %p67 = scmp.eq.s32.totalorder %s15, 3
    %p68 = por %p66, %p67
    %p69 = scmp.ne.s32.totalorder %s60, %s61
    %p70 = scmp.eq.s32.totalorder %s15, 0
    %p71 = por %p69, %p70
    %p72 = scmp.ne.s32.totalorder %s60, %s61
    %p73 = scmp.eq.s32.totalorder %s16, 3
    %p74 = por %p72, %p73
    %p76 = scmp.ne.s32.totalorder %s61, %s75
    %p77 = scmp.eq.s32.totalorder %s16, 0
    %p78 = por %p76, %p77
    %s80 = sadd.s32 %s79, 1
    %p83 = scmp.eq.s32.totalorder %s10, 3
    %p84 = scmp.ne.s32.totalorder %s79, %s81
    %p85 = scmp.eq.s32.totalorder %s10, 0
    %p86 = por %p84, %p85
    %p87 = scmp.ne.s32.totalorder %s79, %s81
    %p88 = scmp.eq.s32.totalorder %s15, 3
    %p89 = por %p87, %p88
    %p90 = scmp.ne.s32.totalorder %s81, %s82
    %p91 = scmp.eq.s32.totalorder %s15, 0
    %p92 = por %p90, %p91
    %p93 = scmp.ne.s32.totalorder %s81, %s82
    %p94 = scmp.eq.s32.totalorder %s16, 3
    %p95 = por %p93, %p94
    %p97 = scmp.ne.s32.totalorder %s82, %s96
    %p98 = scmp.eq.s32.totalorder %s16, 0
    %p99 = por %p97, %p98
    %s100 = ssub.s32 %s17, %s29
    %p101 = scmp.eq.s32.totalorder %s100, 0
    %s103 = sadd.s32 %s102, 1
    %s104 = scalar_select %p101, %s102, %s103
    %p107 = pneg %p101
    %p108 = scmp.eq.s32.totalorder %s10, 3
    %p109 = por %p107, %p108
    %p110 = scmp.ne.s32.totalorder %s102, %s105
    %p111 = scmp.eq.s32.totalorder %s10, 0
    %p112 = por %p110, %p111
    %p113 = scmp.ne.s32.totalorder %s102, %s105
    %p114 = scmp.eq.s32.totalorder %s15, 3
    %p115 = por %p113, %p114
    %p116 = scmp.ne.s32.totalorder %s105, %s106
    %p117 = scmp.eq.s32.totalorder %s15, 0
    %p118 = por %p116, %p117
    %p119 = scmp.ne.s32.totalorder %s105, %s106
    %p120 = scmp.eq.s32.totalorder %s16, 3
    %p121 = por %p119, %p120
    %p123 = scmp.ne.s32.totalorder %s106, %s122
    %p124 = scmp.eq.s32.totalorder %s16, 0
    %p125 = por %p123, %p124
    %s126 = ssub.s32 %s17, %s29
    %s127 = ssub.s32 %s18, %s25
    %s128 = sor.u32 %s126, %s127
    %p129 = scmp.eq.s32.totalorder %s128, 0
    %s131 = sadd.s32 %s130, 1
    %s132 = scalar_select %p129, %s130, %s131
    %p135 = pneg %p129
    %p136 = scmp.eq.s32.totalorder %s10, 3
    %p137 = por %p135, %p136
    %p138 = scmp.ne.s32.totalorder %s130, %s133
    %p139 = scmp.eq.s32.totalorder %s10, 0
    %p140 = por %p138, %p139
    %p141 = scmp.ne.s32.totalorder %s130, %s133
    %p142 = scmp.eq.s32.totalorder %s15, 3
    %p143 = por %p141, %p142
    %p144 = scmp.ne.s32.totalorder %s133, %s134
    %p145 = scmp.eq.s32.totalorder %s15, 0
    %p146 = por %p144, %p145
    %p147 = scmp.ne.s32.totalorder %s133, %s134
    %p148 = scmp.eq.s32.totalorder %s16, 3
    %p149 = por %p147, %p148
    %p151 = scmp.ne.s32.totalorder %s134, %s150
    %p152 = scmp.eq.s32.totalorder %s16, 0
    %p153 = por %p151, %p152
    %p154 = scmp.le.s32.totalorder 1, %s10
    %p155 = scmp.lt.s32.totalorder %s10, 5
    %p156 = pnand %p154, %p155
    %p157 = pneg %p156
    // Predicated region
    $region9: #{upsampling_block_forward.9} parent=5 // pred_check
      _
    $region10: #{upsampling_block_forward.9} parent=5 // pred_check_branch
      %159 = sbr.rel (%p156) target = $region12
    $region11: #{upsampling_block_forward.9} parent=5 // pred_region
      %s160 = ssub.s32 %s10, 1
      // Predicated region
      $region13: #{upsampling_block_forward.9} parent=11 // pred_check
        %p161 = pneg %p71
      $region14: #{upsampling_block_forward.9} parent=11 // pred_check_branch
        %163 = sbr.rel (%p161) target = $region16
      $region15: #{upsampling_block_forward.9} parent=11 // pred_region
        _
      $region16: #{upsampling_block_forward.9} parent=11 // pred_fallthru
        _
      // Predicated region
      $region17: #{upsampling_block_forward.9} parent=11 // pred_check
        %p164 = pneg %p92
      $region18: #{upsampling_block_forward.9} parent=11 // pred_check_branch
        %166 = sbr.rel (%p164) target = $region20
      $region19: #{upsampling_block_forward.9} parent=11 // pred_region
        _
      $region20: #{upsampling_block_forward.9} parent=11 // pred_fallthru
        _
    $region12: #{upsampling_block_forward.9} parent=5 // pred_fallthru
      _
    %p167 = scmp.lt.s32.totalorder %s10, 4
    // Predicated region
    $region21: #{upsampling_block_forward.9} parent=5 // pred_check
      %p168 = pneg %p167
    $region22: #{upsampling_block_forward.9} parent=5 // pred_check_branch
      %170 = sbr.rel (%p168) target = $region24
    $region23: #{upsampling_block_forward.9} parent=5 // pred_region
      // Predicated region
      $region25: #{upsampling_block_forward.9} parent=23 // pred_check
        %p171 = pneg %p44
      $region26: #{upsampling_block_forward.9} parent=23 // pred_check_branch
        %173 = sbr.rel (%p171) target = $region28
      $region27: #{upsampling_block_forward.9} parent=23 // pred_region
        %s174 = smul.u32 64, %s18
        %p175 = scmp.lt.s32.totalorder %s17, 1
        %s176 = scalar_select %p175, %s17, 1
        %p177 = scmp.lt.s32.totalorder %s174, 127
        %s178 = scalar_select %p177, %s174, 127
        %s179 = smul.addr %s176, 128
        %s180 = sadd.s32 %s178, %s179
        %s181 = smul.addr %s180, 8
        %s182 = scalar_lea.vmem %s0, %s181
        %s183 = smul.u32 64, %s18
      $region28: #{upsampling_block_forward.9} parent=23 // pred_fallthru
        _
      // Predicated region
      $region29: #{upsampling_block_forward.9} parent=23 // pred_check
        %p184 = pneg %p112
      $region30: #{upsampling_block_forward.9} parent=23 // pred_check_branch
        %186 = sbr.rel (%p184) target = $region32
      $region31: #{upsampling_block_forward.9} parent=23 // pred_region
        %p187 = scmp.lt.s32.totalorder %s17, 1
        %s188 = scalar_select %p187, %s17, 1
        %s189 = scalar_lea.vmem %s3, %s188
      $region32: #{upsampling_block_forward.9} parent=23 // pred_fallthru
        _
    $region24: #{upsampling_block_forward.9} parent=5 // pred_fallthru
      _
    %p190 = scmp.le.s32.totalorder 1, %s10
    %p191 = scmp.lt.s32.totalorder %s10, 5
    %p192 = pnand %p190, %p191
    %p193 = pneg %p192
    // Predicated region
    $region33: #{upsampling_block_forward.9} parent=5 // pred_check
      _
    $region34: #{upsampling_block_forward.9} parent=5 // pred_check_branch
      %195 = sbr.rel (%p192) target = $region36
    $region35: #{upsampling_block_forward.9} parent=5 // pred_region
      %s196 = ssub.s32 %s10, 1
      %s197 = smul.u32 64, %s20
      %p198 = scmp.lt.s32.totalorder %s19, 1
      %s199 = scalar_select %p198, %s19, 1
      %p200 = scmp.lt.s32.totalorder %s197, 127
      %s201 = scalar_select %p200, %s197, 127
      %s202 = smul.addr %s199, 128
      %s203 = sadd.s32 %s201, %s202
      %s204 = smul.addr %s203, 8
      %s205 = scalar_lea.vmem %s0, %s204
      %p206 = pneg %p50
      %p207 = pneg %p47
      %p208 = pneg %p71
      %p209 = pneg %p68
      %p210 = pneg %p92
      %p211 = pneg %p89
      %p212 = scmp.lt.s32.totalorder %s19, 1
      %s213 = scalar_select %p212, %s19, 1
      %s214 = scalar_lea.vmem %s3, %s213
      %p215 = pneg %p118
      %p216 = pneg %p115
      %p217 = pneg %p146
      %p218 = pneg %p143
      %s219 = smul.u32 64, %s20
      %p220 = scmp.lt.s32.totalorder %s19, 1
      %s221 = scalar_select %p220, %s19, 1
      %p222 = scmp.lt.s32.totalorder %s219, 127
      %s223 = scalar_select %p222, %s219, 127
      %s224 = smul.addr %s221, 128
      %s225 = sadd.s32 %s223, %s224
      %s226 = smul.addr %s225, 8
      %s227 = scalar_lea.vmem %s4, %s226
      %s228 = smul.u32 64, %s20
      %p229 = scmp.lt.s32.totalorder %s19, 1
      %s230 = scalar_select %p229, %s19, 1
      %p231 = scmp.lt.s32.totalorder %s228, 127
      %s232 = scalar_select %p231, %s228, 127
      %s233 = smul.addr %s230, 128
      %s234 = sadd.s32 %s232, %s233
      %s235 = smul.addr %s234, 8
      %s236 = scalar_lea.vmem %s0, %s235
      %s237 = smul.u32 64, %s20
      %p238 = scmp.lt.s32.totalorder %s19, 1
      %s239 = scalar_select %p238, %s19, 1
      %s240 = scalar_lea.vmem %s3, %s239
      %s241 = smul.u32 64, %s20
      %p242 = scmp.lt.s32.totalorder %s19, 1
      %s243 = scalar_select %p242, %s19, 1
      %p244 = scmp.lt.s32.totalorder %s241, 127
      %s245 = scalar_select %p244, %s241, 127
      %s246 = smul.addr %s243, 128
      %s247 = sadd.s32 %s245, %s246
      %s248 = smul.addr %s247, 8
      %s249 = scalar_lea.vmem %s4, %s248
      %s250 = smul.u32 64, %s20
      %v251 = vld [vmem:[%s236] sm:$0xff]
      %v252 = vld [vmem:[%s236 + $0x8] sm:$0xff]
      %v253 = vld [vmem:[%s236 + $0x10] sm:$0xff]
      %v254 = vld [vmem:[%s236 + $0x18] sm:$0xff]
      %v255 = vld [vmem:[%s236 + $0x20] sm:$0xff]
      %v256 = vld [vmem:[%s236 + $0x28] sm:$0xff]
      %v257 = vld [vmem:[%s236 + $0x30] sm:$0xff]
      %v258 = vld [vmem:[%s236 + $0x38] sm:$0xff]
      %v259 = vld [vmem:[%s236 + $0x40] sm:$0xff]
      %v260 = vld [vmem:[%s236 + $0x48] sm:$0xff]
      %v261 = vld [vmem:[%s236 + $0x50] sm:$0xff]
      %v262 = vld [vmem:[%s236 + $0x58] sm:$0xff]
      %v263 = vld [vmem:[%s236 + $0x60] sm:$0xff]
      %v264 = vld [vmem:[%s236 + $0x68] sm:$0xff]
      %v265 = vld [vmem:[%s236 + $0x70] sm:$0xff]
      %v266 = vld [vmem:[%s236 + $0x78] sm:$0xff]
      %v267 = vld [vmem:[%s236 + $0x80] sm:$0xff]
      %v268 = vld [vmem:[%s236 + $0x88] sm:$0xff]
      %v269 = vld [vmem:[%s236 + $0x90] sm:$0xff]
      %v270 = vld [vmem:[%s236 + $0x98] sm:$0xff]
      %v271 = vld [vmem:[%s236 + $0xa0] sm:$0xff]
      %v272 = vld [vmem:[%s236 + $0xa8] sm:$0xff]
      %v273 = vld [vmem:[%s236 + $0xb0] sm:$0xff]
      %v274 = vld [vmem:[%s236 + $0xb8] sm:$0xff]
      %v275 = vld [vmem:[%s236 + $0xc0] sm:$0xff]
      %v276 = vld [vmem:[%s236 + $0xc8] sm:$0xff]
      %v277 = vld [vmem:[%s236 + $0xd0] sm:$0xff]
      %v278 = vld [vmem:[%s236 + $0xd8] sm:$0xff]
      %v279 = vld [vmem:[%s236 + $0xe0] sm:$0xff]
      %v280 = vld [vmem:[%s236 + $0xe8] sm:$0xff]
      %v281 = vld [vmem:[%s236 + $0xf0] sm:$0xff]
      %v282 = vld [vmem:[%s236 + $0xf8] sm:$0xff]
      %v283 = vld [vmem:[%s236 + $0x100] sm:$0xff]
      %v284 = vld [vmem:[%s236 + $0x108] sm:$0xff]
      %v285 = vld [vmem:[%s236 + $0x110] sm:$0xff]
      %v286 = vld [vmem:[%s236 + $0x118] sm:$0xff]
      %v287 = vld [vmem:[%s236 + $0x120] sm:$0xff]
      %v288 = vld [vmem:[%s236 + $0x128] sm:$0xff]
      %v289 = vld [vmem:[%s236 + $0x130] sm:$0xff]
      %v290 = vld [vmem:[%s236 + $0x138] sm:$0xff]
      %v291 = vld [vmem:[%s236 + $0x140] sm:$0xff]
      %v292 = vld [vmem:[%s236 + $0x148] sm:$0xff]
      %v293 = vld [vmem:[%s236 + $0x150] sm:$0xff]
      %v294 = vld [vmem:[%s236 + $0x158] sm:$0xff]
      %v295 = vld [vmem:[%s236 + $0x160] sm:$0xff]
      %v296 = vld [vmem:[%s236 + $0x168] sm:$0xff]
      %v297 = vld [vmem:[%s236 + $0x170] sm:$0xff]
      %v298 = vld [vmem:[%s236 + $0x178] sm:$0xff]
      %v299 = vld [vmem:[%s236 + $0x180] sm:$0xff]
      %v300 = vld [vmem:[%s236 + $0x188] sm:$0xff]
      %v301 = vld [vmem:[%s236 + $0x190] sm:$0xff]
      %v302 = vld [vmem:[%s236 + $0x198] sm:$0xff]
      %v303 = vld [vmem:[%s236 + $0x1a0] sm:$0xff]
      %v304 = vld [vmem:[%s236 + $0x1a8] sm:$0xff]
      %v305 = vld [vmem:[%s236 + $0x1b0] sm:$0xff]
      %v306 = vld [vmem:[%s236 + $0x1b8] sm:$0xff]
      %v307 = vld [vmem:[%s236 + $0x1c0] sm:$0xff]
      %v308 = vld [vmem:[%s236 + $0x1c8] sm:$0xff]
      %v309 = vld [vmem:[%s236 + $0x1d0] sm:$0xff]
      %v310 = vld [vmem:[%s236 + $0x1d8] sm:$0xff]
      %v311 = vld [vmem:[%s236 + $0x1e0] sm:$0xff]
      %v312 = vld [vmem:[%s236 + $0x1e8] sm:$0xff]
      %v313 = vld [vmem:[%s236 + $0x1f0] sm:$0xff]
      %v314 = vld [vmem:[%s236 + $0x1f8] sm:$0xff]
      %v315 = vld [vmem:[%s1] sm:$0x1]
      %v317 = vlaneseq
      %v318 = vshrl.u32 %v317, 7
      %v319 = vsub.s32 0, %v318
      %v320 = vrot.slane %v315, %v319
      %v322 = vmul.f32 %v251, %v320
      %v323 = vmul.f32 %v252, %v320
      %v324 = vmul.f32 %v253, %v320
      %v325 = vmul.f32 %v254, %v320
      %v326 = vmul.f32 %v255, %v320
      %v327 = vmul.f32 %v256, %v320
      %v328 = vmul.f32 %v257, %v320
      %v329 = vmul.f32 %v258, %v320
      %v330 = vmul.f32 %v259, %v320
      %v331 = vmul.f32 %v260, %v320
      %v332 = vmul.f32 %v261, %v320
      %v333 = vmul.f32 %v262, %v320
      %v334 = vmul.f32 %v263, %v320
      %v335 = vmul.f32 %v264, %v320
      %v336 = vmul.f32 %v265, %v320
      %v337 = vmul.f32 %v266, %v320
      %v338 = vmul.f32 %v267, %v320
      %v339 = vmul.f32 %v268, %v320
      %v340 = vmul.f32 %v269, %v320
      %v341 = vmul.f32 %v270, %v320
      %v342 = vmul.f32 %v271, %v320
      %v343 = vmul.f32 %v272, %v320
      %v344 = vmul.f32 %v273, %v320
      %v345 = vmul.f32 %v274, %v320
      %v346 = vmul.f32 %v275, %v320
      %v347 = vmul.f32 %v276, %v320
      %v348 = vmul.f32 %v277, %v320
      %v349 = vmul.f32 %v278, %v320
      %v350 = vmul.f32 %v279, %v320
      %v351 = vmul.f32 %v280, %v320
      %v352 = vmul.f32 %v281, %v320
      %v353 = vmul.f32 %v282, %v320
      %v354 = vmul.f32 %v283, %v320
      %v355 = vmul.f32 %v284, %v320
      %v356 = vmul.f32 %v285, %v320
      %v357 = vmul.f32 %v286, %v320
      %v358 = vmul.f32 %v287, %v320
      %v359 = vmul.f32 %v288, %v320
      %v360 = vmul.f32 %v289, %v320
      %v361 = vmul.f32 %v290, %v320
      %v362 = vmul.f32 %v291, %v320
      %v363 = vmul.f32 %v292, %v320
      %v364 = vmul.f32 %v293, %v320
      %v365 = vmul.f32 %v294, %v320
      %v366 = vmul.f32 %v295, %v320
      %v367 = vmul.f32 %v296, %v320
      %v368 = vmul.f32 %v297, %v320
      %v369 = vmul.f32 %v298, %v320
      %v370 = vmul.f32 %v299, %v320
      %v371 = vmul.f32 %v300, %v320
      %v372 = vmul.f32 %v301, %v320
      %v373 = vmul.f32 %v302, %v320
      %v374 = vmul.f32 %v303, %v320
      %v375 = vmul.f32 %v304, %v320
      %v376 = vmul.f32 %v305, %v320
      %v377 = vmul.f32 %v306, %v320
      %v378 = vmul.f32 %v307, %v320
      %v379 = vmul.f32 %v308, %v320
      %v380 = vmul.f32 %v309, %v320
      %v381 = vmul.f32 %v310, %v320
      %v382 = vmul.f32 %v311, %v320
      %v383 = vmul.f32 %v312, %v320
      %v384 = vmul.f32 %v313, %v320
      %v385 = vmul.f32 %v314, %v320
      %v386 = vld [vmem:[%s2] sm:$0x1]
      %v388 = vlaneseq
      %v389 = vshrl.u32 %v388, 7
      %v390 = vsub.s32 0, %v389
      %v391 = vrot.slane %v386, %v390
      %v393 = vadd.f32 %v322, %v391
      %v394 = vadd.f32 %v323, %v391
      %v395 = vadd.f32 %v324, %v391
      %v396 = vadd.f32 %v325, %v391
      %v397 = vadd.f32 %v326, %v391
      %v398 = vadd.f32 %v327, %v391
      %v399 = vadd.f32 %v328, %v391
      %v400 = vadd.f32 %v329, %v391
      %v401 = vadd.f32 %v330, %v391
      %v402 = vadd.f32 %v331, %v391
      %v403 = vadd.f32 %v332, %v391
      %v404 = vadd.f32 %v333, %v391
      %v405 = vadd.f32 %v334, %v391
      %v406 = vadd.f32 %v335, %v391
      %v407 = vadd.f32 %v336, %v391
      %v408 = vadd.f32 %v337, %v391
      %v409 = vadd.f32 %v338, %v391
      %v410 = vadd.f32 %v339, %v391
      %v411 = vadd.f32 %v340, %v391
      %v412 = vadd.f32 %v341, %v391
      %v413 = vadd.f32 %v342, %v391
      %v414 = vadd.f32 %v343, %v391
      %v415 = vadd.f32 %v344, %v391
      %v416 = vadd.f32 %v345, %v391
      %v417 = vadd.f32 %v346, %v391
      %v418 = vadd.f32 %v347, %v391
      %v419 = vadd.f32 %v348, %v391
      %v420 = vadd.f32 %v349, %v391
      %v421 = vadd.f32 %v350, %v391
      %v422 = vadd.f32 %v351, %v391
      %v423 = vadd.f32 %v352, %v391
      %v424 = vadd.f32 %v353, %v391
      %v425 = vadd.f32 %v354, %v391
      %v426 = vadd.f32 %v355, %v391
      %v427 = vadd.f32 %v356, %v391
      %v428 = vadd.f32 %v357, %v391
      %v429 = vadd.f32 %v358, %v391
      %v430 = vadd.f32 %v359, %v391
      %v431 = vadd.f32 %v360, %v391
      %v432 = vadd.f32 %v361, %v391
      %v433 = vadd.f32 %v362, %v391
      %v434 = vadd.f32 %v363, %v391
      %v435 = vadd.f32 %v364, %v391
      %v436 = vadd.f32 %v365, %v391
      %v437 = vadd.f32 %v366, %v391
      %v438 = vadd.f32 %v367, %v391
      %v439 = vadd.f32 %v368, %v391
      %v440 = vadd.f32 %v369, %v391
      %v441 = vadd.f32 %v370, %v391
      %v442 = vadd.f32 %v371, %v391
      %v443 = vadd.f32 %v372, %v391
      %v444 = vadd.f32 %v373, %v391
      %v445 = vadd.f32 %v374, %v391
      %v446 = vadd.f32 %v375, %v391
      %v447 = vadd.f32 %v376, %v391
      %v448 = vadd.f32 %v377, %v391
      %v449 = vadd.f32 %v378, %v391
      %v450 = vadd.f32 %v379, %v391
      %v451 = vadd.f32 %v380, %v391
      %v452 = vadd.f32 %v381, %v391
      %v453 = vadd.f32 %v382, %v391
      %v454 = vadd.f32 %v383, %v391
      %v455 = vadd.f32 %v384, %v391
      %v456 = vadd.f32 %v385, %v391
      %v457 = vmax.f32 %v393, 0.0
      %v458 = vmax.f32 %v394, 0.0
      %v459 = vmax.f32 %v395, 0.0
      %v460 = vmax.f32 %v396, 0.0
      %v461 = vmax.f32 %v397, 0.0
      %v462 = vmax.f32 %v398, 0.0
      %v463 = vmax.f32 %v399, 0.0
      %v464 = vmax.f32 %v400, 0.0
      %v465 = vmax.f32 %v401, 0.0
      %v466 = vmax.f32 %v402, 0.0
      %v467 = vmax.f32 %v403, 0.0
      %v468 = vmax.f32 %v404, 0.0
      %v469 = vmax.f32 %v405, 0.0
      %v470 = vmax.f32 %v406, 0.0
      %v471 = vmax.f32 %v407, 0.0
      %v472 = vmax.f32 %v408, 0.0
      %v473 = vmax.f32 %v409, 0.0
      %v474 = vmax.f32 %v410, 0.0
      %v475 = vmax.f32 %v411, 0.0
      %v476 = vmax.f32 %v412, 0.0
      %v477 = vmax.f32 %v413, 0.0
      %v478 = vmax.f32 %v414, 0.0
      %v479 = vmax.f32 %v415, 0.0
      %v480 = vmax.f32 %v416, 0.0
      %v481 = vmax.f32 %v417, 0.0
      %v482 = vmax.f32 %v418, 0.0
      %v483 = vmax.f32 %v419, 0.0
      %v484 = vmax.f32 %v420, 0.0
      %v485 = vmax.f32 %v421, 0.0
      %v486 = vmax.f32 %v422, 0.0
      %v487 = vmax.f32 %v423, 0.0
      %v488 = vmax.f32 %v424, 0.0
      %v489 = vmax.f32 %v425, 0.0
      %v490 = vmax.f32 %v426, 0.0
      %v491 = vmax.f32 %v427, 0.0
      %v492 = vmax.f32 %v428, 0.0
      %v493 = vmax.f32 %v429, 0.0
      %v494 = vmax.f32 %v430, 0.0
      %v495 = vmax.f32 %v431, 0.0
      %v496 = vmax.f32 %v432, 0.0
      %v497 = vmax.f32 %v433, 0.0
      %v498 = vmax.f32 %v434, 0.0
      %v499 = vmax.f32 %v435, 0.0
      %v500 = vmax.f32 %v436, 0.0
      %v501 = vmax.f32 %v437, 0.0
      %v502 = vmax.f32 %v438, 0.0
      %v503 = vmax.f32 %v439, 0.0
      %v504 = vmax.f32 %v440, 0.0
      %v505 = vmax.f32 %v441, 0.0
      %v506 = vmax.f32 %v442, 0.0
      %v507 = vmax.f32 %v443, 0.0
      %v508 = vmax.f32 %v444, 0.0
      %v509 = vmax.f32 %v445, 0.0
      %v510 = vmax.f32 %v446, 0.0
      %v511 = vmax.f32 %v447, 0.0
      %v512 = vmax.f32 %v448, 0.0
      %v513 = vmax.f32 %v449, 0.0
      %v514 = vmax.f32 %v450, 0.0
      %v515 = vmax.f32 %v451, 0.0
      %v516 = vmax.f32 %v452, 0.0
      %v517 = vmax.f32 %v453, 0.0
      %v518 = vmax.f32 %v454, 0.0
      %v519 = vmax.f32 %v455, 0.0
      %v520 = vmax.f32 %v456, 0.0
      %v521 = vld [vmem:[%s240] sm:$0x1]
      %v523 = vlaneseq
      %v524 = vshrl.u32 %v523, 7
      %v525 = vsub.s32 0, %v524
      %v526 = vrot.slane %v521, %v525
      %v528 = vadd.f32 %v457, %v526
      %v529 = vadd.f32 %v458, %v526
      %v530 = vadd.f32 %v459, %v526
      %v531 = vadd.f32 %v460, %v526
      %v532 = vadd.f32 %v461, %v526
      %v533 = vadd.f32 %v462, %v526
      %v534 = vadd.f32 %v463, %v526
      %v535 = vadd.f32 %v464, %v526
      %v536 = vadd.f32 %v465, %v526
      %v537 = vadd.f32 %v466, %v526
      %v538 = vadd.f32 %v467, %v526
      %v539 = vadd.f32 %v468, %v526
      %v540 = vadd.f32 %v469, %v526
      %v541 = vadd.f32 %v470, %v526
      %v542 = vadd.f32 %v471, %v526
      %v543 = vadd.f32 %v472, %v526
      %v544 = vadd.f32 %v473, %v526
      %v545 = vadd.f32 %v474, %v526
      %v546 = vadd.f32 %v475, %v526
      %v547 = vadd.f32 %v476, %v526
      %v548 = vadd.f32 %v477, %v526
      %v549 = vadd.f32 %v478, %v526
      %v550 = vadd.f32 %v479, %v526
      %v551 = vadd.f32 %v480, %v526
      %v552 = vadd.f32 %v481, %v526
      %v553 = vadd.f32 %v482, %v526
      %v554 = vadd.f32 %v483, %v526
      %v555 = vadd.f32 %v484, %v526
      %v556 = vadd.f32 %v485, %v526
      %v557 = vadd.f32 %v486, %v526
      %v558 = vadd.f32 %v487, %v526
      %v559 = vadd.f32 %v488, %v526
      %v560 = vadd.f32 %v489, %v526
      %v561 = vadd.f32 %v490, %v526
      %v562 = vadd.f32 %v491, %v526
      %v563 = vadd.f32 %v492, %v526
      %v564 = vadd.f32 %v493, %v526
      %v565 = vadd.f32 %v494, %v526
      %v566 = vadd.f32 %v495, %v526
      %v567 = vadd.f32 %v496, %v526
      %v568 = vadd.f32 %v497, %v526
      %v569 = vadd.f32 %v498, %v526
      %v570 = vadd.f32 %v499, %v526
      %v571 = vadd.f32 %v500, %v526
      %v572 = vadd.f32 %v501, %v526
      %v573 = vadd.f32 %v502, %v526
      %v574 = vadd.f32 %v503, %v526
      %v575 = vadd.f32 %v504, %v526
      %v576 = vadd.f32 %v505, %v526
      %v577 = vadd.f32 %v506, %v526
      %v578 = vadd.f32 %v507, %v526
      %v579 = vadd.f32 %v508, %v526
      %v580 = vadd.f32 %v509, %v526
      %v581 = vadd.f32 %v510, %v526
      %v582 = vadd.f32 %v511, %v526
      %v583 = vadd.f32 %v512, %v526
      %v584 = vadd.f32 %v513, %v526
      %v585 = vadd.f32 %v514, %v526
      %v586 = vadd.f32 %v515, %v526
      %v587 = vadd.f32 %v516, %v526
      %v588 = vadd.f32 %v517, %v526
      %v589 = vadd.f32 %v518, %v526
      %v590 = vadd.f32 %v519, %v526
      %v591 = vadd.f32 %v520, %v526
      %592 = vst [vmem:[%s249] sm:$0xff] %v528
      %593 = vst [vmem:[%s249 + $0x8] sm:$0xff] %v529
      %594 = vst [vmem:[%s249 + $0x10] sm:$0xff] %v530
      %595 = vst [vmem:[%s249 + $0x18] sm:$0xff] %v531
      %596 = vst [vmem:[%s249 + $0x20] sm:$0xff] %v532
      %597 = vst [vmem:[%s249 + $0x28] sm:$0xff] %v533
      %598 = vst [vmem:[%s249 + $0x30] sm:$0xff] %v534
      %599 = vst [vmem:[%s249 + $0x38] sm:$0xff] %v535
      %600 = vst [vmem:[%s249 + $0x40] sm:$0xff] %v536
      %601 = vst [vmem:[%s249 + $0x48] sm:$0xff] %v537
      %602 = vst [vmem:[%s249 + $0x50] sm:$0xff] %v538
      %603 = vst [vmem:[%s249 + $0x58] sm:$0xff] %v539
      %604 = vst [vmem:[%s249 + $0x60] sm:$0xff] %v540
      %605 = vst [vmem:[%s249 + $0x68] sm:$0xff] %v541
      %606 = vst [vmem:[%s249 + $0x70] sm:$0xff] %v542
      %607 = vst [vmem:[%s249 + $0x78] sm:$0xff] %v543
      %608 = vst [vmem:[%s249 + $0x80] sm:$0xff] %v544
      %609 = vst [vmem:[%s249 + $0x88] sm:$0xff] %v545
      %610 = vst [vmem:[%s249 + $0x90] sm:$0xff] %v546
      %611 = vst [vmem:[%s249 + $0x98] sm:$0xff] %v547
      %612 = vst [vmem:[%s249 + $0xa0] sm:$0xff] %v548
      %613 = vst [vmem:[%s249 + $0xa8] sm:$0xff] %v549
      %614 = vst [vmem:[%s249 + $0xb0] sm:$0xff] %v550
      %615 = vst [vmem:[%s249 + $0xb8] sm:$0xff] %v551
      %616 = vst [vmem:[%s249 + $0xc0] sm:$0xff] %v552
      %617 = vst [vmem:[%s249 + $0xc8] sm:$0xff] %v553
      %618 = vst [vmem:[%s249 + $0xd0] sm:$0xff] %v554
      %619 = vst [vmem:[%s249 + $0xd8] sm:$0xff] %v555
      %620 = vst [vmem:[%s249 + $0xe0] sm:$0xff] %v556
      %621 = vst [vmem:[%s249 + $0xe8] sm:$0xff] %v557
      %622 = vst [vmem:[%s249 + $0xf0] sm:$0xff] %v558
      %623 = vst [vmem:[%s249 + $0xf8] sm:$0xff] %v559
      %624 = vst [vmem:[%s249 + $0x100] sm:$0xff] %v560
      %625 = vst [vmem:[%s249 + $0x108] sm:$0xff] %v561
      %626 = vst [vmem:[%s249 + $0x110] sm:$0xff] %v562
      %627 = vst [vmem:[%s249 + $0x118] sm:$0xff] %v563
      %628 = vst [vmem:[%s249 + $0x120] sm:$0xff] %v564
      %629 = vst [vmem:[%s249 + $0x128] sm:$0xff] %v565
      %630 = vst [vmem:[%s249 + $0x130] sm:$0xff] %v566
      %631 = vst [vmem:[%s249 + $0x138] sm:$0xff] %v567
      %632 = vst [vmem:[%s249 + $0x140] sm:$0xff] %v568
      %633 = vst [vmem:[%s249 + $0x148] sm:$0xff] %v569
      %634 = vst [vmem:[%s249 + $0x150] sm:$0xff] %v570
      %635 = vst [vmem:[%s249 + $0x158] sm:$0xff] %v571
      %636 = vst [vmem:[%s249 + $0x160] sm:$0xff] %v572
      %637 = vst [vmem:[%s249 + $0x168] sm:$0xff] %v573
      %638 = vst [vmem:[%s249 + $0x170] sm:$0xff] %v574
      %639 = vst [vmem:[%s249 + $0x178] sm:$0xff] %v575
      %640 = vst [vmem:[%s249 + $0x180] sm:$0xff] %v576
      %641 = vst [vmem:[%s249 + $0x188] sm:$0xff] %v577
      %642 = vst [vmem:[%s249 + $0x190] sm:$0xff] %v578
      %643 = vst [vmem:[%s249 + $0x198] sm:$0xff] %v579
      %644 = vst [vmem:[%s249 + $0x1a0] sm:$0xff] %v580
      %645 = vst [vmem:[%s249 + $0x1a8] sm:$0xff] %v581
      %646 = vst [vmem:[%s249 + $0x1b0] sm:$0xff] %v582
      %647 = vst [vmem:[%s249 + $0x1b8] sm:$0xff] %v583
      %648 = vst [vmem:[%s249 + $0x1c0] sm:$0xff] %v584
      %649 = vst [vmem:[%s249 + $0x1c8] sm:$0xff] %v585
      %650 = vst [vmem:[%s249 + $0x1d0] sm:$0xff] %v586
      %651 = vst [vmem:[%s249 + $0x1d8] sm:$0xff] %v587
      %652 = vst [vmem:[%s249 + $0x1e0] sm:$0xff] %v588
      %653 = vst [vmem:[%s249 + $0x1e8] sm:$0xff] %v589
      %654 = vst [vmem:[%s249 + $0x1f0] sm:$0xff] %v590
      %655 = vst [vmem:[%s249 + $0x1f8] sm:$0xff] %v591
      %s656 = smul.u32 64, %s20
      %p657 = scmp.lt.s32.totalorder %s19, 1
      %s658 = scalar_select %p657, %s19, 1
      %p659 = scmp.lt.s32.totalorder %s656, 127
      %s660 = scalar_select %p659, %s656, 127
      %s661 = smul.addr %s658, 128
      %s662 = sadd.s32 %s660, %s661
      %s663 = smul.addr %s662, 8
      %s664 = scalar_lea.vmem %s4, %s663
      // Predicated region
      $region37: #{upsampling_block_forward.9} parent=35 // pred_check
        %p665 = pneg %p143
      $region38: #{upsampling_block_forward.9} parent=35 // pred_check_branch
        %667 = sbr.rel (%p665) target = $region40
      $region39: #{upsampling_block_forward.9} parent=35 // pred_region
        %s668 = smul.u32 64, %s20
      $region40: #{upsampling_block_forward.9} parent=35 // pred_fallthru
        _
    $region36: #{upsampling_block_forward.9} parent=5 // pred_fallthru
      _
    %p669 = scmp.le.s32.totalorder 2, %s10
    // Predicated region
    $region41: #{upsampling_block_forward.9} parent=5 // pred_check
      %p670 = pneg %p669
    $region42: #{upsampling_block_forward.9} parent=5 // pred_check_branch
      %672 = sbr.rel (%p670) target = $region44
    $region43: #{upsampling_block_forward.9} parent=5 // pred_region
      %s673 = ssub.s32 %s10, 2
      // Predicated region
      $region45: #{upsampling_block_forward.9} parent=43 // pred_check
        %p674 = pneg %p149
      $region46: #{upsampling_block_forward.9} parent=43 // pred_check_branch
        %676 = sbr.rel (%p674) target = $region48
      $region47: #{upsampling_block_forward.9} parent=43 // pred_region
        %s677 = smul.u32 64, %s22
        %p678 = scmp.lt.s32.totalorder %s21, 1
        %s679 = scalar_select %p678, %s21, 1
        %p680 = scmp.lt.s32.totalorder %s677, 127
        %s681 = scalar_select %p680, %s677, 127
        %s682 = smul.addr %s679, 128
        %s683 = sadd.s32 %s681, %s682
        %s684 = smul.addr %s683, 8
        %s685 = scalar_lea.vmem %s4, %s684
      $region48: #{upsampling_block_forward.9} parent=43 // pred_fallthru
        _
    $region44: #{upsampling_block_forward.9} parent=5 // pred_fallthru
      _
  $region6: #{upsampling_block_forward.9} parent=0 // loop_footer
    %s14 = sadd.s32 1, %s10
  $region7: #{upsampling_block_forward.9} parent=0 // loop_footer_branch
    %9 = sbr.rel target = $region3
  $region8: #{upsampling_block_forward.9} parent=0 // loop_exit
    _

</llo_original>
